<compile_context>
chip_gen: v7x
topology: tpu7x:2x2x1
jax: 0.10.0
libtpu: 0.0.40
codegen_flags: <defaults>
</compile_context>

<pallas_src>
import jax
import jax.numpy as jnp
from jax import lax
from jax.experimental import pallas as pl
from jax.experimental.pallas import tpu as pltpu


def _contrastive_pair_loss_kernel(margin_ref,   # SMEM (1,) f32: softplus(raw_margin)
                                  nvalid_ref,   # SMEM (1,) i32: true pair count P
                                  ei_ref,       # VMEM (Dp, tile) bf16, lane-major pairs
                                  ej_ref,       # VMEM (Dp, tile) bf16
                                  ps_ref,       # VMEM (1, tile)  f32 posterior similarity
                                  out_ref,      # VMEM (1, 1, 1)  f32 per-split partial sum
                                  acc_ref):     # VMEM scratch (1, tile) f32
    step = pl.program_id(1)                     # reduction axis (last, "arbitrary")

    @pl.when(step == 0)
    def _():
        acc_ref[...] = jnp.zeros_like(acc_ref)

    d, t = ei_ref.shape
    m = margin_ref[0]
    n_valid = nvalid_ref[0]

    # Lane-block width chosen so the three (8, lane_blk) f32 accumulators plus
    # the two cast chunks stay within the 64-vreg register file.
    lane_blk = t
    while lane_blk > 1024:
        lane_blk //= 2
    n_lane = t // lane_blk
    n_dchunk = d // 8

    # Global column (pair) offset of this grid block, for the validity mask.
    col0 = (pl.program_id(0) * pl.num_programs(1) + step) * t

    for lb in range(n_lane):
        c0 = lb * lane_blk

        si = jnp.zeros((8, lane_blk), jnp.float32)
        sj = jnp.zeros((8, lane_blk), jnp.float32)
        sij = jnp.zeros((8, lane_blk), jnp.float32)
        # Fused cast -> mul -> accumulate over D in 8-sublane chunks: plain VPU
        # adds on lane-dense vregs, no full (D, tile) f32 temporaries.
        for dc in range(n_dchunk):
            a = ei_ref[dc * 8:(dc + 1) * 8, c0:c0 + lane_blk].astype(jnp.float32)
            b = ej_ref[dc * 8:(dc + 1) * 8, c0:c0 + lane_blk].astype(jnp.float32)
            si = si + a * a
            sj = sj + b * b
            sij = sij + a * b
        # One 8-wide sublane (XLU) reduce per quantity.
        si = jnp.sum(si, axis=0, keepdims=True)        # (1, lane_blk)
        sj = jnp.sum(sj, axis=0, keepdims=True)
        sij = jnp.sum(sij, axis=0, keepdims=True)

        # cos = <ei,ej> / (max(||ei||,1e-12) * max(||ej||,1e-12)); rsqrt -> EUP.
        cos = (sij * lax.rsqrt(jnp.maximum(si, 1e-24))
                   * lax.rsqrt(jnp.maximum(sj, 1e-24)))

        ps = ps_ref[:, c0:c0 + lane_blk]               # (1, lane_blk) f32
        pos = (cos - 1.0) ** 2
        neg = jnp.maximum(cos - m, 0.0) ** 2
        pair = neg + ps * (pos - neg)                  # == pos*ps + neg*(1-ps)

        # Explicitly mask padded pair columns (robust even if margin <= 0).
        col = col0 + c0 + lax.broadcasted_iota(jnp.int32, (1, lane_blk), 1)
        pair = jnp.where(col < n_valid, pair, 0.0)

        acc_ref[:, c0:c0 + lane_blk] += pair

    @pl.when(step == pl.num_programs(1) - 1)
    def _():
        out_ref[...] = jnp.sum(acc_ref[...]).reshape(1, 1, 1)


def contrastive_loss_pallas(embeddings, E, idx_i, idx_j, raw_margin, *,
                            tile=4096, num_splits=1, slab_dtype=jnp.bfloat16):
    """ContrastiveLoss forward given already-sampled pair indices."""
    assert tile % 128 == 0, "tile must be a multiple of the 128-lane width"
    P = int(idx_i.shape[0])
    D = int(embeddings.shape[1])

    # --- glue: gather pair rows (data-dependent gather stays in XLA), laid out
    # lane-major (D, P) so the pair axis maps onto the 128-lane axis.
    emb = embeddings.astype(slab_dtype)                      # bf16 halves HBM bytes
    emb_i = jnp.take(emb, idx_i, axis=0).T                   # (D, P)
    emb_j = jnp.take(emb, idx_j, axis=0).T                   # (D, P)
    ps = jnp.sum(jnp.take(E, idx_i, axis=0) * jnp.take(E, idx_j, axis=0),
                 axis=1).astype(jnp.float32)[None, :]        # (1, P)

    # --- pad D to a multiple of 8 sublanes (zero rows don't change norms/dots)
    Dp = ((D + 7) // 8) * 8
    if Dp != D:
        emb_i = jnp.pad(emb_i, ((0, Dp - D), (0, 0)))
        emb_j = jnp.pad(emb_j, ((0, Dp - D), (0, 0)))

    # --- pad pair axis so it divides num_splits * tile (masked in-kernel) -----
    chunk = num_splits * tile
    P_pad = pl.cdiv(P, chunk) * chunk
    if P_pad != P:
        pad = P_pad - P
        emb_i = jnp.pad(emb_i, ((0, 0), (0, pad)))
        emb_j = jnp.pad(emb_j, ((0, 0), (0, pad)))
        ps = jnp.pad(ps, ((0, 0), (0, pad)))
    steps = P_pad // chunk                                    # tiles per split

    # Scalar prefetch: softplus(margin) hoisted out of the kernel + valid count.
    eff_margin = jax.nn.softplus(jnp.asarray(raw_margin, jnp.float32)).reshape((1,))
    n_valid = jnp.asarray([P], jnp.int32)

    # VMEM budget from the actual double-buffered block footprint (+ slack for
    # compiler temporaries); ~8 MiB at tile=4096, far under every chip's VMEM.
    slab_bytes = jnp.dtype(slab_dtype).itemsize
    block_bytes = 2 * Dp * tile * slab_bytes + tile * 4       # one buffer set
    vmem_limit = int(2 * block_bytes + 8 * tile * 4 + (4 << 20))

    def pair_map(c, p, _margin, _nvalid):
        return (0, c * steps + p)

    partials = pl.pallas_call(
        _contrastive_pair_loss_kernel,
        out_shape=jax.ShapeDtypeStruct((num_splits, 1, 1), jnp.float32),
        grid_spec=pltpu.PrefetchScalarGridSpec(
            num_scalar_prefetch=2,
            grid=(num_splits, steps),
            in_specs=[
                pl.BlockSpec((Dp, tile), pair_map),
                pl.BlockSpec((Dp, tile), pair_map),
                pl.BlockSpec((1, tile), pair_map),
            ],
            out_specs=pl.BlockSpec((1, 1, 1), lambda c, p, _m, _n: (c, 0, 0)),
            scratch_shapes=[pltpu.VMEM((1, tile), jnp.float32)],
        ),
        compiler_params=pltpu.CompilerParams(
            # TODO(synk): on v7x use pltpu.CORE_PARALLEL for the split axis
            # (with num_splits=2) so the grid actually shards across both
            # TensorCores; plain "parallel" is a no-op on single-TC v5e/v6e.
            dimension_semantics=("parallel", "arbitrary"),
            vmem_limit_bytes=vmem_limit),
    )(eff_margin, n_valid, emb_i, emb_j, ps)

    return jnp.sum(partials) / float(P)


def sample_pairs(key, E, num_pairs, eps=1e-6):
    """Posterior-based pair sampling (stochastic; mirrors the torch semantics:
    classes ~ Categorical(E.mean(0)); per-class pair endpoints ~ multinomial
    with replacement, probability proportional to 1 / (E[:, cls] + eps))."""
    k_cls, k_p0, k_p1 = jax.random.split(key, 3)
    global_class_probs = E.mean(axis=0)                              # (2,)
    sampled_classes = jax.random.categorical(
        k_cls, jnp.log(global_class_probs), shape=(num_pairs,))
    logits0 = jnp.log(1.0 / (E[:, 0] + eps))
    logits1 = jnp.log(1.0 / (E[:, 1] + eps))
    idx_c0 = jax.random.categorical(k_p0, logits0, shape=(num_pairs, 2))
    idx_c1 = jax.random.categorical(k_p1, logits1, shape=(num_pairs, 2))
    pairs = jnp.where((sampled_classes == 0)[:, None], idx_c0, idx_c1)
    pairs = pairs.astype(jnp.int32)
    return pairs[:, 0], pairs[:, 1]


if __name__ == "__main__":
    key = jax.random.PRNGKey(0)
    k_emb, k_e, k_samp = jax.random.split(key, 3)

    # Small synthetic shapes: N nodes, D embedding dim, 2 classes, P sampled pairs.
    N, D = 64, 128
    num_pairs = 10000                      # module default num_pairs

    embeddings = jax.random.normal(k_emb, (N, D), dtype=jnp.float32)
    E = jax.nn.softmax(jax.random.normal(k_e, (N, 2), dtype=jnp.float32), axis=1)

    # Deterministic parameter init (nn.Parameter(torch.tensor(0.5))).
    raw_margin = jnp.float32(0.5)

    # Stochastic pair sampling (glue).
    idx_i, idx_j = sample_pairs(k_samp, E, num_pairs)

    # Default path (single-TC v5e/v6e style): num_splits=1, tile=4096.
    loss = contrastive_loss_pallas(embeddings, E, idx_i, idx_j, raw_margin)
    loss = jax.block_until_ready(loss)

    # Also exercise the multi-split partial-sum path (v7x-style).
    loss2 = contrastive_loss_pallas(embeddings, E, idx_i, idx_j, raw_margin,
                                    tile=2048, num_splits=2)
    loss2 = jax.block_until_ready(loss2)

    # --- references -----------------------------------------------------------
    eff_m = jax.nn.softplus(raw_margin)
    ps = E[idx_i, 0] * E[idx_j, 0] + E[idx_i, 1] * E[idx_j, 1]

    # (a) kernel-matched precision: bf16-rounded slabs, f32 math.
    emb_q = embeddings.astype(jnp.bfloat16).astype(jnp.float32)
    ei, ej = emb_q[idx_i], emb_q[idx_j]
    ni = ei / jnp.maximum(jnp.linalg.norm(ei, axis=1, keepdims=True), 1e-12)
    nj = ej / jnp.maximum(jnp.linalg.norm(ej, axis=1, keepdims=True), 1e-12)
    cos = jnp.sum(ni * nj, axis=1)
    ref = jnp.mean((cos - 1.0) ** 2 * ps
                   + jnp.maximum(cos - eff_m, 0.0) ** 2 * (1.0 - ps))

    # (b) full-f32 reference matching the torch module exactly (loose check,
    #     only differs by the bf16 slab rounding).
    ne = embeddings / jnp.maximum(
        jnp.linalg.norm(embeddings, axis=1, keepdims=True), 1e-12)
    cos32 = jnp.sum(ne[idx_i] * ne[idx_j], axis=1)
    ref32 = jnp.mean((cos32 - 1.0) ** 2 * ps
                     + jnp.maximum(cos32 - eff_m, 0.0) ** 2 * (1.0 - ps))

    assert jnp.allclose(loss, ref, atol=5e-4, rtol=5e-4), (loss, ref)
    assert jnp.allclose(loss2, ref, atol=5e-4, rtol=5e-4), (loss2, ref)
    assert jnp.allclose(loss, ref32, atol=2e-2, rtol=2e-2), (loss, ref32)
    print("KERNEL_OK")
</pallas_src>

<mosaic_0001>
module attributes {stable_mosaic.version = 11 : i64} {
  func.func @_contrastive_pair_loss_kernel(%arg0: i32, %arg1: i32, %arg2: memref<1xf32, #tpu.memory_space<smem>>, %arg3: memref<1xi32, #tpu.memory_space<smem>>, %arg4: memref<128x4096xbf16, #tpu.memory_space<vmem>>, %arg5: memref<128x4096xbf16, #tpu.memory_space<vmem>>, %arg6: memref<1x4096xf32, #tpu.memory_space<vmem>>, %arg7: memref<1x1x1xf32, #tpu.memory_space<vmem>>, %arg8: memref<1x4096xf32, #tpu.memory_space<vmem>>) attributes {dimension_semantics = [#tpu.dimension_semantics<parallel>, #tpu.dimension_semantics<arbitrary>], iteration_bounds = array<i64: 1, 3>, scalar_prefetch = 2 : i64, scratch_operands = 1 : i64, tpu.core_type = #tpu.core_type<tc>, window_params = [{transform_indices = @transform_0, window_bounds = array<i64: 128, 4096>}, {transform_indices = @transform_1, window_bounds = array<i64: 128, 4096>}, {transform_indices = @transform_2, window_bounds = array<i64: 1, 4096>}, {transform_indices = @transform_3, window_bounds = array<i64: 1, 1, 1>}]} {
    %c0_i32 = arith.constant 0 : i32
    %0 = arith.cmpi eq, %arg1, %c0_i32 : i32
    %1 = arith.extui %0 : i1 to i32
    %c0_i32_0 = arith.constant 0 : i32
    %2 = arith.cmpi ne, %1, %c0_i32_0 : i32
    scf.if %2 {
      %cst_309 = arith.constant 0.000000e+00 : f32
      %811 = vector.broadcast %cst_309 : f32 to vector<1x4096xf32>
      %c0_310 = arith.constant 0 : index
      %c0_311 = arith.constant 0 : index
      %812 = vector.load %arg8[%c0_310, %c0_311] : memref<1x4096xf32, #tpu.memory_space<vmem>>, vector<1x4096xf32>
      tpu.vector_store %arg8[%c0_310, %c0_311], %811 {strides = array<i32>} : memref<1x4096xf32, #tpu.memory_space<vmem>>, vector<1x4096xf32>,
    } else {
    }
    %c0 = arith.constant 0 : index
    %3 = memref.load %arg2[%c0] : memref<1xf32, #tpu.memory_space<smem>>
    %c0_1 = arith.constant 0 : index
    %4 = memref.load %arg3[%c0_1] : memref<1xi32, #tpu.memory_space<smem>>
    %c3_i32 = arith.constant 3 : i32
    %5 = arith.muli %arg0, %c3_i32 : i32
    %6 = arith.addi %5, %arg1 : i32
    %c4096_i32 = arith.constant 4096 : i32
    %7 = arith.muli %6, %c4096_i32 : i32
    %cst = arith.constant 0.000000e+00 : f32
    %8 = vector.broadcast %cst : f32 to vector<8x1024xf32>
    %cst_2 = arith.constant 0.000000e+00 : f32
    %9 = vector.broadcast %cst_2 : f32 to vector<8x1024xf32>
    %cst_3 = arith.constant 0.000000e+00 : f32
    %10 = vector.broadcast %cst_3 : f32 to vector<8x1024xf32>
    %c0_4 = arith.constant 0 : index
    %c0_5 = arith.constant 0 : index
    %11 = vector.load %arg4[%c0_4, %c0_5] : memref<128x4096xbf16, #tpu.memory_space<vmem>>, vector<8x1024xbf16>
    %12 = arith.extf %11 : vector<8x1024xbf16> to vector<8x1024xf32>
    %c0_6 = arith.constant 0 : index
    %c0_7 = arith.constant 0 : index
    %13 = vector.load %arg5[%c0_6, %c0_7] : memref<128x4096xbf16, #tpu.memory_space<vmem>>, vector<8x1024xbf16>
    %14 = arith.extf %13 : vector<8x1024xbf16> to vector<8x1024xf32>
    %15 = arith.mulf %12, %12 : vector<8x1024xf32>
    %16 = arith.addf %8, %15 : vector<8x1024xf32>
    %17 = arith.mulf %14, %14 : vector<8x1024xf32>
    %18 = arith.addf %9, %17 : vector<8x1024xf32>
    %19 = arith.mulf %12, %14 : vector<8x1024xf32>
    %20 = arith.addf %10, %19 : vector<8x1024xf32>
    %c8 = arith.constant 8 : index
    %c0_8 = arith.constant 0 : index
    %21 = vector.load %arg4[%c8, %c0_8] : memref<128x4096xbf16, #tpu.memory_space<vmem>>, vector<8x1024xbf16>
    %22 = arith.extf %21 : vector<8x1024xbf16> to vector<8x1024xf32>
    %c8_9 = arith.constant 8 : index
    %c0_10 = arith.constant 0 : index
    %23 = vector.load %arg5[%c8_9, %c0_10] : memref<128x4096xbf16, #tpu.memory_space<vmem>>, vector<8x1024xbf16>
    %24 = arith.extf %23 : vector<8x1024xbf16> to vector<8x1024xf32>
    %25 = arith.mulf %22, %22 : vector<8x1024xf32>
    %26 = arith.addf %16, %25 : vector<8x1024xf32>
    %27 = arith.mulf %24, %24 : vector<8x1024xf32>
    %28 = arith.addf %18, %27 : vector<8x1024xf32>
    %29 = arith.mulf %22, %24 : vector<8x1024xf32>
    %30 = arith.addf %20, %29 : vector<8x1024xf32>
    %c16 = arith.constant 16 : index
    %c0_11 = arith.constant 0 : index
    %31 = vector.load %arg4[%c16, %c0_11] : memref<128x4096xbf16, #tpu.memory_space<vmem>>, vector<8x1024xbf16>
    %32 = arith.extf %31 : vector<8x1024xbf16> to vector<8x1024xf32>
    %c16_12 = arith.constant 16 : index
    %c0_13 = arith.constant 0 : index
    %33 = vector.load %arg5[%c16_12, %c0_13] : memref<128x4096xbf16, #tpu.memory_space<vmem>>, vector<8x1024xbf16>
    %34 = arith.extf %33 : vector<8x1024xbf16> to vector<8x1024xf32>
    %35 = arith.mulf %32, %32 : vector<8x1024xf32>
    %36 = arith.addf %26, %35 : vector<8x1024xf32>
    %37 = arith.mulf %34, %34 : vector<8x1024xf32>
    %38 = arith.addf %28, %37 : vector<8x1024xf32>
    %39 = arith.mulf %32, %34 : vector<8x1024xf32>
    %40 = arith.addf %30, %39 : vector<8x1024xf32>
    %c24 = arith.constant 24 : index
    %c0_14 = arith.constant 0 : index
    %41 = vector.load %arg4[%c24, %c0_14] : memref<128x4096xbf16, #tpu.memory_space<vmem>>, vector<8x1024xbf16>
    %42 = arith.extf %41 : vector<8x1024xbf16> to vector<8x1024xf32>
    %c24_15 = arith.constant 24 : index
    %c0_16 = arith.constant 0 : index
    %43 = vector.load %arg5[%c24_15, %c0_16] : memref<128x4096xbf16, #tpu.memory_space<vmem>>, vector<8x1024xbf16>
    %44 = arith.extf %43 : vector<8x1024xbf16> to vector<8x1024xf32>
    %45 = arith.mulf %42, %42 : vector<8x1024xf32>
    %46 = arith.addf %36, %45 : vector<8x1024xf32>
    %47 = arith.mulf %44, %44 : vector<8x1024xf32>
    %48 = arith.addf %38, %47 : vector<8x1024xf32>
    %49 = arith.mulf %42, %44 : vector<8x1024xf32>
    %50 = arith.addf %40, %49 : vector<8x1024xf32>
    %c32 = arith.constant 32 : index
    %c0_17 = arith.constant 0 : index
    %51 = vector.load %arg4[%c32, %c0_17] : memref<128x4096xbf16, #tpu.memory_space<vmem>>, vector<8x1024xbf16>
    %52 = arith.extf %51 : vector<8x1024xbf16> to vector<8x1024xf32>
    %c32_18 = arith.constant 32 : index
    %c0_19 = arith.constant 0 : index
    %53 = vector.load %arg5[%c32_18, %c0_19] : memref<128x4096xbf16, #tpu.memory_space<vmem>>, vector<8x1024xbf16>
    %54 = arith.extf %53 : vector<8x1024xbf16> to vector<8x1024xf32>
    %55 = arith.mulf %52, %52 : vector<8x1024xf32>
    %56 = arith.addf %46, %55 : vector<8x1024xf32>
    %57 = arith.mulf %54, %54 : vector<8x1024xf32>
    %58 = arith.addf %48, %57 : vector<8x1024xf32>
    %59 = arith.mulf %52, %54 : vector<8x1024xf32>
    %60 = arith.addf %50, %59 : vector<8x1024xf32>
    %c40 = arith.constant 40 : index
    %c0_20 = arith.constant 0 : index
    %61 = vector.load %arg4[%c40, %c0_20] : memref<128x4096xbf16, #tpu.memory_space<vmem>>, vector<8x1024xbf16>
    %62 = arith.extf %61 : vector<8x1024xbf16> to vector<8x1024xf32>
    %c40_21 = arith.constant 40 : index
    %c0_22 = arith.constant 0 : index
    %63 = vector.load %arg5[%c40_21, %c0_22] : memref<128x4096xbf16, #tpu.memory_space<vmem>>, vector<8x1024xbf16>
    %64 = arith.extf %63 : vector<8x1024xbf16> to vector<8x1024xf32>
    %65 = arith.mulf %62, %62 : vector<8x1024xf32>
    %66 = arith.addf %56, %65 : vector<8x1024xf32>
    %67 = arith.mulf %64, %64 : vector<8x1024xf32>
    %68 = arith.addf %58, %67 : vector<8x1024xf32>
    %69 = arith.mulf %62, %64 : vector<8x1024xf32>
    %70 = arith.addf %60, %69 : vector<8x1024xf32>
    %c48 = arith.constant 48 : index
    %c0_23 = arith.constant 0 : index
    %71 = vector.load %arg4[%c48, %c0_23] : memref<128x4096xbf16, #tpu.memory_space<vmem>>, vector<8x1024xbf16>
    %72 = arith.extf %71 : vector<8x1024xbf16> to vector<8x1024xf32>
    %c48_24 = arith.constant 48 : index
    %c0_25 = arith.constant 0 : index
    %73 = vector.load %arg5[%c48_24, %c0_25] : memref<128x4096xbf16, #tpu.memory_space<vmem>>, vector<8x1024xbf16>
    %74 = arith.extf %73 : vector<8x1024xbf16> to vector<8x1024xf32>
    %75 = arith.mulf %72, %72 : vector<8x1024xf32>
    %76 = arith.addf %66, %75 : vector<8x1024xf32>
    %77 = arith.mulf %74, %74 : vector<8x1024xf32>
    %78 = arith.addf %68, %77 : vector<8x1024xf32>
    %79 = arith.mulf %72, %74 : vector<8x1024xf32>
    %80 = arith.addf %70, %79 : vector<8x1024xf32>
    %c56 = arith.constant 56 : index
    %c0_26 = arith.constant 0 : index
    %81 = vector.load %arg4[%c56, %c0_26] : memref<128x4096xbf16, #tpu.memory_space<vmem>>, vector<8x1024xbf16>
    %82 = arith.extf %81 : vector<8x1024xbf16> to vector<8x1024xf32>
    %c56_27 = arith.constant 56 : index
    %c0_28 = arith.constant 0 : index
    %83 = vector.load %arg5[%c56_27, %c0_28] : memref<128x4096xbf16, #tpu.memory_space<vmem>>, vector<8x1024xbf16>
    %84 = arith.extf %83 : vector<8x1024xbf16> to vector<8x1024xf32>
    %85 = arith.mulf %82, %82 : vector<8x1024xf32>
    %86 = arith.addf %76, %85 : vector<8x1024xf32>
    %87 = arith.mulf %84, %84 : vector<8x1024xf32>
    %88 = arith.addf %78, %87 : vector<8x1024xf32>
    %89 = arith.mulf %82, %84 : vector<8x1024xf32>
    %90 = arith.addf %80, %89 : vector<8x1024xf32>
    %c64 = arith.constant 64 : index
    %c0_29 = arith.constant 0 : index
    %91 = vector.load %arg4[%c64, %c0_29] : memref<128x4096xbf16, #tpu.memory_space<vmem>>, vector<8x1024xbf16>
    %92 = arith.extf %91 : vector<8x1024xbf16> to vector<8x1024xf32>
    %c64_30 = arith.constant 64 : index
    %c0_31 = arith.constant 0 : index
    %93 = vector.load %arg5[%c64_30, %c0_31] : memref<128x4096xbf16, #tpu.memory_space<vmem>>, vector<8x1024xbf16>
    %94 = arith.extf %93 : vector<8x1024xbf16> to vector<8x1024xf32>
    %95 = arith.mulf %92, %92 : vector<8x1024xf32>
    %96 = arith.addf %86, %95 : vector<8x1024xf32>
    %97 = arith.mulf %94, %94 : vector<8x1024xf32>
    %98 = arith.addf %88, %97 : vector<8x1024xf32>
    %99 = arith.mulf %92, %94 : vector<8x1024xf32>
    %100 = arith.addf %90, %99 : vector<8x1024xf32>
    %c72 = arith.constant 72 : index
    %c0_32 = arith.constant 0 : index
    %101 = vector.load %arg4[%c72, %c0_32] : memref<128x4096xbf16, #tpu.memory_space<vmem>>, vector<8x1024xbf16>
    %102 = arith.extf %101 : vector<8x1024xbf16> to vector<8x1024xf32>
    %c72_33 = arith.constant 72 : index
    %c0_34 = arith.constant 0 : index
    %103 = vector.load %arg5[%c72_33, %c0_34] : memref<128x4096xbf16, #tpu.memory_space<vmem>>, vector<8x1024xbf16>
    %104 = arith.extf %103 : vector<8x1024xbf16> to vector<8x1024xf32>
    %105 = arith.mulf %102, %102 : vector<8x1024xf32>
    %106 = arith.addf %96, %105 : vector<8x1024xf32>
    %107 = arith.mulf %104, %104 : vector<8x1024xf32>
    %108 = arith.addf %98, %107 : vector<8x1024xf32>
    %109 = arith.mulf %102, %104 : vector<8x1024xf32>
    %110 = arith.addf %100, %109 : vector<8x1024xf32>
    %c80 = arith.constant 80 : index
    %c0_35 = arith.constant 0 : index
    %111 = vector.load %arg4[%c80, %c0_35] : memref<128x4096xbf16, #tpu.memory_space<vmem>>, vector<8x1024xbf16>
    %112 = arith.extf %111 : vector<8x1024xbf16> to vector<8x1024xf32>
    %c80_36 = arith.constant 80 : index
    %c0_37 = arith.constant 0 : index
    %113 = vector.load %arg5[%c80_36, %c0_37] : memref<128x4096xbf16, #tpu.memory_space<vmem>>, vector<8x1024xbf16>
    %114 = arith.extf %113 : vector<8x1024xbf16> to vector<8x1024xf32>
    %115 = arith.mulf %112, %112 : vector<8x1024xf32>
    %116 = arith.addf %106, %115 : vector<8x1024xf32>
    %117 = arith.mulf %114, %114 : vector<8x1024xf32>
    %118 = arith.addf %108, %117 : vector<8x1024xf32>
    %119 = arith.mulf %112, %114 : vector<8x1024xf32>
    %120 = arith.addf %110, %119 : vector<8x1024xf32>
    %c88 = arith.constant 88 : index
    %c0_38 = arith.constant 0 : index
    %121 = vector.load %arg4[%c88, %c0_38] : memref<128x4096xbf16, #tpu.memory_space<vmem>>, vector<8x1024xbf16>
    %122 = arith.extf %121 : vector<8x1024xbf16> to vector<8x1024xf32>
    %c88_39 = arith.constant 88 : index
    %c0_40 = arith.constant 0 : index
    %123 = vector.load %arg5[%c88_39, %c0_40] : memref<128x4096xbf16, #tpu.memory_space<vmem>>, vector<8x1024xbf16>
    %124 = arith.extf %123 : vector<8x1024xbf16> to vector<8x1024xf32>
    %125 = arith.mulf %122, %122 : vector<8x1024xf32>
    %126 = arith.addf %116, %125 : vector<8x1024xf32>
    %127 = arith.mulf %124, %124 : vector<8x1024xf32>
    %128 = arith.addf %118, %127 : vector<8x1024xf32>
    %129 = arith.mulf %122, %124 : vector<8x1024xf32>
    %130 = arith.addf %120, %129 : vector<8x1024xf32>
    %c96 = arith.constant 96 : index
    %c0_41 = arith.constant 0 : index
    %131 = vector.load %arg4[%c96, %c0_41] : memref<128x4096xbf16, #tpu.memory_space<vmem>>, vector<8x1024xbf16>
    %132 = arith.extf %131 : vector<8x1024xbf16> to vector<8x1024xf32>
    %c96_42 = arith.constant 96 : index
    %c0_43 = arith.constant 0 : index
    %133 = vector.load %arg5[%c96_42, %c0_43] : memref<128x4096xbf16, #tpu.memory_space<vmem>>, vector<8x1024xbf16>
    %134 = arith.extf %133 : vector<8x1024xbf16> to vector<8x1024xf32>
    %135 = arith.mulf %132, %132 : vector<8x1024xf32>
    %136 = arith.addf %126, %135 : vector<8x1024xf32>
    %137 = arith.mulf %134, %134 : vector<8x1024xf32>
    %138 = arith.addf %128, %137 : vector<8x1024xf32>
    %139 = arith.mulf %132, %134 : vector<8x1024xf32>
    %140 = arith.addf %130, %139 : vector<8x1024xf32>
    %c104 = arith.constant 104 : index
    %c0_44 = arith.constant 0 : index
    %141 = vector.load %arg4[%c104, %c0_44] : memref<128x4096xbf16, #tpu.memory_space<vmem>>, vector<8x1024xbf16>
    %142 = arith.extf %141 : vector<8x1024xbf16> to vector<8x1024xf32>
    %c104_45 = arith.constant 104 : index
    %c0_46 = arith.constant 0 : index
    %143 = vector.load %arg5[%c104_45, %c0_46] : memref<128x4096xbf16, #tpu.memory_space<vmem>>, vector<8x1024xbf16>
    %144 = arith.extf %143 : vector<8x1024xbf16> to vector<8x1024xf32>
    %145 = arith.mulf %142, %142 : vector<8x1024xf32>
    %146 = arith.addf %136, %145 : vector<8x1024xf32>
    %147 = arith.mulf %144, %144 : vector<8x1024xf32>
    %148 = arith.addf %138, %147 : vector<8x1024xf32>
    %149 = arith.mulf %142, %144 : vector<8x1024xf32>
    %150 = arith.addf %140, %149 : vector<8x1024xf32>
    %c112 = arith.constant 112 : index
    %c0_47 = arith.constant 0 : index
    %151 = vector.load %arg4[%c112, %c0_47] : memref<128x4096xbf16, #tpu.memory_space<vmem>>, vector<8x1024xbf16>
    %152 = arith.extf %151 : vector<8x1024xbf16> to vector<8x1024xf32>
    %c112_48 = arith.constant 112 : index
    %c0_49 = arith.constant 0 : index
    %153 = vector.load %arg5[%c112_48, %c0_49] : memref<128x4096xbf16, #tpu.memory_space<vmem>>, vector<8x1024xbf16>
    %154 = arith.extf %153 : vector<8x1024xbf16> to vector<8x1024xf32>
    %155 = arith.mulf %152, %152 : vector<8x1024xf32>
    %156 = arith.addf %146, %155 : vector<8x1024xf32>
    %157 = arith.mulf %154, %154 : vector<8x1024xf32>
    %158 = arith.addf %148, %157 : vector<8x1024xf32>
    %159 = arith.mulf %152, %154 : vector<8x1024xf32>
    %160 = arith.addf %150, %159 : vector<8x1024xf32>
    %c120 = arith.constant 120 : index
    %c0_50 = arith.constant 0 : index
    %161 = vector.load %arg4[%c120, %c0_50] : memref<128x4096xbf16, #tpu.memory_space<vmem>>, vector<8x1024xbf16>
    %162 = arith.extf %161 : vector<8x1024xbf16> to vector<8x1024xf32>
    %c120_51 = arith.constant 120 : index
    %c0_52 = arith.constant 0 : index
    %163 = vector.load %arg5[%c120_51, %c0_52] : memref<128x4096xbf16, #tpu.memory_space<vmem>>, vector<8x1024xbf16>
    %164 = arith.extf %163 : vector<8x1024xbf16> to vector<8x1024xf32>
    %165 = arith.mulf %162, %162 : vector<8x1024xf32>
    %166 = arith.addf %156, %165 : vector<8x1024xf32>
    %167 = arith.mulf %164, %164 : vector<8x1024xf32>
    %168 = arith.addf %158, %167 : vector<8x1024xf32>
    %169 = arith.mulf %162, %164 : vector<8x1024xf32>
    %170 = arith.addf %160, %169 : vector<8x1024xf32>
    %cst_53 = arith.constant dense<0.000000e+00> : vector<1024xf32>
    %171 = vector.multi_reduction <add>, %166, %cst_53 [0] : vector<8x1024xf32> to vector<1024xf32>
    %172 = vector.shape_cast %171 : vector<1024xf32> to vector<1x1024xf32>
    %cst_54 = arith.constant dense<0.000000e+00> : vector<1024xf32>
    %173 = vector.multi_reduction <add>, %168, %cst_54 [0] : vector<8x1024xf32> to vector<1024xf32>
    %174 = vector.shape_cast %173 : vector<1024xf32> to vector<1x1024xf32>
    %cst_55 = arith.constant dense<0.000000e+00> : vector<1024xf32>
    %175 = vector.multi_reduction <add>, %170, %cst_55 [0] : vector<8x1024xf32> to vector<1024xf32>
    %176 = vector.shape_cast %175 : vector<1024xf32> to vector<1x1024xf32>
    %cst_56 = arith.constant 1.000000e-24 : f32
    %177 = vector.broadcast %cst_56 : f32 to vector<1x1024xf32>
    %178 = arith.maximumf %172, %177 : vector<1x1024xf32>
    %179 = math.rsqrt %178 : vector<1x1024xf32>
    %180 = arith.mulf %176, %179 : vector<1x1024xf32>
    %cst_57 = arith.constant 1.000000e-24 : f32
    %181 = vector.broadcast %cst_57 : f32 to vector<1x1024xf32>
    %182 = arith.maximumf %174, %181 : vector<1x1024xf32>
    %183 = math.rsqrt %182 : vector<1x1024xf32>
    %184 = arith.mulf %180, %183 : vector<1x1024xf32>
    %c0_58 = arith.constant 0 : index
    %c0_59 = arith.constant 0 : index
    %185 = vector.load %arg6[%c0_58, %c0_59] : memref<1x4096xf32, #tpu.memory_space<vmem>>, vector<1x1024xf32>
    %cst_60 = arith.constant 1.000000e+00 : f32
    %186 = vector.broadcast %cst_60 : f32 to vector<1x1024xf32>
    %187 = arith.subf %184, %186 : vector<1x1024xf32>
    %188 = arith.mulf %187, %187 : vector<1x1024xf32>
    %189 = vector.broadcast %3 : f32 to vector<1x1024xf32>
    %190 = arith.subf %184, %189 : vector<1x1024xf32>
    %cst_61 = arith.constant 0.000000e+00 : f32
    %191 = vector.broadcast %cst_61 : f32 to vector<1x1024xf32>
    %192 = arith.maximumf %190, %191 : vector<1x1024xf32>
    %193 = arith.mulf %192, %192 : vector<1x1024xf32>
    %194 = arith.subf %188, %193 : vector<1x1024xf32>
    %195 = arith.mulf %185, %194 : vector<1x1024xf32>
    %196 = arith.addf %193, %195 : vector<1x1024xf32>
    %c0_i32_62 = arith.constant 0 : i32
    %197 = arith.addi %7, %c0_i32_62 : i32
    %198 = tpu.iota {dimensions = array<i32: 1>} : vector<1x1024xi32>
    %199 = vector.broadcast %197 : i32 to vector<1x1024xi32>
    %200 = arith.addi %199, %198 : vector<1x1024xi32>
    %201 = vector.broadcast %4 : i32 to vector<1x1024xi32>
    %202 = arith.cmpi slt, %200, %201 : vector<1x1024xi32>
    %cst_63 = arith.constant 0.000000e+00 : f32
    %203 = vector.broadcast %cst_63 : f32 to vector<1x1024xf32>
    %204 = arith.select %202, %196, %203 : vector<1x1024xi1>, vector<1x1024xf32>
    %c0_64 = arith.constant 0 : index
    %c0_65 = arith.constant 0 : index
    %205 = vector.load %arg8[%c0_64, %c0_65] : memref<1x4096xf32, #tpu.memory_space<vmem>>, vector<1x1024xf32>
    %206 = arith.addf %205, %204 : vector<1x1024xf32>
    %c0_66 = arith.constant 0 : index
    %c0_67 = arith.constant 0 : index
    %207 = vector.load %arg8[%c0_66, %c0_67] : memref<1x4096xf32, #tpu.memory_space<vmem>>, vector<1x1024xf32>
    tpu.vector_store %arg8[%c0_66, %c0_67], %206 {strides = array<i32>} : memref<1x4096xf32, #tpu.memory_space<vmem>>, vector<1x1024xf32>,
    %cst_68 = arith.constant 0.000000e+00 : f32
    %208 = vector.broadcast %cst_68 : f32 to vector<8x1024xf32>
    %cst_69 = arith.constant 0.000000e+00 : f32
    %209 = vector.broadcast %cst_69 : f32 to vector<8x1024xf32>
    %cst_70 = arith.constant 0.000000e+00 : f32
    %210 = vector.broadcast %cst_70 : f32 to vector<8x1024xf32>
    %c0_71 = arith.constant 0 : index
    %c1024 = arith.constant 1024 : index
    %211 = vector.load %arg4[%c0_71, %c1024] : memref<128x4096xbf16, #tpu.memory_space<vmem>>, vector<8x1024xbf16>
    %212 = arith.extf %211 : vector<8x1024xbf16> to vector<8x1024xf32>
    %c0_72 = arith.constant 0 : index
    %c1024_73 = arith.constant 1024 : index
    %213 = vector.load %arg5[%c0_72, %c1024_73] : memref<128x4096xbf16, #tpu.memory_space<vmem>>, vector<8x1024xbf16>
    %214 = arith.extf %213 : vector<8x1024xbf16> to vector<8x1024xf32>
    %215 = arith.mulf %212, %212 : vector<8x1024xf32>
    %216 = arith.addf %208, %215 : vector<8x1024xf32>
    %217 = arith.mulf %214, %214 : vector<8x1024xf32>
    %218 = arith.addf %209, %217 : vector<8x1024xf32>
    %219 = arith.mulf %212, %214 : vector<8x1024xf32>
    %220 = arith.addf %210, %219 : vector<8x1024xf32>
    %c8_74 = arith.constant 8 : index
    %c1024_75 = arith.constant 1024 : index
    %221 = vector.load %arg4[%c8_74, %c1024_75] : memref<128x4096xbf16, #tpu.memory_space<vmem>>, vector<8x1024xbf16>
    %222 = arith.extf %221 : vector<8x1024xbf16> to vector<8x1024xf32>
    %c8_76 = arith.constant 8 : index
    %c1024_77 = arith.constant 1024 : index
    %223 = vector.load %arg5[%c8_76, %c1024_77] : memref<128x4096xbf16, #tpu.memory_space<vmem>>, vector<8x1024xbf16>
    %224 = arith.extf %223 : vector<8x1024xbf16> to vector<8x1024xf32>
    %225 = arith.mulf %222, %222 : vector<8x1024xf32>
    %226 = arith.addf %216, %225 : vector<8x1024xf32>
    %227 = arith.mulf %224, %224 : vector<8x1024xf32>
    %228 = arith.addf %218, %227 : vector<8x1024xf32>
    %229 = arith.mulf %222, %224 : vector<8x1024xf32>
    %230 = arith.addf %220, %229 : vector<8x1024xf32>
    %c16_78 = arith.constant 16 : index
    %c1024_79 = arith.constant 1024 : index
    %231 = vector.load %arg4[%c16_78, %c1024_79] : memref<128x4096xbf16, #tpu.memory_space<vmem>>, vector<8x1024xbf16>
    %232 = arith.extf %231 : vector<8x1024xbf16> to vector<8x1024xf32>
    %c16_80 = arith.constant 16 : index
    %c1024_81 = arith.constant 1024 : index
    %233 = vector.load %arg5[%c16_80, %c1024_81] : memref<128x4096xbf16, #tpu.memory_space<vmem>>, vector<8x1024xbf16>
    %234 = arith.extf %233 : vector<8x1024xbf16> to vector<8x1024xf32>
    %235 = arith.mulf %232, %232 : vector<8x1024xf32>
    %236 = arith.addf %226, %235 : vector<8x1024xf32>
    %237 = arith.mulf %234, %234 : vector<8x1024xf32>
    %238 = arith.addf %228, %237 : vector<8x1024xf32>
    %239 = arith.mulf %232, %234 : vector<8x1024xf32>
    %240 = arith.addf %230, %239 : vector<8x1024xf32>
    %c24_82 = arith.constant 24 : index
    %c1024_83 = arith.constant 1024 : index
    %241 = vector.load %arg4[%c24_82, %c1024_83] : memref<128x4096xbf16, #tpu.memory_space<vmem>>, vector<8x1024xbf16>
    %242 = arith.extf %241 : vector<8x1024xbf16> to vector<8x1024xf32>
    %c24_84 = arith.constant 24 : index
    %c1024_85 = arith.constant 1024 : index
    %243 = vector.load %arg5[%c24_84, %c1024_85] : memref<128x4096xbf16, #tpu.memory_space<vmem>>, vector<8x1024xbf16>
    %244 = arith.extf %243 : vector<8x1024xbf16> to vector<8x1024xf32>
    %245 = arith.mulf %242, %242 : vector<8x1024xf32>
    %246 = arith.addf %236, %245 : vector<8x1024xf32>
    %247 = arith.mulf %244, %244 : vector<8x1024xf32>
    %248 = arith.addf %238, %247 : vector<8x1024xf32>
    %249 = arith.mulf %242, %244 : vector<8x1024xf32>
    %250 = arith.addf %240, %249 : vector<8x1024xf32>
    %c32_86 = arith.constant 32 : index
    %c1024_87 = arith.constant 1024 : index
    %251 = vector.load %arg4[%c32_86, %c1024_87] : memref<128x4096xbf16, #tpu.memory_space<vmem>>, vector<8x1024xbf16>
    %252 = arith.extf %251 : vector<8x1024xbf16> to vector<8x1024xf32>
    %c32_88 = arith.constant 32 : index
    %c1024_89 = arith.constant 1024 : index
    %253 = vector.load %arg5[%c32_88, %c1024_89] : memref<128x4096xbf16, #tpu.memory_space<vmem>>, vector<8x1024xbf16>
    %254 = arith.extf %253 : vector<8x1024xbf16> to vector<8x1024xf32>
    %255 = arith.mulf %252, %252 : vector<8x1024xf32>
    %256 = arith.addf %246, %255 : vector<8x1024xf32>
    %257 = arith.mulf %254, %254 : vector<8x1024xf32>
    %258 = arith.addf %248, %257 : vector<8x1024xf32>
    %259 = arith.mulf %252, %254 : vector<8x1024xf32>
    %260 = arith.addf %250, %259 : vector<8x1024xf32>
    %c40_90 = arith.constant 40 : index
    %c1024_91 = arith.constant 1024 : index
    %261 = vector.load %arg4[%c40_90, %c1024_91] : memref<128x4096xbf16, #tpu.memory_space<vmem>>, vector<8x1024xbf16>
    %262 = arith.extf %261 : vector<8x1024xbf16> to vector<8x1024xf32>
    %c40_92 = arith.constant 40 : index
    %c1024_93 = arith.constant 1024 : index
    %263 = vector.load %arg5[%c40_92, %c1024_93] : memref<128x4096xbf16, #tpu.memory_space<vmem>>, vector<8x1024xbf16>
    %264 = arith.extf %263 : vector<8x1024xbf16> to vector<8x1024xf32>
    %265 = arith.mulf %262, %262 : vector<8x1024xf32>
    %266 = arith.addf %256, %265 : vector<8x1024xf32>
    %267 = arith.mulf %264, %264 : vector<8x1024xf32>
    %268 = arith.addf %258, %267 : vector<8x1024xf32>
    %269 = arith.mulf %262, %264 : vector<8x1024xf32>
    %270 = arith.addf %260, %269 : vector<8x1024xf32>
    %c48_94 = arith.constant 48 : index
    %c1024_95 = arith.constant 1024 : index
    %271 = vector.load %arg4[%c48_94, %c1024_95] : memref<128x4096xbf16, #tpu.memory_space<vmem>>, vector<8x1024xbf16>
    %272 = arith.extf %271 : vector<8x1024xbf16> to vector<8x1024xf32>
    %c48_96 = arith.constant 48 : index
    %c1024_97 = arith.constant 1024 : index
    %273 = vector.load %arg5[%c48_96, %c1024_97] : memref<128x4096xbf16, #tpu.memory_space<vmem>>, vector<8x1024xbf16>
    %274 = arith.extf %273 : vector<8x1024xbf16> to vector<8x1024xf32>
    %275 = arith.mulf %272, %272 : vector<8x1024xf32>
    %276 = arith.addf %266, %275 : vector<8x1024xf32>
    %277 = arith.mulf %274, %274 : vector<8x1024xf32>
    %278 = arith.addf %268, %277 : vector<8x1024xf32>
    %279 = arith.mulf %272, %274 : vector<8x1024xf32>
    %280 = arith.addf %270, %279 : vector<8x1024xf32>
    %c56_98 = arith.constant 56 : index
    %c1024_99 = arith.constant 1024 : index
    %281 = vector.load %arg4[%c56_98, %c1024_99] : memref<128x4096xbf16, #tpu.memory_space<vmem>>, vector<8x1024xbf16>
    %282 = arith.extf %281 : vector<8x1024xbf16> to vector<8x1024xf32>
    %c56_100 = arith.constant 56 : index
    %c1024_101 = arith.constant 1024 : index
    %283 = vector.load %arg5[%c56_100, %c1024_101] : memref<128x4096xbf16, #tpu.memory_space<vmem>>, vector<8x1024xbf16>
    %284 = arith.extf %283 : vector<8x1024xbf16> to vector<8x1024xf32>
    %285 = arith.mulf %282, %282 : vector<8x1024xf32>
    %286 = arith.addf %276, %285 : vector<8x1024xf32>
    %287 = arith.mulf %284, %284 : vector<8x1024xf32>
    %288 = arith.addf %278, %287 : vector<8x1024xf32>
    %289 = arith.mulf %282, %284 : vector<8x1024xf32>
    %290 = arith.addf %280, %289 : vector<8x1024xf32>
    %c64_102 = arith.constant 64 : index
    %c1024_103 = arith.constant 1024 : index
    %291 = vector.load %arg4[%c64_102, %c1024_103] : memref<128x4096xbf16, #tpu.memory_space<vmem>>, vector<8x1024xbf16>
    %292 = arith.extf %291 : vector<8x1024xbf16> to vector<8x1024xf32>
    %c64_104 = arith.constant 64 : index
    %c1024_105 = arith.constant 1024 : index
    %293 = vector.load %arg5[%c64_104, %c1024_105] : memref<128x4096xbf16, #tpu.memory_space<vmem>>, vector<8x1024xbf16>
    %294 = arith.extf %293 : vector<8x1024xbf16> to vector<8x1024xf32>
    %295 = arith.mulf %292, %292 : vector<8x1024xf32>
    %296 = arith.addf %286, %295 : vector<8x1024xf32>
    %297 = arith.mulf %294, %294 : vector<8x1024xf32>
    %298 = arith.addf %288, %297 : vector<8x1024xf32>
    %299 = arith.mulf %292, %294 : vector<8x1024xf32>
    %300 = arith.addf %290, %299 : vector<8x1024xf32>
    %c72_106 = arith.constant 72 : index
    %c1024_107 = arith.constant 1024 : index
    %301 = vector.load %arg4[%c72_106, %c1024_107] : memref<128x4096xbf16, #tpu.memory_space<vmem>>, vector<8x1024xbf16>
    %302 = arith.extf %301 : vector<8x1024xbf16> to vector<8x1024xf32>
    %c72_108 = arith.constant 72 : index
    %c1024_109 = arith.constant 1024 : index
    %303 = vector.load %arg5[%c72_108, %c1024_109] : memref<128x4096xbf16, #tpu.memory_space<vmem>>, vector<8x1024xbf16>
    %304 = arith.extf %303 : vector<8x1024xbf16> to vector<8x1024xf32>
    %305 = arith.mulf %302, %302 : vector<8x1024xf32>
    %306 = arith.addf %296, %305 : vector<8x1024xf32>
    %307 = arith.mulf %304, %304 : vector<8x1024xf32>
    %308 = arith.addf %298, %307 : vector<8x1024xf32>
    %309 = arith.mulf %302, %304 : vector<8x1024xf32>
    %310 = arith.addf %300, %309 : vector<8x1024xf32>
    %c80_110 = arith.constant 80 : index
    %c1024_111 = arith.constant 1024 : index
    %311 = vector.load %arg4[%c80_110, %c1024_111] : memref<128x4096xbf16, #tpu.memory_space<vmem>>, vector<8x1024xbf16>
    %312 = arith.extf %311 : vector<8x1024xbf16> to vector<8x1024xf32>
    %c80_112 = arith.constant 80 : index
    %c1024_113 = arith.constant 1024 : index
    %313 = vector.load %arg5[%c80_112, %c1024_113] : memref<128x4096xbf16, #tpu.memory_space<vmem>>, vector<8x1024xbf16>
    %314 = arith.extf %313 : vector<8x1024xbf16> to vector<8x1024xf32>
    %315 = arith.mulf %312, %312 : vector<8x1024xf32>
    %316 = arith.addf %306, %315 : vector<8x1024xf32>
    %317 = arith.mulf %314, %314 : vector<8x1024xf32>
    %318 = arith.addf %308, %317 : vector<8x1024xf32>
    %319 = arith.mulf %312, %314 : vector<8x1024xf32>
    %320 = arith.addf %310, %319 : vector<8x1024xf32>
    %c88_114 = arith.constant 88 : index
    %c1024_115 = arith.constant 1024 : index
    %321 = vector.load %arg4[%c88_114, %c1024_115] : memref<128x4096xbf16, #tpu.memory_space<vmem>>, vector<8x1024xbf16>
    %322 = arith.extf %321 : vector<8x1024xbf16> to vector<8x1024xf32>
    %c88_116 = arith.constant 88 : index
    %c1024_117 = arith.constant 1024 : index
    %323 = vector.load %arg5[%c88_116, %c1024_117] : memref<128x4096xbf16, #tpu.memory_space<vmem>>, vector<8x1024xbf16>
    %324 = arith.extf %323 : vector<8x1024xbf16> to vector<8x1024xf32>
    %325 = arith.mulf %322, %322 : vector<8x1024xf32>
    %326 = arith.addf %316, %325 : vector<8x1024xf32>
    %327 = arith.mulf %324, %324 : vector<8x1024xf32>
    %328 = arith.addf %318, %327 : vector<8x1024xf32>
    %329 = arith.mulf %322, %324 : vector<8x1024xf32>
    %330 = arith.addf %320, %329 : vector<8x1024xf32>
    %c96_118 = arith.constant 96 : index
    %c1024_119 = arith.constant 1024 : index
    %331 = vector.load %arg4[%c96_118, %c1024_119] : memref<128x4096xbf16, #tpu.memory_space<vmem>>, vector<8x1024xbf16>
    %332 = arith.extf %331 : vector<8x1024xbf16> to vector<8x1024xf32>
    %c96_120 = arith.constant 96 : index
    %c1024_121 = arith.constant 1024 : index
    %333 = vector.load %arg5[%c96_120, %c1024_121] : memref<128x4096xbf16, #tpu.memory_space<vmem>>, vector<8x1024xbf16>
    %334 = arith.extf %333 : vector<8x1024xbf16> to vector<8x1024xf32>
    %335 = arith.mulf %332, %332 : vector<8x1024xf32>
    %336 = arith.addf %326, %335 : vector<8x1024xf32>
    %337 = arith.mulf %334, %334 : vector<8x1024xf32>
    %338 = arith.addf %328, %337 : vector<8x1024xf32>
    %339 = arith.mulf %332, %334 : vector<8x1024xf32>
    %340 = arith.addf %330, %339 : vector<8x1024xf32>
    %c104_122 = arith.constant 104 : index
    %c1024_123 = arith.constant 1024 : index
    %341 = vector.load %arg4[%c104_122, %c1024_123] : memref<128x4096xbf16, #tpu.memory_space<vmem>>, vector<8x1024xbf16>
    %342 = arith.extf %341 : vector<8x1024xbf16> to vector<8x1024xf32>
    %c104_124 = arith.constant 104 : index
    %c1024_125 = arith.constant 1024 : index
    %343 = vector.load %arg5[%c104_124, %c1024_125] : memref<128x4096xbf16, #tpu.memory_space<vmem>>, vector<8x1024xbf16>
    %344 = arith.extf %343 : vector<8x1024xbf16> to vector<8x1024xf32>
    %345 = arith.mulf %342, %342 : vector<8x1024xf32>
    %346 = arith.addf %336, %345 : vector<8x1024xf32>
    %347 = arith.mulf %344, %344 : vector<8x1024xf32>
    %348 = arith.addf %338, %347 : vector<8x1024xf32>
    %349 = arith.mulf %342, %344 : vector<8x1024xf32>
    %350 = arith.addf %340, %349 : vector<8x1024xf32>
    %c112_126 = arith.constant 112 : index
    %c1024_127 = arith.constant 1024 : index
    %351 = vector.load %arg4[%c112_126, %c1024_127] : memref<128x4096xbf16, #tpu.memory_space<vmem>>, vector<8x1024xbf16>
    %352 = arith.extf %351 : vector<8x1024xbf16> to vector<8x1024xf32>
    %c112_128 = arith.constant 112 : index
    %c1024_129 = arith.constant 1024 : index
    %353 = vector.load %arg5[%c112_128, %c1024_129] : memref<128x4096xbf16, #tpu.memory_space<vmem>>, vector<8x1024xbf16>
    %354 = arith.extf %353 : vector<8x1024xbf16> to vector<8x1024xf32>
    %355 = arith.mulf %352, %352 : vector<8x1024xf32>
    %356 = arith.addf %346, %355 : vector<8x1024xf32>
    %357 = arith.mulf %354, %354 : vector<8x1024xf32>
    %358 = arith.addf %348, %357 : vector<8x1024xf32>
    %359 = arith.mulf %352, %354 : vector<8x1024xf32>
    %360 = arith.addf %350, %359 : vector<8x1024xf32>
    %c120_130 = arith.constant 120 : index
    %c1024_131 = arith.constant 1024 : index
    %361 = vector.load %arg4[%c120_130, %c1024_131] : memref<128x4096xbf16, #tpu.memory_space<vmem>>, vector<8x1024xbf16>
    %362 = arith.extf %361 : vector<8x1024xbf16> to vector<8x1024xf32>
    %c120_132 = arith.constant 120 : index
    %c1024_133 = arith.constant 1024 : index
    %363 = vector.load %arg5[%c120_132, %c1024_133] : memref<128x4096xbf16, #tpu.memory_space<vmem>>, vector<8x1024xbf16>
    %364 = arith.extf %363 : vector<8x1024xbf16> to vector<8x1024xf32>
    %365 = arith.mulf %362, %362 : vector<8x1024xf32>
    %366 = arith.addf %356, %365 : vector<8x1024xf32>
    %367 = arith.mulf %364, %364 : vector<8x1024xf32>
    %368 = arith.addf %358, %367 : vector<8x1024xf32>
    %369 = arith.mulf %362, %364 : vector<8x1024xf32>
    %370 = arith.addf %360, %369 : vector<8x1024xf32>
    %cst_134 = arith.constant dense<0.000000e+00> : vector<1024xf32>
    %371 = vector.multi_reduction <add>, %366, %cst_134 [0] : vector<8x1024xf32> to vector<1024xf32>
    %372 = vector.shape_cast %371 : vector<1024xf32> to vector<1x1024xf32>
    %cst_135 = arith.constant dense<0.000000e+00> : vector<1024xf32>
    %373 = vector.multi_reduction <add>, %368, %cst_135 [0] : vector<8x1024xf32> to vector<1024xf32>
    %374 = vector.shape_cast %373 : vector<1024xf32> to vector<1x1024xf32>
    %cst_136 = arith.constant dense<0.000000e+00> : vector<1024xf32>
    %375 = vector.multi_reduction <add>, %370, %cst_136 [0] : vector<8x1024xf32> to vector<1024xf32>
    %376 = vector.shape_cast %375 : vector<1024xf32> to vector<1x1024xf32>
    %cst_137 = arith.constant 1.000000e-24 : f32
    %377 = vector.broadcast %cst_137 : f32 to vector<1x1024xf32>
    %378 = arith.maximumf %372, %377 : vector<1x1024xf32>
    %379 = math.rsqrt %378 : vector<1x1024xf32>
    %380 = arith.mulf %376, %379 : vector<1x1024xf32>
    %cst_138 = arith.constant 1.000000e-24 : f32
    %381 = vector.broadcast %cst_138 : f32 to vector<1x1024xf32>
    %382 = arith.maximumf %374, %381 : vector<1x1024xf32>
    %383 = math.rsqrt %382 : vector<1x1024xf32>
    %384 = arith.mulf %380, %383 : vector<1x1024xf32>
    %c0_139 = arith.constant 0 : index
    %c1024_140 = arith.constant 1024 : index
    %385 = vector.load %arg6[%c0_139, %c1024_140] : memref<1x4096xf32, #tpu.memory_space<vmem>>, vector<1x1024xf32>
    %cst_141 = arith.constant 1.000000e+00 : f32
    %386 = vector.broadcast %cst_141 : f32 to vector<1x1024xf32>
    %387 = arith.subf %384, %386 : vector<1x1024xf32>
    %388 = arith.mulf %387, %387 : vector<1x1024xf32>
    %389 = vector.broadcast %3 : f32 to vector<1x1024xf32>
    %390 = arith.subf %384, %389 : vector<1x1024xf32>
    %cst_142 = arith.constant 0.000000e+00 : f32
    %391 = vector.broadcast %cst_142 : f32 to vector<1x1024xf32>
    %392 = arith.maximumf %390, %391 : vector<1x1024xf32>
    %393 = arith.mulf %392, %392 : vector<1x1024xf32>
    %394 = arith.subf %388, %393 : vector<1x1024xf32>
    %395 = arith.mulf %385, %394 : vector<1x1024xf32>
    %396 = arith.addf %393, %395 : vector<1x1024xf32>
    %c1024_i32 = arith.constant 1024 : i32
    %397 = arith.addi %7, %c1024_i32 : i32
    %398 = tpu.iota {dimensions = array<i32: 1>} : vector<1x1024xi32>
    %399 = vector.broadcast %397 : i32 to vector<1x1024xi32>
    %400 = arith.addi %399, %398 : vector<1x1024xi32>
    %401 = vector.broadcast %4 : i32 to vector<1x1024xi32>
    %402 = arith.cmpi slt, %400, %401 : vector<1x1024xi32>
    %cst_143 = arith.constant 0.000000e+00 : f32
    %403 = vector.broadcast %cst_143 : f32 to vector<1x1024xf32>
    %404 = arith.select %402, %396, %403 : vector<1x1024xi1>, vector<1x1024xf32>
    %c0_144 = arith.constant 0 : index
    %c1024_145 = arith.constant 1024 : index
    %405 = vector.load %arg8[%c0_144, %c1024_145] : memref<1x4096xf32, #tpu.memory_space<vmem>>, vector<1x1024xf32>
    %406 = arith.addf %405, %404 : vector<1x1024xf32>
    %c0_146 = arith.constant 0 : index
    %c1024_147 = arith.constant 1024 : index
    %407 = vector.load %arg8[%c0_146, %c1024_147] : memref<1x4096xf32, #tpu.memory_space<vmem>>, vector<1x1024xf32>
    tpu.vector_store %arg8[%c0_146, %c1024_147], %406 {strides = array<i32>} : memref<1x4096xf32, #tpu.memory_space<vmem>>, vector<1x1024xf32>,
    %cst_148 = arith.constant 0.000000e+00 : f32
    %408 = vector.broadcast %cst_148 : f32 to vector<8x1024xf32>
    %cst_149 = arith.constant 0.000000e+00 : f32
    %409 = vector.broadcast %cst_149 : f32 to vector<8x1024xf32>
    %cst_150 = arith.constant 0.000000e+00 : f32
    %410 = vector.broadcast %cst_150 : f32 to vector<8x1024xf32>
    %c0_151 = arith.constant 0 : index
    %c2048 = arith.constant 2048 : index
    %411 = vector.load %arg4[%c0_151, %c2048] : memref<128x4096xbf16, #tpu.memory_space<vmem>>, vector<8x1024xbf16>
    %412 = arith.extf %411 : vector<8x1024xbf16> to vector<8x1024xf32>
    %c0_152 = arith.constant 0 : index
    %c2048_153 = arith.constant 2048 : index
    %413 = vector.load %arg5[%c0_152, %c2048_153] : memref<128x4096xbf16, #tpu.memory_space<vmem>>, vector<8x1024xbf16>
    %414 = arith.extf %413 : vector<8x1024xbf16> to vector<8x1024xf32>
    %415 = arith.mulf %412, %412 : vector<8x1024xf32>
    %416 = arith.addf %408, %415 : vector<8x1024xf32>
    %417 = arith.mulf %414, %414 : vector<8x1024xf32>
    %418 = arith.addf %409, %417 : vector<8x1024xf32>
    %419 = arith.mulf %412, %414 : vector<8x1024xf32>
    %420 = arith.addf %410, %419 : vector<8x1024xf32>
    %c8_154 = arith.constant 8 : index
    %c2048_155 = arith.constant 2048 : index
    %421 = vector.load %arg4[%c8_154, %c2048_155] : memref<128x4096xbf16, #tpu.memory_space<vmem>>, vector<8x1024xbf16>
    %422 = arith.extf %421 : vector<8x1024xbf16> to vector<8x1024xf32>
    %c8_156 = arith.constant 8 : index
    %c2048_157 = arith.constant 2048 : index
    %423 = vector.load %arg5[%c8_156, %c2048_157] : memref<128x4096xbf16, #tpu.memory_space<vmem>>, vector<8x1024xbf16>
    %424 = arith.extf %423 : vector<8x1024xbf16> to vector<8x1024xf32>
    %425 = arith.mulf %422, %422 : vector<8x1024xf32>
    %426 = arith.addf %416, %425 : vector<8x1024xf32>
    %427 = arith.mulf %424, %424 : vector<8x1024xf32>
    %428 = arith.addf %418, %427 : vector<8x1024xf32>
    %429 = arith.mulf %422, %424 : vector<8x1024xf32>
    %430 = arith.addf %420, %429 : vector<8x1024xf32>
    %c16_158 = arith.constant 16 : index
    %c2048_159 = arith.constant 2048 : index
    %431 = vector.load %arg4[%c16_158, %c2048_159] : memref<128x4096xbf16, #tpu.memory_space<vmem>>, vector<8x1024xbf16>
    %432 = arith.extf %431 : vector<8x1024xbf16> to vector<8x1024xf32>
    %c16_160 = arith.constant 16 : index
    %c2048_161 = arith.constant 2048 : index
    %433 = vector.load %arg5[%c16_160, %c2048_161] : memref<128x4096xbf16, #tpu.memory_space<vmem>>, vector<8x1024xbf16>
    %434 = arith.extf %433 : vector<8x1024xbf16> to vector<8x1024xf32>
    %435 = arith.mulf %432, %432 : vector<8x1024xf32>
    %436 = arith.addf %426, %435 : vector<8x1024xf32>
    %437 = arith.mulf %434, %434 : vector<8x1024xf32>
    %438 = arith.addf %428, %437 : vector<8x1024xf32>
    %439 = arith.mulf %432, %434 : vector<8x1024xf32>
    %440 = arith.addf %430, %439 : vector<8x1024xf32>
    %c24_162 = arith.constant 24 : index
    %c2048_163 = arith.constant 2048 : index
    %441 = vector.load %arg4[%c24_162, %c2048_163] : memref<128x4096xbf16, #tpu.memory_space<vmem>>, vector<8x1024xbf16>
    %442 = arith.extf %441 : vector<8x1024xbf16> to vector<8x1024xf32>
    %c24_164 = arith.constant 24 : index
    %c2048_165 = arith.constant 2048 : index
    %443 = vector.load %arg5[%c24_164, %c2048_165] : memref<128x4096xbf16, #tpu.memory_space<vmem>>, vector<8x1024xbf16>
    %444 = arith.extf %443 : vector<8x1024xbf16> to vector<8x1024xf32>
    %445 = arith.mulf %442, %442 : vector<8x1024xf32>
    %446 = arith.addf %436, %445 : vector<8x1024xf32>
    %447 = arith.mulf %444, %444 : vector<8x1024xf32>
    %448 = arith.addf %438, %447 : vector<8x1024xf32>
    %449 = arith.mulf %442, %444 : vector<8x1024xf32>
    %450 = arith.addf %440, %449 : vector<8x1024xf32>
    %c32_166 = arith.constant 32 : index
    %c2048_167 = arith.constant 2048 : index
    %451 = vector.load %arg4[%c32_166, %c2048_167] : memref<128x4096xbf16, #tpu.memory_space<vmem>>, vector<8x1024xbf16>
    %452 = arith.extf %451 : vector<8x1024xbf16> to vector<8x1024xf32>
    %c32_168 = arith.constant 32 : index
    %c2048_169 = arith.constant 2048 : index
    %453 = vector.load %arg5[%c32_168, %c2048_169] : memref<128x4096xbf16, #tpu.memory_space<vmem>>, vector<8x1024xbf16>
    %454 = arith.extf %453 : vector<8x1024xbf16> to vector<8x1024xf32>
    %455 = arith.mulf %452, %452 : vector<8x1024xf32>
    %456 = arith.addf %446, %455 : vector<8x1024xf32>
    %457 = arith.mulf %454, %454 : vector<8x1024xf32>
    %458 = arith.addf %448, %457 : vector<8x1024xf32>
    %459 = arith.mulf %452, %454 : vector<8x1024xf32>
    %460 = arith.addf %450, %459 : vector<8x1024xf32>
    %c40_170 = arith.constant 40 : index
    %c2048_171 = arith.constant 2048 : index
    %461 = vector.load %arg4[%c40_170, %c2048_171] : memref<128x4096xbf16, #tpu.memory_space<vmem>>, vector<8x1024xbf16>
    %462 = arith.extf %461 : vector<8x1024xbf16> to vector<8x1024xf32>
    %c40_172 = arith.constant 40 : index
    %c2048_173 = arith.constant 2048 : index
    %463 = vector.load %arg5[%c40_172, %c2048_173] : memref<128x4096xbf16, #tpu.memory_space<vmem>>, vector<8x1024xbf16>
    %464 = arith.extf %463 : vector<8x1024xbf16> to vector<8x1024xf32>
    %465 = arith.mulf %462, %462 : vector<8x1024xf32>
    %466 = arith.addf %456, %465 : vector<8x1024xf32>
    %467 = arith.mulf %464, %464 : vector<8x1024xf32>
    %468 = arith.addf %458, %467 : vector<8x1024xf32>
    %469 = arith.mulf %462, %464 : vector<8x1024xf32>
    %470 = arith.addf %460, %469 : vector<8x1024xf32>
    %c48_174 = arith.constant 48 : index
    %c2048_175 = arith.constant 2048 : index
    %471 = vector.load %arg4[%c48_174, %c2048_175] : memref<128x4096xbf16, #tpu.memory_space<vmem>>, vector<8x1024xbf16>
    %472 = arith.extf %471 : vector<8x1024xbf16> to vector<8x1024xf32>
    %c48_176 = arith.constant 48 : index
    %c2048_177 = arith.constant 2048 : index
    %473 = vector.load %arg5[%c48_176, %c2048_177] : memref<128x4096xbf16, #tpu.memory_space<vmem>>, vector<8x1024xbf16>
    %474 = arith.extf %473 : vector<8x1024xbf16> to vector<8x1024xf32>
    %475 = arith.mulf %472, %472 : vector<8x1024xf32>
    %476 = arith.addf %466, %475 : vector<8x1024xf32>
    %477 = arith.mulf %474, %474 : vector<8x1024xf32>
    %478 = arith.addf %468, %477 : vector<8x1024xf32>
    %479 = arith.mulf %472, %474 : vector<8x1024xf32>
    %480 = arith.addf %470, %479 : vector<8x1024xf32>
    %c56_178 = arith.constant 56 : index
    %c2048_179 = arith.constant 2048 : index
    %481 = vector.load %arg4[%c56_178, %c2048_179] : memref<128x4096xbf16, #tpu.memory_space<vmem>>, vector<8x1024xbf16>
    %482 = arith.extf %481 : vector<8x1024xbf16> to vector<8x1024xf32>
    %c56_180 = arith.constant 56 : index
    %c2048_181 = arith.constant 2048 : index
    %483 = vector.load %arg5[%c56_180, %c2048_181] : memref<128x4096xbf16, #tpu.memory_space<vmem>>, vector<8x1024xbf16>
    %484 = arith.extf %483 : vector<8x1024xbf16> to vector<8x1024xf32>
    %485 = arith.mulf %482, %482 : vector<8x1024xf32>
    %486 = arith.addf %476, %485 : vector<8x1024xf32>
    %487 = arith.mulf %484, %484 : vector<8x1024xf32>
    %488 = arith.addf %478, %487 : vector<8x1024xf32>
    %489 = arith.mulf %482, %484 : vector<8x1024xf32>
    %490 = arith.addf %480, %489 : vector<8x1024xf32>
    %c64_182 = arith.constant 64 : index
    %c2048_183 = arith.constant 2048 : index
    %491 = vector.load %arg4[%c64_182, %c2048_183] : memref<128x4096xbf16, #tpu.memory_space<vmem>>, vector<8x1024xbf16>
    %492 = arith.extf %491 : vector<8x1024xbf16> to vector<8x1024xf32>
    %c64_184 = arith.constant 64 : index
    %c2048_185 = arith.constant 2048 : index
    %493 = vector.load %arg5[%c64_184, %c2048_185] : memref<128x4096xbf16, #tpu.memory_space<vmem>>, vector<8x1024xbf16>
    %494 = arith.extf %493 : vector<8x1024xbf16> to vector<8x1024xf32>
    %495 = arith.mulf %492, %492 : vector<8x1024xf32>
    %496 = arith.addf %486, %495 : vector<8x1024xf32>
    %497 = arith.mulf %494, %494 : vector<8x1024xf32>
    %498 = arith.addf %488, %497 : vector<8x1024xf32>
    %499 = arith.mulf %492, %494 : vector<8x1024xf32>
    %500 = arith.addf %490, %499 : vector<8x1024xf32>
    %c72_186 = arith.constant 72 : index
    %c2048_187 = arith.constant 2048 : index
    %501 = vector.load %arg4[%c72_186, %c2048_187] : memref<128x4096xbf16, #tpu.memory_space<vmem>>, vector<8x1024xbf16>
    %502 = arith.extf %501 : vector<8x1024xbf16> to vector<8x1024xf32>
    %c72_188 = arith.constant 72 : index
    %c2048_189 = arith.constant 2048 : index
    %503 = vector.load %arg5[%c72_188, %c2048_189] : memref<128x4096xbf16, #tpu.memory_space<vmem>>, vector<8x1024xbf16>
    %504 = arith.extf %503 : vector<8x1024xbf16> to vector<8x1024xf32>
    %505 = arith.mulf %502, %502 : vector<8x1024xf32>
    %506 = arith.addf %496, %505 : vector<8x1024xf32>
    %507 = arith.mulf %504, %504 : vector<8x1024xf32>
    %508 = arith.addf %498, %507 : vector<8x1024xf32>
    %509 = arith.mulf %502, %504 : vector<8x1024xf32>
    %510 = arith.addf %500, %509 : vector<8x1024xf32>
    %c80_190 = arith.constant 80 : index
    %c2048_191 = arith.constant 2048 : index
    %511 = vector.load %arg4[%c80_190, %c2048_191] : memref<128x4096xbf16, #tpu.memory_space<vmem>>, vector<8x1024xbf16>
    %512 = arith.extf %511 : vector<8x1024xbf16> to vector<8x1024xf32>
    %c80_192 = arith.constant 80 : index
    %c2048_193 = arith.constant 2048 : index
    %513 = vector.load %arg5[%c80_192, %c2048_193] : memref<128x4096xbf16, #tpu.memory_space<vmem>>, vector<8x1024xbf16>
    %514 = arith.extf %513 : vector<8x1024xbf16> to vector<8x1024xf32>
    %515 = arith.mulf %512, %512 : vector<8x1024xf32>
    %516 = arith.addf %506, %515 : vector<8x1024xf32>
    %517 = arith.mulf %514, %514 : vector<8x1024xf32>
    %518 = arith.addf %508, %517 : vector<8x1024xf32>
    %519 = arith.mulf %512, %514 : vector<8x1024xf32>
    %520 = arith.addf %510, %519 : vector<8x1024xf32>
    %c88_194 = arith.constant 88 : index
    %c2048_195 = arith.constant 2048 : index
    %521 = vector.load %arg4[%c88_194, %c2048_195] : memref<128x4096xbf16, #tpu.memory_space<vmem>>, vector<8x1024xbf16>
    %522 = arith.extf %521 : vector<8x1024xbf16> to vector<8x1024xf32>
    %c88_196 = arith.constant 88 : index
    %c2048_197 = arith.constant 2048 : index
    %523 = vector.load %arg5[%c88_196, %c2048_197] : memref<128x4096xbf16, #tpu.memory_space<vmem>>, vector<8x1024xbf16>
    %524 = arith.extf %523 : vector<8x1024xbf16> to vector<8x1024xf32>
    %525 = arith.mulf %522, %522 : vector<8x1024xf32>
    %526 = arith.addf %516, %525 : vector<8x1024xf32>
    %527 = arith.mulf %524, %524 : vector<8x1024xf32>
    %528 = arith.addf %518, %527 : vector<8x1024xf32>
    %529 = arith.mulf %522, %524 : vector<8x1024xf32>
    %530 = arith.addf %520, %529 : vector<8x1024xf32>
    %c96_198 = arith.constant 96 : index
    %c2048_199 = arith.constant 2048 : index
    %531 = vector.load %arg4[%c96_198, %c2048_199] : memref<128x4096xbf16, #tpu.memory_space<vmem>>, vector<8x1024xbf16>
    %532 = arith.extf %531 : vector<8x1024xbf16> to vector<8x1024xf32>
    %c96_200 = arith.constant 96 : index
    %c2048_201 = arith.constant 2048 : index
    %533 = vector.load %arg5[%c96_200, %c2048_201] : memref<128x4096xbf16, #tpu.memory_space<vmem>>, vector<8x1024xbf16>
    %534 = arith.extf %533 : vector<8x1024xbf16> to vector<8x1024xf32>
    %535 = arith.mulf %532, %532 : vector<8x1024xf32>
    %536 = arith.addf %526, %535 : vector<8x1024xf32>
    %537 = arith.mulf %534, %534 : vector<8x1024xf32>
    %538 = arith.addf %528, %537 : vector<8x1024xf32>
    %539 = arith.mulf %532, %534 : vector<8x1024xf32>
    %540 = arith.addf %530, %539 : vector<8x1024xf32>
    %c104_202 = arith.constant 104 : index
    %c2048_203 = arith.constant 2048 : index
    %541 = vector.load %arg4[%c104_202, %c2048_203] : memref<128x4096xbf16, #tpu.memory_space<vmem>>, vector<8x1024xbf16>
    %542 = arith.extf %541 : vector<8x1024xbf16> to vector<8x1024xf32>
    %c104_204 = arith.constant 104 : index
    %c2048_205 = arith.constant 2048 : index
    %543 = vector.load %arg5[%c104_204, %c2048_205] : memref<128x4096xbf16, #tpu.memory_space<vmem>>, vector<8x1024xbf16>
    %544 = arith.extf %543 : vector<8x1024xbf16> to vector<8x1024xf32>
    %545 = arith.mulf %542, %542 : vector<8x1024xf32>
    %546 = arith.addf %536, %545 : vector<8x1024xf32>
    %547 = arith.mulf %544, %544 : vector<8x1024xf32>
    %548 = arith.addf %538, %547 : vector<8x1024xf32>
    %549 = arith.mulf %542, %544 : vector<8x1024xf32>
    %550 = arith.addf %540, %549 : vector<8x1024xf32>
    %c112_206 = arith.constant 112 : index
    %c2048_207 = arith.constant 2048 : index
    %551 = vector.load %arg4[%c112_206, %c2048_207] : memref<128x4096xbf16, #tpu.memory_space<vmem>>, vector<8x1024xbf16>
    %552 = arith.extf %551 : vector<8x1024xbf16> to vector<8x1024xf32>
    %c112_208 = arith.constant 112 : index
    %c2048_209 = arith.constant 2048 : index
    %553 = vector.load %arg5[%c112_208, %c2048_209] : memref<128x4096xbf16, #tpu.memory_space<vmem>>, vector<8x1024xbf16>
    %554 = arith.extf %553 : vector<8x1024xbf16> to vector<8x1024xf32>
    %555 = arith.mulf %552, %552 : vector<8x1024xf32>
    %556 = arith.addf %546, %555 : vector<8x1024xf32>
    %557 = arith.mulf %554, %554 : vector<8x1024xf32>
    %558 = arith.addf %548, %557 : vector<8x1024xf32>
    %559 = arith.mulf %552, %554 : vector<8x1024xf32>
    %560 = arith.addf %550, %559 : vector<8x1024xf32>
    %c120_210 = arith.constant 120 : index
    %c2048_211 = arith.constant 2048 : index
    %561 = vector.load %arg4[%c120_210, %c2048_211] : memref<128x4096xbf16, #tpu.memory_space<vmem>>, vector<8x1024xbf16>
    %562 = arith.extf %561 : vector<8x1024xbf16> to vector<8x1024xf32>
    %c120_212 = arith.constant 120 : index
    %c2048_213 = arith.constant 2048 : index
    %563 = vector.load %arg5[%c120_212, %c2048_213] : memref<128x4096xbf16, #tpu.memory_space<vmem>>, vector<8x1024xbf16>
    %564 = arith.extf %563 : vector<8x1024xbf16> to vector<8x1024xf32>
    %565 = arith.mulf %562, %562 : vector<8x1024xf32>
    %566 = arith.addf %556, %565 : vector<8x1024xf32>
    %567 = arith.mulf %564, %564 : vector<8x1024xf32>
    %568 = arith.addf %558, %567 : vector<8x1024xf32>
    %569 = arith.mulf %562, %564 : vector<8x1024xf32>
    %570 = arith.addf %560, %569 : vector<8x1024xf32>
    %cst_214 = arith.constant dense<0.000000e+00> : vector<1024xf32>
    %571 = vector.multi_reduction <add>, %566, %cst_214 [0] : vector<8x1024xf32> to vector<1024xf32>
    %572 = vector.shape_cast %571 : vector<1024xf32> to vector<1x1024xf32>
    %cst_215 = arith.constant dense<0.000000e+00> : vector<1024xf32>
    %573 = vector.multi_reduction <add>, %568, %cst_215 [0] : vector<8x1024xf32> to vector<1024xf32>
    %574 = vector.shape_cast %573 : vector<1024xf32> to vector<1x1024xf32>
    %cst_216 = arith.constant dense<0.000000e+00> : vector<1024xf32>
    %575 = vector.multi_reduction <add>, %570, %cst_216 [0] : vector<8x1024xf32> to vector<1024xf32>
    %576 = vector.shape_cast %575 : vector<1024xf32> to vector<1x1024xf32>
    %cst_217 = arith.constant 1.000000e-24 : f32
    %577 = vector.broadcast %cst_217 : f32 to vector<1x1024xf32>
    %578 = arith.maximumf %572, %577 : vector<1x1024xf32>
    %579 = math.rsqrt %578 : vector<1x1024xf32>
    %580 = arith.mulf %576, %579 : vector<1x1024xf32>
    %cst_218 = arith.constant 1.000000e-24 : f32
    %581 = vector.broadcast %cst_218 : f32 to vector<1x1024xf32>
    %582 = arith.maximumf %574, %581 : vector<1x1024xf32>
    %583 = math.rsqrt %582 : vector<1x1024xf32>
    %584 = arith.mulf %580, %583 : vector<1x1024xf32>
    %c0_219 = arith.constant 0 : index
    %c2048_220 = arith.constant 2048 : index
    %585 = vector.load %arg6[%c0_219, %c2048_220] : memref<1x4096xf32, #tpu.memory_space<vmem>>, vector<1x1024xf32>
    %cst_221 = arith.constant 1.000000e+00 : f32
    %586 = vector.broadcast %cst_221 : f32 to vector<1x1024xf32>
    %587 = arith.subf %584, %586 : vector<1x1024xf32>
    %588 = arith.mulf %587, %587 : vector<1x1024xf32>
    %589 = vector.broadcast %3 : f32 to vector<1x1024xf32>
    %590 = arith.subf %584, %589 : vector<1x1024xf32>
    %cst_222 = arith.constant 0.000000e+00 : f32
    %591 = vector.broadcast %cst_222 : f32 to vector<1x1024xf32>
    %592 = arith.maximumf %590, %591 : vector<1x1024xf32>
    %593 = arith.mulf %592, %592 : vector<1x1024xf32>
    %594 = arith.subf %588, %593 : vector<1x1024xf32>
    %595 = arith.mulf %585, %594 : vector<1x1024xf32>
    %596 = arith.addf %593, %595 : vector<1x1024xf32>
    %c2048_i32 = arith.constant 2048 : i32
    %597 = arith.addi %7, %c2048_i32 : i32
    %598 = tpu.iota {dimensions = array<i32: 1>} : vector<1x1024xi32>
    %599 = vector.broadcast %597 : i32 to vector<1x1024xi32>
    %600 = arith.addi %599, %598 : vector<1x1024xi32>
    %601 = vector.broadcast %4 : i32 to vector<1x1024xi32>
    %602 = arith.cmpi slt, %600, %601 : vector<1x1024xi32>
    %cst_223 = arith.constant 0.000000e+00 : f32
    %603 = vector.broadcast %cst_223 : f32 to vector<1x1024xf32>
    %604 = arith.select %602, %596, %603 : vector<1x1024xi1>, vector<1x1024xf32>
    %c0_224 = arith.constant 0 : index
    %c2048_225 = arith.constant 2048 : index
    %605 = vector.load %arg8[%c0_224, %c2048_225] : memref<1x4096xf32, #tpu.memory_space<vmem>>, vector<1x1024xf32>
    %606 = arith.addf %605, %604 : vector<1x1024xf32>
    %c0_226 = arith.constant 0 : index
    %c2048_227 = arith.constant 2048 : index
    %607 = vector.load %arg8[%c0_226, %c2048_227] : memref<1x4096xf32, #tpu.memory_space<vmem>>, vector<1x1024xf32>
    tpu.vector_store %arg8[%c0_226, %c2048_227], %606 {strides = array<i32>} : memref<1x4096xf32, #tpu.memory_space<vmem>>, vector<1x1024xf32>,
    %cst_228 = arith.constant 0.000000e+00 : f32
    %608 = vector.broadcast %cst_228 : f32 to vector<8x1024xf32>
    %cst_229 = arith.constant 0.000000e+00 : f32
    %609 = vector.broadcast %cst_229 : f32 to vector<8x1024xf32>
    %cst_230 = arith.constant 0.000000e+00 : f32
    %610 = vector.broadcast %cst_230 : f32 to vector<8x1024xf32>
    %c0_231 = arith.constant 0 : index
    %c3072 = arith.constant 3072 : index
    %611 = vector.load %arg4[%c0_231, %c3072] : memref<128x4096xbf16, #tpu.memory_space<vmem>>, vector<8x1024xbf16>
    %612 = arith.extf %611 : vector<8x1024xbf16> to vector<8x1024xf32>
    %c0_232 = arith.constant 0 : index
    %c3072_233 = arith.constant 3072 : index
    %613 = vector.load %arg5[%c0_232, %c3072_233] : memref<128x4096xbf16, #tpu.memory_space<vmem>>, vector<8x1024xbf16>
    %614 = arith.extf %613 : vector<8x1024xbf16> to vector<8x1024xf32>
    %615 = arith.mulf %612, %612 : vector<8x1024xf32>
    %616 = arith.addf %608, %615 : vector<8x1024xf32>
    %617 = arith.mulf %614, %614 : vector<8x1024xf32>
    %618 = arith.addf %609, %617 : vector<8x1024xf32>
    %619 = arith.mulf %612, %614 : vector<8x1024xf32>
    %620 = arith.addf %610, %619 : vector<8x1024xf32>
    %c8_234 = arith.constant 8 : index
    %c3072_235 = arith.constant 3072 : index
    %621 = vector.load %arg4[%c8_234, %c3072_235] : memref<128x4096xbf16, #tpu.memory_space<vmem>>, vector<8x1024xbf16>
    %622 = arith.extf %621 : vector<8x1024xbf16> to vector<8x1024xf32>
    %c8_236 = arith.constant 8 : index
    %c3072_237 = arith.constant 3072 : index
    %623 = vector.load %arg5[%c8_236, %c3072_237] : memref<128x4096xbf16, #tpu.memory_space<vmem>>, vector<8x1024xbf16>
    %624 = arith.extf %623 : vector<8x1024xbf16> to vector<8x1024xf32>
    %625 = arith.mulf %622, %622 : vector<8x1024xf32>
    %626 = arith.addf %616, %625 : vector<8x1024xf32>
    %627 = arith.mulf %624, %624 : vector<8x1024xf32>
    %628 = arith.addf %618, %627 : vector<8x1024xf32>
    %629 = arith.mulf %622, %624 : vector<8x1024xf32>
    %630 = arith.addf %620, %629 : vector<8x1024xf32>
    %c16_238 = arith.constant 16 : index
    %c3072_239 = arith.constant 3072 : index
    %631 = vector.load %arg4[%c16_238, %c3072_239] : memref<128x4096xbf16, #tpu.memory_space<vmem>>, vector<8x1024xbf16>
    %632 = arith.extf %631 : vector<8x1024xbf16> to vector<8x1024xf32>
    %c16_240 = arith.constant 16 : index
    %c3072_241 = arith.constant 3072 : index
    %633 = vector.load %arg5[%c16_240, %c3072_241] : memref<128x4096xbf16, #tpu.memory_space<vmem>>, vector<8x1024xbf16>
    %634 = arith.extf %633 : vector<8x1024xbf16> to vector<8x1024xf32>
    %635 = arith.mulf %632, %632 : vector<8x1024xf32>
    %636 = arith.addf %626, %635 : vector<8x1024xf32>
    %637 = arith.mulf %634, %634 : vector<8x1024xf32>
    %638 = arith.addf %628, %637 : vector<8x1024xf32>
    %639 = arith.mulf %632, %634 : vector<8x1024xf32>
    %640 = arith.addf %630, %639 : vector<8x1024xf32>
    %c24_242 = arith.constant 24 : index
    %c3072_243 = arith.constant 3072 : index
    %641 = vector.load %arg4[%c24_242, %c3072_243] : memref<128x4096xbf16, #tpu.memory_space<vmem>>, vector<8x1024xbf16>
    %642 = arith.extf %641 : vector<8x1024xbf16> to vector<8x1024xf32>
    %c24_244 = arith.constant 24 : index
    %c3072_245 = arith.constant 3072 : index
    %643 = vector.load %arg5[%c24_244, %c3072_245] : memref<128x4096xbf16, #tpu.memory_space<vmem>>, vector<8x1024xbf16>
    %644 = arith.extf %643 : vector<8x1024xbf16> to vector<8x1024xf32>
    %645 = arith.mulf %642, %642 : vector<8x1024xf32>
    %646 = arith.addf %636, %645 : vector<8x1024xf32>
    %647 = arith.mulf %644, %644 : vector<8x1024xf32>
    %648 = arith.addf %638, %647 : vector<8x1024xf32>
    %649 = arith.mulf %642, %644 : vector<8x1024xf32>
    %650 = arith.addf %640, %649 : vector<8x1024xf32>
    %c32_246 = arith.constant 32 : index
    %c3072_247 = arith.constant 3072 : index
    %651 = vector.load %arg4[%c32_246, %c3072_247] : memref<128x4096xbf16, #tpu.memory_space<vmem>>, vector<8x1024xbf16>
    %652 = arith.extf %651 : vector<8x1024xbf16> to vector<8x1024xf32>
    %c32_248 = arith.constant 32 : index
    %c3072_249 = arith.constant 3072 : index
    %653 = vector.load %arg5[%c32_248, %c3072_249] : memref<128x4096xbf16, #tpu.memory_space<vmem>>, vector<8x1024xbf16>
    %654 = arith.extf %653 : vector<8x1024xbf16> to vector<8x1024xf32>
    %655 = arith.mulf %652, %652 : vector<8x1024xf32>
    %656 = arith.addf %646, %655 : vector<8x1024xf32>
    %657 = arith.mulf %654, %654 : vector<8x1024xf32>
    %658 = arith.addf %648, %657 : vector<8x1024xf32>
    %659 = arith.mulf %652, %654 : vector<8x1024xf32>
    %660 = arith.addf %650, %659 : vector<8x1024xf32>
    %c40_250 = arith.constant 40 : index
    %c3072_251 = arith.constant 3072 : index
    %661 = vector.load %arg4[%c40_250, %c3072_251] : memref<128x4096xbf16, #tpu.memory_space<vmem>>, vector<8x1024xbf16>
    %662 = arith.extf %661 : vector<8x1024xbf16> to vector<8x1024xf32>
    %c40_252 = arith.constant 40 : index
    %c3072_253 = arith.constant 3072 : index
    %663 = vector.load %arg5[%c40_252, %c3072_253] : memref<128x4096xbf16, #tpu.memory_space<vmem>>, vector<8x1024xbf16>
    %664 = arith.extf %663 : vector<8x1024xbf16> to vector<8x1024xf32>
    %665 = arith.mulf %662, %662 : vector<8x1024xf32>
    %666 = arith.addf %656, %665 : vector<8x1024xf32>
    %667 = arith.mulf %664, %664 : vector<8x1024xf32>
    %668 = arith.addf %658, %667 : vector<8x1024xf32>
    %669 = arith.mulf %662, %664 : vector<8x1024xf32>
    %670 = arith.addf %660, %669 : vector<8x1024xf32>
    %c48_254 = arith.constant 48 : index
    %c3072_255 = arith.constant 3072 : index
    %671 = vector.load %arg4[%c48_254, %c3072_255] : memref<128x4096xbf16, #tpu.memory_space<vmem>>, vector<8x1024xbf16>
    %672 = arith.extf %671 : vector<8x1024xbf16> to vector<8x1024xf32>
    %c48_256 = arith.constant 48 : index
    %c3072_257 = arith.constant 3072 : index
    %673 = vector.load %arg5[%c48_256, %c3072_257] : memref<128x4096xbf16, #tpu.memory_space<vmem>>, vector<8x1024xbf16>
    %674 = arith.extf %673 : vector<8x1024xbf16> to vector<8x1024xf32>
    %675 = arith.mulf %672, %672 : vector<8x1024xf32>
    %676 = arith.addf %666, %675 : vector<8x1024xf32>
    %677 = arith.mulf %674, %674 : vector<8x1024xf32>
    %678 = arith.addf %668, %677 : vector<8x1024xf32>
    %679 = arith.mulf %672, %674 : vector<8x1024xf32>
    %680 = arith.addf %670, %679 : vector<8x1024xf32>
    %c56_258 = arith.constant 56 : index
    %c3072_259 = arith.constant 3072 : index
    %681 = vector.load %arg4[%c56_258, %c3072_259] : memref<128x4096xbf16, #tpu.memory_space<vmem>>, vector<8x1024xbf16>
    %682 = arith.extf %681 : vector<8x1024xbf16> to vector<8x1024xf32>
    %c56_260 = arith.constant 56 : index
    %c3072_261 = arith.constant 3072 : index
    %683 = vector.load %arg5[%c56_260, %c3072_261] : memref<128x4096xbf16, #tpu.memory_space<vmem>>, vector<8x1024xbf16>
    %684 = arith.extf %683 : vector<8x1024xbf16> to vector<8x1024xf32>
    %685 = arith.mulf %682, %682 : vector<8x1024xf32>
    %686 = arith.addf %676, %685 : vector<8x1024xf32>
    %687 = arith.mulf %684, %684 : vector<8x1024xf32>
    %688 = arith.addf %678, %687 : vector<8x1024xf32>
    %689 = arith.mulf %682, %684 : vector<8x1024xf32>
    %690 = arith.addf %680, %689 : vector<8x1024xf32>
    %c64_262 = arith.constant 64 : index
    %c3072_263 = arith.constant 3072 : index
    %691 = vector.load %arg4[%c64_262, %c3072_263] : memref<128x4096xbf16, #tpu.memory_space<vmem>>, vector<8x1024xbf16>
    %692 = arith.extf %691 : vector<8x1024xbf16> to vector<8x1024xf32>
    %c64_264 = arith.constant 64 : index
    %c3072_265 = arith.constant 3072 : index
    %693 = vector.load %arg5[%c64_264, %c3072_265] : memref<128x4096xbf16, #tpu.memory_space<vmem>>, vector<8x1024xbf16>
    %694 = arith.extf %693 : vector<8x1024xbf16> to vector<8x1024xf32>
    %695 = arith.mulf %692, %692 : vector<8x1024xf32>
    %696 = arith.addf %686, %695 : vector<8x1024xf32>
    %697 = arith.mulf %694, %694 : vector<8x1024xf32>
    %698 = arith.addf %688, %697 : vector<8x1024xf32>
    %699 = arith.mulf %692, %694 : vector<8x1024xf32>
    %700 = arith.addf %690, %699 : vector<8x1024xf32>
    %c72_266 = arith.constant 72 : index
    %c3072_267 = arith.constant 3072 : index
    %701 = vector.load %arg4[%c72_266, %c3072_267] : memref<128x4096xbf16, #tpu.memory_space<vmem>>, vector<8x1024xbf16>
    %702 = arith.extf %701 : vector<8x1024xbf16> to vector<8x1024xf32>
    %c72_268 = arith.constant 72 : index
    %c3072_269 = arith.constant 3072 : index
    %703 = vector.load %arg5[%c72_268, %c3072_269] : memref<128x4096xbf16, #tpu.memory_space<vmem>>, vector<8x1024xbf16>
    %704 = arith.extf %703 : vector<8x1024xbf16> to vector<8x1024xf32>
    %705 = arith.mulf %702, %702 : vector<8x1024xf32>
    %706 = arith.addf %696, %705 : vector<8x1024xf32>
    %707 = arith.mulf %704, %704 : vector<8x1024xf32>
    %708 = arith.addf %698, %707 : vector<8x1024xf32>
    %709 = arith.mulf %702, %704 : vector<8x1024xf32>
    %710 = arith.addf %700, %709 : vector<8x1024xf32>
    %c80_270 = arith.constant 80 : index
    %c3072_271 = arith.constant 3072 : index
    %711 = vector.load %arg4[%c80_270, %c3072_271] : memref<128x4096xbf16, #tpu.memory_space<vmem>>, vector<8x1024xbf16>
    %712 = arith.extf %711 : vector<8x1024xbf16> to vector<8x1024xf32>
    %c80_272 = arith.constant 80 : index
    %c3072_273 = arith.constant 3072 : index
    %713 = vector.load %arg5[%c80_272, %c3072_273] : memref<128x4096xbf16, #tpu.memory_space<vmem>>, vector<8x1024xbf16>
    %714 = arith.extf %713 : vector<8x1024xbf16> to vector<8x1024xf32>
    %715 = arith.mulf %712, %712 : vector<8x1024xf32>
    %716 = arith.addf %706, %715 : vector<8x1024xf32>
    %717 = arith.mulf %714, %714 : vector<8x1024xf32>
    %718 = arith.addf %708, %717 : vector<8x1024xf32>
    %719 = arith.mulf %712, %714 : vector<8x1024xf32>
    %720 = arith.addf %710, %719 : vector<8x1024xf32>
    %c88_274 = arith.constant 88 : index
    %c3072_275 = arith.constant 3072 : index
    %721 = vector.load %arg4[%c88_274, %c3072_275] : memref<128x4096xbf16, #tpu.memory_space<vmem>>, vector<8x1024xbf16>
    %722 = arith.extf %721 : vector<8x1024xbf16> to vector<8x1024xf32>
    %c88_276 = arith.constant 88 : index
    %c3072_277 = arith.constant 3072 : index
    %723 = vector.load %arg5[%c88_276, %c3072_277] : memref<128x4096xbf16, #tpu.memory_space<vmem>>, vector<8x1024xbf16>
    %724 = arith.extf %723 : vector<8x1024xbf16> to vector<8x1024xf32>
    %725 = arith.mulf %722, %722 : vector<8x1024xf32>
    %726 = arith.addf %716, %725 : vector<8x1024xf32>
    %727 = arith.mulf %724, %724 : vector<8x1024xf32>
    %728 = arith.addf %718, %727 : vector<8x1024xf32>
    %729 = arith.mulf %722, %724 : vector<8x1024xf32>
    %730 = arith.addf %720, %729 : vector<8x1024xf32>
    %c96_278 = arith.constant 96 : index
    %c3072_279 = arith.constant 3072 : index
    %731 = vector.load %arg4[%c96_278, %c3072_279] : memref<128x4096xbf16, #tpu.memory_space<vmem>>, vector<8x1024xbf16>
    %732 = arith.extf %731 : vector<8x1024xbf16> to vector<8x1024xf32>
    %c96_280 = arith.constant 96 : index
    %c3072_281 = arith.constant 3072 : index
    %733 = vector.load %arg5[%c96_280, %c3072_281] : memref<128x4096xbf16, #tpu.memory_space<vmem>>, vector<8x1024xbf16>
    %734 = arith.extf %733 : vector<8x1024xbf16> to vector<8x1024xf32>
    %735 = arith.mulf %732, %732 : vector<8x1024xf32>
    %736 = arith.addf %726, %735 : vector<8x1024xf32>
    %737 = arith.mulf %734, %734 : vector<8x1024xf32>
    %738 = arith.addf %728, %737 : vector<8x1024xf32>
    %739 = arith.mulf %732, %734 : vector<8x1024xf32>
    %740 = arith.addf %730, %739 : vector<8x1024xf32>
    %c104_282 = arith.constant 104 : index
    %c3072_283 = arith.constant 3072 : index
    %741 = vector.load %arg4[%c104_282, %c3072_283] : memref<128x4096xbf16, #tpu.memory_space<vmem>>, vector<8x1024xbf16>
    %742 = arith.extf %741 : vector<8x1024xbf16> to vector<8x1024xf32>
    %c104_284 = arith.constant 104 : index
    %c3072_285 = arith.constant 3072 : index
    %743 = vector.load %arg5[%c104_284, %c3072_285] : memref<128x4096xbf16, #tpu.memory_space<vmem>>, vector<8x1024xbf16>
    %744 = arith.extf %743 : vector<8x1024xbf16> to vector<8x1024xf32>
    %745 = arith.mulf %742, %742 : vector<8x1024xf32>
    %746 = arith.addf %736, %745 : vector<8x1024xf32>
    %747 = arith.mulf %744, %744 : vector<8x1024xf32>
    %748 = arith.addf %738, %747 : vector<8x1024xf32>
    %749 = arith.mulf %742, %744 : vector<8x1024xf32>
    %750 = arith.addf %740, %749 : vector<8x1024xf32>
    %c112_286 = arith.constant 112 : index
    %c3072_287 = arith.constant 3072 : index
    %751 = vector.load %arg4[%c112_286, %c3072_287] : memref<128x4096xbf16, #tpu.memory_space<vmem>>, vector<8x1024xbf16>
    %752 = arith.extf %751 : vector<8x1024xbf16> to vector<8x1024xf32>
    %c112_288 = arith.constant 112 : index
    %c3072_289 = arith.constant 3072 : index
    %753 = vector.load %arg5[%c112_288, %c3072_289] : memref<128x4096xbf16, #tpu.memory_space<vmem>>, vector<8x1024xbf16>
    %754 = arith.extf %753 : vector<8x1024xbf16> to vector<8x1024xf32>
    %755 = arith.mulf %752, %752 : vector<8x1024xf32>
    %756 = arith.addf %746, %755 : vector<8x1024xf32>
    %757 = arith.mulf %754, %754 : vector<8x1024xf32>
    %758 = arith.addf %748, %757 : vector<8x1024xf32>
    %759 = arith.mulf %752, %754 : vector<8x1024xf32>
    %760 = arith.addf %750, %759 : vector<8x1024xf32>
    %c120_290 = arith.constant 120 : index
    %c3072_291 = arith.constant 3072 : index
    %761 = vector.load %arg4[%c120_290, %c3072_291] : memref<128x4096xbf16, #tpu.memory_space<vmem>>, vector<8x1024xbf16>
    %762 = arith.extf %761 : vector<8x1024xbf16> to vector<8x1024xf32>
    %c120_292 = arith.constant 120 : index
    %c3072_293 = arith.constant 3072 : index
    %763 = vector.load %arg5[%c120_292, %c3072_293] : memref<128x4096xbf16, #tpu.memory_space<vmem>>, vector<8x1024xbf16>
    %764 = arith.extf %763 : vector<8x1024xbf16> to vector<8x1024xf32>
    %765 = arith.mulf %762, %762 : vector<8x1024xf32>
    %766 = arith.addf %756, %765 : vector<8x1024xf32>
    %767 = arith.mulf %764, %764 : vector<8x1024xf32>
    %768 = arith.addf %758, %767 : vector<8x1024xf32>
    %769 = arith.mulf %762, %764 : vector<8x1024xf32>
    %770 = arith.addf %760, %769 : vector<8x1024xf32>
    %cst_294 = arith.constant dense<0.000000e+00> : vector<1024xf32>
    %771 = vector.multi_reduction <add>, %766, %cst_294 [0] : vector<8x1024xf32> to vector<1024xf32>
    %772 = vector.shape_cast %771 : vector<1024xf32> to vector<1x1024xf32>
    %cst_295 = arith.constant dense<0.000000e+00> : vector<1024xf32>
    %773 = vector.multi_reduction <add>, %768, %cst_295 [0] : vector<8x1024xf32> to vector<1024xf32>
    %774 = vector.shape_cast %773 : vector<1024xf32> to vector<1x1024xf32>
    %cst_296 = arith.constant dense<0.000000e+00> : vector<1024xf32>
    %775 = vector.multi_reduction <add>, %770, %cst_296 [0] : vector<8x1024xf32> to vector<1024xf32>
    %776 = vector.shape_cast %775 : vector<1024xf32> to vector<1x1024xf32>
    %cst_297 = arith.constant 1.000000e-24 : f32
    %777 = vector.broadcast %cst_297 : f32 to vector<1x1024xf32>
    %778 = arith.maximumf %772, %777 : vector<1x1024xf32>
    %779 = math.rsqrt %778 : vector<1x1024xf32>
    %780 = arith.mulf %776, %779 : vector<1x1024xf32>
    %cst_298 = arith.constant 1.000000e-24 : f32
    %781 = vector.broadcast %cst_298 : f32 to vector<1x1024xf32>
    %782 = arith.maximumf %774, %781 : vector<1x1024xf32>
    %783 = math.rsqrt %782 : vector<1x1024xf32>
    %784 = arith.mulf %780, %783 : vector<1x1024xf32>
    %c0_299 = arith.constant 0 : index
    %c3072_300 = arith.constant 3072 : index
    %785 = vector.load %arg6[%c0_299, %c3072_300] : memref<1x4096xf32, #tpu.memory_space<vmem>>, vector<1x1024xf32>
    %cst_301 = arith.constant 1.000000e+00 : f32
    %786 = vector.broadcast %cst_301 : f32 to vector<1x1024xf32>
    %787 = arith.subf %784, %786 : vector<1x1024xf32>
    %788 = arith.mulf %787, %787 : vector<1x1024xf32>
    %789 = vector.broadcast %3 : f32 to vector<1x1024xf32>
    %790 = arith.subf %784, %789 : vector<1x1024xf32>
    %cst_302 = arith.constant 0.000000e+00 : f32
    %791 = vector.broadcast %cst_302 : f32 to vector<1x1024xf32>
    %792 = arith.maximumf %790, %791 : vector<1x1024xf32>
    %793 = arith.mulf %792, %792 : vector<1x1024xf32>
    %794 = arith.subf %788, %793 : vector<1x1024xf32>
    %795 = arith.mulf %785, %794 : vector<1x1024xf32>
    %796 = arith.addf %793, %795 : vector<1x1024xf32>
    %c3072_i32 = arith.constant 3072 : i32
    %797 = arith.addi %7, %c3072_i32 : i32
    %798 = tpu.iota {dimensions = array<i32: 1>} : vector<1x1024xi32>
    %799 = vector.broadcast %797 : i32 to vector<1x1024xi32>
    %800 = arith.addi %799, %798 : vector<1x1024xi32>
    %801 = vector.broadcast %4 : i32 to vector<1x1024xi32>
    %802 = arith.cmpi slt, %800, %801 : vector<1x1024xi32>
    %cst_303 = arith.constant 0.000000e+00 : f32
    %803 = vector.broadcast %cst_303 : f32 to vector<1x1024xf32>
    %804 = arith.select %802, %796, %803 : vector<1x1024xi1>, vector<1x1024xf32>
    %c0_304 = arith.constant 0 : index
    %c3072_305 = arith.constant 3072 : index
    %805 = vector.load %arg8[%c0_304, %c3072_305] : memref<1x4096xf32, #tpu.memory_space<vmem>>, vector<1x1024xf32>
    %806 = arith.addf %805, %804 : vector<1x1024xf32>
    %c0_306 = arith.constant 0 : index
    %c3072_307 = arith.constant 3072 : index
    %807 = vector.load %arg8[%c0_306, %c3072_307] : memref<1x4096xf32, #tpu.memory_space<vmem>>, vector<1x1024xf32>
    tpu.vector_store %arg8[%c0_306, %c3072_307], %806 {strides = array<i32>} : memref<1x4096xf32, #tpu.memory_space<vmem>>, vector<1x1024xf32>,
    %c2_i32 = arith.constant 2 : i32
    %808 = arith.cmpi eq, %arg1, %c2_i32 : i32
    %809 = arith.extui %808 : i1 to i32
    %c0_i32_308 = arith.constant 0 : i32
    %810 = arith.cmpi ne, %809, %c0_i32_308 : i32
    scf.if %810 {
      %c0_309 = arith.constant 0 : index
      %c0_310 = arith.constant 0 : index
      %811 = vector.load %arg8[%c0_309, %c0_310] : memref<1x4096xf32, #tpu.memory_space<vmem>>, vector<1x4096xf32>
      %812 = vector.shape_cast %811 : vector<1x4096xf32> to vector<1x1x4096xf32>
      %cst_311 = arith.constant dense<0.000000e+00> : vector<1xf32>
      %813 = vector.multi_reduction <add>, %812, %cst_311 [1, 2] : vector<1x1x4096xf32> to vector<1xf32>
      %814 = vector.shape_cast %813 : vector<1xf32> to vector<1x1x1xf32>
      %815 = vector.extract %814[0, 0, 0] : f32 from vector<1x1x1xf32>
      %816 = vector.broadcast %815 : f32 to vector<1x1x1xf32>
      %c0_312 = arith.constant 0 : index
      %c0_313 = arith.constant 0 : index
      %c0_314 = arith.constant 0 : index
      %817 = vector.load %arg7[%c0_312, %c0_313, %c0_314] : memref<1x1x1xf32, #tpu.memory_space<vmem>>, vector<1x1x1xf32>
      tpu.vector_store %arg7[%c0_312, %c0_313, %c0_314], %816 {strides = array<i32>} : memref<1x1x1xf32, #tpu.memory_space<vmem>>, vector<1x1x1xf32>,
    } else {
    }
    return
  }
  func.func @transform_0(%arg0: i32, %arg1: i32, %arg2: memref<1xf32, #tpu.memory_space<smem>>, %arg3: memref<1xi32, #tpu.memory_space<smem>>) -> (i32, i32) {
    %c3_i32 = arith.constant 3 : i32
    %0 = arith.muli %arg0, %c3_i32 : i32
    %1 = arith.addi %0, %arg1 : i32
    %c0_i32 = arith.constant 0 : i32
    %c0_i32_0 = arith.constant 0 : i32
    return %c0_i32, %1 : i32, i32
  }
  func.func @transform_1(%arg0: i32, %arg1: i32, %arg2: memref<1xf32, #tpu.memory_space<smem>>, %arg3: memref<1xi32, #tpu.memory_space<smem>>) -> (i32, i32) {
    %c3_i32 = arith.constant 3 : i32
    %0 = arith.muli %arg0, %c3_i32 : i32
    %1 = arith.addi %0, %arg1 : i32
    %c0_i32 = arith.constant 0 : i32
    %c0_i32_0 = arith.constant 0 : i32
    return %c0_i32, %1 : i32, i32
  }
  func.func @transform_2(%arg0: i32, %arg1: i32, %arg2: memref<1xf32, #tpu.memory_space<smem>>, %arg3: memref<1xi32, #tpu.memory_space<smem>>) -> (i32, i32) {
    %c3_i32 = arith.constant 3 : i32
    %0 = arith.muli %arg0, %c3_i32 : i32
    %1 = arith.addi %0, %arg1 : i32
    %c0_i32 = arith.constant 0 : i32
    %c0_i32_0 = arith.constant 0 : i32
    return %c0_i32, %1 : i32, i32
  }
  func.func @transform_3(%arg0: i32, %arg1: i32, %arg2: memref<1xf32, #tpu.memory_space<smem>>, %arg3: memref<1xi32, #tpu.memory_space<smem>>) -> (i32, i32, i32) {
    %c0_i32 = arith.constant 0 : i32
    %c0_i32_0 = arith.constant 0 : i32
    %c0_i32_1 = arith.constant 0 : i32
    return %arg0, %c0_i32, %c0_i32_0 : i32, i32, i32
  }
}

</mosaic_0001>

<llo_original>
// kernel: tpu_custom_call.1
$region0: #{tpu_custom_call.1}
  #allocation0 [shape = 'u32[]', space=smem, size = 0x4, offset = 0x4, fixed_abs, tag = 'smem constant byte address 0x4 - core index']
  #allocation1 [shape = 'u32[144,128]{1,0:T(1,128)}', space=vmem, size = 0x12000, scoped, tag = 'internal scratch']
  #allocation2 [shape = 'f32[1,4096]{1,0:T(1,128)}', space=vmem, size = 0x4000, scoped, tag = 'scratch operand']
  #allocation3 [shape = 's32[1]{0}', space=sflag, size = 0x4, scoped, tag = 'scoped memory for tpu_custom_call.1']
  #allocation4 [shape = 'f32[1]{0:T(128)S(6)}', space=smem, size = 0x200, scoped, tag = 'prefetched SMEM operand 0']
  #allocation5 [shape = 's32[1]{0:T(128)S(6)}', space=smem, size = 0x200, scoped, tag = 'prefetched SMEM operand 1']
  %s0 = inlined_call_operand.<no memory space> [shape: f32[1], index: 0, kind: input, shape index: {}]
  %s1 = inlined_call_operand.<no memory space> [shape: s32[1], index: 1, kind: input, shape index: {}]
  %s2 = inlined_call_operand.hbm [shape: bf16[128,12288], index: 2, kind: input, shape index: {}]
  %s3 = inlined_call_operand.hbm [shape: bf16[128,12288], index: 3, kind: input, shape index: {}]
  %s4 = inlined_call_operand.hbm [shape: f32[1,12288], index: 4, kind: input, shape index: {}]
  %s5 = inlined_call_operand.hbm [shape: f32[1,1,1], index: 5, kind: output, shape index: {}]
  %s6 = sld [smem:[#allocation0]]
  $region65: #{tpu_custom_call.1} parent=0
    _
  %s8 = ssub.s32 1, %s6
  %s9 = scalar_select 0, %s8, %s6
  %10 = sst [smem:[#allocation4]] %s0
  %11 = sst [smem:[#allocation5]] %s1
  $region1: #{tpu_custom_call.1} parent=0
    #allocation6 [shape = 'u8[2097152]{0}', space=vmem, size = 0x200000, scoped, tag = 'input window, operand 2']
    #allocation7 [shape = 's32[2]{0}', space=sflag, size = 0x8, scoped, tag = 'scoped memory for tpu_custom_call.1']
    #allocation8 [shape = 's32[2]{0}', space=sflag, size = 0x8, scoped, tag = 'scoped memory for tpu_custom_call.1']
    #allocation9 [shape = 'u8[2097152]{0}', space=vmem, size = 0x200000, scoped, tag = 'input window, operand 3']
    #allocation10 [shape = 's32[2]{0}', space=sflag, size = 0x8, scoped, tag = 'scoped memory for tpu_custom_call.1']
    #allocation11 [shape = 'u8[32768]{0}', space=vmem, size = 0x8000, scoped, tag = 'input window, operand 4']
    #allocation12 [shape = 'u8[512]{0}', space=vmem, size = 0x400, scoped, tag = 'output window, operand 0, single buffered']
    %12 = vsyncpa [#allocation7], 0
    %s13 = scalar_lea.sflag [#allocation7], 1
    %14 = vsyncpa %s13, 0
    %15 = vsyncpa [#allocation10], 0
    %s16 = scalar_lea.sflag [#allocation10], 1
    %17 = vsyncpa %s16, 0
    %18 = vsyncpa [#allocation8], 0
    loop: start=0, step=1, limit=5
    $region2: #{tpu_custom_call.1} parent=1 // loop_pre_header
      _
    $region3: #{tpu_custom_call.1} parent=1 // loop_header
      %s20 = sphi 0, %s24
      %p21 = scmp.ge.s32.totalorder %s20, 5
      %s27 = sphi 0, %s39
      %s28 = sphi 0, %s35
      %s29 = sphi 0, %s27
      %s30 = sphi 0, %s28
      %s31 = sphi 0, %s29
      %s32 = sphi 0, %s30
      %s46 = sphi 0, %s48
      %s49 = sphi 0, %s46
      %s50 = sphi 0, %s49
      %s66 = sphi 0, %s50
      %s76 = sphi 0, %s78
      %s79 = sphi 0, %s76
      %s80 = sphi 0, %s79
      %s96 = sphi 0, %s80
      %s106 = sphi 0, %s108
      %s109 = sphi 0, %s106
      %s110 = sphi 0, %s109
      %s126 = sphi 0, %s110
      %s132 = sphi 0, %s134
      %s135 = sphi 0, %s132
      %s136 = sphi 0, %s135
      %s152 = sphi 0, %s136
    $region4: #{tpu_custom_call.1} parent=1 // loop_header_branch
      %23 = sbr.rel (%p21) target = $region8
    $region5: #{tpu_custom_call.1} parent=1 // loop_body
      %s25 = ssub.s32 %s20, 1
      %s26 = ssub.s32 %s20, 2
      %s33 = sadd.s32 1, %s28
      %p34 = scmp.ge.s32.totalorder %s33, 3
      %s35 = scalar_select %p34, 0, %s33
      %s36 = sadd.s32 1, %s27
      %s37 = scalar_select %p34, %s36, %s27
      %p38 = scmp.ge.s32.totalorder %s37, 1
      %s39 = scalar_select %p38, 0, %s37
      %s40 = smul.u32 %s27, 3
      %s41 = sadd.s32 %s40, %s28
      %s42 = smul.u32 %s39, 3
      %s43 = sadd.s32 %s42, %s35
      %s44 = ssub.s32 %s41, %s43
      %p45 = scmp.eq.s32.totalorder %s44, 0
      %s47 = sadd.s32 %s46, 1
      %s48 = scalar_select %p45, %s46, %s47
      %p51 = pneg %p45
      %p52 = scmp.eq.s32.totalorder %s20, 2
      %p53 = por %p51, %p52
      %p54 = scmp.ne.s32.totalorder %s46, %s49
      %p55 = scmp.eq.s32.totalorder %s20, 0
      %p56 = por %p54, %p55
      %p57 = scmp.ne.s32.totalorder %s46, %s49
      %p58 = scmp.eq.s32.totalorder %s25, 2
      %p59 = por %p57, %p58
      %p60 = scmp.ne.s32.totalorder %s49, %s50
      %p61 = scmp.eq.s32.totalorder %s25, 0
      %p62 = por %p60, %p61
      %p63 = scmp.ne.s32.totalorder %s49, %s50
      %p64 = scmp.eq.s32.totalorder %s26, 2
      %p65 = por %p63, %p64
      %p67 = scmp.ne.s32.totalorder %s50, %s66
      %p68 = scmp.eq.s32.totalorder %s26, 0
      %p69 = por %p67, %p68
      %s70 = smul.u32 %s27, 3
      %s71 = sadd.s32 %s70, %s28
      %s72 = smul.u32 %s39, 3
      %s73 = sadd.s32 %s72, %s35
      %s74 = ssub.s32 %s71, %s73
      %p75 = scmp.eq.s32.totalorder %s74, 0
      %s77 = sadd.s32 %s76, 1
      %s78 = scalar_select %p75, %s76, %s77
      %p81 = pneg %p75
      %p82 = scmp.eq.s32.totalorder %s20, 2
      %p83 = por %p81, %p82
      %p84 = scmp.ne.s32.totalorder %s76, %s79
      %p85 = scmp.eq.s32.totalorder %s20, 0
      %p86 = por %p84, %p85
      %p87 = scmp.ne.s32.totalorder %s76, %s79
      %p88 = scmp.eq.s32.totalorder %s25, 2
      %p89 = por %p87, %p88
      %p90 = scmp.ne.s32.totalorder %s79, %s80
      %p91 = scmp.eq.s32.totalorder %s25, 0
      %p92 = por %p90, %p91
      %p93 = scmp.ne.s32.totalorder %s79, %s80
      %p94 = scmp.eq.s32.totalorder %s26, 2
      %p95 = por %p93, %p94
      %p97 = scmp.ne.s32.totalorder %s80, %s96
      %p98 = scmp.eq.s32.totalorder %s26, 0
      %p99 = por %p97, %p98
      %s100 = smul.u32 %s27, 3
      %s101 = sadd.s32 %s100, %s28
      %s102 = smul.u32 %s39, 3
      %s103 = sadd.s32 %s102, %s35
      %s104 = ssub.s32 %s101, %s103
      %p105 = scmp.eq.s32.totalorder %s104, 0
      %s107 = sadd.s32 %s106, 1
      %s108 = scalar_select %p105, %s106, %s107
      %p111 = pneg %p105
      %p112 = scmp.eq.s32.totalorder %s20, 2
      %p113 = por %p111, %p112
      %p114 = scmp.ne.s32.totalorder %s106, %s109
      %p115 = scmp.eq.s32.totalorder %s20, 0
      %p116 = por %p114, %p115
      %p117 = scmp.ne.s32.totalorder %s106, %s109
      %p118 = scmp.eq.s32.totalorder %s25, 2
      %p119 = por %p117, %p118
      %p120 = scmp.ne.s32.totalorder %s109, %s110
      %p121 = scmp.eq.s32.totalorder %s25, 0
      %p122 = por %p120, %p121
      %p123 = scmp.ne.s32.totalorder %s109, %s110
      %p124 = scmp.eq.s32.totalorder %s26, 2
      %p125 = por %p123, %p124
      %p127 = scmp.ne.s32.totalorder %s110, %s126
      %p128 = scmp.eq.s32.totalorder %s26, 0
      %p129 = por %p127, %p128
      %s130 = ssub.s32 %s27, %s39
      %p131 = scmp.eq.s32.totalorder %s130, 0
      %s133 = sadd.s32 %s132, 1
      %s134 = scalar_select %p131, %s132, %s133
      %p137 = pneg %p131
      %p138 = scmp.eq.s32.totalorder %s20, 2
      %p139 = por %p137, %p138
      %p140 = scmp.ne.s32.totalorder %s132, %s135
      %p141 = scmp.eq.s32.totalorder %s20, 0
      %p142 = por %p140, %p141
      %p143 = scmp.ne.s32.totalorder %s132, %s135
      %p144 = scmp.eq.s32.totalorder %s25, 2
      %p145 = por %p143, %p144
      %p146 = scmp.ne.s32.totalorder %s135, %s136
      %p147 = scmp.eq.s32.totalorder %s25, 0
      %p148 = por %p146, %p147
      %p149 = scmp.ne.s32.totalorder %s135, %s136
      %p150 = scmp.eq.s32.totalorder %s26, 2
      %p151 = por %p149, %p150
      %p153 = scmp.ne.s32.totalorder %s136, %s152
      %p154 = scmp.eq.s32.totalorder %s26, 0
      %p155 = por %p153, %p154
      %p156 = scmp.le.s32.totalorder 1, %s20
      %p157 = scmp.lt.s32.totalorder %s20, 4
      %p158 = pnand %p156, %p157
      %p159 = pneg %p158
      // Predicated region
      $region9: #{tpu_custom_call.1} parent=5 // pred_check
        _
      $region10: #{tpu_custom_call.1} parent=5 // pred_check_branch
        %161 = sbr.rel (%p158) target = $region12
      $region11: #{tpu_custom_call.1} parent=5 // pred_region
        %s162 = ssub.s32 %s20, 1
      $region12: #{tpu_custom_call.1} parent=5 // pred_fallthru
        _
      %p163 = scmp.lt.s32.totalorder %s20, 3
      // Predicated region
      $region13: #{tpu_custom_call.1} parent=5 // pred_check
        %p164 = pneg %p163
      $region14: #{tpu_custom_call.1} parent=5 // pred_check_branch
        %166 = sbr.rel (%p164) target = $region16
      $region15: #{tpu_custom_call.1} parent=5 // pred_region
        // Predicated region
        $region17: #{tpu_custom_call.1} parent=15 // pred_check
          %p167 = pneg %p56
        $region18: #{tpu_custom_call.1} parent=15 // pred_check_branch
          %169 = sbr.rel (%p167) target = $region20
        $region19: #{tpu_custom_call.1} parent=15 // pred_region
          %s170 = sand.u32 %s46, 1
          %s171 = scalar_lea.sflag [#allocation7], %s170
          %s172 = sand.u32 %s46, 1
          %s173 = smul.addr %s172, 2048
          %s174 = scalar_lea.vmem [#allocation6], %s173
          %s175 = smul.u32 %s27, 3
          %s176 = sadd.s32 %s175, %s28
          %s177 = smul.u32 32, %s176
          %s179 = ssub.s32 32768, 32768
          %180 = vsyncadd %s171, %s179
          %s181 = smul.addr %s177, 64
          %s182 = scalar_lea.hbm %s2, %s181
          %s183 = sshll.u32 %s174, 4
          %s184 = int_to_ptr.vmem [resolvable:$true] %s183
          %189 = dma.hbm_to_vmem [thread:$0]  %s182, 32768, %s184, %s171, 6144, 2048, 128
        $region20: #{tpu_custom_call.1} parent=15 // pred_fallthru
          _
        // Predicated region
        $region21: #{tpu_custom_call.1} parent=15 // pred_check
          %p190 = pneg %p86
        $region22: #{tpu_custom_call.1} parent=15 // pred_check_branch
          %192 = sbr.rel (%p190) target = $region24
        $region23: #{tpu_custom_call.1} parent=15 // pred_region
          %s193 = sand.u32 %s20, 1
          %s194 = scalar_lea.sflag [#allocation10], %s193
          %s195 = sand.u32 %s76, 1
          %s196 = smul.addr %s195, 2048
          %s197 = scalar_lea.vmem [#allocation9], %s196
          %s198 = smul.u32 %s27, 3
          %s199 = sadd.s32 %s198, %s28
          %s200 = smul.u32 32, %s199
          %s202 = ssub.s32 32768, 32768
          %203 = vsyncadd %s194, %s202
          %s204 = smul.addr %s200, 64
          %s205 = scalar_lea.hbm %s3, %s204
          %s206 = sshll.u32 %s197, 4
          %s207 = int_to_ptr.vmem [resolvable:$true] %s206
          %212 = dma.hbm_to_vmem [thread:$0]  %s205, 32768, %s207, %s194, 6144, 2048, 128
        $region24: #{tpu_custom_call.1} parent=15 // pred_fallthru
          _
        // Predicated region
        $region25: #{tpu_custom_call.1} parent=15 // pred_check
          %p213 = pneg %p116
        $region26: #{tpu_custom_call.1} parent=15 // pred_check_branch
          %215 = sbr.rel (%p213) target = $region28
        $region27: #{tpu_custom_call.1} parent=15 // pred_region
          %s216 = sand.u32 %s20, 1
          %s217 = scalar_lea.sflag [#allocation10], %s216
          %s218 = sand.u32 %s106, 1
          %s219 = smul.addr %s218, 32
          %s220 = scalar_lea.vmem [#allocation11], %s219
          %s221 = smul.u32 %s27, 3
          %s222 = sadd.s32 %s221, %s28
          %s223 = smul.u32 32, %s222
          %s225 = ssub.s32 512, 512
          %226 = vsyncadd %s217, %s225
          %s227 = smul.addr %s223, 16
          %s228 = scalar_lea.hbm %s4, %s227
          %s230 = sshll.u32 %s220, 4
          %s231 = int_to_ptr.vmem [resolvable:$true] %s230
          %233 = dma.hbm_to_vmem [thread:$0]  %s228, 512, %s231, %s217
        $region28: #{tpu_custom_call.1} parent=15 // pred_fallthru
          _
      $region16: #{tpu_custom_call.1} parent=5 // pred_fallthru
        _
      %p234 = scmp.le.s32.totalorder 1, %s20
      %p235 = scmp.lt.s32.totalorder %s20, 4
      %p236 = pnand %p234, %p235
      %p237 = pneg %p236
      // Predicated region
      $region29: #{tpu_custom_call.1} parent=5 // pred_check
        _
      $region30: #{tpu_custom_call.1} parent=5 // pred_check_branch
        %239 = sbr.rel (%p236) target = $region32
      $region31: #{tpu_custom_call.1} parent=5 // pred_region
        %s240 = ssub.s32 %s20, 1
        %s241 = sand.u32 %s49, 1
        %s242 = scalar_lea.sflag [#allocation7], %s241
        %s243 = sand.u32 %s49, 1
        %s244 = smul.addr %s243, 2048
        %s245 = scalar_lea.vmem [#allocation6], %s244
        // Predicated region
        $region33: #{tpu_custom_call.1} parent=31 // pred_check
          %p246 = pneg %p62
        $region34: #{tpu_custom_call.1} parent=31 // pred_check_branch
          %248 = sbr.rel (%p246) target = $region36
        $region35: #{tpu_custom_call.1} parent=31 // pred_region
          %249 = dma.done %s242, 32768
        $region36: #{tpu_custom_call.1} parent=31 // pred_fallthru
          _
        %s250 = sand.u32 %s25, 1
        %s251 = scalar_lea.sflag [#allocation10], %s250
        %s252 = sand.u32 %s79, 1
        %s253 = smul.addr %s252, 2048
        %s254 = scalar_lea.vmem [#allocation9], %s253
        // Predicated region
        $region37: #{tpu_custom_call.1} parent=31 // pred_check
          %p255 = pneg %p92
        $region38: #{tpu_custom_call.1} parent=31 // pred_check_branch
          %257 = sbr.rel (%p255) target = $region40
        $region39: #{tpu_custom_call.1} parent=31 // pred_region
          %258 = dma.done %s251, 32768
        $region40: #{tpu_custom_call.1} parent=31 // pred_fallthru
          _
        %s259 = sand.u32 %s25, 1
        %s260 = scalar_lea.sflag [#allocation10], %s259
        %s261 = sand.u32 %s109, 1
        %s262 = smul.addr %s261, 32
        %s263 = scalar_lea.vmem [#allocation11], %s262
        // Predicated region
        $region41: #{tpu_custom_call.1} parent=31 // pred_check
          %p264 = pneg %p122
        $region42: #{tpu_custom_call.1} parent=31 // pred_check_branch
          %266 = sbr.rel (%p264) target = $region44
        $region43: #{tpu_custom_call.1} parent=31 // pred_region
          %267 = dma.done %s260, 512
        $region44: #{tpu_custom_call.1} parent=31 // pred_fallthru
          _
        %s268 = sand.u32 %s49, 1
        %s269 = scalar_lea.sflag [#allocation7], %s268
        %s270 = sand.u32 %s49, 1
        %s271 = smul.addr %s270, 2048
        %s272 = scalar_lea.vmem [#allocation6], %s271
        %p273 = pneg %p62
        %p274 = pneg %p59
        %s275 = sand.u32 %s25, 1
        %s276 = scalar_lea.sflag [#allocation10], %s275
        %s277 = sand.u32 %s79, 1
        %s278 = smul.addr %s277, 2048
        %s279 = scalar_lea.vmem [#allocation9], %s278
        %p280 = pneg %p92
        %p281 = pneg %p89
        %s282 = sand.u32 %s25, 1
        %s283 = scalar_lea.sflag [#allocation10], %s282
        %s284 = sand.u32 %s109, 1
        %s285 = smul.addr %s284, 32
        %s286 = scalar_lea.vmem [#allocation11], %s285
        %p287 = pneg %p122
        %p288 = pneg %p119
        %p289 = pneg %p148
        %p290 = pneg %p145
        %s291 = smul.u32 %s29, 3
        %s292 = sadd.s32 %s291, %s30
        %s293 = smul.u32 32, %s292
        %s294 = smul.u32 %s29, 3
        %s295 = sadd.s32 %s294, %s30
        %s296 = smul.u32 32, %s295
        %s297 = smul.u32 %s29, 3
        %s298 = sadd.s32 %s297, %s30
        %s299 = smul.u32 32, %s298
        %p300 = scmp.eq.s32.totalorder %s30, 0
        // Predicated region
        $region45: #{tpu_custom_call.1} parent=31 // pred_check
          %p301 = pneg %p300
        $region46: #{tpu_custom_call.1} parent=31 // pred_check_branch
          %303 = sbr.rel (%p301) target = $region48
        $region47: #{tpu_custom_call.1} parent=31 // pred_region
          %304 = vst [vmem:[#allocation2] sm:$0xff] 0.0
          %305 = vst [vmem:[#allocation2 + $0x8] sm:$0xff] 0.0
          %306 = vst [vmem:[#allocation2 + $0x10] sm:$0xff] 0.0
          %307 = vst [vmem:[#allocation2 + $0x18] sm:$0xff] 0.0
        $region48: #{tpu_custom_call.1} parent=31 // pred_fallthru
          _
        %s308 = sld [smem:[#allocation4]]
        %s309 = sld [smem:[#allocation5]]
        %s310 = smul.u32 %s29, 3
        %s311 = sadd.s32 %s310, %s30
        %s312 = smul.u32 %s311, 4096
        %v313 = vld [vmem:[%s245] sm:$0xff]
        %v314 = vld [vmem:[%s245 + $0x8] sm:$0xff]
        %v315 = vld [vmem:[%s245 + $0x10] sm:$0xff]
        %v316 = vld [vmem:[%s245 + $0x18] sm:$0xff]
        %v317 = vunpack.c.l.bf16 %v313
        %v318 = vunpack.c.h.bf16 %v313
        %v319 = vunpack.c.l.bf16 %v314
        %v320 = vunpack.c.h.bf16 %v314
        %v321 = vunpack.c.l.bf16 %v315
        %v322 = vunpack.c.h.bf16 %v315
        %v323 = vunpack.c.l.bf16 %v316
        %v324 = vunpack.c.h.bf16 %v316
        %v325 = vld [vmem:[%s254] sm:$0xff]
        %v326 = vld [vmem:[%s254 + $0x8] sm:$0xff]
        %v327 = vld [vmem:[%s254 + $0x10] sm:$0xff]
        %v328 = vld [vmem:[%s254 + $0x18] sm:$0xff]
        %v329 = vunpack.c.l.bf16 %v325
        %v330 = vunpack.c.h.bf16 %v325
        %v331 = vunpack.c.l.bf16 %v326
        %v332 = vunpack.c.h.bf16 %v326
        %v333 = vunpack.c.l.bf16 %v327
        %v334 = vunpack.c.h.bf16 %v327
        %v335 = vunpack.c.l.bf16 %v328
        %v336 = vunpack.c.h.bf16 %v328
        %v337 = vmul.f32 %v317, %v317
        %v338 = vmul.f32 %v318, %v318
        %v339 = vmul.f32 %v319, %v319
        %v340 = vmul.f32 %v320, %v320
        %v341 = vmul.f32 %v321, %v321
        %v342 = vmul.f32 %v322, %v322
        %v343 = vmul.f32 %v323, %v323
        %v344 = vmul.f32 %v324, %v324
        %v345 = vadd.f32 %v337, 0.0
        %v346 = vadd.f32 %v338, 0.0
        %v347 = vadd.f32 %v339, 0.0
        %v348 = vadd.f32 %v340, 0.0
        %v349 = vadd.f32 %v341, 0.0
        %v350 = vadd.f32 %v342, 0.0
        %v351 = vadd.f32 %v343, 0.0
        %v352 = vadd.f32 %v344, 0.0
        %v353 = vmul.f32 %v329, %v329
        %v354 = vmul.f32 %v330, %v330
        %v355 = vmul.f32 %v331, %v331
        %v356 = vmul.f32 %v332, %v332
        %v357 = vmul.f32 %v333, %v333
        %v358 = vmul.f32 %v334, %v334
        %v359 = vmul.f32 %v335, %v335
        %v360 = vmul.f32 %v336, %v336
        %v361 = vadd.f32 %v353, 0.0
        %v362 = vadd.f32 %v354, 0.0
        %v363 = vadd.f32 %v355, 0.0
        %v364 = vadd.f32 %v356, 0.0
        %v365 = vadd.f32 %v357, 0.0
        %v366 = vadd.f32 %v358, 0.0
        %v367 = vadd.f32 %v359, 0.0
        %v368 = vadd.f32 %v360, 0.0
        %v369 = vmul.f32 %v317, %v329
        %v370 = vmul.f32 %v318, %v330
        %v371 = vmul.f32 %v319, %v331
        %v372 = vmul.f32 %v320, %v332
        %v373 = vmul.f32 %v321, %v333
        %v374 = vmul.f32 %v322, %v334
        %v375 = vmul.f32 %v323, %v335
        %v376 = vmul.f32 %v324, %v336
        %v377 = vadd.f32 %v369, 0.0
        %v378 = vadd.f32 %v370, 0.0
        %v379 = vadd.f32 %v371, 0.0
        %v380 = vadd.f32 %v372, 0.0
        %v381 = vadd.f32 %v373, 0.0
        %v382 = vadd.f32 %v374, 0.0
        %v383 = vadd.f32 %v375, 0.0
        %v384 = vadd.f32 %v376, 0.0
        %v385 = vld [vmem:[%s245 + $0x80] sm:$0xff]
        %v386 = vld [vmem:[%s245 + $0x88] sm:$0xff]
        %v387 = vld [vmem:[%s245 + $0x90] sm:$0xff]
        %v388 = vld [vmem:[%s245 + $0x98] sm:$0xff]
        %v389 = vunpack.c.l.bf16 %v385
        %v390 = vunpack.c.h.bf16 %v385
        %v391 = vunpack.c.l.bf16 %v386
        %v392 = vunpack.c.h.bf16 %v386
        %v393 = vunpack.c.l.bf16 %v387
        %v394 = vunpack.c.h.bf16 %v387
        %v395 = vunpack.c.l.bf16 %v388
        %v396 = vunpack.c.h.bf16 %v388
        %v397 = vld [vmem:[%s254 + $0x80] sm:$0xff]
        %v398 = vld [vmem:[%s254 + $0x88] sm:$0xff]
        %v399 = vld [vmem:[%s254 + $0x90] sm:$0xff]
        %v400 = vld [vmem:[%s254 + $0x98] sm:$0xff]
        %v401 = vunpack.c.l.bf16 %v397
        %v402 = vunpack.c.h.bf16 %v397
        %v403 = vunpack.c.l.bf16 %v398
        %v404 = vunpack.c.h.bf16 %v398
        %v405 = vunpack.c.l.bf16 %v399
        %v406 = vunpack.c.h.bf16 %v399
        %v407 = vunpack.c.l.bf16 %v400
        %v408 = vunpack.c.h.bf16 %v400
        %v409 = vmul.f32 %v389, %v389
        %v410 = vmul.f32 %v390, %v390
        %v411 = vmul.f32 %v391, %v391
        %v412 = vmul.f32 %v392, %v392
        %v413 = vmul.f32 %v393, %v393
        %v414 = vmul.f32 %v394, %v394
        %v415 = vmul.f32 %v395, %v395
        %v416 = vmul.f32 %v396, %v396
        %v417 = vadd.f32 %v345, %v409
        %v418 = vadd.f32 %v346, %v410
        %v419 = vadd.f32 %v347, %v411
        %v420 = vadd.f32 %v348, %v412
        %v421 = vadd.f32 %v349, %v413
        %v422 = vadd.f32 %v350, %v414
        %v423 = vadd.f32 %v351, %v415
        %v424 = vadd.f32 %v352, %v416
        %v425 = vmul.f32 %v401, %v401
        %v426 = vmul.f32 %v402, %v402
        %v427 = vmul.f32 %v403, %v403
        %v428 = vmul.f32 %v404, %v404
        %v429 = vmul.f32 %v405, %v405
        %v430 = vmul.f32 %v406, %v406
        %v431 = vmul.f32 %v407, %v407
        %v432 = vmul.f32 %v408, %v408
        %v433 = vadd.f32 %v361, %v425
        %v434 = vadd.f32 %v362, %v426
        %v435 = vadd.f32 %v363, %v427
        %v436 = vadd.f32 %v364, %v428
        %v437 = vadd.f32 %v365, %v429
        %v438 = vadd.f32 %v366, %v430
        %v439 = vadd.f32 %v367, %v431
        %v440 = vadd.f32 %v368, %v432
        %v441 = vmul.f32 %v389, %v401
        %v442 = vmul.f32 %v390, %v402
        %v443 = vmul.f32 %v391, %v403
        %v444 = vmul.f32 %v392, %v404
        %v445 = vmul.f32 %v393, %v405
        %v446 = vmul.f32 %v394, %v406
        %v447 = vmul.f32 %v395, %v407
        %v448 = vmul.f32 %v396, %v408
        %v449 = vadd.f32 %v377, %v441
        %v450 = vadd.f32 %v378, %v442
        %v451 = vadd.f32 %v379, %v443
        %v452 = vadd.f32 %v380, %v444
        %v453 = vadd.f32 %v381, %v445
        %v454 = vadd.f32 %v382, %v446
        %v455 = vadd.f32 %v383, %v447
        %v456 = vadd.f32 %v384, %v448
        %v457 = vld [vmem:[%s245 + $0x100] sm:$0xff]
        %v458 = vld [vmem:[%s245 + $0x108] sm:$0xff]
        %v459 = vld [vmem:[%s245 + $0x110] sm:$0xff]
        %v460 = vld [vmem:[%s245 + $0x118] sm:$0xff]
        %v461 = vunpack.c.l.bf16 %v457
        %v462 = vunpack.c.h.bf16 %v457
        %v463 = vunpack.c.l.bf16 %v458
        %v464 = vunpack.c.h.bf16 %v458
        %v465 = vunpack.c.l.bf16 %v459
        %v466 = vunpack.c.h.bf16 %v459
        %v467 = vunpack.c.l.bf16 %v460
        %v468 = vunpack.c.h.bf16 %v460
        %v469 = vld [vmem:[%s254 + $0x100] sm:$0xff]
        %v470 = vld [vmem:[%s254 + $0x108] sm:$0xff]
        %v471 = vld [vmem:[%s254 + $0x110] sm:$0xff]
        %v472 = vld [vmem:[%s254 + $0x118] sm:$0xff]
        %v473 = vunpack.c.l.bf16 %v469
        %v474 = vunpack.c.h.bf16 %v469
        %v475 = vunpack.c.l.bf16 %v470
        %v476 = vunpack.c.h.bf16 %v470
        %v477 = vunpack.c.l.bf16 %v471
        %v478 = vunpack.c.h.bf16 %v471
        %v479 = vunpack.c.l.bf16 %v472
        %v480 = vunpack.c.h.bf16 %v472
        %v481 = vmul.f32 %v461, %v461
        %v482 = vmul.f32 %v462, %v462
        %v483 = vmul.f32 %v463, %v463
        %v484 = vmul.f32 %v464, %v464
        %v485 = vmul.f32 %v465, %v465
        %v486 = vmul.f32 %v466, %v466
        %v487 = vmul.f32 %v467, %v467
        %v488 = vmul.f32 %v468, %v468
        %v489 = vadd.f32 %v417, %v481
        %v490 = vadd.f32 %v418, %v482
        %v491 = vadd.f32 %v419, %v483
        %v492 = vadd.f32 %v420, %v484
        %v493 = vadd.f32 %v421, %v485
        %v494 = vadd.f32 %v422, %v486
        %v495 = vadd.f32 %v423, %v487
        %v496 = vadd.f32 %v424, %v488
        %v497 = vmul.f32 %v473, %v473
        %v498 = vmul.f32 %v474, %v474
        %v499 = vmul.f32 %v475, %v475
        %v500 = vmul.f32 %v476, %v476
        %v501 = vmul.f32 %v477, %v477
        %v502 = vmul.f32 %v478, %v478
        %v503 = vmul.f32 %v479, %v479
        %v504 = vmul.f32 %v480, %v480
        %v505 = vadd.f32 %v433, %v497
        %v506 = vadd.f32 %v434, %v498
        %v507 = vadd.f32 %v435, %v499
        %v508 = vadd.f32 %v436, %v500
        %v509 = vadd.f32 %v437, %v501
        %v510 = vadd.f32 %v438, %v502
        %v511 = vadd.f32 %v439, %v503
        %v512 = vadd.f32 %v440, %v504
        %v513 = vmul.f32 %v461, %v473
        %v514 = vmul.f32 %v462, %v474
        %v515 = vmul.f32 %v463, %v475
        %v516 = vmul.f32 %v464, %v476
        %v517 = vmul.f32 %v465, %v477
        %v518 = vmul.f32 %v466, %v478
        %v519 = vmul.f32 %v467, %v479
        %v520 = vmul.f32 %v468, %v480
        %v521 = vadd.f32 %v449, %v513
        %v522 = vadd.f32 %v450, %v514
        %v523 = vadd.f32 %v451, %v515
        %v524 = vadd.f32 %v452, %v516
        %v525 = vadd.f32 %v453, %v517
        %v526 = vadd.f32 %v454, %v518
        %v527 = vadd.f32 %v455, %v519
        %v528 = vadd.f32 %v456, %v520
        %v529 = vld [vmem:[%s245 + $0x180] sm:$0xff]
        %v530 = vld [vmem:[%s245 + $0x188] sm:$0xff]
        %v531 = vld [vmem:[%s245 + $0x190] sm:$0xff]
        %v532 = vld [vmem:[%s245 + $0x198] sm:$0xff]
        %v533 = vunpack.c.l.bf16 %v529
        %v534 = vunpack.c.h.bf16 %v529
        %v535 = vunpack.c.l.bf16 %v530
        %v536 = vunpack.c.h.bf16 %v530
        %v537 = vunpack.c.l.bf16 %v531
        %v538 = vunpack.c.h.bf16 %v531
        %v539 = vunpack.c.l.bf16 %v532
        %v540 = vunpack.c.h.bf16 %v532
        %v541 = vld [vmem:[%s254 + $0x180] sm:$0xff]
        %v542 = vld [vmem:[%s254 + $0x188] sm:$0xff]
        %v543 = vld [vmem:[%s254 + $0x190] sm:$0xff]
        %v544 = vld [vmem:[%s254 + $0x198] sm:$0xff]
        %v545 = vunpack.c.l.bf16 %v541
        %v546 = vunpack.c.h.bf16 %v541
        %v547 = vunpack.c.l.bf16 %v542
        %v548 = vunpack.c.h.bf16 %v542
        %v549 = vunpack.c.l.bf16 %v543
        %v550 = vunpack.c.h.bf16 %v543
        %v551 = vunpack.c.l.bf16 %v544
        %v552 = vunpack.c.h.bf16 %v544
        %v553 = vmul.f32 %v533, %v533
        %v554 = vmul.f32 %v534, %v534
        %v555 = vmul.f32 %v535, %v535
        %v556 = vmul.f32 %v536, %v536
        %v557 = vmul.f32 %v537, %v537
        %v558 = vmul.f32 %v538, %v538
        %v559 = vmul.f32 %v539, %v539
        %v560 = vmul.f32 %v540, %v540
        %v561 = vadd.f32 %v489, %v553
        %v562 = vadd.f32 %v490, %v554
        %v563 = vadd.f32 %v491, %v555
        %v564 = vadd.f32 %v492, %v556
        %v565 = vadd.f32 %v493, %v557
        %v566 = vadd.f32 %v494, %v558
        %v567 = vadd.f32 %v495, %v559
        %v568 = vadd.f32 %v496, %v560
        %v569 = vmul.f32 %v545, %v545
        %v570 = vmul.f32 %v546, %v546
        %v571 = vmul.f32 %v547, %v547
        %v572 = vmul.f32 %v548, %v548
        %v573 = vmul.f32 %v549, %v549
        %v574 = vmul.f32 %v550, %v550
        %v575 = vmul.f32 %v551, %v551
        %v576 = vmul.f32 %v552, %v552
        %v577 = vadd.f32 %v505, %v569
        %v578 = vadd.f32 %v506, %v570
        %v579 = vadd.f32 %v507, %v571
        %v580 = vadd.f32 %v508, %v572
        %v581 = vadd.f32 %v509, %v573
        %v582 = vadd.f32 %v510, %v574
        %v583 = vadd.f32 %v511, %v575
        %v584 = vadd.f32 %v512, %v576
        %v585 = vmul.f32 %v533, %v545
        %v586 = vmul.f32 %v534, %v546
        %v587 = vmul.f32 %v535, %v547
        %v588 = vmul.f32 %v536, %v548
        %v589 = vmul.f32 %v537, %v549
        %v590 = vmul.f32 %v538, %v550
        %v591 = vmul.f32 %v539, %v551
        %v592 = vmul.f32 %v540, %v552
        %v593 = vadd.f32 %v521, %v585
        %v594 = vadd.f32 %v522, %v586
        %v595 = vadd.f32 %v523, %v587
        %v596 = vadd.f32 %v524, %v588
        %v597 = vadd.f32 %v525, %v589
        %v598 = vadd.f32 %v526, %v590
        %v599 = vadd.f32 %v527, %v591
        %v600 = vadd.f32 %v528, %v592
        %v601 = vld [vmem:[%s245 + $0x200] sm:$0xff]
        %v602 = vld [vmem:[%s245 + $0x208] sm:$0xff]
        %v603 = vld [vmem:[%s245 + $0x210] sm:$0xff]
        %v604 = vld [vmem:[%s245 + $0x218] sm:$0xff]
        %v605 = vunpack.c.l.bf16 %v601
        %v606 = vunpack.c.h.bf16 %v601
        %v607 = vunpack.c.l.bf16 %v602
        %v608 = vunpack.c.h.bf16 %v602
        %v609 = vunpack.c.l.bf16 %v603
        %v610 = vunpack.c.h.bf16 %v603
        %v611 = vunpack.c.l.bf16 %v604
        %v612 = vunpack.c.h.bf16 %v604
        %v613 = vld [vmem:[%s254 + $0x200] sm:$0xff]
        %v614 = vld [vmem:[%s254 + $0x208] sm:$0xff]
        %v615 = vld [vmem:[%s254 + $0x210] sm:$0xff]
        %v616 = vld [vmem:[%s254 + $0x218] sm:$0xff]
        %v617 = vunpack.c.l.bf16 %v613
        %v618 = vunpack.c.h.bf16 %v613
        %v619 = vunpack.c.l.bf16 %v614
        %v620 = vunpack.c.h.bf16 %v614
        %v621 = vunpack.c.l.bf16 %v615
        %v622 = vunpack.c.h.bf16 %v615
        %v623 = vunpack.c.l.bf16 %v616
        %v624 = vunpack.c.h.bf16 %v616
        %v625 = vmul.f32 %v605, %v605
        %v626 = vmul.f32 %v606, %v606
        %v627 = vmul.f32 %v607, %v607
        %v628 = vmul.f32 %v608, %v608
        %v629 = vmul.f32 %v609, %v609
        %v630 = vmul.f32 %v610, %v610
        %v631 = vmul.f32 %v611, %v611
        %v632 = vmul.f32 %v612, %v612
        %v633 = vadd.f32 %v561, %v625
        %v634 = vadd.f32 %v562, %v626
        %v635 = vadd.f32 %v563, %v627
        %v636 = vadd.f32 %v564, %v628
        %v637 = vadd.f32 %v565, %v629
        %v638 = vadd.f32 %v566, %v630
        %v639 = vadd.f32 %v567, %v631
        %v640 = vadd.f32 %v568, %v632
        %v641 = vmul.f32 %v617, %v617
        %v642 = vmul.f32 %v618, %v618
        %v643 = vmul.f32 %v619, %v619
        %v644 = vmul.f32 %v620, %v620
        %v645 = vmul.f32 %v621, %v621
        %v646 = vmul.f32 %v622, %v622
        %v647 = vmul.f32 %v623, %v623
        %v648 = vmul.f32 %v624, %v624
        %v649 = vadd.f32 %v577, %v641
        %v650 = vadd.f32 %v578, %v642
        %v651 = vadd.f32 %v579, %v643
        %v652 = vadd.f32 %v580, %v644
        %v653 = vadd.f32 %v581, %v645
        %v654 = vadd.f32 %v582, %v646
        %v655 = vadd.f32 %v583, %v647
        %v656 = vadd.f32 %v584, %v648
        %v657 = vmul.f32 %v605, %v617
        %v658 = vmul.f32 %v606, %v618
        %v659 = vmul.f32 %v607, %v619
        %v660 = vmul.f32 %v608, %v620
        %v661 = vmul.f32 %v609, %v621
        %v662 = vmul.f32 %v610, %v622
        %v663 = vmul.f32 %v611, %v623
        %v664 = vmul.f32 %v612, %v624
        %v665 = vadd.f32 %v593, %v657
        %v666 = vadd.f32 %v594, %v658
        %v667 = vadd.f32 %v595, %v659
        %v668 = vadd.f32 %v596, %v660
        %v669 = vadd.f32 %v597, %v661
        %v670 = vadd.f32 %v598, %v662
        %v671 = vadd.f32 %v599, %v663
        %v672 = vadd.f32 %v600, %v664
        %v673 = vld [vmem:[%s245 + $0x280] sm:$0xff]
        %v674 = vld [vmem:[%s245 + $0x288] sm:$0xff]
        %v675 = vld [vmem:[%s245 + $0x290] sm:$0xff]
        %v676 = vld [vmem:[%s245 + $0x298] sm:$0xff]
        %v677 = vunpack.c.l.bf16 %v673
        %v678 = vunpack.c.h.bf16 %v673
        %v679 = vunpack.c.l.bf16 %v674
        %v680 = vunpack.c.h.bf16 %v674
        %v681 = vunpack.c.l.bf16 %v675
        %v682 = vunpack.c.h.bf16 %v675
        %v683 = vunpack.c.l.bf16 %v676
        %v684 = vunpack.c.h.bf16 %v676
        %v685 = vld [vmem:[%s254 + $0x280] sm:$0xff]
        %v686 = vld [vmem:[%s254 + $0x288] sm:$0xff]
        %v687 = vld [vmem:[%s254 + $0x290] sm:$0xff]
        %v688 = vld [vmem:[%s254 + $0x298] sm:$0xff]
        %v689 = vunpack.c.l.bf16 %v685
        %v690 = vunpack.c.h.bf16 %v685
        %v691 = vunpack.c.l.bf16 %v686
        %v692 = vunpack.c.h.bf16 %v686
        %v693 = vunpack.c.l.bf16 %v687
        %v694 = vunpack.c.h.bf16 %v687
        %v695 = vunpack.c.l.bf16 %v688
        %v696 = vunpack.c.h.bf16 %v688
        %v697 = vmul.f32 %v677, %v677
        %v698 = vmul.f32 %v678, %v678
        %v699 = vmul.f32 %v679, %v679
        %v700 = vmul.f32 %v680, %v680
        %v701 = vmul.f32 %v681, %v681
        %v702 = vmul.f32 %v682, %v682
        %v703 = vmul.f32 %v683, %v683
        %v704 = vmul.f32 %v684, %v684
        %v705 = vadd.f32 %v633, %v697
        %v706 = vadd.f32 %v634, %v698
        %v707 = vadd.f32 %v635, %v699
        %v708 = vadd.f32 %v636, %v700
        %v709 = vadd.f32 %v637, %v701
        %v710 = vadd.f32 %v638, %v702
        %v711 = vadd.f32 %v639, %v703
        %v712 = vadd.f32 %v640, %v704
        %v713 = vmul.f32 %v689, %v689
        %v714 = vmul.f32 %v690, %v690
        %v715 = vmul.f32 %v691, %v691
        %v716 = vmul.f32 %v692, %v692
        %v717 = vmul.f32 %v693, %v693
        %v718 = vmul.f32 %v694, %v694
        %v719 = vmul.f32 %v695, %v695
        %v720 = vmul.f32 %v696, %v696
        %v721 = vadd.f32 %v649, %v713
        %v722 = vadd.f32 %v650, %v714
        %v723 = vadd.f32 %v651, %v715
        %v724 = vadd.f32 %v652, %v716
        %v725 = vadd.f32 %v653, %v717
        %v726 = vadd.f32 %v654, %v718
        %v727 = vadd.f32 %v655, %v719
        %v728 = vadd.f32 %v656, %v720
        %v729 = vmul.f32 %v677, %v689
        %v730 = vmul.f32 %v678, %v690
        %v731 = vmul.f32 %v679, %v691
        %v732 = vmul.f32 %v680, %v692
        %v733 = vmul.f32 %v681, %v693
        %v734 = vmul.f32 %v682, %v694
        %v735 = vmul.f32 %v683, %v695
        %v736 = vmul.f32 %v684, %v696
        %v737 = vadd.f32 %v665, %v729
        %v738 = vadd.f32 %v666, %v730
        %v739 = vadd.f32 %v667, %v731
        %v740 = vadd.f32 %v668, %v732
        %v741 = vadd.f32 %v669, %v733
        %v742 = vadd.f32 %v670, %v734
        %v743 = vadd.f32 %v671, %v735
        %v744 = vadd.f32 %v672, %v736
        %v745 = vld [vmem:[%s245 + $0x300] sm:$0xff]
        %v746 = vld [vmem:[%s245 + $0x308] sm:$0xff]
        %v747 = vld [vmem:[%s245 + $0x310] sm:$0xff]
        %v748 = vld [vmem:[%s245 + $0x318] sm:$0xff]
        %v749 = vunpack.c.l.bf16 %v745
        %v750 = vunpack.c.h.bf16 %v745
        %v751 = vunpack.c.l.bf16 %v746
        %v752 = vunpack.c.h.bf16 %v746
        %v753 = vunpack.c.l.bf16 %v747
        %v754 = vunpack.c.h.bf16 %v747
        %v755 = vunpack.c.l.bf16 %v748
        %v756 = vunpack.c.h.bf16 %v748
        %v757 = vld [vmem:[%s254 + $0x300] sm:$0xff]
        %v758 = vld [vmem:[%s254 + $0x308] sm:$0xff]
        %v759 = vld [vmem:[%s254 + $0x310] sm:$0xff]
        %v760 = vld [vmem:[%s254 + $0x318] sm:$0xff]
        %v761 = vunpack.c.l.bf16 %v757
        %v762 = vunpack.c.h.bf16 %v757
        %v763 = vunpack.c.l.bf16 %v758
        %v764 = vunpack.c.h.bf16 %v758
        %v765 = vunpack.c.l.bf16 %v759
        %v766 = vunpack.c.h.bf16 %v759
        %v767 = vunpack.c.l.bf16 %v760
        %v768 = vunpack.c.h.bf16 %v760
        %v769 = vmul.f32 %v749, %v749
        %v770 = vmul.f32 %v750, %v750
        %v771 = vmul.f32 %v751, %v751
        %v772 = vmul.f32 %v752, %v752
        %v773 = vmul.f32 %v753, %v753
        %v774 = vmul.f32 %v754, %v754
        %v775 = vmul.f32 %v755, %v755
        %v776 = vmul.f32 %v756, %v756
        %v777 = vadd.f32 %v705, %v769
        %v778 = vadd.f32 %v706, %v770
        %v779 = vadd.f32 %v707, %v771
        %v780 = vadd.f32 %v708, %v772
        %v781 = vadd.f32 %v709, %v773
        %v782 = vadd.f32 %v710, %v774
        %v783 = vadd.f32 %v711, %v775
        %v784 = vadd.f32 %v712, %v776
        %v785 = vmul.f32 %v761, %v761
        %v786 = vmul.f32 %v762, %v762
        %v787 = vmul.f32 %v763, %v763
        %v788 = vmul.f32 %v764, %v764
        %v789 = vmul.f32 %v765, %v765
        %v790 = vmul.f32 %v766, %v766
        %v791 = vmul.f32 %v767, %v767
        %v792 = vmul.f32 %v768, %v768
        %v793 = vadd.f32 %v721, %v785
        %v794 = vadd.f32 %v722, %v786
        %v795 = vadd.f32 %v723, %v787
        %v796 = vadd.f32 %v724, %v788
        %v797 = vadd.f32 %v725, %v789
        %v798 = vadd.f32 %v726, %v790
        %v799 = vadd.f32 %v727, %v791
        %v800 = vadd.f32 %v728, %v792
        %v801 = vmul.f32 %v749, %v761
        %v802 = vmul.f32 %v750, %v762
        %v803 = vmul.f32 %v751, %v763
        %v804 = vmul.f32 %v752, %v764
        %v805 = vmul.f32 %v753, %v765
        %v806 = vmul.f32 %v754, %v766
        %v807 = vmul.f32 %v755, %v767
        %v808 = vmul.f32 %v756, %v768
        %v809 = vadd.f32 %v737, %v801
        %v810 = vadd.f32 %v738, %v802
        %v811 = vadd.f32 %v739, %v803
        %v812 = vadd.f32 %v740, %v804
        %v813 = vadd.f32 %v741, %v805
        %v814 = vadd.f32 %v742, %v806
        %v815 = vadd.f32 %v743, %v807
        %v816 = vadd.f32 %v744, %v808
        %v817 = vld [vmem:[%s245 + $0x380] sm:$0xff]
        %v818 = vld [vmem:[%s245 + $0x388] sm:$0xff]
        %v819 = vld [vmem:[%s245 + $0x390] sm:$0xff]
        %v820 = vld [vmem:[%s245 + $0x398] sm:$0xff]
        %v821 = vunpack.c.l.bf16 %v817
        %v822 = vunpack.c.h.bf16 %v817
        %v823 = vunpack.c.l.bf16 %v818
        %v824 = vunpack.c.h.bf16 %v818
        %v825 = vunpack.c.l.bf16 %v819
        %v826 = vunpack.c.h.bf16 %v819
        %v827 = vunpack.c.l.bf16 %v820
        %v828 = vunpack.c.h.bf16 %v820
        %v829 = vld [vmem:[%s254 + $0x380] sm:$0xff]
        %v830 = vld [vmem:[%s254 + $0x388] sm:$0xff]
        %v831 = vld [vmem:[%s254 + $0x390] sm:$0xff]
        %v832 = vld [vmem:[%s254 + $0x398] sm:$0xff]
        %v833 = vunpack.c.l.bf16 %v829
        %v834 = vunpack.c.h.bf16 %v829
        %v835 = vunpack.c.l.bf16 %v830
        %v836 = vunpack.c.h.bf16 %v830
        %v837 = vunpack.c.l.bf16 %v831
        %v838 = vunpack.c.h.bf16 %v831
        %v839 = vunpack.c.l.bf16 %v832
        %v840 = vunpack.c.h.bf16 %v832
        %v841 = vmul.f32 %v821, %v821
        %v842 = vmul.f32 %v822, %v822
        %v843 = vmul.f32 %v823, %v823
        %v844 = vmul.f32 %v824, %v824
        %v845 = vmul.f32 %v825, %v825
        %v846 = vmul.f32 %v826, %v826
        %v847 = vmul.f32 %v827, %v827
        %v848 = vmul.f32 %v828, %v828
        %v849 = vadd.f32 %v777, %v841
        %v850 = vadd.f32 %v778, %v842
        %v851 = vadd.f32 %v779, %v843
        %v852 = vadd.f32 %v780, %v844
        %v853 = vadd.f32 %v781, %v845
        %v854 = vadd.f32 %v782, %v846
        %v855 = vadd.f32 %v783, %v847
        %v856 = vadd.f32 %v784, %v848
        %v857 = vmul.f32 %v833, %v833
        %v858 = vmul.f32 %v834, %v834
        %v859 = vmul.f32 %v835, %v835
        %v860 = vmul.f32 %v836, %v836
        %v861 = vmul.f32 %v837, %v837
        %v862 = vmul.f32 %v838, %v838
        %v863 = vmul.f32 %v839, %v839
        %v864 = vmul.f32 %v840, %v840
        %v865 = vadd.f32 %v793, %v857
        %v866 = vadd.f32 %v794, %v858
        %v867 = vadd.f32 %v795, %v859
        %v868 = vadd.f32 %v796, %v860
        %v869 = vadd.f32 %v797, %v861
        %v870 = vadd.f32 %v798, %v862
        %v871 = vadd.f32 %v799, %v863
        %v872 = vadd.f32 %v800, %v864
        %v873 = vmul.f32 %v821, %v833
        %v874 = vmul.f32 %v822, %v834
        %v875 = vmul.f32 %v823, %v835
        %v876 = vmul.f32 %v824, %v836
        %v877 = vmul.f32 %v825, %v837
        %v878 = vmul.f32 %v826, %v838
        %v879 = vmul.f32 %v827, %v839
        %v880 = vmul.f32 %v828, %v840
        %v881 = vadd.f32 %v809, %v873
        %v882 = vadd.f32 %v810, %v874
        %v883 = vadd.f32 %v811, %v875
        %v884 = vadd.f32 %v812, %v876
        %v885 = vadd.f32 %v813, %v877
        %v886 = vadd.f32 %v814, %v878
        %v887 = vadd.f32 %v815, %v879
        %v888 = vadd.f32 %v816, %v880
        %v889 = vld [vmem:[%s245 + $0x400] sm:$0xff]
        %v890 = vld [vmem:[%s245 + $0x408] sm:$0xff]
        %v891 = vld [vmem:[%s245 + $0x410] sm:$0xff]
        %v892 = vld [vmem:[%s245 + $0x418] sm:$0xff]
        %v893 = vunpack.c.l.bf16 %v889
        %v894 = vunpack.c.h.bf16 %v889
        %v895 = vunpack.c.l.bf16 %v890
        %v896 = vunpack.c.h.bf16 %v890
        %v897 = vunpack.c.l.bf16 %v891
        %v898 = vunpack.c.h.bf16 %v891
        %v899 = vunpack.c.l.bf16 %v892
        %v900 = vunpack.c.h.bf16 %v892
        %v901 = vld [vmem:[%s254 + $0x400] sm:$0xff]
        %v902 = vld [vmem:[%s254 + $0x408] sm:$0xff]
        %v903 = vld [vmem:[%s254 + $0x410] sm:$0xff]
        %v904 = vld [vmem:[%s254 + $0x418] sm:$0xff]
        %v905 = vunpack.c.l.bf16 %v901
        %v906 = vunpack.c.h.bf16 %v901
        %v907 = vunpack.c.l.bf16 %v902
        %v908 = vunpack.c.h.bf16 %v902
        %v909 = vunpack.c.l.bf16 %v903
        %v910 = vunpack.c.h.bf16 %v903
        %v911 = vunpack.c.l.bf16 %v904
        %v912 = vunpack.c.h.bf16 %v904
        %v913 = vmul.f32 %v893, %v893
        %v914 = vmul.f32 %v894, %v894
        %v915 = vmul.f32 %v895, %v895
        %v916 = vmul.f32 %v896, %v896
        %v917 = vmul.f32 %v897, %v897
        %v918 = vmul.f32 %v898, %v898
        %v919 = vmul.f32 %v899, %v899
        %v920 = vmul.f32 %v900, %v900
        %v921 = vadd.f32 %v849, %v913
        %v922 = vadd.f32 %v850, %v914
        %v923 = vadd.f32 %v851, %v915
        %v924 = vadd.f32 %v852, %v916
        %v925 = vadd.f32 %v853, %v917
        %v926 = vadd.f32 %v854, %v918
        %v927 = vadd.f32 %v855, %v919
        %v928 = vadd.f32 %v856, %v920
        %v929 = vmul.f32 %v905, %v905
        %v930 = vmul.f32 %v906, %v906
        %v931 = vmul.f32 %v907, %v907
        %v932 = vmul.f32 %v908, %v908
        %v933 = vmul.f32 %v909, %v909
        %v934 = vmul.f32 %v910, %v910
        %v935 = vmul.f32 %v911, %v911
        %v936 = vmul.f32 %v912, %v912
        %v937 = vadd.f32 %v865, %v929
        %v938 = vadd.f32 %v866, %v930
        %v939 = vadd.f32 %v867, %v931
        %v940 = vadd.f32 %v868, %v932
        %v941 = vadd.f32 %v869, %v933
        %v942 = vadd.f32 %v870, %v934
        %v943 = vadd.f32 %v871, %v935
        %v944 = vadd.f32 %v872, %v936
        %v945 = vmul.f32 %v893, %v905
        %v946 = vmul.f32 %v894, %v906
        %v947 = vmul.f32 %v895, %v907
        %v948 = vmul.f32 %v896, %v908
        %v949 = vmul.f32 %v897, %v909
        %v950 = vmul.f32 %v898, %v910
        %v951 = vmul.f32 %v899, %v911
        %v952 = vmul.f32 %v900, %v912
        %v953 = vadd.f32 %v881, %v945
        %v954 = vadd.f32 %v882, %v946
        %v955 = vadd.f32 %v883, %v947
        %v956 = vadd.f32 %v884, %v948
        %v957 = vadd.f32 %v885, %v949
        %v958 = vadd.f32 %v886, %v950
        %v959 = vadd.f32 %v887, %v951
        %v960 = vadd.f32 %v888, %v952
        %v961 = vld [vmem:[%s245 + $0x480] sm:$0xff]
        %v962 = vld [vmem:[%s245 + $0x488] sm:$0xff]
        %v963 = vld [vmem:[%s245 + $0x490] sm:$0xff]
        %v964 = vld [vmem:[%s245 + $0x498] sm:$0xff]
        %v965 = vunpack.c.l.bf16 %v961
        %v966 = vunpack.c.h.bf16 %v961
        %v967 = vunpack.c.l.bf16 %v962
        %v968 = vunpack.c.h.bf16 %v962
        %v969 = vunpack.c.l.bf16 %v963
        %v970 = vunpack.c.h.bf16 %v963
        %v971 = vunpack.c.l.bf16 %v964
        %v972 = vunpack.c.h.bf16 %v964
        %v973 = vld [vmem:[%s254 + $0x480] sm:$0xff]
        %v974 = vld [vmem:[%s254 + $0x488] sm:$0xff]
        %v975 = vld [vmem:[%s254 + $0x490] sm:$0xff]
        %v976 = vld [vmem:[%s254 + $0x498] sm:$0xff]
        %v977 = vunpack.c.l.bf16 %v973
        %v978 = vunpack.c.h.bf16 %v973
        %v979 = vunpack.c.l.bf16 %v974
        %v980 = vunpack.c.h.bf16 %v974
        %v981 = vunpack.c.l.bf16 %v975
        %v982 = vunpack.c.h.bf16 %v975
        %v983 = vunpack.c.l.bf16 %v976
        %v984 = vunpack.c.h.bf16 %v976
        %v985 = vmul.f32 %v965, %v965
        %v986 = vmul.f32 %v966, %v966
        %v987 = vmul.f32 %v967, %v967
        %v988 = vmul.f32 %v968, %v968
        %v989 = vmul.f32 %v969, %v969
        %v990 = vmul.f32 %v970, %v970
        %v991 = vmul.f32 %v971, %v971
        %v992 = vmul.f32 %v972, %v972
        %v993 = vadd.f32 %v921, %v985
        %v994 = vadd.f32 %v922, %v986
        %v995 = vadd.f32 %v923, %v987
        %v996 = vadd.f32 %v924, %v988
        %v997 = vadd.f32 %v925, %v989
        %v998 = vadd.f32 %v926, %v990
        %v999 = vadd.f32 %v927, %v991
        %v1000 = vadd.f32 %v928, %v992
        %v1001 = vmul.f32 %v977, %v977
        %v1002 = vmul.f32 %v978, %v978
        %v1003 = vmul.f32 %v979, %v979
        %v1004 = vmul.f32 %v980, %v980
        %v1005 = vmul.f32 %v981, %v981
        %v1006 = vmul.f32 %v982, %v982
        %v1007 = vmul.f32 %v983, %v983
        %v1008 = vmul.f32 %v984, %v984
        %v1009 = vadd.f32 %v937, %v1001
        %v1010 = vadd.f32 %v938, %v1002
        %v1011 = vadd.f32 %v939, %v1003
        %v1012 = vadd.f32 %v940, %v1004
        %v1013 = vadd.f32 %v941, %v1005
        %v1014 = vadd.f32 %v942, %v1006
        %v1015 = vadd.f32 %v943, %v1007
        %v1016 = vadd.f32 %v944, %v1008
        %v1017 = vmul.f32 %v965, %v977
        %v1018 = vmul.f32 %v966, %v978
        %v1019 = vmul.f32 %v967, %v979
        %v1020 = vmul.f32 %v968, %v980
        %v1021 = vmul.f32 %v969, %v981
        %v1022 = vmul.f32 %v970, %v982
        %v1023 = vmul.f32 %v971, %v983
        %v1024 = vmul.f32 %v972, %v984
        %v1025 = vadd.f32 %v953, %v1017
        %v1026 = vadd.f32 %v954, %v1018
        %v1027 = vadd.f32 %v955, %v1019
        %v1028 = vadd.f32 %v956, %v1020
        %v1029 = vadd.f32 %v957, %v1021
        %v1030 = vadd.f32 %v958, %v1022
        %v1031 = vadd.f32 %v959, %v1023
        %v1032 = vadd.f32 %v960, %v1024
        %v1033 = vld [vmem:[%s245 + $0x500] sm:$0xff]
        %v1034 = vld [vmem:[%s245 + $0x508] sm:$0xff]
        %v1035 = vld [vmem:[%s245 + $0x510] sm:$0xff]
        %v1036 = vld [vmem:[%s245 + $0x518] sm:$0xff]
        %v1037 = vunpack.c.l.bf16 %v1033
        %v1038 = vunpack.c.h.bf16 %v1033
        %v1039 = vunpack.c.l.bf16 %v1034
        %v1040 = vunpack.c.h.bf16 %v1034
        %v1041 = vunpack.c.l.bf16 %v1035
        %v1042 = vunpack.c.h.bf16 %v1035
        %v1043 = vunpack.c.l.bf16 %v1036
        %v1044 = vunpack.c.h.bf16 %v1036
        %v1045 = vld [vmem:[%s254 + $0x500] sm:$0xff]
        %v1046 = vld [vmem:[%s254 + $0x508] sm:$0xff]
        %v1047 = vld [vmem:[%s254 + $0x510] sm:$0xff]
        %v1048 = vld [vmem:[%s254 + $0x518] sm:$0xff]
        %v1049 = vunpack.c.l.bf16 %v1045
        %v1050 = vunpack.c.h.bf16 %v1045
        %v1051 = vunpack.c.l.bf16 %v1046
        %v1052 = vunpack.c.h.bf16 %v1046
        %v1053 = vunpack.c.l.bf16 %v1047
        %v1054 = vunpack.c.h.bf16 %v1047
        %v1055 = vunpack.c.l.bf16 %v1048
        %v1056 = vunpack.c.h.bf16 %v1048
        %v1057 = vmul.f32 %v1037, %v1037
        %v1058 = vmul.f32 %v1038, %v1038
        %v1059 = vmul.f32 %v1039, %v1039
        %v1060 = vmul.f32 %v1040, %v1040
        %v1061 = vmul.f32 %v1041, %v1041
        %v1062 = vmul.f32 %v1042, %v1042
        %v1063 = vmul.f32 %v1043, %v1043
        %v1064 = vmul.f32 %v1044, %v1044
        %v1065 = vadd.f32 %v993, %v1057
        %v1066 = vadd.f32 %v994, %v1058
        %v1067 = vadd.f32 %v995, %v1059
        %v1068 = vadd.f32 %v996, %v1060
        %v1069 = vadd.f32 %v997, %v1061
        %v1070 = vadd.f32 %v998, %v1062
        %v1071 = vadd.f32 %v999, %v1063
        %v1072 = vadd.f32 %v1000, %v1064
        %v1073 = vmul.f32 %v1049, %v1049
        %v1074 = vmul.f32 %v1050, %v1050
        %v1075 = vmul.f32 %v1051, %v1051
        %v1076 = vmul.f32 %v1052, %v1052
        %v1077 = vmul.f32 %v1053, %v1053
        %v1078 = vmul.f32 %v1054, %v1054
        %v1079 = vmul.f32 %v1055, %v1055
        %v1080 = vmul.f32 %v1056, %v1056
        %v1081 = vadd.f32 %v1009, %v1073
        %v1082 = vadd.f32 %v1010, %v1074
        %v1083 = vadd.f32 %v1011, %v1075
        %v1084 = vadd.f32 %v1012, %v1076
        %v1085 = vadd.f32 %v1013, %v1077
        %v1086 = vadd.f32 %v1014, %v1078
        %v1087 = vadd.f32 %v1015, %v1079
        %v1088 = vadd.f32 %v1016, %v1080
        %v1089 = vmul.f32 %v1037, %v1049
        %v1090 = vmul.f32 %v1038, %v1050
        %v1091 = vmul.f32 %v1039, %v1051
        %v1092 = vmul.f32 %v1040, %v1052
        %v1093 = vmul.f32 %v1041, %v1053
        %v1094 = vmul.f32 %v1042, %v1054
        %v1095 = vmul.f32 %v1043, %v1055
        %v1096 = vmul.f32 %v1044, %v1056
        %v1097 = vadd.f32 %v1025, %v1089
        %v1098 = vadd.f32 %v1026, %v1090
        %v1099 = vadd.f32 %v1027, %v1091
        %v1100 = vadd.f32 %v1028, %v1092
        %v1101 = vadd.f32 %v1029, %v1093
        %v1102 = vadd.f32 %v1030, %v1094
        %v1103 = vadd.f32 %v1031, %v1095
        %v1104 = vadd.f32 %v1032, %v1096
        %v1105 = vld [vmem:[%s245 + $0x580] sm:$0xff]
        %v1106 = vld [vmem:[%s245 + $0x588] sm:$0xff]
        %v1107 = vld [vmem:[%s245 + $0x590] sm:$0xff]
        %v1108 = vld [vmem:[%s245 + $0x598] sm:$0xff]
        %v1109 = vunpack.c.l.bf16 %v1105
        %v1110 = vunpack.c.h.bf16 %v1105
        %v1111 = vunpack.c.l.bf16 %v1106
        %v1112 = vunpack.c.h.bf16 %v1106
        %v1113 = vunpack.c.l.bf16 %v1107
        %v1114 = vunpack.c.h.bf16 %v1107
        %v1115 = vunpack.c.l.bf16 %v1108
        %v1116 = vunpack.c.h.bf16 %v1108
        %v1117 = vld [vmem:[%s254 + $0x580] sm:$0xff]
        %v1118 = vld [vmem:[%s254 + $0x588] sm:$0xff]
        %v1119 = vld [vmem:[%s254 + $0x590] sm:$0xff]
        %v1120 = vld [vmem:[%s254 + $0x598] sm:$0xff]
        %v1121 = vunpack.c.l.bf16 %v1117
        %v1122 = vunpack.c.h.bf16 %v1117
        %v1123 = vunpack.c.l.bf16 %v1118
        %v1124 = vunpack.c.h.bf16 %v1118
        %v1125 = vunpack.c.l.bf16 %v1119
        %v1126 = vunpack.c.h.bf16 %v1119
        %v1127 = vunpack.c.l.bf16 %v1120
        %v1128 = vunpack.c.h.bf16 %v1120
        %v1129 = vmul.f32 %v1109, %v1109
        %v1130 = vmul.f32 %v1110, %v1110
        %v1131 = vmul.f32 %v1111, %v1111
        %v1132 = vmul.f32 %v1112, %v1112
        %v1133 = vmul.f32 %v1113, %v1113
        %v1134 = vmul.f32 %v1114, %v1114
        %v1135 = vmul.f32 %v1115, %v1115
        %v1136 = vmul.f32 %v1116, %v1116
        %v1137 = vadd.f32 %v1065, %v1129
        %v1138 = vadd.f32 %v1066, %v1130
        %v1139 = vadd.f32 %v1067, %v1131
        %v1140 = vadd.f32 %v1068, %v1132
        %v1141 = vadd.f32 %v1069, %v1133
        %v1142 = vadd.f32 %v1070, %v1134
        %v1143 = vadd.f32 %v1071, %v1135
        %v1144 = vadd.f32 %v1072, %v1136
        %v1145 = vmul.f32 %v1121, %v1121
        %v1146 = vmul.f32 %v1122, %v1122
        %v1147 = vmul.f32 %v1123, %v1123
        %v1148 = vmul.f32 %v1124, %v1124
        %v1149 = vmul.f32 %v1125, %v1125
        %v1150 = vmul.f32 %v1126, %v1126
        %v1151 = vmul.f32 %v1127, %v1127
        %v1152 = vmul.f32 %v1128, %v1128
        %v1153 = vadd.f32 %v1081, %v1145
        %v1154 = vadd.f32 %v1082, %v1146
        %v1155 = vadd.f32 %v1083, %v1147
        %v1156 = vadd.f32 %v1084, %v1148
        %v1157 = vadd.f32 %v1085, %v1149
        %v1158 = vadd.f32 %v1086, %v1150
        %v1159 = vadd.f32 %v1087, %v1151
        %v1160 = vadd.f32 %v1088, %v1152
        %v1161 = vmul.f32 %v1109, %v1121
        %v1162 = vmul.f32 %v1110, %v1122
        %v1163 = vmul.f32 %v1111, %v1123
        %v1164 = vmul.f32 %v1112, %v1124
        %v1165 = vmul.f32 %v1113, %v1125
        %v1166 = vmul.f32 %v1114, %v1126
        %v1167 = vmul.f32 %v1115, %v1127
        %v1168 = vmul.f32 %v1116, %v1128
        %v1169 = vadd.f32 %v1097, %v1161
        %v1170 = vadd.f32 %v1098, %v1162
        %v1171 = vadd.f32 %v1099, %v1163
        %v1172 = vadd.f32 %v1100, %v1164
        %v1173 = vadd.f32 %v1101, %v1165
        %v1174 = vadd.f32 %v1102, %v1166
        %v1175 = vadd.f32 %v1103, %v1167
        %v1176 = vadd.f32 %v1104, %v1168
        %v1177 = vld [vmem:[%s245 + $0x600] sm:$0xff]
        %v1178 = vld [vmem:[%s245 + $0x608] sm:$0xff]
        %v1179 = vld [vmem:[%s245 + $0x610] sm:$0xff]
        %v1180 = vld [vmem:[%s245 + $0x618] sm:$0xff]
        %v1181 = vunpack.c.l.bf16 %v1177
        %v1182 = vunpack.c.h.bf16 %v1177
        %v1183 = vunpack.c.l.bf16 %v1178
        %v1184 = vunpack.c.h.bf16 %v1178
        %v1185 = vunpack.c.l.bf16 %v1179
        %v1186 = vunpack.c.h.bf16 %v1179
        %v1187 = vunpack.c.l.bf16 %v1180
        %v1188 = vunpack.c.h.bf16 %v1180
        %v1189 = vld [vmem:[%s254 + $0x600] sm:$0xff]
        %v1190 = vld [vmem:[%s254 + $0x608] sm:$0xff]
        %v1191 = vld [vmem:[%s254 + $0x610] sm:$0xff]
        %v1192 = vld [vmem:[%s254 + $0x618] sm:$0xff]
        %v1193 = vunpack.c.l.bf16 %v1189
        %v1194 = vunpack.c.h.bf16 %v1189
        %v1195 = vunpack.c.l.bf16 %v1190
        %v1196 = vunpack.c.h.bf16 %v1190
        %v1197 = vunpack.c.l.bf16 %v1191
        %v1198 = vunpack.c.h.bf16 %v1191
        %v1199 = vunpack.c.l.bf16 %v1192
        %v1200 = vunpack.c.h.bf16 %v1192
        %v1201 = vmul.f32 %v1181, %v1181
        %v1202 = vmul.f32 %v1182, %v1182
        %v1203 = vmul.f32 %v1183, %v1183
        %v1204 = vmul.f32 %v1184, %v1184
        %v1205 = vmul.f32 %v1185, %v1185
        %v1206 = vmul.f32 %v1186, %v1186
        %v1207 = vmul.f32 %v1187, %v1187
        %v1208 = vmul.f32 %v1188, %v1188
        %v1209 = vadd.f32 %v1137, %v1201
        %v1210 = vadd.f32 %v1138, %v1202
        %v1211 = vadd.f32 %v1139, %v1203
        %v1212 = vadd.f32 %v1140, %v1204
        %v1213 = vadd.f32 %v1141, %v1205
        %v1214 = vadd.f32 %v1142, %v1206
        %v1215 = vadd.f32 %v1143, %v1207
        %v1216 = vadd.f32 %v1144, %v1208
        %v1217 = vmul.f32 %v1193, %v1193
        %v1218 = vmul.f32 %v1194, %v1194
        %v1219 = vmul.f32 %v1195, %v1195
        %v1220 = vmul.f32 %v1196, %v1196
        %v1221 = vmul.f32 %v1197, %v1197
        %v1222 = vmul.f32 %v1198, %v1198
        %v1223 = vmul.f32 %v1199, %v1199
        %v1224 = vmul.f32 %v1200, %v1200
        %v1225 = vadd.f32 %v1153, %v1217
        %v1226 = vadd.f32 %v1154, %v1218
        %v1227 = vadd.f32 %v1155, %v1219
        %v1228 = vadd.f32 %v1156, %v1220
        %v1229 = vadd.f32 %v1157, %v1221
        %v1230 = vadd.f32 %v1158, %v1222
        %v1231 = vadd.f32 %v1159, %v1223
        %v1232 = vadd.f32 %v1160, %v1224
        %v1233 = vmul.f32 %v1181, %v1193
        %v1234 = vmul.f32 %v1182, %v1194
        %v1235 = vmul.f32 %v1183, %v1195
        %v1236 = vmul.f32 %v1184, %v1196
        %v1237 = vmul.f32 %v1185, %v1197
        %v1238 = vmul.f32 %v1186, %v1198
        %v1239 = vmul.f32 %v1187, %v1199
        %v1240 = vmul.f32 %v1188, %v1200
        %v1241 = vadd.f32 %v1169, %v1233
        %v1242 = vadd.f32 %v1170, %v1234
        %v1243 = vadd.f32 %v1171, %v1235
        %v1244 = vadd.f32 %v1172, %v1236
        %v1245 = vadd.f32 %v1173, %v1237
        %v1246 = vadd.f32 %v1174, %v1238
        %v1247 = vadd.f32 %v1175, %v1239
        %v1248 = vadd.f32 %v1176, %v1240
        %v1249 = vld [vmem:[%s245 + $0x680] sm:$0xff]
        %v1250 = vld [vmem:[%s245 + $0x688] sm:$0xff]
        %v1251 = vld [vmem:[%s245 + $0x690] sm:$0xff]
        %v1252 = vld [vmem:[%s245 + $0x698] sm:$0xff]
        %v1253 = vunpack.c.l.bf16 %v1249
        %v1254 = vunpack.c.h.bf16 %v1249
        %v1255 = vunpack.c.l.bf16 %v1250
        %v1256 = vunpack.c.h.bf16 %v1250
        %v1257 = vunpack.c.l.bf16 %v1251
        %v1258 = vunpack.c.h.bf16 %v1251
        %v1259 = vunpack.c.l.bf16 %v1252
        %v1260 = vunpack.c.h.bf16 %v1252
        %v1261 = vld [vmem:[%s254 + $0x680] sm:$0xff]
        %v1262 = vld [vmem:[%s254 + $0x688] sm:$0xff]
        %v1263 = vld [vmem:[%s254 + $0x690] sm:$0xff]
        %v1264 = vld [vmem:[%s254 + $0x698] sm:$0xff]
        %v1265 = vunpack.c.l.bf16 %v1261
        %v1266 = vunpack.c.h.bf16 %v1261
        %v1267 = vunpack.c.l.bf16 %v1262
        %v1268 = vunpack.c.h.bf16 %v1262
        %v1269 = vunpack.c.l.bf16 %v1263
        %v1270 = vunpack.c.h.bf16 %v1263
        %v1271 = vunpack.c.l.bf16 %v1264
        %v1272 = vunpack.c.h.bf16 %v1264
        %v1273 = vmul.f32 %v1253, %v1253
        %v1274 = vmul.f32 %v1254, %v1254
        %v1275 = vmul.f32 %v1255, %v1255
        %v1276 = vmul.f32 %v1256, %v1256
        %v1277 = vmul.f32 %v1257, %v1257
        %v1278 = vmul.f32 %v1258, %v1258
        %v1279 = vmul.f32 %v1259, %v1259
        %v1280 = vmul.f32 %v1260, %v1260
        %v1281 = vadd.f32 %v1209, %v1273
        %v1282 = vadd.f32 %v1210, %v1274
        %v1283 = vadd.f32 %v1211, %v1275
        %v1284 = vadd.f32 %v1212, %v1276
        %v1285 = vadd.f32 %v1213, %v1277
        %v1286 = vadd.f32 %v1214, %v1278
        %v1287 = vadd.f32 %v1215, %v1279
        %v1288 = vadd.f32 %v1216, %v1280
        %v1289 = vmul.f32 %v1265, %v1265
        %v1290 = vmul.f32 %v1266, %v1266
        %v1291 = vmul.f32 %v1267, %v1267
        %v1292 = vmul.f32 %v1268, %v1268
        %v1293 = vmul.f32 %v1269, %v1269
        %v1294 = vmul.f32 %v1270, %v1270
        %v1295 = vmul.f32 %v1271, %v1271
        %v1296 = vmul.f32 %v1272, %v1272
        %v1297 = vadd.f32 %v1225, %v1289
        %v1298 = vadd.f32 %v1226, %v1290
        %v1299 = vadd.f32 %v1227, %v1291
        %v1300 = vadd.f32 %v1228, %v1292
        %v1301 = vadd.f32 %v1229, %v1293
        %v1302 = vadd.f32 %v1230, %v1294
        %v1303 = vadd.f32 %v1231, %v1295
        %v1304 = vadd.f32 %v1232, %v1296
        %v1305 = vmul.f32 %v1253, %v1265
        %v1306 = vmul.f32 %v1254, %v1266
        %v1307 = vmul.f32 %v1255, %v1267
        %v1308 = vmul.f32 %v1256, %v1268
        %v1309 = vmul.f32 %v1257, %v1269
        %v1310 = vmul.f32 %v1258, %v1270
        %v1311 = vmul.f32 %v1259, %v1271
        %v1312 = vmul.f32 %v1260, %v1272
        %v1313 = vadd.f32 %v1241, %v1305
        %v1314 = vadd.f32 %v1242, %v1306
        %v1315 = vadd.f32 %v1243, %v1307
        %v1316 = vadd.f32 %v1244, %v1308
        %v1317 = vadd.f32 %v1245, %v1309
        %v1318 = vadd.f32 %v1246, %v1310
        %v1319 = vadd.f32 %v1247, %v1311
        %v1320 = vadd.f32 %v1248, %v1312
        %v1321 = vld [vmem:[%s245 + $0x700] sm:$0xff]
        %v1322 = vld [vmem:[%s245 + $0x708] sm:$0xff]
        %v1323 = vld [vmem:[%s245 + $0x710] sm:$0xff]
        %v1324 = vld [vmem:[%s245 + $0x718] sm:$0xff]
        %v1325 = vunpack.c.l.bf16 %v1321
        %v1326 = vunpack.c.h.bf16 %v1321
        %v1327 = vunpack.c.l.bf16 %v1322
        %v1328 = vunpack.c.h.bf16 %v1322
        %v1329 = vunpack.c.l.bf16 %v1323
        %v1330 = vunpack.c.h.bf16 %v1323
        %v1331 = vunpack.c.l.bf16 %v1324
        %v1332 = vunpack.c.h.bf16 %v1324
        %v1333 = vld [vmem:[%s254 + $0x700] sm:$0xff]
        %v1334 = vld [vmem:[%s254 + $0x708] sm:$0xff]
        %v1335 = vld [vmem:[%s254 + $0x710] sm:$0xff]
        %v1336 = vld [vmem:[%s254 + $0x718] sm:$0xff]
        %v1337 = vunpack.c.l.bf16 %v1333
        %v1338 = vunpack.c.h.bf16 %v1333
        %v1339 = vunpack.c.l.bf16 %v1334
        %v1340 = vunpack.c.h.bf16 %v1334
        %v1341 = vunpack.c.l.bf16 %v1335
        %v1342 = vunpack.c.h.bf16 %v1335
        %v1343 = vunpack.c.l.bf16 %v1336
        %v1344 = vunpack.c.h.bf16 %v1336
        %v1345 = vmul.f32 %v1325, %v1325
        %v1346 = vmul.f32 %v1326, %v1326
        %v1347 = vmul.f32 %v1327, %v1327
        %v1348 = vmul.f32 %v1328, %v1328
        %v1349 = vmul.f32 %v1329, %v1329
        %v1350 = vmul.f32 %v1330, %v1330
        %v1351 = vmul.f32 %v1331, %v1331
        %v1352 = vmul.f32 %v1332, %v1332
        %v1353 = vadd.f32 %v1281, %v1345
        %v1354 = vadd.f32 %v1282, %v1346
        %v1355 = vadd.f32 %v1283, %v1347
        %v1356 = vadd.f32 %v1284, %v1348
        %v1357 = vadd.f32 %v1285, %v1349
        %v1358 = vadd.f32 %v1286, %v1350
        %v1359 = vadd.f32 %v1287, %v1351
        %v1360 = vadd.f32 %v1288, %v1352
        %v1361 = vmul.f32 %v1337, %v1337
        %v1362 = vmul.f32 %v1338, %v1338
        %v1363 = vmul.f32 %v1339, %v1339
        %v1364 = vmul.f32 %v1340, %v1340
        %v1365 = vmul.f32 %v1341, %v1341
        %v1366 = vmul.f32 %v1342, %v1342
        %v1367 = vmul.f32 %v1343, %v1343
        %v1368 = vmul.f32 %v1344, %v1344
        %v1369 = vadd.f32 %v1297, %v1361
        %v1370 = vadd.f32 %v1298, %v1362
        %v1371 = vadd.f32 %v1299, %v1363
        %v1372 = vadd.f32 %v1300, %v1364
        %v1373 = vadd.f32 %v1301, %v1365
        %v1374 = vadd.f32 %v1302, %v1366
        %v1375 = vadd.f32 %v1303, %v1367
        %v1376 = vadd.f32 %v1304, %v1368
        %v1377 = vmul.f32 %v1325, %v1337
        %v1378 = vmul.f32 %v1326, %v1338
        %v1379 = vmul.f32 %v1327, %v1339
        %v1380 = vmul.f32 %v1328, %v1340
        %v1381 = vmul.f32 %v1329, %v1341
        %v1382 = vmul.f32 %v1330, %v1342
        %v1383 = vmul.f32 %v1331, %v1343
        %v1384 = vmul.f32 %v1332, %v1344
        %v1385 = vadd.f32 %v1313, %v1377
        %v1386 = vadd.f32 %v1314, %v1378
        %v1387 = vadd.f32 %v1315, %v1379
        %v1388 = vadd.f32 %v1316, %v1380
        %v1389 = vadd.f32 %v1317, %v1381
        %v1390 = vadd.f32 %v1318, %v1382
        %v1391 = vadd.f32 %v1319, %v1383
        %v1392 = vadd.f32 %v1320, %v1384
        %v1393 = vld [vmem:[%s245 + $0x780] sm:$0xff]
        %v1394 = vld [vmem:[%s245 + $0x788] sm:$0xff]
        %v1395 = vld [vmem:[%s245 + $0x790] sm:$0xff]
        %v1396 = vld [vmem:[%s245 + $0x798] sm:$0xff]
        %v1397 = vunpack.c.l.bf16 %v1393
        %v1398 = vunpack.c.h.bf16 %v1393
        %v1399 = vunpack.c.l.bf16 %v1394
        %v1400 = vunpack.c.h.bf16 %v1394
        %v1401 = vunpack.c.l.bf16 %v1395
        %v1402 = vunpack.c.h.bf16 %v1395
        %v1403 = vunpack.c.l.bf16 %v1396
        %v1404 = vunpack.c.h.bf16 %v1396
        %v1405 = vld [vmem:[%s254 + $0x780] sm:$0xff]
        %v1406 = vld [vmem:[%s254 + $0x788] sm:$0xff]
        %v1407 = vld [vmem:[%s254 + $0x790] sm:$0xff]
        %v1408 = vld [vmem:[%s254 + $0x798] sm:$0xff]
        %v1409 = vunpack.c.l.bf16 %v1405
        %v1410 = vunpack.c.h.bf16 %v1405
        %v1411 = vunpack.c.l.bf16 %v1406
        %v1412 = vunpack.c.h.bf16 %v1406
        %v1413 = vunpack.c.l.bf16 %v1407
        %v1414 = vunpack.c.h.bf16 %v1407
        %v1415 = vunpack.c.l.bf16 %v1408
        %v1416 = vunpack.c.h.bf16 %v1408
        %v1417 = vmul.f32 %v1397, %v1397
        %v1418 = vmul.f32 %v1398, %v1398
        %v1419 = vmul.f32 %v1399, %v1399
        %v1420 = vmul.f32 %v1400, %v1400
        %v1421 = vmul.f32 %v1401, %v1401
        %v1422 = vmul.f32 %v1402, %v1402
        %v1423 = vmul.f32 %v1403, %v1403
        %v1424 = vmul.f32 %v1404, %v1404
        %v1425 = vadd.f32 %v1353, %v1417
        %v1426 = vadd.f32 %v1354, %v1418
        %v1427 = vadd.f32 %v1355, %v1419
        %v1428 = vadd.f32 %v1356, %v1420
        %v1429 = vadd.f32 %v1357, %v1421
        %v1430 = vadd.f32 %v1358, %v1422
        %v1431 = vadd.f32 %v1359, %v1423
        %v1432 = vadd.f32 %v1360, %v1424
        %v1433 = vmul.f32 %v1409, %v1409
        %v1434 = vmul.f32 %v1410, %v1410
        %v1435 = vmul.f32 %v1411, %v1411
        %v1436 = vmul.f32 %v1412, %v1412
        %v1437 = vmul.f32 %v1413, %v1413
        %v1438 = vmul.f32 %v1414, %v1414
        %v1439 = vmul.f32 %v1415, %v1415
        %v1440 = vmul.f32 %v1416, %v1416
        %v1441 = vadd.f32 %v1369, %v1433
        %v1442 = vadd.f32 %v1370, %v1434
        %v1443 = vadd.f32 %v1371, %v1435
        %v1444 = vadd.f32 %v1372, %v1436
        %v1445 = vadd.f32 %v1373, %v1437
        %v1446 = vadd.f32 %v1374, %v1438
        %v1447 = vadd.f32 %v1375, %v1439
        %v1448 = vadd.f32 %v1376, %v1440
        %v1449 = vmul.f32 %v1397, %v1409
        %v1450 = vmul.f32 %v1398, %v1410
        %v1451 = vmul.f32 %v1399, %v1411
        %v1452 = vmul.f32 %v1400, %v1412
        %v1453 = vmul.f32 %v1401, %v1413
        %v1454 = vmul.f32 %v1402, %v1414
        %v1455 = vmul.f32 %v1403, %v1415
        %v1456 = vmul.f32 %v1404, %v1416
        %v1457 = vadd.f32 %v1385, %v1449
        %v1458 = vadd.f32 %v1386, %v1450
        %v1459 = vadd.f32 %v1387, %v1451
        %v1460 = vadd.f32 %v1388, %v1452
        %v1461 = vadd.f32 %v1389, %v1453
        %v1462 = vadd.f32 %v1390, %v1454
        %v1463 = vadd.f32 %v1391, %v1455
        %v1464 = vadd.f32 %v1392, %v1456
        %v1465 = vrot.slane %v1425, 4
        %v1466 = vadd.f32 %v1425, %v1465
        %v1467 = vrot.slane %v1466, 2
        %v1468 = vadd.f32 %v1466, %v1467
        %v1469 = vrot.slane %v1468, 1
        %v1470 = vadd.f32 %v1468, %v1469
        %v1471 = vrot.slane %v1426, 4
        %v1472 = vadd.f32 %v1426, %v1471
        %v1473 = vrot.slane %v1472, 2
        %v1474 = vadd.f32 %v1472, %v1473
        %v1475 = vrot.slane %v1474, 1
        %v1476 = vadd.f32 %v1474, %v1475
        %v1477 = vrot.slane %v1427, 4
        %v1478 = vadd.f32 %v1427, %v1477
        %v1479 = vrot.slane %v1478, 2
        %v1480 = vadd.f32 %v1478, %v1479
        %v1481 = vrot.slane %v1480, 1
        %v1482 = vadd.f32 %v1480, %v1481
        %v1483 = vrot.slane %v1428, 4
        %v1484 = vadd.f32 %v1428, %v1483
        %v1485 = vrot.slane %v1484, 2
        %v1486 = vadd.f32 %v1484, %v1485
        %v1487 = vrot.slane %v1486, 1
        %v1488 = vadd.f32 %v1486, %v1487
        %v1489 = vrot.slane %v1429, 4
        %v1490 = vadd.f32 %v1429, %v1489
        %v1491 = vrot.slane %v1490, 2
        %v1492 = vadd.f32 %v1490, %v1491
        %v1493 = vrot.slane %v1492, 1
        %v1494 = vadd.f32 %v1492, %v1493
        %v1495 = vrot.slane %v1430, 4
        %v1496 = vadd.f32 %v1430, %v1495
        %v1497 = vrot.slane %v1496, 2
        %v1498 = vadd.f32 %v1496, %v1497
        %v1499 = vrot.slane %v1498, 1
        %v1500 = vadd.f32 %v1498, %v1499
        %v1501 = vrot.slane %v1431, 4
        %v1502 = vadd.f32 %v1431, %v1501
        %v1503 = vrot.slane %v1502, 2
        %v1504 = vadd.f32 %v1502, %v1503
        %v1505 = vrot.slane %v1504, 1
        %v1506 = vadd.f32 %v1504, %v1505
        %v1507 = vrot.slane %v1432, 4
        %v1508 = vadd.f32 %v1432, %v1507
        %v1509 = vrot.slane %v1508, 2
        %v1510 = vadd.f32 %v1508, %v1509
        %v1511 = vrot.slane %v1510, 1
        %v1512 = vadd.f32 %v1510, %v1511
        %v1513 = vrot.slane %v1441, 4
        %v1514 = vadd.f32 %v1441, %v1513
        %v1515 = vrot.slane %v1514, 2
        %v1516 = vadd.f32 %v1514, %v1515
        %v1517 = vrot.slane %v1516, 1
        %v1518 = vadd.f32 %v1516, %v1517
        %v1519 = vrot.slane %v1442, 4
        %v1520 = vadd.f32 %v1442, %v1519
        %v1521 = vrot.slane %v1520, 2
        %v1522 = vadd.f32 %v1520, %v1521
        %v1523 = vrot.slane %v1522, 1
        %v1524 = vadd.f32 %v1522, %v1523
        %v1525 = vrot.slane %v1443, 4
        %v1526 = vadd.f32 %v1443, %v1525
        %v1527 = vrot.slane %v1526, 2
        %v1528 = vadd.f32 %v1526, %v1527
        %v1529 = vrot.slane %v1528, 1
        %v1530 = vadd.f32 %v1528, %v1529
        %v1531 = vrot.slane %v1444, 4
        %v1532 = vadd.f32 %v1444, %v1531
        %v1533 = vrot.slane %v1532, 2
        %v1534 = vadd.f32 %v1532, %v1533
        %v1535 = vrot.slane %v1534, 1
        %v1536 = vadd.f32 %v1534, %v1535
        %v1537 = vrot.slane %v1445, 4
        %v1538 = vadd.f32 %v1445, %v1537
        %v1539 = vrot.slane %v1538, 2
        %v1540 = vadd.f32 %v1538, %v1539
        %v1541 = vrot.slane %v1540, 1
        %v1542 = vadd.f32 %v1540, %v1541
        %v1543 = vrot.slane %v1446, 4
        %v1544 = vadd.f32 %v1446, %v1543
        %v1545 = vrot.slane %v1544, 2
        %v1546 = vadd.f32 %v1544, %v1545
        %v1547 = vrot.slane %v1546, 1
        %v1548 = vadd.f32 %v1546, %v1547
        %v1549 = vrot.slane %v1447, 4
        %v1550 = vadd.f32 %v1447, %v1549
        %v1551 = vrot.slane %v1550, 2
        %v1552 = vadd.f32 %v1550, %v1551
        %v1553 = vrot.slane %v1552, 1
        %v1554 = vadd.f32 %v1552, %v1553
        %v1555 = vrot.slane %v1448, 4
        %v1556 = vadd.f32 %v1448, %v1555
        %v1557 = vrot.slane %v1556, 2
        %v1558 = vadd.f32 %v1556, %v1557
        %v1559 = vrot.slane %v1558, 1
        %v1560 = vadd.f32 %v1558, %v1559
        %v1561 = vrot.slane %v1457, 4
        %v1562 = vadd.f32 %v1457, %v1561
        %v1563 = vrot.slane %v1562, 2
        %v1564 = vadd.f32 %v1562, %v1563
        %v1565 = vrot.slane %v1564, 1
        %v1566 = vadd.f32 %v1564, %v1565
        %v1567 = vrot.slane %v1458, 4
        %v1568 = vadd.f32 %v1458, %v1567
        %v1569 = vrot.slane %v1568, 2
        %v1570 = vadd.f32 %v1568, %v1569
        %v1571 = vrot.slane %v1570, 1
        %v1572 = vadd.f32 %v1570, %v1571
        %v1573 = vrot.slane %v1459, 4
        %v1574 = vadd.f32 %v1459, %v1573
        %v1575 = vrot.slane %v1574, 2
        %v1576 = vadd.f32 %v1574, %v1575
        %v1577 = vrot.slane %v1576, 1
        %v1578 = vadd.f32 %v1576, %v1577
        %v1579 = vrot.slane %v1460, 4
        %v1580 = vadd.f32 %v1460, %v1579
        %v1581 = vrot.slane %v1580, 2
        %v1582 = vadd.f32 %v1580, %v1581
        %v1583 = vrot.slane %v1582, 1
        %v1584 = vadd.f32 %v1582, %v1583
        %v1585 = vrot.slane %v1461, 4
        %v1586 = vadd.f32 %v1461, %v1585
        %v1587 = vrot.slane %v1586, 2
        %v1588 = vadd.f32 %v1586, %v1587
        %v1589 = vrot.slane %v1588, 1
        %v1590 = vadd.f32 %v1588, %v1589
        %v1591 = vrot.slane %v1462, 4
        %v1592 = vadd.f32 %v1462, %v1591
        %v1593 = vrot.slane %v1592, 2
        %v1594 = vadd.f32 %v1592, %v1593
        %v1595 = vrot.slane %v1594, 1
        %v1596 = vadd.f32 %v1594, %v1595
        %v1597 = vrot.slane %v1463, 4
        %v1598 = vadd.f32 %v1463, %v1597
        %v1599 = vrot.slane %v1598, 2
        %v1600 = vadd.f32 %v1598, %v1599
        %v1601 = vrot.slane %v1600, 1
        %v1602 = vadd.f32 %v1600, %v1601
        %v1603 = vrot.slane %v1464, 4
        %v1604 = vadd.f32 %v1464, %v1603
        %v1605 = vrot.slane %v1604, 2
        %v1606 = vadd.f32 %v1604, %v1605
        %v1607 = vrot.slane %v1606, 1
        %v1608 = vadd.f32 %v1606, %v1607
        %v1609 = vmax.f32 %v1470, 1e-24
        %v1610 = vmax.f32 %v1476, 1e-24
        %v1611 = vmax.f32 %v1482, 1e-24
        %v1612 = vmax.f32 %v1488, 1e-24
        %v1613 = vmax.f32 %v1494, 1e-24
        %v1614 = vmax.f32 %v1500, 1e-24
        %v1615 = vmax.f32 %v1506, 1e-24
        %v1616 = vmax.f32 %v1512, 1e-24
        %v1617 = vrsqrt.pop %v1609
        %v1618 = vrsqrt.pop %v1610
        %v1619 = vrsqrt.pop %v1611
        %v1620 = vrsqrt.pop %v1612
        %v1621 = vrsqrt.pop %v1613
        %v1622 = vrsqrt.pop %v1614
        %v1623 = vrsqrt.pop %v1615
        %v1624 = vrsqrt.pop %v1616
        %v1625 = vmul.f32 %v1566, %v1617
        %v1626 = vmul.f32 %v1572, %v1618
        %v1627 = vmul.f32 %v1578, %v1619
        %v1628 = vmul.f32 %v1584, %v1620
        %v1629 = vmul.f32 %v1590, %v1621
        %v1630 = vmul.f32 %v1596, %v1622
        %v1631 = vmul.f32 %v1602, %v1623
        %v1632 = vmul.f32 %v1608, %v1624
        %v1633 = vmax.f32 %v1518, 1e-24
        %v1634 = vmax.f32 %v1524, 1e-24
        %v1635 = vmax.f32 %v1530, 1e-24
        %v1636 = vmax.f32 %v1536, 1e-24
        %v1637 = vmax.f32 %v1542, 1e-24
        %v1638 = vmax.f32 %v1548, 1e-24
        %v1639 = vmax.f32 %v1554, 1e-24
        %v1640 = vmax.f32 %v1560, 1e-24
        %v1641 = vrsqrt.pop %v1633
        %v1642 = vrsqrt.pop %v1634
        %v1643 = vrsqrt.pop %v1635
        %v1644 = vrsqrt.pop %v1636
        %v1645 = vrsqrt.pop %v1637
        %v1646 = vrsqrt.pop %v1638
        %v1647 = vrsqrt.pop %v1639
        %v1648 = vrsqrt.pop %v1640
        %v1649 = vmul.f32 %v1625, %v1641
        %v1650 = vmul.f32 %v1626, %v1642
        %v1651 = vmul.f32 %v1627, %v1643
        %v1652 = vmul.f32 %v1628, %v1644
        %v1653 = vmul.f32 %v1629, %v1645
        %v1654 = vmul.f32 %v1630, %v1646
        %v1655 = vmul.f32 %v1631, %v1647
        %v1656 = vmul.f32 %v1632, %v1648
        %v1657 = vld [vmem:[%s263] sm:$0xff]
        %v1658 = vsub.f32 %v1649, 1.0
        %v1659 = vsub.f32 %v1650, 1.0
        %v1660 = vsub.f32 %v1651, 1.0
        %v1661 = vsub.f32 %v1652, 1.0
        %v1662 = vsub.f32 %v1653, 1.0
        %v1663 = vsub.f32 %v1654, 1.0
        %v1664 = vsub.f32 %v1655, 1.0
        %v1665 = vsub.f32 %v1656, 1.0
        %v1666 = vmul.f32 %v1658, %v1658
        %v1667 = vmul.f32 %v1659, %v1659
        %v1668 = vmul.f32 %v1660, %v1660
        %v1669 = vmul.f32 %v1661, %v1661
        %v1670 = vmul.f32 %v1662, %v1662
        %v1671 = vmul.f32 %v1663, %v1663
        %v1672 = vmul.f32 %v1664, %v1664
        %v1673 = vmul.f32 %v1665, %v1665
        %v1674 = vstv %s308
        %v1675 = vsub.f32 %v1649, %v1674
        %v1676 = vsub.f32 %v1650, %v1674
        %v1677 = vsub.f32 %v1651, %v1674
        %v1678 = vsub.f32 %v1652, %v1674
        %v1679 = vsub.f32 %v1653, %v1674
        %v1680 = vsub.f32 %v1654, %v1674
        %v1681 = vsub.f32 %v1655, %v1674
        %v1682 = vsub.f32 %v1656, %v1674
        %v1683 = vmax.f32 %v1675, 0.0
        %v1684 = vmax.f32 %v1676, 0.0
        %v1685 = vmax.f32 %v1677, 0.0
        %v1686 = vmax.f32 %v1678, 0.0
        %v1687 = vmax.f32 %v1679, 0.0
        %v1688 = vmax.f32 %v1680, 0.0
        %v1689 = vmax.f32 %v1681, 0.0
        %v1690 = vmax.f32 %v1682, 0.0
        %v1691 = vmul.f32 %v1683, %v1683
        %v1692 = vmul.f32 %v1684, %v1684
        %v1693 = vmul.f32 %v1685, %v1685
        %v1694 = vmul.f32 %v1686, %v1686
        %v1695 = vmul.f32 %v1687, %v1687
        %v1696 = vmul.f32 %v1688, %v1688
        %v1697 = vmul.f32 %v1689, %v1689
        %v1698 = vmul.f32 %v1690, %v1690
        %v1699 = vsub.f32 %v1666, %v1691
        %v1700 = vsub.f32 %v1667, %v1692
        %v1701 = vsub.f32 %v1668, %v1693
        %v1702 = vsub.f32 %v1669, %v1694
        %v1703 = vsub.f32 %v1670, %v1695
        %v1704 = vsub.f32 %v1671, %v1696
        %v1705 = vsub.f32 %v1672, %v1697
        %v1706 = vsub.f32 %v1673, %v1698
        %v1715 = vcombine.low %v1699, %v1700
        %v1716 = vcombine.low %v1701, %v1702
        %v1717 = vcombine.low %v1703, %v1704
        %v1718 = vcombine.low %v1705, %v1706
        %v1720 = vunpack.c.l.s4 1966171168
        %v1721 = vunpack.c.0.s8 %v1720
        %v1722 = vlaneseq
        %v1723 = vshrl.u32 %v1722, 7
        %v1724 = vsub.s32 %v1721, %v1723
        %v1725 = vrot.slane %v1715, %v1724
        %v1727 = vunpack.c.l.s4 1966171168
        %v1728 = vunpack.c.0.s8 %v1727
        %v1729 = vlaneseq
        %v1730 = vshrl.u32 %v1729, 7
        %v1731 = vsub.s32 %v1728, %v1730
        %v1732 = vrot.slane %v1716, %v1731
        %v1734 = vunpack.c.l.s4 1966171168
        %v1735 = vunpack.c.0.s8 %v1734
        %v1736 = vlaneseq
        %v1737 = vshrl.u32 %v1736, 7
        %v1738 = vsub.s32 %v1735, %v1737
        %v1739 = vrot.slane %v1717, %v1738
        %v1741 = vunpack.c.l.s4 1966171168
        %v1742 = vunpack.c.0.s8 %v1741
        %v1743 = vlaneseq
        %v1744 = vshrl.u32 %v1743, 7
        %v1745 = vsub.s32 %v1742, %v1744
        %v1746 = vrot.slane %v1718, %v1745
        %v1747 = vcombine.low %v1725, %v1732
        %v1748 = vcombine.low %v1739, %v1746
        %v1750 = vunpack.c.l.s4 1966171168
        %v1751 = vunpack.c.0.s8 %v1750
        %v1752 = vlaneseq
        %v1753 = vshrl.u32 %v1752, 7
        %v1754 = vsub.s32 %v1751, %v1753
        %v1755 = vrot.slane %v1747, %v1754
        %v1757 = vunpack.c.l.s4 1966171168
        %v1758 = vunpack.c.0.s8 %v1757
        %v1759 = vlaneseq
        %v1760 = vshrl.u32 %v1759, 7
        %v1761 = vsub.s32 %v1758, %v1760
        %v1762 = vrot.slane %v1748, %v1761
        %v1763 = vcombine.low %v1755, %v1762
        %v1765 = vmul.f32 %v1657, %v1763
        %v1767 = vlaneseq
        %v1768 = vshrl.u32 %v1767, 7
        %v1769 = vsub.s32 0, %v1768
        %v1770 = vrot.slane %v1765, %v1769
        %v1771 = vlaneseq
        %v1772 = vshrl.u32 %v1771, 7
        %v1773 = vsub.s32 1, %v1772
        %v1774 = vrot.slane %v1765, %v1773
        %v1775 = vlaneseq
        %v1776 = vshrl.u32 %v1775, 7
        %v1777 = vsub.s32 2, %v1776
        %v1778 = vrot.slane %v1765, %v1777
        %v1779 = vlaneseq
        %v1780 = vshrl.u32 %v1779, 7
        %v1781 = vsub.s32 3, %v1780
        %v1782 = vrot.slane %v1765, %v1781
        %v1783 = vlaneseq
        %v1784 = vshrl.u32 %v1783, 7
        %v1785 = vsub.s32 4, %v1784
        %v1786 = vrot.slane %v1765, %v1785
        %v1787 = vlaneseq
        %v1788 = vshrl.u32 %v1787, 7
        %v1789 = vsub.s32 5, %v1788
        %v1790 = vrot.slane %v1765, %v1789
        %v1791 = vlaneseq
        %v1792 = vshrl.u32 %v1791, 7
        %v1793 = vsub.s32 6, %v1792
        %v1794 = vrot.slane %v1765, %v1793
        %v1795 = vlaneseq
        %v1796 = vshrl.u32 %v1795, 7
        %v1797 = vsub.s32 7, %v1796
        %v1798 = vrot.slane %v1765, %v1797
        %v1807 = vadd.f32 %v1691, %v1770
        %v1808 = vadd.f32 %v1692, %v1774
        %v1809 = vadd.f32 %v1693, %v1778
        %v1810 = vadd.f32 %v1694, %v1782
        %v1811 = vadd.f32 %v1695, %v1786
        %v1812 = vadd.f32 %v1696, %v1790
        %v1813 = vadd.f32 %v1697, %v1794
        %v1814 = vadd.f32 %v1698, %v1798
        %v1815 = vlaneseq
        %v1816 = vand.u32 %v1815, 127
        %v1817 = vadd.s32 %v1816, 128
        %v1818 = vadd.s32 %v1816, 256
        %v1819 = vadd.s32 %v1816, 384
        %v1820 = vadd.s32 %v1816, 512
        %v1821 = vadd.s32 %v1816, 640
        %v1822 = vadd.s32 %v1816, 768
        %v1823 = vadd.s32 %v1816, 896
        %v1824 = vstv %s312
        %v1825 = vadd.s32 %v1824, %v1816
        %v1826 = vadd.s32 %v1824, %v1817
        %v1827 = vadd.s32 %v1824, %v1818
        %v1828 = vadd.s32 %v1824, %v1819
        %v1829 = vadd.s32 %v1824, %v1820
        %v1830 = vadd.s32 %v1824, %v1821
        %v1831 = vadd.s32 %v1824, %v1822
        %v1832 = vadd.s32 %v1824, %v1823
        %v1833 = vstv %s309
        %vm1834 = vcmp.lt.s32.totalorder %v1825, %v1833
        %vm1835 = vcmp.lt.s32.totalorder %v1826, %v1833
        %vm1836 = vcmp.lt.s32.totalorder %v1827, %v1833
        %vm1837 = vcmp.lt.s32.totalorder %v1828, %v1833
        %vm1838 = vcmp.lt.s32.totalorder %v1829, %v1833
        %vm1839 = vcmp.lt.s32.totalorder %v1830, %v1833
        %vm1840 = vcmp.lt.s32.totalorder %v1831, %v1833
        %vm1841 = vcmp.lt.s32.totalorder %v1832, %v1833
        %v1842 = vsel %vm1834, %v1807, 0.0
        %v1843 = vsel %vm1835, %v1808, 0.0
        %v1844 = vsel %vm1836, %v1809, 0.0
        %v1845 = vsel %vm1837, %v1810, 0.0
        %v1846 = vsel %vm1838, %v1811, 0.0
        %v1847 = vsel %vm1839, %v1812, 0.0
        %v1848 = vsel %vm1840, %v1813, 0.0
        %v1849 = vsel %vm1841, %v1814, 0.0
        %v1850 = vld [vmem:[#allocation2] sm:$0xff]
        %v1859 = vcombine.low %v1842, %v1843
        %v1860 = vcombine.low %v1844, %v1845
        %v1861 = vcombine.low %v1846, %v1847
        %v1862 = vcombine.low %v1848, %v1849
        %v1864 = vunpack.c.l.s4 1966171168
        %v1865 = vunpack.c.0.s8 %v1864
        %v1866 = vlaneseq
        %v1867 = vshrl.u32 %v1866, 7
        %v1868 = vsub.s32 %v1865, %v1867
        %v1869 = vrot.slane %v1859, %v1868
        %v1871 = vunpack.c.l.s4 1966171168
        %v1872 = vunpack.c.0.s8 %v1871
        %v1873 = vlaneseq
        %v1874 = vshrl.u32 %v1873, 7
        %v1875 = vsub.s32 %v1872, %v1874
        %v1876 = vrot.slane %v1860, %v1875
        %v1878 = vunpack.c.l.s4 1966171168
        %v1879 = vunpack.c.0.s8 %v1878
        %v1880 = vlaneseq
        %v1881 = vshrl.u32 %v1880, 7
        %v1882 = vsub.s32 %v1879, %v1881
        %v1883 = vrot.slane %v1861, %v1882
        %v1885 = vunpack.c.l.s4 1966171168
        %v1886 = vunpack.c.0.s8 %v1885
        %v1887 = vlaneseq
        %v1888 = vshrl.u32 %v1887, 7
        %v1889 = vsub.s32 %v1886, %v1888
        %v1890 = vrot.slane %v1862, %v1889
        %v1891 = vcombine.low %v1869, %v1876
        %v1892 = vcombine.low %v1883, %v1890
        %v1894 = vunpack.c.l.s4 1966171168
        %v1895 = vunpack.c.0.s8 %v1894
        %v1896 = vlaneseq
        %v1897 = vshrl.u32 %v1896, 7
        %v1898 = vsub.s32 %v1895, %v1897
        %v1899 = vrot.slane %v1891, %v1898
        %v1901 = vunpack.c.l.s4 1966171168
        %v1902 = vunpack.c.0.s8 %v1901
        %v1903 = vlaneseq
        %v1904 = vshrl.u32 %v1903, 7
        %v1905 = vsub.s32 %v1902, %v1904
        %v1906 = vrot.slane %v1892, %v1905
        %v1907 = vcombine.low %v1899, %v1906
        %v1909 = vadd.f32 %v1850, %v1907
        %1910 = vst [vmem:[#allocation2] sm:$0xff] %v1909
        %v1911 = vld [vmem:[%s245 + $0x20] sm:$0xff]
        %v1912 = vld [vmem:[%s245 + $0x28] sm:$0xff]
        %v1913 = vld [vmem:[%s245 + $0x30] sm:$0xff]
        %v1914 = vld [vmem:[%s245 + $0x38] sm:$0xff]
        %v1915 = vunpack.c.l.bf16 %v1911
        %v1916 = vunpack.c.h.bf16 %v1911
        %v1917 = vunpack.c.l.bf16 %v1912
        %v1918 = vunpack.c.h.bf16 %v1912
        %v1919 = vunpack.c.l.bf16 %v1913
        %v1920 = vunpack.c.h.bf16 %v1913
        %v1921 = vunpack.c.l.bf16 %v1914
        %v1922 = vunpack.c.h.bf16 %v1914
        %v1923 = vld [vmem:[%s254 + $0x20] sm:$0xff]
        %v1924 = vld [vmem:[%s254 + $0x28] sm:$0xff]
        %v1925 = vld [vmem:[%s254 + $0x30] sm:$0xff]
        %v1926 = vld [vmem:[%s254 + $0x38] sm:$0xff]
        %v1927 = vunpack.c.l.bf16 %v1923
        %v1928 = vunpack.c.h.bf16 %v1923
        %v1929 = vunpack.c.l.bf16 %v1924
        %v1930 = vunpack.c.h.bf16 %v1924
        %v1931 = vunpack.c.l.bf16 %v1925
        %v1932 = vunpack.c.h.bf16 %v1925
        %v1933 = vunpack.c.l.bf16 %v1926
        %v1934 = vunpack.c.h.bf16 %v1926
        %v1935 = vmul.f32 %v1915, %v1915
        %v1936 = vmul.f32 %v1916, %v1916
        %v1937 = vmul.f32 %v1917, %v1917
        %v1938 = vmul.f32 %v1918, %v1918
        %v1939 = vmul.f32 %v1919, %v1919
        %v1940 = vmul.f32 %v1920, %v1920
        %v1941 = vmul.f32 %v1921, %v1921
        %v1942 = vmul.f32 %v1922, %v1922
        %v1943 = vadd.f32 %v1935, 0.0
        %v1944 = vadd.f32 %v1936, 0.0
        %v1945 = vadd.f32 %v1937, 0.0
        %v1946 = vadd.f32 %v1938, 0.0
        %v1947 = vadd.f32 %v1939, 0.0
        %v1948 = vadd.f32 %v1940, 0.0
        %v1949 = vadd.f32 %v1941, 0.0
        %v1950 = vadd.f32 %v1942, 0.0
        %v1951 = vmul.f32 %v1927, %v1927
        %v1952 = vmul.f32 %v1928, %v1928
        %v1953 = vmul.f32 %v1929, %v1929
        %v1954 = vmul.f32 %v1930, %v1930
        %v1955 = vmul.f32 %v1931, %v1931
        %v1956 = vmul.f32 %v1932, %v1932
        %v1957 = vmul.f32 %v1933, %v1933
        %v1958 = vmul.f32 %v1934, %v1934
        %v1959 = vadd.f32 %v1951, 0.0
        %v1960 = vadd.f32 %v1952, 0.0
        %v1961 = vadd.f32 %v1953, 0.0
        %v1962 = vadd.f32 %v1954, 0.0
        %v1963 = vadd.f32 %v1955, 0.0
        %v1964 = vadd.f32 %v1956, 0.0
        %v1965 = vadd.f32 %v1957, 0.0
        %v1966 = vadd.f32 %v1958, 0.0
        %v1967 = vmul.f32 %v1915, %v1927
        %v1968 = vmul.f32 %v1916, %v1928
        %v1969 = vmul.f32 %v1917, %v1929
        %v1970 = vmul.f32 %v1918, %v1930
        %v1971 = vmul.f32 %v1919, %v1931
        %v1972 = vmul.f32 %v1920, %v1932
        %v1973 = vmul.f32 %v1921, %v1933
        %v1974 = vmul.f32 %v1922, %v1934
        %v1975 = vadd.f32 %v1967, 0.0
        %v1976 = vadd.f32 %v1968, 0.0
        %v1977 = vadd.f32 %v1969, 0.0
        %v1978 = vadd.f32 %v1970, 0.0
        %v1979 = vadd.f32 %v1971, 0.0
        %v1980 = vadd.f32 %v1972, 0.0
        %v1981 = vadd.f32 %v1973, 0.0
        %v1982 = vadd.f32 %v1974, 0.0
        %v1983 = vld [vmem:[%s245 + $0xa0] sm:$0xff]
        %v1984 = vld [vmem:[%s245 + $0xa8] sm:$0xff]
        %v1985 = vld [vmem:[%s245 + $0xb0] sm:$0xff]
        %v1986 = vld [vmem:[%s245 + $0xb8] sm:$0xff]
        %v1987 = vunpack.c.l.bf16 %v1983
        %v1988 = vunpack.c.h.bf16 %v1983
        %v1989 = vunpack.c.l.bf16 %v1984
        %v1990 = vunpack.c.h.bf16 %v1984
        %v1991 = vunpack.c.l.bf16 %v1985
        %v1992 = vunpack.c.h.bf16 %v1985
        %v1993 = vunpack.c.l.bf16 %v1986
        %v1994 = vunpack.c.h.bf16 %v1986
        %v1995 = vld [vmem:[%s254 + $0xa0] sm:$0xff]
        %v1996 = vld [vmem:[%s254 + $0xa8] sm:$0xff]
        %v1997 = vld [vmem:[%s254 + $0xb0] sm:$0xff]
        %v1998 = vld [vmem:[%s254 + $0xb8] sm:$0xff]
        %v1999 = vunpack.c.l.bf16 %v1995
        %v2000 = vunpack.c.h.bf16 %v1995
        %v2001 = vunpack.c.l.bf16 %v1996
        %v2002 = vunpack.c.h.bf16 %v1996
        %v2003 = vunpack.c.l.bf16 %v1997
        %v2004 = vunpack.c.h.bf16 %v1997
        %v2005 = vunpack.c.l.bf16 %v1998
        %v2006 = vunpack.c.h.bf16 %v1998
        %v2007 = vmul.f32 %v1987, %v1987
        %v2008 = vmul.f32 %v1988, %v1988
        %v2009 = vmul.f32 %v1989, %v1989
        %v2010 = vmul.f32 %v1990, %v1990
        %v2011 = vmul.f32 %v1991, %v1991
        %v2012 = vmul.f32 %v1992, %v1992
        %v2013 = vmul.f32 %v1993, %v1993
        %v2014 = vmul.f32 %v1994, %v1994
        %v2015 = vadd.f32 %v1943, %v2007
        %v2016 = vadd.f32 %v1944, %v2008
        %v2017 = vadd.f32 %v1945, %v2009
        %v2018 = vadd.f32 %v1946, %v2010
        %v2019 = vadd.f32 %v1947, %v2011
        %v2020 = vadd.f32 %v1948, %v2012
        %v2021 = vadd.f32 %v1949, %v2013
        %v2022 = vadd.f32 %v1950, %v2014
        %v2023 = vmul.f32 %v1999, %v1999
        %v2024 = vmul.f32 %v2000, %v2000
        %v2025 = vmul.f32 %v2001, %v2001
        %v2026 = vmul.f32 %v2002, %v2002
        %v2027 = vmul.f32 %v2003, %v2003
        %v2028 = vmul.f32 %v2004, %v2004
        %v2029 = vmul.f32 %v2005, %v2005
        %v2030 = vmul.f32 %v2006, %v2006
        %v2031 = vadd.f32 %v1959, %v2023
        %v2032 = vadd.f32 %v1960, %v2024
        %v2033 = vadd.f32 %v1961, %v2025
        %v2034 = vadd.f32 %v1962, %v2026
        %v2035 = vadd.f32 %v1963, %v2027
        %v2036 = vadd.f32 %v1964, %v2028
        %v2037 = vadd.f32 %v1965, %v2029
        %v2038 = vadd.f32 %v1966, %v2030
        %v2039 = vmul.f32 %v1987, %v1999
        %v2040 = vmul.f32 %v1988, %v2000
        %v2041 = vmul.f32 %v1989, %v2001
        %v2042 = vmul.f32 %v1990, %v2002
        %v2043 = vmul.f32 %v1991, %v2003
        %v2044 = vmul.f32 %v1992, %v2004
        %v2045 = vmul.f32 %v1993, %v2005
        %v2046 = vmul.f32 %v1994, %v2006
        %v2047 = vadd.f32 %v1975, %v2039
        %v2048 = vadd.f32 %v1976, %v2040
        %v2049 = vadd.f32 %v1977, %v2041
        %v2050 = vadd.f32 %v1978, %v2042
        %v2051 = vadd.f32 %v1979, %v2043
        %v2052 = vadd.f32 %v1980, %v2044
        %v2053 = vadd.f32 %v1981, %v2045
        %v2054 = vadd.f32 %v1982, %v2046
        %v2055 = vld [vmem:[%s245 + $0x120] sm:$0xff]
        %v2056 = vld [vmem:[%s245 + $0x128] sm:$0xff]
        %v2057 = vld [vmem:[%s245 + $0x130] sm:$0xff]
        %v2058 = vld [vmem:[%s245 + $0x138] sm:$0xff]
        %v2059 = vunpack.c.l.bf16 %v2055
        %v2060 = vunpack.c.h.bf16 %v2055
        %v2061 = vunpack.c.l.bf16 %v2056
        %v2062 = vunpack.c.h.bf16 %v2056
        %v2063 = vunpack.c.l.bf16 %v2057
        %v2064 = vunpack.c.h.bf16 %v2057
        %v2065 = vunpack.c.l.bf16 %v2058
        %v2066 = vunpack.c.h.bf16 %v2058
        %v2067 = vld [vmem:[%s254 + $0x120] sm:$0xff]
        %v2068 = vld [vmem:[%s254 + $0x128] sm:$0xff]
        %v2069 = vld [vmem:[%s254 + $0x130] sm:$0xff]
        %v2070 = vld [vmem:[%s254 + $0x138] sm:$0xff]
        %v2071 = vunpack.c.l.bf16 %v2067
        %v2072 = vunpack.c.h.bf16 %v2067
        %v2073 = vunpack.c.l.bf16 %v2068
        %v2074 = vunpack.c.h.bf16 %v2068
        %v2075 = vunpack.c.l.bf16 %v2069
        %v2076 = vunpack.c.h.bf16 %v2069
        %v2077 = vunpack.c.l.bf16 %v2070
        %v2078 = vunpack.c.h.bf16 %v2070
        %v2079 = vmul.f32 %v2059, %v2059
        %v2080 = vmul.f32 %v2060, %v2060
        %v2081 = vmul.f32 %v2061, %v2061
        %v2082 = vmul.f32 %v2062, %v2062
        %v2083 = vmul.f32 %v2063, %v2063
        %v2084 = vmul.f32 %v2064, %v2064
        %v2085 = vmul.f32 %v2065, %v2065
        %v2086 = vmul.f32 %v2066, %v2066
        %v2087 = vadd.f32 %v2015, %v2079
        %v2088 = vadd.f32 %v2016, %v2080
        %v2089 = vadd.f32 %v2017, %v2081
        %v2090 = vadd.f32 %v2018, %v2082
        %v2091 = vadd.f32 %v2019, %v2083
        %v2092 = vadd.f32 %v2020, %v2084
        %v2093 = vadd.f32 %v2021, %v2085
        %v2094 = vadd.f32 %v2022, %v2086
        %v2095 = vmul.f32 %v2071, %v2071
        %v2096 = vmul.f32 %v2072, %v2072
        %v2097 = vmul.f32 %v2073, %v2073
        %v2098 = vmul.f32 %v2074, %v2074
        %v2099 = vmul.f32 %v2075, %v2075
        %v2100 = vmul.f32 %v2076, %v2076
        %v2101 = vmul.f32 %v2077, %v2077
        %v2102 = vmul.f32 %v2078, %v2078
        %v2103 = vadd.f32 %v2031, %v2095
        %v2104 = vadd.f32 %v2032, %v2096
        %v2105 = vadd.f32 %v2033, %v2097
        %v2106 = vadd.f32 %v2034, %v2098
        %v2107 = vadd.f32 %v2035, %v2099
        %v2108 = vadd.f32 %v2036, %v2100
        %v2109 = vadd.f32 %v2037, %v2101
        %v2110 = vadd.f32 %v2038, %v2102
        %v2111 = vmul.f32 %v2059, %v2071
        %v2112 = vmul.f32 %v2060, %v2072
        %v2113 = vmul.f32 %v2061, %v2073
        %v2114 = vmul.f32 %v2062, %v2074
        %v2115 = vmul.f32 %v2063, %v2075
        %v2116 = vmul.f32 %v2064, %v2076
        %v2117 = vmul.f32 %v2065, %v2077
        %v2118 = vmul.f32 %v2066, %v2078
        %v2119 = vadd.f32 %v2047, %v2111
        %v2120 = vadd.f32 %v2048, %v2112
        %v2121 = vadd.f32 %v2049, %v2113
        %v2122 = vadd.f32 %v2050, %v2114
        %v2123 = vadd.f32 %v2051, %v2115
        %v2124 = vadd.f32 %v2052, %v2116
        %v2125 = vadd.f32 %v2053, %v2117
        %v2126 = vadd.f32 %v2054, %v2118
        %v2127 = vld [vmem:[%s245 + $0x1a0] sm:$0xff]
        %v2128 = vld [vmem:[%s245 + $0x1a8] sm:$0xff]
        %v2129 = vld [vmem:[%s245 + $0x1b0] sm:$0xff]
        %v2130 = vld [vmem:[%s245 + $0x1b8] sm:$0xff]
        %v2131 = vunpack.c.l.bf16 %v2127
        %v2132 = vunpack.c.h.bf16 %v2127
        %v2133 = vunpack.c.l.bf16 %v2128
        %v2134 = vunpack.c.h.bf16 %v2128
        %v2135 = vunpack.c.l.bf16 %v2129
        %v2136 = vunpack.c.h.bf16 %v2129
        %v2137 = vunpack.c.l.bf16 %v2130
        %v2138 = vunpack.c.h.bf16 %v2130
        %v2139 = vld [vmem:[%s254 + $0x1a0] sm:$0xff]
        %v2140 = vld [vmem:[%s254 + $0x1a8] sm:$0xff]
        %v2141 = vld [vmem:[%s254 + $0x1b0] sm:$0xff]
        %v2142 = vld [vmem:[%s254 + $0x1b8] sm:$0xff]
        %v2143 = vunpack.c.l.bf16 %v2139
        %v2144 = vunpack.c.h.bf16 %v2139
        %v2145 = vunpack.c.l.bf16 %v2140
        %v2146 = vunpack.c.h.bf16 %v2140
        %v2147 = vunpack.c.l.bf16 %v2141
        %v2148 = vunpack.c.h.bf16 %v2141
        %v2149 = vunpack.c.l.bf16 %v2142
        %v2150 = vunpack.c.h.bf16 %v2142
        %v2151 = vmul.f32 %v2131, %v2131
        %v2152 = vmul.f32 %v2132, %v2132
        %v2153 = vmul.f32 %v2133, %v2133
        %v2154 = vmul.f32 %v2134, %v2134
        %v2155 = vmul.f32 %v2135, %v2135
        %v2156 = vmul.f32 %v2136, %v2136
        %v2157 = vmul.f32 %v2137, %v2137
        %v2158 = vmul.f32 %v2138, %v2138
        %v2159 = vadd.f32 %v2087, %v2151
        %v2160 = vadd.f32 %v2088, %v2152
        %v2161 = vadd.f32 %v2089, %v2153
        %v2162 = vadd.f32 %v2090, %v2154
        %v2163 = vadd.f32 %v2091, %v2155
        %v2164 = vadd.f32 %v2092, %v2156
        %v2165 = vadd.f32 %v2093, %v2157
        %v2166 = vadd.f32 %v2094, %v2158
        %v2167 = vmul.f32 %v2143, %v2143
        %v2168 = vmul.f32 %v2144, %v2144
        %v2169 = vmul.f32 %v2145, %v2145
        %v2170 = vmul.f32 %v2146, %v2146
        %v2171 = vmul.f32 %v2147, %v2147
        %v2172 = vmul.f32 %v2148, %v2148
        %v2173 = vmul.f32 %v2149, %v2149
        %v2174 = vmul.f32 %v2150, %v2150
        %v2175 = vadd.f32 %v2103, %v2167
        %v2176 = vadd.f32 %v2104, %v2168
        %v2177 = vadd.f32 %v2105, %v2169
        %v2178 = vadd.f32 %v2106, %v2170
        %v2179 = vadd.f32 %v2107, %v2171
        %v2180 = vadd.f32 %v2108, %v2172
        %v2181 = vadd.f32 %v2109, %v2173
        %v2182 = vadd.f32 %v2110, %v2174
        %v2183 = vmul.f32 %v2131, %v2143
        %v2184 = vmul.f32 %v2132, %v2144
        %v2185 = vmul.f32 %v2133, %v2145
        %v2186 = vmul.f32 %v2134, %v2146
        %v2187 = vmul.f32 %v2135, %v2147
        %v2188 = vmul.f32 %v2136, %v2148
        %v2189 = vmul.f32 %v2137, %v2149
        %v2190 = vmul.f32 %v2138, %v2150
        %v2191 = vadd.f32 %v2119, %v2183
        %v2192 = vadd.f32 %v2120, %v2184
        %v2193 = vadd.f32 %v2121, %v2185
        %v2194 = vadd.f32 %v2122, %v2186
        %v2195 = vadd.f32 %v2123, %v2187
        %v2196 = vadd.f32 %v2124, %v2188
        %v2197 = vadd.f32 %v2125, %v2189
        %v2198 = vadd.f32 %v2126, %v2190
        %v2199 = vld [vmem:[%s245 + $0x220] sm:$0xff]
        %v2200 = vld [vmem:[%s245 + $0x228] sm:$0xff]
        %v2201 = vld [vmem:[%s245 + $0x230] sm:$0xff]
        %v2202 = vld [vmem:[%s245 + $0x238] sm:$0xff]
        %v2203 = vunpack.c.l.bf16 %v2199
        %v2204 = vunpack.c.h.bf16 %v2199
        %v2205 = vunpack.c.l.bf16 %v2200
        %v2206 = vunpack.c.h.bf16 %v2200
        %v2207 = vunpack.c.l.bf16 %v2201
        %v2208 = vunpack.c.h.bf16 %v2201
        %v2209 = vunpack.c.l.bf16 %v2202
        %v2210 = vunpack.c.h.bf16 %v2202
        %v2211 = vld [vmem:[%s254 + $0x220] sm:$0xff]
        %v2212 = vld [vmem:[%s254 + $0x228] sm:$0xff]
        %v2213 = vld [vmem:[%s254 + $0x230] sm:$0xff]
        %v2214 = vld [vmem:[%s254 + $0x238] sm:$0xff]
        %v2215 = vunpack.c.l.bf16 %v2211
        %v2216 = vunpack.c.h.bf16 %v2211
        %v2217 = vunpack.c.l.bf16 %v2212
        %v2218 = vunpack.c.h.bf16 %v2212
        %v2219 = vunpack.c.l.bf16 %v2213
        %v2220 = vunpack.c.h.bf16 %v2213
        %v2221 = vunpack.c.l.bf16 %v2214
        %v2222 = vunpack.c.h.bf16 %v2214
        %v2223 = vmul.f32 %v2203, %v2203
        %v2224 = vmul.f32 %v2204, %v2204
        %v2225 = vmul.f32 %v2205, %v2205
        %v2226 = vmul.f32 %v2206, %v2206
        %v2227 = vmul.f32 %v2207, %v2207
        %v2228 = vmul.f32 %v2208, %v2208
        %v2229 = vmul.f32 %v2209, %v2209
        %v2230 = vmul.f32 %v2210, %v2210
        %v2231 = vadd.f32 %v2159, %v2223
        %v2232 = vadd.f32 %v2160, %v2224
        %v2233 = vadd.f32 %v2161, %v2225
        %v2234 = vadd.f32 %v2162, %v2226
        %v2235 = vadd.f32 %v2163, %v2227
        %v2236 = vadd.f32 %v2164, %v2228
        %v2237 = vadd.f32 %v2165, %v2229
        %v2238 = vadd.f32 %v2166, %v2230
        %v2239 = vmul.f32 %v2215, %v2215
        %v2240 = vmul.f32 %v2216, %v2216
        %v2241 = vmul.f32 %v2217, %v2217
        %v2242 = vmul.f32 %v2218, %v2218
        %v2243 = vmul.f32 %v2219, %v2219
        %v2244 = vmul.f32 %v2220, %v2220
        %v2245 = vmul.f32 %v2221, %v2221
        %v2246 = vmul.f32 %v2222, %v2222
        %v2247 = vadd.f32 %v2175, %v2239
        %v2248 = vadd.f32 %v2176, %v2240
        %v2249 = vadd.f32 %v2177, %v2241
        %v2250 = vadd.f32 %v2178, %v2242
        %v2251 = vadd.f32 %v2179, %v2243
        %v2252 = vadd.f32 %v2180, %v2244
        %v2253 = vadd.f32 %v2181, %v2245
        %v2254 = vadd.f32 %v2182, %v2246
        %v2255 = vmul.f32 %v2203, %v2215
        %v2256 = vmul.f32 %v2204, %v2216
        %v2257 = vmul.f32 %v2205, %v2217
        %v2258 = vmul.f32 %v2206, %v2218
        %v2259 = vmul.f32 %v2207, %v2219
        %v2260 = vmul.f32 %v2208, %v2220
        %v2261 = vmul.f32 %v2209, %v2221
        %v2262 = vmul.f32 %v2210, %v2222
        %v2263 = vadd.f32 %v2191, %v2255
        %v2264 = vadd.f32 %v2192, %v2256
        %v2265 = vadd.f32 %v2193, %v2257
        %v2266 = vadd.f32 %v2194, %v2258
        %v2267 = vadd.f32 %v2195, %v2259
        %v2268 = vadd.f32 %v2196, %v2260
        %v2269 = vadd.f32 %v2197, %v2261
        %v2270 = vadd.f32 %v2198, %v2262
        %v2271 = vld [vmem:[%s245 + $0x2a0] sm:$0xff]
        %v2272 = vld [vmem:[%s245 + $0x2a8] sm:$0xff]
        %v2273 = vld [vmem:[%s245 + $0x2b0] sm:$0xff]
        %v2274 = vld [vmem:[%s245 + $0x2b8] sm:$0xff]
        %v2275 = vunpack.c.l.bf16 %v2271
        %v2276 = vunpack.c.h.bf16 %v2271
        %v2277 = vunpack.c.l.bf16 %v2272
        %v2278 = vunpack.c.h.bf16 %v2272
        %v2279 = vunpack.c.l.bf16 %v2273
        %v2280 = vunpack.c.h.bf16 %v2273
        %v2281 = vunpack.c.l.bf16 %v2274
        %v2282 = vunpack.c.h.bf16 %v2274
        %v2283 = vld [vmem:[%s254 + $0x2a0] sm:$0xff]
        %v2284 = vld [vmem:[%s254 + $0x2a8] sm:$0xff]
        %v2285 = vld [vmem:[%s254 + $0x2b0] sm:$0xff]
        %v2286 = vld [vmem:[%s254 + $0x2b8] sm:$0xff]
        %v2287 = vunpack.c.l.bf16 %v2283
        %v2288 = vunpack.c.h.bf16 %v2283
        %v2289 = vunpack.c.l.bf16 %v2284
        %v2290 = vunpack.c.h.bf16 %v2284
        %v2291 = vunpack.c.l.bf16 %v2285
        %v2292 = vunpack.c.h.bf16 %v2285
        %v2293 = vunpack.c.l.bf16 %v2286
        %v2294 = vunpack.c.h.bf16 %v2286
        %v2295 = vmul.f32 %v2275, %v2275
        %v2296 = vmul.f32 %v2276, %v2276
        %v2297 = vmul.f32 %v2277, %v2277
        %v2298 = vmul.f32 %v2278, %v2278
        %v2299 = vmul.f32 %v2279, %v2279
        %v2300 = vmul.f32 %v2280, %v2280
        %v2301 = vmul.f32 %v2281, %v2281
        %v2302 = vmul.f32 %v2282, %v2282
        %v2303 = vadd.f32 %v2231, %v2295
        %v2304 = vadd.f32 %v2232, %v2296
        %v2305 = vadd.f32 %v2233, %v2297
        %v2306 = vadd.f32 %v2234, %v2298
        %v2307 = vadd.f32 %v2235, %v2299
        %v2308 = vadd.f32 %v2236, %v2300
        %v2309 = vadd.f32 %v2237, %v2301
        %v2310 = vadd.f32 %v2238, %v2302
        %v2311 = vmul.f32 %v2287, %v2287
        %v2312 = vmul.f32 %v2288, %v2288
        %v2313 = vmul.f32 %v2289, %v2289
        %v2314 = vmul.f32 %v2290, %v2290
        %v2315 = vmul.f32 %v2291, %v2291
        %v2316 = vmul.f32 %v2292, %v2292
        %v2317 = vmul.f32 %v2293, %v2293
        %v2318 = vmul.f32 %v2294, %v2294
        %v2319 = vadd.f32 %v2247, %v2311
        %v2320 = vadd.f32 %v2248, %v2312
        %v2321 = vadd.f32 %v2249, %v2313
        %v2322 = vadd.f32 %v2250, %v2314
        %v2323 = vadd.f32 %v2251, %v2315
        %v2324 = vadd.f32 %v2252, %v2316
        %v2325 = vadd.f32 %v2253, %v2317
        %v2326 = vadd.f32 %v2254, %v2318
        %v2327 = vmul.f32 %v2275, %v2287
        %v2328 = vmul.f32 %v2276, %v2288
        %v2329 = vmul.f32 %v2277, %v2289
        %v2330 = vmul.f32 %v2278, %v2290
        %v2331 = vmul.f32 %v2279, %v2291
        %v2332 = vmul.f32 %v2280, %v2292
        %v2333 = vmul.f32 %v2281, %v2293
        %v2334 = vmul.f32 %v2282, %v2294
        %v2335 = vadd.f32 %v2263, %v2327
        %v2336 = vadd.f32 %v2264, %v2328
        %v2337 = vadd.f32 %v2265, %v2329
        %v2338 = vadd.f32 %v2266, %v2330
        %v2339 = vadd.f32 %v2267, %v2331
        %v2340 = vadd.f32 %v2268, %v2332
        %v2341 = vadd.f32 %v2269, %v2333
        %v2342 = vadd.f32 %v2270, %v2334
        %v2343 = vld [vmem:[%s245 + $0x320] sm:$0xff]
        %v2344 = vld [vmem:[%s245 + $0x328] sm:$0xff]
        %v2345 = vld [vmem:[%s245 + $0x330] sm:$0xff]
        %v2346 = vld [vmem:[%s245 + $0x338] sm:$0xff]
        %v2347 = vunpack.c.l.bf16 %v2343
        %v2348 = vunpack.c.h.bf16 %v2343
        %v2349 = vunpack.c.l.bf16 %v2344
        %v2350 = vunpack.c.h.bf16 %v2344
        %v2351 = vunpack.c.l.bf16 %v2345
        %v2352 = vunpack.c.h.bf16 %v2345
        %v2353 = vunpack.c.l.bf16 %v2346
        %v2354 = vunpack.c.h.bf16 %v2346
        %v2355 = vld [vmem:[%s254 + $0x320] sm:$0xff]
        %v2356 = vld [vmem:[%s254 + $0x328] sm:$0xff]
        %v2357 = vld [vmem:[%s254 + $0x330] sm:$0xff]
        %v2358 = vld [vmem:[%s254 + $0x338] sm:$0xff]
        %v2359 = vunpack.c.l.bf16 %v2355
        %v2360 = vunpack.c.h.bf16 %v2355
        %v2361 = vunpack.c.l.bf16 %v2356
        %v2362 = vunpack.c.h.bf16 %v2356
        %v2363 = vunpack.c.l.bf16 %v2357
        %v2364 = vunpack.c.h.bf16 %v2357
        %v2365 = vunpack.c.l.bf16 %v2358
        %v2366 = vunpack.c.h.bf16 %v2358
        %v2367 = vmul.f32 %v2347, %v2347
        %v2368 = vmul.f32 %v2348, %v2348
        %v2369 = vmul.f32 %v2349, %v2349
        %v2370 = vmul.f32 %v2350, %v2350
        %v2371 = vmul.f32 %v2351, %v2351
        %v2372 = vmul.f32 %v2352, %v2352
        %v2373 = vmul.f32 %v2353, %v2353
        %v2374 = vmul.f32 %v2354, %v2354
        %v2375 = vadd.f32 %v2303, %v2367
        %v2376 = vadd.f32 %v2304, %v2368
        %v2377 = vadd.f32 %v2305, %v2369
        %v2378 = vadd.f32 %v2306, %v2370
        %v2379 = vadd.f32 %v2307, %v2371
        %v2380 = vadd.f32 %v2308, %v2372
        %v2381 = vadd.f32 %v2309, %v2373
        %v2382 = vadd.f32 %v2310, %v2374
        %v2383 = vmul.f32 %v2359, %v2359
        %v2384 = vmul.f32 %v2360, %v2360
        %v2385 = vmul.f32 %v2361, %v2361
        %v2386 = vmul.f32 %v2362, %v2362
        %v2387 = vmul.f32 %v2363, %v2363
        %v2388 = vmul.f32 %v2364, %v2364
        %v2389 = vmul.f32 %v2365, %v2365
        %v2390 = vmul.f32 %v2366, %v2366
        %v2391 = vadd.f32 %v2319, %v2383
        %v2392 = vadd.f32 %v2320, %v2384
        %v2393 = vadd.f32 %v2321, %v2385
        %v2394 = vadd.f32 %v2322, %v2386
        %v2395 = vadd.f32 %v2323, %v2387
        %v2396 = vadd.f32 %v2324, %v2388
        %v2397 = vadd.f32 %v2325, %v2389
        %v2398 = vadd.f32 %v2326, %v2390
        %v2399 = vmul.f32 %v2347, %v2359
        %v2400 = vmul.f32 %v2348, %v2360
        %v2401 = vmul.f32 %v2349, %v2361
        %v2402 = vmul.f32 %v2350, %v2362
        %v2403 = vmul.f32 %v2351, %v2363
        %v2404 = vmul.f32 %v2352, %v2364
        %v2405 = vmul.f32 %v2353, %v2365
        %v2406 = vmul.f32 %v2354, %v2366
        %v2407 = vadd.f32 %v2335, %v2399
        %v2408 = vadd.f32 %v2336, %v2400
        %v2409 = vadd.f32 %v2337, %v2401
        %v2410 = vadd.f32 %v2338, %v2402
        %v2411 = vadd.f32 %v2339, %v2403
        %v2412 = vadd.f32 %v2340, %v2404
        %v2413 = vadd.f32 %v2341, %v2405
        %v2414 = vadd.f32 %v2342, %v2406
        %v2415 = vld [vmem:[%s245 + $0x3a0] sm:$0xff]
        %v2416 = vld [vmem:[%s245 + $0x3a8] sm:$0xff]
        %v2417 = vld [vmem:[%s245 + $0x3b0] sm:$0xff]
        %v2418 = vld [vmem:[%s245 + $0x3b8] sm:$0xff]
        %v2419 = vunpack.c.l.bf16 %v2415
        %v2420 = vunpack.c.h.bf16 %v2415
        %v2421 = vunpack.c.l.bf16 %v2416
        %v2422 = vunpack.c.h.bf16 %v2416
        %v2423 = vunpack.c.l.bf16 %v2417
        %v2424 = vunpack.c.h.bf16 %v2417
        %v2425 = vunpack.c.l.bf16 %v2418
        %v2426 = vunpack.c.h.bf16 %v2418
        %v2427 = vld [vmem:[%s254 + $0x3a0] sm:$0xff]
        %v2428 = vld [vmem:[%s254 + $0x3a8] sm:$0xff]
        %v2429 = vld [vmem:[%s254 + $0x3b0] sm:$0xff]
        %v2430 = vld [vmem:[%s254 + $0x3b8] sm:$0xff]
        %v2431 = vunpack.c.l.bf16 %v2427
        %v2432 = vunpack.c.h.bf16 %v2427
        %v2433 = vunpack.c.l.bf16 %v2428
        %v2434 = vunpack.c.h.bf16 %v2428
        %v2435 = vunpack.c.l.bf16 %v2429
        %v2436 = vunpack.c.h.bf16 %v2429
        %v2437 = vunpack.c.l.bf16 %v2430
        %v2438 = vunpack.c.h.bf16 %v2430
        %v2439 = vmul.f32 %v2419, %v2419
        %v2440 = vmul.f32 %v2420, %v2420
        %v2441 = vmul.f32 %v2421, %v2421
        %v2442 = vmul.f32 %v2422, %v2422
        %v2443 = vmul.f32 %v2423, %v2423
        %v2444 = vmul.f32 %v2424, %v2424
        %v2445 = vmul.f32 %v2425, %v2425
        %v2446 = vmul.f32 %v2426, %v2426
        %v2447 = vadd.f32 %v2375, %v2439
        %v2448 = vadd.f32 %v2376, %v2440
        %v2449 = vadd.f32 %v2377, %v2441
        %v2450 = vadd.f32 %v2378, %v2442
        %v2451 = vadd.f32 %v2379, %v2443
        %v2452 = vadd.f32 %v2380, %v2444
        %v2453 = vadd.f32 %v2381, %v2445
        %v2454 = vadd.f32 %v2382, %v2446
        %v2455 = vmul.f32 %v2431, %v2431
        %v2456 = vmul.f32 %v2432, %v2432
        %v2457 = vmul.f32 %v2433, %v2433
        %v2458 = vmul.f32 %v2434, %v2434
        %v2459 = vmul.f32 %v2435, %v2435
        %v2460 = vmul.f32 %v2436, %v2436
        %v2461 = vmul.f32 %v2437, %v2437
        %v2462 = vmul.f32 %v2438, %v2438
        %v2463 = vadd.f32 %v2391, %v2455
        %v2464 = vadd.f32 %v2392, %v2456
        %v2465 = vadd.f32 %v2393, %v2457
        %v2466 = vadd.f32 %v2394, %v2458
        %v2467 = vadd.f32 %v2395, %v2459
        %v2468 = vadd.f32 %v2396, %v2460
        %v2469 = vadd.f32 %v2397, %v2461
        %v2470 = vadd.f32 %v2398, %v2462
        %v2471 = vmul.f32 %v2419, %v2431
        %v2472 = vmul.f32 %v2420, %v2432
        %v2473 = vmul.f32 %v2421, %v2433
        %v2474 = vmul.f32 %v2422, %v2434
        %v2475 = vmul.f32 %v2423, %v2435
        %v2476 = vmul.f32 %v2424, %v2436
        %v2477 = vmul.f32 %v2425, %v2437
        %v2478 = vmul.f32 %v2426, %v2438
        %v2479 = vadd.f32 %v2407, %v2471
        %v2480 = vadd.f32 %v2408, %v2472
        %v2481 = vadd.f32 %v2409, %v2473
        %v2482 = vadd.f32 %v2410, %v2474
        %v2483 = vadd.f32 %v2411, %v2475
        %v2484 = vadd.f32 %v2412, %v2476
        %v2485 = vadd.f32 %v2413, %v2477
        %v2486 = vadd.f32 %v2414, %v2478
        %v2487 = vld [vmem:[%s245 + $0x420] sm:$0xff]
        %v2488 = vld [vmem:[%s245 + $0x428] sm:$0xff]
        %v2489 = vld [vmem:[%s245 + $0x430] sm:$0xff]
        %v2490 = vld [vmem:[%s245 + $0x438] sm:$0xff]
        %v2491 = vunpack.c.l.bf16 %v2487
        %v2492 = vunpack.c.h.bf16 %v2487
        %v2493 = vunpack.c.l.bf16 %v2488
        %v2494 = vunpack.c.h.bf16 %v2488
        %v2495 = vunpack.c.l.bf16 %v2489
        %v2496 = vunpack.c.h.bf16 %v2489
        %v2497 = vunpack.c.l.bf16 %v2490
        %v2498 = vunpack.c.h.bf16 %v2490
        %v2499 = vld [vmem:[%s254 + $0x420] sm:$0xff]
        %v2500 = vld [vmem:[%s254 + $0x428] sm:$0xff]
        %v2501 = vld [vmem:[%s254 + $0x430] sm:$0xff]
        %v2502 = vld [vmem:[%s254 + $0x438] sm:$0xff]
        %v2503 = vunpack.c.l.bf16 %v2499
        %v2504 = vunpack.c.h.bf16 %v2499
        %v2505 = vunpack.c.l.bf16 %v2500
        %v2506 = vunpack.c.h.bf16 %v2500
        %v2507 = vunpack.c.l.bf16 %v2501
        %v2508 = vunpack.c.h.bf16 %v2501
        %v2509 = vunpack.c.l.bf16 %v2502
        %v2510 = vunpack.c.h.bf16 %v2502
        %v2511 = vmul.f32 %v2491, %v2491
        %v2512 = vmul.f32 %v2492, %v2492
        %v2513 = vmul.f32 %v2493, %v2493
        %v2514 = vmul.f32 %v2494, %v2494
        %v2515 = vmul.f32 %v2495, %v2495
        %v2516 = vmul.f32 %v2496, %v2496
        %v2517 = vmul.f32 %v2497, %v2497
        %v2518 = vmul.f32 %v2498, %v2498
        %v2519 = vadd.f32 %v2447, %v2511
        %v2520 = vadd.f32 %v2448, %v2512
        %v2521 = vadd.f32 %v2449, %v2513
        %v2522 = vadd.f32 %v2450, %v2514
        %v2523 = vadd.f32 %v2451, %v2515
        %v2524 = vadd.f32 %v2452, %v2516
        %v2525 = vadd.f32 %v2453, %v2517
        %v2526 = vadd.f32 %v2454, %v2518
        %v2527 = vmul.f32 %v2503, %v2503
        %v2528 = vmul.f32 %v2504, %v2504
        %v2529 = vmul.f32 %v2505, %v2505
        %v2530 = vmul.f32 %v2506, %v2506
        %v2531 = vmul.f32 %v2507, %v2507
        %v2532 = vmul.f32 %v2508, %v2508
        %v2533 = vmul.f32 %v2509, %v2509
        %v2534 = vmul.f32 %v2510, %v2510
        %v2535 = vadd.f32 %v2463, %v2527
        %v2536 = vadd.f32 %v2464, %v2528
        %v2537 = vadd.f32 %v2465, %v2529
        %v2538 = vadd.f32 %v2466, %v2530
        %v2539 = vadd.f32 %v2467, %v2531
        %v2540 = vadd.f32 %v2468, %v2532
        %v2541 = vadd.f32 %v2469, %v2533
        %v2542 = vadd.f32 %v2470, %v2534
        %v2543 = vmul.f32 %v2491, %v2503
        %v2544 = vmul.f32 %v2492, %v2504
        %v2545 = vmul.f32 %v2493, %v2505
        %v2546 = vmul.f32 %v2494, %v2506
        %v2547 = vmul.f32 %v2495, %v2507
        %v2548 = vmul.f32 %v2496, %v2508
        %v2549 = vmul.f32 %v2497, %v2509
        %v2550 = vmul.f32 %v2498, %v2510
        %v2551 = vadd.f32 %v2479, %v2543
        %v2552 = vadd.f32 %v2480, %v2544
        %v2553 = vadd.f32 %v2481, %v2545
        %v2554 = vadd.f32 %v2482, %v2546
        %v2555 = vadd.f32 %v2483, %v2547
        %v2556 = vadd.f32 %v2484, %v2548
        %v2557 = vadd.f32 %v2485, %v2549
        %v2558 = vadd.f32 %v2486, %v2550
        %v2559 = vld [vmem:[%s245 + $0x4a0] sm:$0xff]
        %v2560 = vld [vmem:[%s245 + $0x4a8] sm:$0xff]
        %v2561 = vld [vmem:[%s245 + $0x4b0] sm:$0xff]
        %v2562 = vld [vmem:[%s245 + $0x4b8] sm:$0xff]
        %v2563 = vunpack.c.l.bf16 %v2559
        %v2564 = vunpack.c.h.bf16 %v2559
        %v2565 = vunpack.c.l.bf16 %v2560
        %v2566 = vunpack.c.h.bf16 %v2560
        %v2567 = vunpack.c.l.bf16 %v2561
        %v2568 = vunpack.c.h.bf16 %v2561
        %v2569 = vunpack.c.l.bf16 %v2562
        %v2570 = vunpack.c.h.bf16 %v2562
        %v2571 = vld [vmem:[%s254 + $0x4a0] sm:$0xff]
        %v2572 = vld [vmem:[%s254 + $0x4a8] sm:$0xff]
        %v2573 = vld [vmem:[%s254 + $0x4b0] sm:$0xff]
        %v2574 = vld [vmem:[%s254 + $0x4b8] sm:$0xff]
        %v2575 = vunpack.c.l.bf16 %v2571
        %v2576 = vunpack.c.h.bf16 %v2571
        %v2577 = vunpack.c.l.bf16 %v2572
        %v2578 = vunpack.c.h.bf16 %v2572
        %v2579 = vunpack.c.l.bf16 %v2573
        %v2580 = vunpack.c.h.bf16 %v2573
        %v2581 = vunpack.c.l.bf16 %v2574
        %v2582 = vunpack.c.h.bf16 %v2574
        %v2583 = vmul.f32 %v2563, %v2563
        %v2584 = vmul.f32 %v2564, %v2564
        %v2585 = vmul.f32 %v2565, %v2565
        %v2586 = vmul.f32 %v2566, %v2566
        %v2587 = vmul.f32 %v2567, %v2567
        %v2588 = vmul.f32 %v2568, %v2568
        %v2589 = vmul.f32 %v2569, %v2569
        %v2590 = vmul.f32 %v2570, %v2570
        %v2591 = vadd.f32 %v2519, %v2583
        %v2592 = vadd.f32 %v2520, %v2584
        %v2593 = vadd.f32 %v2521, %v2585
        %v2594 = vadd.f32 %v2522, %v2586
        %v2595 = vadd.f32 %v2523, %v2587
        %v2596 = vadd.f32 %v2524, %v2588
        %v2597 = vadd.f32 %v2525, %v2589
        %v2598 = vadd.f32 %v2526, %v2590
        %v2599 = vmul.f32 %v2575, %v2575
        %v2600 = vmul.f32 %v2576, %v2576
        %v2601 = vmul.f32 %v2577, %v2577
        %v2602 = vmul.f32 %v2578, %v2578
        %v2603 = vmul.f32 %v2579, %v2579
        %v2604 = vmul.f32 %v2580, %v2580
        %v2605 = vmul.f32 %v2581, %v2581
        %v2606 = vmul.f32 %v2582, %v2582
        %v2607 = vadd.f32 %v2535, %v2599
        %v2608 = vadd.f32 %v2536, %v2600
        %v2609 = vadd.f32 %v2537, %v2601
        %v2610 = vadd.f32 %v2538, %v2602
        %v2611 = vadd.f32 %v2539, %v2603
        %v2612 = vadd.f32 %v2540, %v2604
        %v2613 = vadd.f32 %v2541, %v2605
        %v2614 = vadd.f32 %v2542, %v2606
        %v2615 = vmul.f32 %v2563, %v2575
        %v2616 = vmul.f32 %v2564, %v2576
        %v2617 = vmul.f32 %v2565, %v2577
        %v2618 = vmul.f32 %v2566, %v2578
        %v2619 = vmul.f32 %v2567, %v2579
        %v2620 = vmul.f32 %v2568, %v2580
        %v2621 = vmul.f32 %v2569, %v2581
        %v2622 = vmul.f32 %v2570, %v2582
        %v2623 = vadd.f32 %v2551, %v2615
        %v2624 = vadd.f32 %v2552, %v2616
        %v2625 = vadd.f32 %v2553, %v2617
        %v2626 = vadd.f32 %v2554, %v2618
        %v2627 = vadd.f32 %v2555, %v2619
        %v2628 = vadd.f32 %v2556, %v2620
        %v2629 = vadd.f32 %v2557, %v2621
        %v2630 = vadd.f32 %v2558, %v2622
        %v2631 = vld [vmem:[%s245 + $0x520] sm:$0xff]
        %v2632 = vld [vmem:[%s245 + $0x528] sm:$0xff]
        %v2633 = vld [vmem:[%s245 + $0x530] sm:$0xff]
        %v2634 = vld [vmem:[%s245 + $0x538] sm:$0xff]
        %v2635 = vunpack.c.l.bf16 %v2631
        %v2636 = vunpack.c.h.bf16 %v2631
        %v2637 = vunpack.c.l.bf16 %v2632
        %v2638 = vunpack.c.h.bf16 %v2632
        %v2639 = vunpack.c.l.bf16 %v2633
        %v2640 = vunpack.c.h.bf16 %v2633
        %v2641 = vunpack.c.l.bf16 %v2634
        %v2642 = vunpack.c.h.bf16 %v2634
        %v2643 = vld [vmem:[%s254 + $0x520] sm:$0xff]
        %v2644 = vld [vmem:[%s254 + $0x528] sm:$0xff]
        %v2645 = vld [vmem:[%s254 + $0x530] sm:$0xff]
        %v2646 = vld [vmem:[%s254 + $0x538] sm:$0xff]
        %v2647 = vunpack.c.l.bf16 %v2643
        %v2648 = vunpack.c.h.bf16 %v2643
        %v2649 = vunpack.c.l.bf16 %v2644
        %v2650 = vunpack.c.h.bf16 %v2644
        %v2651 = vunpack.c.l.bf16 %v2645
        %v2652 = vunpack.c.h.bf16 %v2645
        %v2653 = vunpack.c.l.bf16 %v2646
        %v2654 = vunpack.c.h.bf16 %v2646
        %v2655 = vmul.f32 %v2635, %v2635
        %v2656 = vmul.f32 %v2636, %v2636
        %v2657 = vmul.f32 %v2637, %v2637
        %v2658 = vmul.f32 %v2638, %v2638
        %v2659 = vmul.f32 %v2639, %v2639
        %v2660 = vmul.f32 %v2640, %v2640
        %v2661 = vmul.f32 %v2641, %v2641
        %v2662 = vmul.f32 %v2642, %v2642
        %v2663 = vadd.f32 %v2591, %v2655
        %v2664 = vadd.f32 %v2592, %v2656
        %v2665 = vadd.f32 %v2593, %v2657
        %v2666 = vadd.f32 %v2594, %v2658
        %v2667 = vadd.f32 %v2595, %v2659
        %v2668 = vadd.f32 %v2596, %v2660
        %v2669 = vadd.f32 %v2597, %v2661
        %v2670 = vadd.f32 %v2598, %v2662
        %v2671 = vmul.f32 %v2647, %v2647
        %v2672 = vmul.f32 %v2648, %v2648
        %v2673 = vmul.f32 %v2649, %v2649
        %v2674 = vmul.f32 %v2650, %v2650
        %v2675 = vmul.f32 %v2651, %v2651
        %v2676 = vmul.f32 %v2652, %v2652
        %v2677 = vmul.f32 %v2653, %v2653
        %v2678 = vmul.f32 %v2654, %v2654
        %v2679 = vadd.f32 %v2607, %v2671
        %v2680 = vadd.f32 %v2608, %v2672
        %v2681 = vadd.f32 %v2609, %v2673
        %v2682 = vadd.f32 %v2610, %v2674
        %v2683 = vadd.f32 %v2611, %v2675
        %v2684 = vadd.f32 %v2612, %v2676
        %v2685 = vadd.f32 %v2613, %v2677
        %v2686 = vadd.f32 %v2614, %v2678
        %v2687 = vmul.f32 %v2635, %v2647
        %v2688 = vmul.f32 %v2636, %v2648
        %v2689 = vmul.f32 %v2637, %v2649
        %v2690 = vmul.f32 %v2638, %v2650
        %v2691 = vmul.f32 %v2639, %v2651
        %v2692 = vmul.f32 %v2640, %v2652
        %v2693 = vmul.f32 %v2641, %v2653
        %v2694 = vmul.f32 %v2642, %v2654
        %v2695 = vadd.f32 %v2623, %v2687
        %v2696 = vadd.f32 %v2624, %v2688
        %v2697 = vadd.f32 %v2625, %v2689
        %v2698 = vadd.f32 %v2626, %v2690
        %v2699 = vadd.f32 %v2627, %v2691
        %v2700 = vadd.f32 %v2628, %v2692
        %v2701 = vadd.f32 %v2629, %v2693
        %v2702 = vadd.f32 %v2630, %v2694
        %v2703 = vld [vmem:[%s245 + $0x5a0] sm:$0xff]
        %v2704 = vld [vmem:[%s245 + $0x5a8] sm:$0xff]
        %v2705 = vld [vmem:[%s245 + $0x5b0] sm:$0xff]
        %v2706 = vld [vmem:[%s245 + $0x5b8] sm:$0xff]
        %v2707 = vunpack.c.l.bf16 %v2703
        %v2708 = vunpack.c.h.bf16 %v2703
        %v2709 = vunpack.c.l.bf16 %v2704
        %v2710 = vunpack.c.h.bf16 %v2704
        %v2711 = vunpack.c.l.bf16 %v2705
        %v2712 = vunpack.c.h.bf16 %v2705
        %v2713 = vunpack.c.l.bf16 %v2706
        %v2714 = vunpack.c.h.bf16 %v2706
        %v2715 = vld [vmem:[%s254 + $0x5a0] sm:$0xff]
        %v2716 = vld [vmem:[%s254 + $0x5a8] sm:$0xff]
        %v2717 = vld [vmem:[%s254 + $0x5b0] sm:$0xff]
        %v2718 = vld [vmem:[%s254 + $0x5b8] sm:$0xff]
        %v2719 = vunpack.c.l.bf16 %v2715
        %v2720 = vunpack.c.h.bf16 %v2715
        %v2721 = vunpack.c.l.bf16 %v2716
        %v2722 = vunpack.c.h.bf16 %v2716
        %v2723 = vunpack.c.l.bf16 %v2717
        %v2724 = vunpack.c.h.bf16 %v2717
        %v2725 = vunpack.c.l.bf16 %v2718
        %v2726 = vunpack.c.h.bf16 %v2718
        %v2727 = vmul.f32 %v2707, %v2707
        %v2728 = vmul.f32 %v2708, %v2708
        %v2729 = vmul.f32 %v2709, %v2709
        %v2730 = vmul.f32 %v2710, %v2710
        %v2731 = vmul.f32 %v2711, %v2711
        %v2732 = vmul.f32 %v2712, %v2712
        %v2733 = vmul.f32 %v2713, %v2713
        %v2734 = vmul.f32 %v2714, %v2714
        %v2735 = vadd.f32 %v2663, %v2727
        %v2736 = vadd.f32 %v2664, %v2728
        %v2737 = vadd.f32 %v2665, %v2729
        %v2738 = vadd.f32 %v2666, %v2730
        %v2739 = vadd.f32 %v2667, %v2731
        %v2740 = vadd.f32 %v2668, %v2732
        %v2741 = vadd.f32 %v2669, %v2733
        %v2742 = vadd.f32 %v2670, %v2734
        %v2743 = vmul.f32 %v2719, %v2719
        %v2744 = vmul.f32 %v2720, %v2720
        %v2745 = vmul.f32 %v2721, %v2721
        %v2746 = vmul.f32 %v2722, %v2722
        %v2747 = vmul.f32 %v2723, %v2723
        %v2748 = vmul.f32 %v2724, %v2724
        %v2749 = vmul.f32 %v2725, %v2725
        %v2750 = vmul.f32 %v2726, %v2726
        %v2751 = vadd.f32 %v2679, %v2743
        %v2752 = vadd.f32 %v2680, %v2744
        %v2753 = vadd.f32 %v2681, %v2745
        %v2754 = vadd.f32 %v2682, %v2746
        %v2755 = vadd.f32 %v2683, %v2747
        %v2756 = vadd.f32 %v2684, %v2748
        %v2757 = vadd.f32 %v2685, %v2749
        %v2758 = vadd.f32 %v2686, %v2750
        %v2759 = vmul.f32 %v2707, %v2719
        %v2760 = vmul.f32 %v2708, %v2720
        %v2761 = vmul.f32 %v2709, %v2721
        %v2762 = vmul.f32 %v2710, %v2722
        %v2763 = vmul.f32 %v2711, %v2723
        %v2764 = vmul.f32 %v2712, %v2724
        %v2765 = vmul.f32 %v2713, %v2725
        %v2766 = vmul.f32 %v2714, %v2726
        %v2767 = vadd.f32 %v2695, %v2759
        %v2768 = vadd.f32 %v2696, %v2760
        %v2769 = vadd.f32 %v2697, %v2761
        %v2770 = vadd.f32 %v2698, %v2762
        %v2771 = vadd.f32 %v2699, %v2763
        %v2772 = vadd.f32 %v2700, %v2764
        %v2773 = vadd.f32 %v2701, %v2765
        %v2774 = vadd.f32 %v2702, %v2766
        %v2775 = vld [vmem:[%s245 + $0x620] sm:$0xff]
        %v2776 = vld [vmem:[%s245 + $0x628] sm:$0xff]
        %v2777 = vld [vmem:[%s245 + $0x630] sm:$0xff]
        %v2778 = vld [vmem:[%s245 + $0x638] sm:$0xff]
        %v2779 = vunpack.c.l.bf16 %v2775
        %v2780 = vunpack.c.h.bf16 %v2775
        %v2781 = vunpack.c.l.bf16 %v2776
        %v2782 = vunpack.c.h.bf16 %v2776
        %v2783 = vunpack.c.l.bf16 %v2777
        %v2784 = vunpack.c.h.bf16 %v2777
        %v2785 = vunpack.c.l.bf16 %v2778
        %v2786 = vunpack.c.h.bf16 %v2778
        %v2787 = vld [vmem:[%s254 + $0x620] sm:$0xff]
        %v2788 = vld [vmem:[%s254 + $0x628] sm:$0xff]
        %v2789 = vld [vmem:[%s254 + $0x630] sm:$0xff]
        %v2790 = vld [vmem:[%s254 + $0x638] sm:$0xff]
        %v2791 = vunpack.c.l.bf16 %v2787
        %v2792 = vunpack.c.h.bf16 %v2787
        %v2793 = vunpack.c.l.bf16 %v2788
        %v2794 = vunpack.c.h.bf16 %v2788
        %v2795 = vunpack.c.l.bf16 %v2789
        %v2796 = vunpack.c.h.bf16 %v2789
        %v2797 = vunpack.c.l.bf16 %v2790
        %v2798 = vunpack.c.h.bf16 %v2790
        %v2799 = vmul.f32 %v2779, %v2779
        %v2800 = vmul.f32 %v2780, %v2780
        %v2801 = vmul.f32 %v2781, %v2781
        %v2802 = vmul.f32 %v2782, %v2782
        %v2803 = vmul.f32 %v2783, %v2783
        %v2804 = vmul.f32 %v2784, %v2784
        %v2805 = vmul.f32 %v2785, %v2785
        %v2806 = vmul.f32 %v2786, %v2786
        %v2807 = vadd.f32 %v2735, %v2799
        %v2808 = vadd.f32 %v2736, %v2800
        %v2809 = vadd.f32 %v2737, %v2801
        %v2810 = vadd.f32 %v2738, %v2802
        %v2811 = vadd.f32 %v2739, %v2803
        %v2812 = vadd.f32 %v2740, %v2804
        %v2813 = vadd.f32 %v2741, %v2805
        %v2814 = vadd.f32 %v2742, %v2806
        %v2815 = vmul.f32 %v2791, %v2791
        %v2816 = vmul.f32 %v2792, %v2792
        %v2817 = vmul.f32 %v2793, %v2793
        %v2818 = vmul.f32 %v2794, %v2794
        %v2819 = vmul.f32 %v2795, %v2795
        %v2820 = vmul.f32 %v2796, %v2796
        %v2821 = vmul.f32 %v2797, %v2797
        %v2822 = vmul.f32 %v2798, %v2798
        %v2823 = vadd.f32 %v2751, %v2815
        %v2824 = vadd.f32 %v2752, %v2816
        %v2825 = vadd.f32 %v2753, %v2817
        %v2826 = vadd.f32 %v2754, %v2818
        %v2827 = vadd.f32 %v2755, %v2819
        %v2828 = vadd.f32 %v2756, %v2820
        %v2829 = vadd.f32 %v2757, %v2821
        %v2830 = vadd.f32 %v2758, %v2822
        %v2831 = vmul.f32 %v2779, %v2791
        %v2832 = vmul.f32 %v2780, %v2792
        %v2833 = vmul.f32 %v2781, %v2793
        %v2834 = vmul.f32 %v2782, %v2794
        %v2835 = vmul.f32 %v2783, %v2795
        %v2836 = vmul.f32 %v2784, %v2796
        %v2837 = vmul.f32 %v2785, %v2797
        %v2838 = vmul.f32 %v2786, %v2798
        %v2839 = vadd.f32 %v2767, %v2831
        %v2840 = vadd.f32 %v2768, %v2832
        %v2841 = vadd.f32 %v2769, %v2833
        %v2842 = vadd.f32 %v2770, %v2834
        %v2843 = vadd.f32 %v2771, %v2835
        %v2844 = vadd.f32 %v2772, %v2836
        %v2845 = vadd.f32 %v2773, %v2837
        %v2846 = vadd.f32 %v2774, %v2838
        %v2847 = vld [vmem:[%s245 + $0x6a0] sm:$0xff]
        %v2848 = vld [vmem:[%s245 + $0x6a8] sm:$0xff]
        %v2849 = vld [vmem:[%s245 + $0x6b0] sm:$0xff]
        %v2850 = vld [vmem:[%s245 + $0x6b8] sm:$0xff]
        %v2851 = vunpack.c.l.bf16 %v2847
        %v2852 = vunpack.c.h.bf16 %v2847
        %v2853 = vunpack.c.l.bf16 %v2848
        %v2854 = vunpack.c.h.bf16 %v2848
        %v2855 = vunpack.c.l.bf16 %v2849
        %v2856 = vunpack.c.h.bf16 %v2849
        %v2857 = vunpack.c.l.bf16 %v2850
        %v2858 = vunpack.c.h.bf16 %v2850
        %v2859 = vld [vmem:[%s254 + $0x6a0] sm:$0xff]
        %v2860 = vld [vmem:[%s254 + $0x6a8] sm:$0xff]
        %v2861 = vld [vmem:[%s254 + $0x6b0] sm:$0xff]
        %v2862 = vld [vmem:[%s254 + $0x6b8] sm:$0xff]
        %v2863 = vunpack.c.l.bf16 %v2859
        %v2864 = vunpack.c.h.bf16 %v2859
        %v2865 = vunpack.c.l.bf16 %v2860
        %v2866 = vunpack.c.h.bf16 %v2860
        %v2867 = vunpack.c.l.bf16 %v2861
        %v2868 = vunpack.c.h.bf16 %v2861
        %v2869 = vunpack.c.l.bf16 %v2862
        %v2870 = vunpack.c.h.bf16 %v2862
        %v2871 = vmul.f32 %v2851, %v2851
        %v2872 = vmul.f32 %v2852, %v2852
        %v2873 = vmul.f32 %v2853, %v2853
        %v2874 = vmul.f32 %v2854, %v2854
        %v2875 = vmul.f32 %v2855, %v2855
        %v2876 = vmul.f32 %v2856, %v2856
        %v2877 = vmul.f32 %v2857, %v2857
        %v2878 = vmul.f32 %v2858, %v2858
        %v2879 = vadd.f32 %v2807, %v2871
        %v2880 = vadd.f32 %v2808, %v2872
        %v2881 = vadd.f32 %v2809, %v2873
        %v2882 = vadd.f32 %v2810, %v2874
        %v2883 = vadd.f32 %v2811, %v2875
        %v2884 = vadd.f32 %v2812, %v2876
        %v2885 = vadd.f32 %v2813, %v2877
        %v2886 = vadd.f32 %v2814, %v2878
        %v2887 = vmul.f32 %v2863, %v2863
        %v2888 = vmul.f32 %v2864, %v2864
        %v2889 = vmul.f32 %v2865, %v2865
        %v2890 = vmul.f32 %v2866, %v2866
        %v2891 = vmul.f32 %v2867, %v2867
        %v2892 = vmul.f32 %v2868, %v2868
        %v2893 = vmul.f32 %v2869, %v2869
        %v2894 = vmul.f32 %v2870, %v2870
        %v2895 = vadd.f32 %v2823, %v2887
        %v2896 = vadd.f32 %v2824, %v2888
        %v2897 = vadd.f32 %v2825, %v2889
        %v2898 = vadd.f32 %v2826, %v2890
        %v2899 = vadd.f32 %v2827, %v2891
        %v2900 = vadd.f32 %v2828, %v2892
        %v2901 = vadd.f32 %v2829, %v2893
        %v2902 = vadd.f32 %v2830, %v2894
        %v2903 = vmul.f32 %v2851, %v2863
        %v2904 = vmul.f32 %v2852, %v2864
        %v2905 = vmul.f32 %v2853, %v2865
        %v2906 = vmul.f32 %v2854, %v2866
        %v2907 = vmul.f32 %v2855, %v2867
        %v2908 = vmul.f32 %v2856, %v2868
        %v2909 = vmul.f32 %v2857, %v2869
        %v2910 = vmul.f32 %v2858, %v2870
        %v2911 = vadd.f32 %v2839, %v2903
        %v2912 = vadd.f32 %v2840, %v2904
        %v2913 = vadd.f32 %v2841, %v2905
        %v2914 = vadd.f32 %v2842, %v2906
        %v2915 = vadd.f32 %v2843, %v2907
        %v2916 = vadd.f32 %v2844, %v2908
        %v2917 = vadd.f32 %v2845, %v2909
        %v2918 = vadd.f32 %v2846, %v2910
        %v2919 = vld [vmem:[%s245 + $0x720] sm:$0xff]
        %v2920 = vld [vmem:[%s245 + $0x728] sm:$0xff]
        %v2921 = vld [vmem:[%s245 + $0x730] sm:$0xff]
        %v2922 = vld [vmem:[%s245 + $0x738] sm:$0xff]
        %v2923 = vunpack.c.l.bf16 %v2919
        %v2924 = vunpack.c.h.bf16 %v2919
        %v2925 = vunpack.c.l.bf16 %v2920
        %v2926 = vunpack.c.h.bf16 %v2920
        %v2927 = vunpack.c.l.bf16 %v2921
        %v2928 = vunpack.c.h.bf16 %v2921
        %v2929 = vunpack.c.l.bf16 %v2922
        %v2930 = vunpack.c.h.bf16 %v2922
        %v2931 = vld [vmem:[%s254 + $0x720] sm:$0xff]
        %v2932 = vld [vmem:[%s254 + $0x728] sm:$0xff]
        %v2933 = vld [vmem:[%s254 + $0x730] sm:$0xff]
        %v2934 = vld [vmem:[%s254 + $0x738] sm:$0xff]
        %v2935 = vunpack.c.l.bf16 %v2931
        %v2936 = vunpack.c.h.bf16 %v2931
        %v2937 = vunpack.c.l.bf16 %v2932
        %v2938 = vunpack.c.h.bf16 %v2932
        %v2939 = vunpack.c.l.bf16 %v2933
        %v2940 = vunpack.c.h.bf16 %v2933
        %v2941 = vunpack.c.l.bf16 %v2934
        %v2942 = vunpack.c.h.bf16 %v2934
        %v2943 = vmul.f32 %v2923, %v2923
        %v2944 = vmul.f32 %v2924, %v2924
        %v2945 = vmul.f32 %v2925, %v2925
        %v2946 = vmul.f32 %v2926, %v2926
        %v2947 = vmul.f32 %v2927, %v2927
        %v2948 = vmul.f32 %v2928, %v2928
        %v2949 = vmul.f32 %v2929, %v2929
        %v2950 = vmul.f32 %v2930, %v2930
        %v2951 = vadd.f32 %v2879, %v2943
        %v2952 = vadd.f32 %v2880, %v2944
        %v2953 = vadd.f32 %v2881, %v2945
        %v2954 = vadd.f32 %v2882, %v2946
        %v2955 = vadd.f32 %v2883, %v2947
        %v2956 = vadd.f32 %v2884, %v2948
        %v2957 = vadd.f32 %v2885, %v2949
        %v2958 = vadd.f32 %v2886, %v2950
        %v2959 = vmul.f32 %v2935, %v2935
        %v2960 = vmul.f32 %v2936, %v2936
        %v2961 = vmul.f32 %v2937, %v2937
        %v2962 = vmul.f32 %v2938, %v2938
        %v2963 = vmul.f32 %v2939, %v2939
        %v2964 = vmul.f32 %v2940, %v2940
        %v2965 = vmul.f32 %v2941, %v2941
        %v2966 = vmul.f32 %v2942, %v2942
        %v2967 = vadd.f32 %v2895, %v2959
        %v2968 = vadd.f32 %v2896, %v2960
        %v2969 = vadd.f32 %v2897, %v2961
        %v2970 = vadd.f32 %v2898, %v2962
        %v2971 = vadd.f32 %v2899, %v2963
        %v2972 = vadd.f32 %v2900, %v2964
        %v2973 = vadd.f32 %v2901, %v2965
        %v2974 = vadd.f32 %v2902, %v2966
        %v2975 = vmul.f32 %v2923, %v2935
        %v2976 = vmul.f32 %v2924, %v2936
        %v2977 = vmul.f32 %v2925, %v2937
        %v2978 = vmul.f32 %v2926, %v2938
        %v2979 = vmul.f32 %v2927, %v2939
        %v2980 = vmul.f32 %v2928, %v2940
        %v2981 = vmul.f32 %v2929, %v2941
        %v2982 = vmul.f32 %v2930, %v2942
        %v2983 = vadd.f32 %v2911, %v2975
        %v2984 = vadd.f32 %v2912, %v2976
        %v2985 = vadd.f32 %v2913, %v2977
        %v2986 = vadd.f32 %v2914, %v2978
        %v2987 = vadd.f32 %v2915, %v2979
        %v2988 = vadd.f32 %v2916, %v2980
        %v2989 = vadd.f32 %v2917, %v2981
        %v2990 = vadd.f32 %v2918, %v2982
        %v2991 = vld [vmem:[%s245 + $0x7a0] sm:$0xff]
        %v2992 = vld [vmem:[%s245 + $0x7a8] sm:$0xff]
        %v2993 = vld [vmem:[%s245 + $0x7b0] sm:$0xff]
        %v2994 = vld [vmem:[%s245 + $0x7b8] sm:$0xff]
        %v2995 = vunpack.c.l.bf16 %v2991
        %v2996 = vunpack.c.h.bf16 %v2991
        %v2997 = vunpack.c.l.bf16 %v2992
        %v2998 = vunpack.c.h.bf16 %v2992
        %v2999 = vunpack.c.l.bf16 %v2993
        %v3000 = vunpack.c.h.bf16 %v2993
        %v3001 = vunpack.c.l.bf16 %v2994
        %v3002 = vunpack.c.h.bf16 %v2994
        %v3003 = vld [vmem:[%s254 + $0x7a0] sm:$0xff]
        %v3004 = vld [vmem:[%s254 + $0x7a8] sm:$0xff]
        %v3005 = vld [vmem:[%s254 + $0x7b0] sm:$0xff]
        %v3006 = vld [vmem:[%s254 + $0x7b8] sm:$0xff]
        %v3007 = vunpack.c.l.bf16 %v3003
        %v3008 = vunpack.c.h.bf16 %v3003
        %v3009 = vunpack.c.l.bf16 %v3004
        %v3010 = vunpack.c.h.bf16 %v3004
        %v3011 = vunpack.c.l.bf16 %v3005
        %v3012 = vunpack.c.h.bf16 %v3005
        %v3013 = vunpack.c.l.bf16 %v3006
        %v3014 = vunpack.c.h.bf16 %v3006
        %v3015 = vmul.f32 %v2995, %v2995
        %v3016 = vmul.f32 %v2996, %v2996
        %v3017 = vmul.f32 %v2997, %v2997
        %v3018 = vmul.f32 %v2998, %v2998
        %v3019 = vmul.f32 %v2999, %v2999
        %v3020 = vmul.f32 %v3000, %v3000
        %v3021 = vmul.f32 %v3001, %v3001
        %v3022 = vmul.f32 %v3002, %v3002
        %v3023 = vadd.f32 %v2951, %v3015
        %v3024 = vadd.f32 %v2952, %v3016
        %v3025 = vadd.f32 %v2953, %v3017
        %v3026 = vadd.f32 %v2954, %v3018
        %v3027 = vadd.f32 %v2955, %v3019
        %v3028 = vadd.f32 %v2956, %v3020
        %v3029 = vadd.f32 %v2957, %v3021
        %v3030 = vadd.f32 %v2958, %v3022
        %v3031 = vmul.f32 %v3007, %v3007
        %v3032 = vmul.f32 %v3008, %v3008
        %v3033 = vmul.f32 %v3009, %v3009
        %v3034 = vmul.f32 %v3010, %v3010
        %v3035 = vmul.f32 %v3011, %v3011
        %v3036 = vmul.f32 %v3012, %v3012
        %v3037 = vmul.f32 %v3013, %v3013
        %v3038 = vmul.f32 %v3014, %v3014
        %v3039 = vadd.f32 %v2967, %v3031
        %v3040 = vadd.f32 %v2968, %v3032
        %v3041 = vadd.f32 %v2969, %v3033
        %v3042 = vadd.f32 %v2970, %v3034
        %v3043 = vadd.f32 %v2971, %v3035
        %v3044 = vadd.f32 %v2972, %v3036
        %v3045 = vadd.f32 %v2973, %v3037
        %v3046 = vadd.f32 %v2974, %v3038
        %v3047 = vmul.f32 %v2995, %v3007
        %v3048 = vmul.f32 %v2996, %v3008
        %v3049 = vmul.f32 %v2997, %v3009
        %v3050 = vmul.f32 %v2998, %v3010
        %v3051 = vmul.f32 %v2999, %v3011
        %v3052 = vmul.f32 %v3000, %v3012
        %v3053 = vmul.f32 %v3001, %v3013
        %v3054 = vmul.f32 %v3002, %v3014
        %v3055 = vadd.f32 %v2983, %v3047
        %v3056 = vadd.f32 %v2984, %v3048
        %v3057 = vadd.f32 %v2985, %v3049
        %v3058 = vadd.f32 %v2986, %v3050
        %v3059 = vadd.f32 %v2987, %v3051
        %v3060 = vadd.f32 %v2988, %v3052
        %v3061 = vadd.f32 %v2989, %v3053
        %v3062 = vadd.f32 %v2990, %v3054
        %v3063 = vrot.slane %v3023, 4
        %v3064 = vadd.f32 %v3023, %v3063
        %v3065 = vrot.slane %v3064, 2
        %v3066 = vadd.f32 %v3064, %v3065
        %v3067 = vrot.slane %v3066, 1
        %v3068 = vadd.f32 %v3066, %v3067
        %v3069 = vrot.slane %v3024, 4
        %v3070 = vadd.f32 %v3024, %v3069
        %v3071 = vrot.slane %v3070, 2
        %v3072 = vadd.f32 %v3070, %v3071
        %v3073 = vrot.slane %v3072, 1
        %v3074 = vadd.f32 %v3072, %v3073
        %v3075 = vrot.slane %v3025, 4
        %v3076 = vadd.f32 %v3025, %v3075
        %v3077 = vrot.slane %v3076, 2
        %v3078 = vadd.f32 %v3076, %v3077
        %v3079 = vrot.slane %v3078, 1
        %v3080 = vadd.f32 %v3078, %v3079
        %v3081 = vrot.slane %v3026, 4
        %v3082 = vadd.f32 %v3026, %v3081
        %v3083 = vrot.slane %v3082, 2
        %v3084 = vadd.f32 %v3082, %v3083
        %v3085 = vrot.slane %v3084, 1
        %v3086 = vadd.f32 %v3084, %v3085
        %v3087 = vrot.slane %v3027, 4
        %v3088 = vadd.f32 %v3027, %v3087
        %v3089 = vrot.slane %v3088, 2
        %v3090 = vadd.f32 %v3088, %v3089
        %v3091 = vrot.slane %v3090, 1
        %v3092 = vadd.f32 %v3090, %v3091
        %v3093 = vrot.slane %v3028, 4
        %v3094 = vadd.f32 %v3028, %v3093
        %v3095 = vrot.slane %v3094, 2
        %v3096 = vadd.f32 %v3094, %v3095
        %v3097 = vrot.slane %v3096, 1
        %v3098 = vadd.f32 %v3096, %v3097
        %v3099 = vrot.slane %v3029, 4
        %v3100 = vadd.f32 %v3029, %v3099
        %v3101 = vrot.slane %v3100, 2
        %v3102 = vadd.f32 %v3100, %v3101
        %v3103 = vrot.slane %v3102, 1
        %v3104 = vadd.f32 %v3102, %v3103
        %v3105 = vrot.slane %v3030, 4
        %v3106 = vadd.f32 %v3030, %v3105
        %v3107 = vrot.slane %v3106, 2
        %v3108 = vadd.f32 %v3106, %v3107
        %v3109 = vrot.slane %v3108, 1
        %v3110 = vadd.f32 %v3108, %v3109
        %v3111 = vrot.slane %v3039, 4
        %v3112 = vadd.f32 %v3039, %v3111
        %v3113 = vrot.slane %v3112, 2
        %v3114 = vadd.f32 %v3112, %v3113
        %v3115 = vrot.slane %v3114, 1
        %v3116 = vadd.f32 %v3114, %v3115
        %v3117 = vrot.slane %v3040, 4
        %v3118 = vadd.f32 %v3040, %v3117
        %v3119 = vrot.slane %v3118, 2
        %v3120 = vadd.f32 %v3118, %v3119
        %v3121 = vrot.slane %v3120, 1
        %v3122 = vadd.f32 %v3120, %v3121
        %v3123 = vrot.slane %v3041, 4
        %v3124 = vadd.f32 %v3041, %v3123
        %v3125 = vrot.slane %v3124, 2
        %v3126 = vadd.f32 %v3124, %v3125
        %v3127 = vrot.slane %v3126, 1
        %v3128 = vadd.f32 %v3126, %v3127
        %v3129 = vrot.slane %v3042, 4
        %v3130 = vadd.f32 %v3042, %v3129
        %v3131 = vrot.slane %v3130, 2
        %v3132 = vadd.f32 %v3130, %v3131
        %v3133 = vrot.slane %v3132, 1
        %v3134 = vadd.f32 %v3132, %v3133
        %v3135 = vrot.slane %v3043, 4
        %v3136 = vadd.f32 %v3043, %v3135
        %v3137 = vrot.slane %v3136, 2
        %v3138 = vadd.f32 %v3136, %v3137
        %v3139 = vrot.slane %v3138, 1
        %v3140 = vadd.f32 %v3138, %v3139
        %v3141 = vrot.slane %v3044, 4
        %v3142 = vadd.f32 %v3044, %v3141
        %v3143 = vrot.slane %v3142, 2
        %v3144 = vadd.f32 %v3142, %v3143
        %v3145 = vrot.slane %v3144, 1
        %v3146 = vadd.f32 %v3144, %v3145
        %v3147 = vrot.slane %v3045, 4
        %v3148 = vadd.f32 %v3045, %v3147
        %v3149 = vrot.slane %v3148, 2
        %v3150 = vadd.f32 %v3148, %v3149
        %v3151 = vrot.slane %v3150, 1
        %v3152 = vadd.f32 %v3150, %v3151
        %v3153 = vrot.slane %v3046, 4
        %v3154 = vadd.f32 %v3046, %v3153
        %v3155 = vrot.slane %v3154, 2
        %v3156 = vadd.f32 %v3154, %v3155
        %v3157 = vrot.slane %v3156, 1
        %v3158 = vadd.f32 %v3156, %v3157
        %v3159 = vrot.slane %v3055, 4
        %v3160 = vadd.f32 %v3055, %v3159
        %v3161 = vrot.slane %v3160, 2
        %v3162 = vadd.f32 %v3160, %v3161
        %v3163 = vrot.slane %v3162, 1
        %v3164 = vadd.f32 %v3162, %v3163
        %v3165 = vrot.slane %v3056, 4
        %v3166 = vadd.f32 %v3056, %v3165
        %v3167 = vrot.slane %v3166, 2
        %v3168 = vadd.f32 %v3166, %v3167
        %v3169 = vrot.slane %v3168, 1
        %v3170 = vadd.f32 %v3168, %v3169
        %v3171 = vrot.slane %v3057, 4
        %v3172 = vadd.f32 %v3057, %v3171
        %v3173 = vrot.slane %v3172, 2
        %v3174 = vadd.f32 %v3172, %v3173
        %v3175 = vrot.slane %v3174, 1
        %v3176 = vadd.f32 %v3174, %v3175
        %v3177 = vrot.slane %v3058, 4
        %v3178 = vadd.f32 %v3058, %v3177
        %v3179 = vrot.slane %v3178, 2
        %v3180 = vadd.f32 %v3178, %v3179
        %v3181 = vrot.slane %v3180, 1
        %v3182 = vadd.f32 %v3180, %v3181
        %v3183 = vrot.slane %v3059, 4
        %v3184 = vadd.f32 %v3059, %v3183
        %v3185 = vrot.slane %v3184, 2
        %v3186 = vadd.f32 %v3184, %v3185
        %v3187 = vrot.slane %v3186, 1
        %v3188 = vadd.f32 %v3186, %v3187
        %v3189 = vrot.slane %v3060, 4
        %v3190 = vadd.f32 %v3060, %v3189
        %v3191 = vrot.slane %v3190, 2
        %v3192 = vadd.f32 %v3190, %v3191
        %v3193 = vrot.slane %v3192, 1
        %v3194 = vadd.f32 %v3192, %v3193
        %v3195 = vrot.slane %v3061, 4
        %v3196 = vadd.f32 %v3061, %v3195
        %v3197 = vrot.slane %v3196, 2
        %v3198 = vadd.f32 %v3196, %v3197
        %v3199 = vrot.slane %v3198, 1
        %v3200 = vadd.f32 %v3198, %v3199
        %v3201 = vrot.slane %v3062, 4
        %v3202 = vadd.f32 %v3062, %v3201
        %v3203 = vrot.slane %v3202, 2
        %v3204 = vadd.f32 %v3202, %v3203
        %v3205 = vrot.slane %v3204, 1
        %v3206 = vadd.f32 %v3204, %v3205
        %v3207 = vmax.f32 %v3068, 1e-24
        %v3208 = vmax.f32 %v3074, 1e-24
        %v3209 = vmax.f32 %v3080, 1e-24
        %v3210 = vmax.f32 %v3086, 1e-24
        %v3211 = vmax.f32 %v3092, 1e-24
        %v3212 = vmax.f32 %v3098, 1e-24
        %v3213 = vmax.f32 %v3104, 1e-24
        %v3214 = vmax.f32 %v3110, 1e-24
        %v3215 = vrsqrt.pop %v3207
        %v3216 = vrsqrt.pop %v3208
        %v3217 = vrsqrt.pop %v3209
        %v3218 = vrsqrt.pop %v3210
        %v3219 = vrsqrt.pop %v3211
        %v3220 = vrsqrt.pop %v3212
        %v3221 = vrsqrt.pop %v3213
        %v3222 = vrsqrt.pop %v3214
        %v3223 = vmul.f32 %v3164, %v3215
        %v3224 = vmul.f32 %v3170, %v3216
        %v3225 = vmul.f32 %v3176, %v3217
        %v3226 = vmul.f32 %v3182, %v3218
        %v3227 = vmul.f32 %v3188, %v3219
        %v3228 = vmul.f32 %v3194, %v3220
        %v3229 = vmul.f32 %v3200, %v3221
        %v3230 = vmul.f32 %v3206, %v3222
        %v3231 = vmax.f32 %v3116, 1e-24
        %v3232 = vmax.f32 %v3122, 1e-24
        %v3233 = vmax.f32 %v3128, 1e-24
        %v3234 = vmax.f32 %v3134, 1e-24
        %v3235 = vmax.f32 %v3140, 1e-24
        %v3236 = vmax.f32 %v3146, 1e-24
        %v3237 = vmax.f32 %v3152, 1e-24
        %v3238 = vmax.f32 %v3158, 1e-24
        %v3239 = vrsqrt.pop %v3231
        %v3240 = vrsqrt.pop %v3232
        %v3241 = vrsqrt.pop %v3233
        %v3242 = vrsqrt.pop %v3234
        %v3243 = vrsqrt.pop %v3235
        %v3244 = vrsqrt.pop %v3236
        %v3245 = vrsqrt.pop %v3237
        %v3246 = vrsqrt.pop %v3238
        %v3247 = vmul.f32 %v3223, %v3239
        %v3248 = vmul.f32 %v3224, %v3240
        %v3249 = vmul.f32 %v3225, %v3241
        %v3250 = vmul.f32 %v3226, %v3242
        %v3251 = vmul.f32 %v3227, %v3243
        %v3252 = vmul.f32 %v3228, %v3244
        %v3253 = vmul.f32 %v3229, %v3245
        %v3254 = vmul.f32 %v3230, %v3246
        %v3255 = vld [vmem:[%s263 + $0x8] sm:$0xff]
        %v3256 = vsub.f32 %v3247, 1.0
        %v3257 = vsub.f32 %v3248, 1.0
        %v3258 = vsub.f32 %v3249, 1.0
        %v3259 = vsub.f32 %v3250, 1.0
        %v3260 = vsub.f32 %v3251, 1.0
        %v3261 = vsub.f32 %v3252, 1.0
        %v3262 = vsub.f32 %v3253, 1.0
        %v3263 = vsub.f32 %v3254, 1.0
        %v3264 = vmul.f32 %v3256, %v3256
        %v3265 = vmul.f32 %v3257, %v3257
        %v3266 = vmul.f32 %v3258, %v3258
        %v3267 = vmul.f32 %v3259, %v3259
        %v3268 = vmul.f32 %v3260, %v3260
        %v3269 = vmul.f32 %v3261, %v3261
        %v3270 = vmul.f32 %v3262, %v3262
        %v3271 = vmul.f32 %v3263, %v3263
        %v3272 = vsub.f32 %v3247, %v1674
        %v3273 = vsub.f32 %v3248, %v1674
        %v3274 = vsub.f32 %v3249, %v1674
        %v3275 = vsub.f32 %v3250, %v1674
        %v3276 = vsub.f32 %v3251, %v1674
        %v3277 = vsub.f32 %v3252, %v1674
        %v3278 = vsub.f32 %v3253, %v1674
        %v3279 = vsub.f32 %v3254, %v1674
        %v3280 = vmax.f32 %v3272, 0.0
        %v3281 = vmax.f32 %v3273, 0.0
        %v3282 = vmax.f32 %v3274, 0.0
        %v3283 = vmax.f32 %v3275, 0.0
        %v3284 = vmax.f32 %v3276, 0.0
        %v3285 = vmax.f32 %v3277, 0.0
        %v3286 = vmax.f32 %v3278, 0.0
        %v3287 = vmax.f32 %v3279, 0.0
        %v3288 = vmul.f32 %v3280, %v3280
        %v3289 = vmul.f32 %v3281, %v3281
        %v3290 = vmul.f32 %v3282, %v3282
        %v3291 = vmul.f32 %v3283, %v3283
        %v3292 = vmul.f32 %v3284, %v3284
        %v3293 = vmul.f32 %v3285, %v3285
        %v3294 = vmul.f32 %v3286, %v3286
        %v3295 = vmul.f32 %v3287, %v3287
        %v3296 = vsub.f32 %v3264, %v3288
        %v3297 = vsub.f32 %v3265, %v3289
        %v3298 = vsub.f32 %v3266, %v3290
        %v3299 = vsub.f32 %v3267, %v3291
        %v3300 = vsub.f32 %v3268, %v3292
        %v3301 = vsub.f32 %v3269, %v3293
        %v3302 = vsub.f32 %v3270, %v3294
        %v3303 = vsub.f32 %v3271, %v3295
        %v3312 = vcombine.low %v3296, %v3297
        %v3313 = vcombine.low %v3298, %v3299
        %v3314 = vcombine.low %v3300, %v3301
        %v3315 = vcombine.low %v3302, %v3303
        %v3317 = vunpack.c.l.s4 1966171168
        %v3318 = vunpack.c.0.s8 %v3317
        %v3319 = vlaneseq
        %v3320 = vshrl.u32 %v3319, 7
        %v3321 = vsub.s32 %v3318, %v3320
        %v3322 = vrot.slane %v3312, %v3321
        %v3324 = vunpack.c.l.s4 1966171168
        %v3325 = vunpack.c.0.s8 %v3324
        %v3326 = vlaneseq
        %v3327 = vshrl.u32 %v3326, 7
        %v3328 = vsub.s32 %v3325, %v3327
        %v3329 = vrot.slane %v3313, %v3328
        %v3331 = vunpack.c.l.s4 1966171168
        %v3332 = vunpack.c.0.s8 %v3331
        %v3333 = vlaneseq
        %v3334 = vshrl.u32 %v3333, 7
        %v3335 = vsub.s32 %v3332, %v3334
        %v3336 = vrot.slane %v3314, %v3335
        %v3338 = vunpack.c.l.s4 1966171168
        %v3339 = vunpack.c.0.s8 %v3338
        %v3340 = vlaneseq
        %v3341 = vshrl.u32 %v3340, 7
        %v3342 = vsub.s32 %v3339, %v3341
        %v3343 = vrot.slane %v3315, %v3342
        %v3344 = vcombine.low %v3322, %v3329
        %v3345 = vcombine.low %v3336, %v3343
        %v3347 = vunpack.c.l.s4 1966171168
        %v3348 = vunpack.c.0.s8 %v3347
        %v3349 = vlaneseq
        %v3350 = vshrl.u32 %v3349, 7
        %v3351 = vsub.s32 %v3348, %v3350
        %v3352 = vrot.slane %v3344, %v3351
        %v3354 = vunpack.c.l.s4 1966171168
        %v3355 = vunpack.c.0.s8 %v3354
        %v3356 = vlaneseq
        %v3357 = vshrl.u32 %v3356, 7
        %v3358 = vsub.s32 %v3355, %v3357
        %v3359 = vrot.slane %v3345, %v3358
        %v3360 = vcombine.low %v3352, %v3359
        %v3362 = vmul.f32 %v3255, %v3360
        %v3364 = vlaneseq
        %v3365 = vshrl.u32 %v3364, 7
        %v3366 = vsub.s32 0, %v3365
        %v3367 = vrot.slane %v3362, %v3366
        %v3368 = vlaneseq
        %v3369 = vshrl.u32 %v3368, 7
        %v3370 = vsub.s32 1, %v3369
        %v3371 = vrot.slane %v3362, %v3370
        %v3372 = vlaneseq
        %v3373 = vshrl.u32 %v3372, 7
        %v3374 = vsub.s32 2, %v3373
        %v3375 = vrot.slane %v3362, %v3374
        %v3376 = vlaneseq
        %v3377 = vshrl.u32 %v3376, 7
        %v3378 = vsub.s32 3, %v3377
        %v3379 = vrot.slane %v3362, %v3378
        %v3380 = vlaneseq
        %v3381 = vshrl.u32 %v3380, 7
        %v3382 = vsub.s32 4, %v3381
        %v3383 = vrot.slane %v3362, %v3382
        %v3384 = vlaneseq
        %v3385 = vshrl.u32 %v3384, 7
        %v3386 = vsub.s32 5, %v3385
        %v3387 = vrot.slane %v3362, %v3386
        %v3388 = vlaneseq
        %v3389 = vshrl.u32 %v3388, 7
        %v3390 = vsub.s32 6, %v3389
        %v3391 = vrot.slane %v3362, %v3390
        %v3392 = vlaneseq
        %v3393 = vshrl.u32 %v3392, 7
        %v3394 = vsub.s32 7, %v3393
        %v3395 = vrot.slane %v3362, %v3394
        %v3404 = vadd.f32 %v3288, %v3367
        %v3405 = vadd.f32 %v3289, %v3371
        %v3406 = vadd.f32 %v3290, %v3375
        %v3407 = vadd.f32 %v3291, %v3379
        %v3408 = vadd.f32 %v3292, %v3383
        %v3409 = vadd.f32 %v3293, %v3387
        %v3410 = vadd.f32 %v3294, %v3391
        %v3411 = vadd.f32 %v3295, %v3395
        %s3412 = sadd.s32 %s312, 1024
        %v3413 = vstv %s3412
        %v3414 = vadd.s32 %v3413, %v1816
        %v3415 = vadd.s32 %v3413, %v1817
        %v3416 = vadd.s32 %v3413, %v1818
        %v3417 = vadd.s32 %v3413, %v1819
        %v3418 = vadd.s32 %v3413, %v1820
        %v3419 = vadd.s32 %v3413, %v1821
        %v3420 = vadd.s32 %v3413, %v1822
        %v3421 = vadd.s32 %v3413, %v1823
        %vm3422 = vcmp.lt.s32.totalorder %v3414, %v1833
        %vm3423 = vcmp.lt.s32.totalorder %v3415, %v1833
        %vm3424 = vcmp.lt.s32.totalorder %v3416, %v1833
        %vm3425 = vcmp.lt.s32.totalorder %v3417, %v1833
        %vm3426 = vcmp.lt.s32.totalorder %v3418, %v1833
        %vm3427 = vcmp.lt.s32.totalorder %v3419, %v1833
        %vm3428 = vcmp.lt.s32.totalorder %v3420, %v1833
        %vm3429 = vcmp.lt.s32.totalorder %v3421, %v1833
        %v3430 = vsel %vm3422, %v3404, 0.0
        %v3431 = vsel %vm3423, %v3405, 0.0
        %v3432 = vsel %vm3424, %v3406, 0.0
        %v3433 = vsel %vm3425, %v3407, 0.0
        %v3434 = vsel %vm3426, %v3408, 0.0
        %v3435 = vsel %vm3427, %v3409, 0.0
        %v3436 = vsel %vm3428, %v3410, 0.0
        %v3437 = vsel %vm3429, %v3411, 0.0
        %v3438 = vld [vmem:[#allocation2 + $0x8] sm:$0xff]
        %v3447 = vcombine.low %v3430, %v3431
        %v3448 = vcombine.low %v3432, %v3433
        %v3449 = vcombine.low %v3434, %v3435
        %v3450 = vcombine.low %v3436, %v3437
        %v3452 = vunpack.c.l.s4 1966171168
        %v3453 = vunpack.c.0.s8 %v3452
        %v3454 = vlaneseq
        %v3455 = vshrl.u32 %v3454, 7
        %v3456 = vsub.s32 %v3453, %v3455
        %v3457 = vrot.slane %v3447, %v3456
        %v3459 = vunpack.c.l.s4 1966171168
        %v3460 = vunpack.c.0.s8 %v3459
        %v3461 = vlaneseq
        %v3462 = vshrl.u32 %v3461, 7
        %v3463 = vsub.s32 %v3460, %v3462
        %v3464 = vrot.slane %v3448, %v3463
        %v3466 = vunpack.c.l.s4 1966171168
        %v3467 = vunpack.c.0.s8 %v3466
        %v3468 = vlaneseq
        %v3469 = vshrl.u32 %v3468, 7
        %v3470 = vsub.s32 %v3467, %v3469
        %v3471 = vrot.slane %v3449, %v3470
        %v3473 = vunpack.c.l.s4 1966171168
        %v3474 = vunpack.c.0.s8 %v3473
        %v3475 = vlaneseq
        %v3476 = vshrl.u32 %v3475, 7
        %v3477 = vsub.s32 %v3474, %v3476
        %v3478 = vrot.slane %v3450, %v3477
        %v3479 = vcombine.low %v3457, %v3464
        %v3480 = vcombine.low %v3471, %v3478
        %v3482 = vunpack.c.l.s4 1966171168
        %v3483 = vunpack.c.0.s8 %v3482
        %v3484 = vlaneseq
        %v3485 = vshrl.u32 %v3484, 7
        %v3486 = vsub.s32 %v3483, %v3485
        %v3487 = vrot.slane %v3479, %v3486
        %v3489 = vunpack.c.l.s4 1966171168
        %v3490 = vunpack.c.0.s8 %v3489
        %v3491 = vlaneseq
        %v3492 = vshrl.u32 %v3491, 7
        %v3493 = vsub.s32 %v3490, %v3492
        %v3494 = vrot.slane %v3480, %v3493
        %v3495 = vcombine.low %v3487, %v3494
        %v3497 = vadd.f32 %v3438, %v3495
        %3498 = vst [vmem:[#allocation2 + $0x8] sm:$0xff] %v3497
        %v3499 = vld [vmem:[%s245 + $0x40] sm:$0xff]
        %v3500 = vld [vmem:[%s245 + $0x48] sm:$0xff]
        %v3501 = vld [vmem:[%s245 + $0x50] sm:$0xff]
        %v3502 = vld [vmem:[%s245 + $0x58] sm:$0xff]
        %v3503 = vunpack.c.l.bf16 %v3499
        %v3504 = vunpack.c.h.bf16 %v3499
        %v3505 = vunpack.c.l.bf16 %v3500
        %v3506 = vunpack.c.h.bf16 %v3500
        %v3507 = vunpack.c.l.bf16 %v3501
        %v3508 = vunpack.c.h.bf16 %v3501
        %v3509 = vunpack.c.l.bf16 %v3502
        %v3510 = vunpack.c.h.bf16 %v3502
        %v3511 = vld [vmem:[%s254 + $0x40] sm:$0xff]
        %v3512 = vld [vmem:[%s254 + $0x48] sm:$0xff]
        %v3513 = vld [vmem:[%s254 + $0x50] sm:$0xff]
        %v3514 = vld [vmem:[%s254 + $0x58] sm:$0xff]
        %v3515 = vunpack.c.l.bf16 %v3511
        %v3516 = vunpack.c.h.bf16 %v3511
        %v3517 = vunpack.c.l.bf16 %v3512
        %v3518 = vunpack.c.h.bf16 %v3512
        %v3519 = vunpack.c.l.bf16 %v3513
        %v3520 = vunpack.c.h.bf16 %v3513
        %v3521 = vunpack.c.l.bf16 %v3514
        %v3522 = vunpack.c.h.bf16 %v3514
        %v3523 = vmul.f32 %v3503, %v3503
        %v3524 = vmul.f32 %v3504, %v3504
        %v3525 = vmul.f32 %v3505, %v3505
        %v3526 = vmul.f32 %v3506, %v3506
        %v3527 = vmul.f32 %v3507, %v3507
        %v3528 = vmul.f32 %v3508, %v3508
        %v3529 = vmul.f32 %v3509, %v3509
        %v3530 = vmul.f32 %v3510, %v3510
        %v3531 = vadd.f32 %v3523, 0.0
        %v3532 = vadd.f32 %v3524, 0.0
        %v3533 = vadd.f32 %v3525, 0.0
        %v3534 = vadd.f32 %v3526, 0.0
        %v3535 = vadd.f32 %v3527, 0.0
        %v3536 = vadd.f32 %v3528, 0.0
        %v3537 = vadd.f32 %v3529, 0.0
        %v3538 = vadd.f32 %v3530, 0.0
        %v3539 = vmul.f32 %v3515, %v3515
        %v3540 = vmul.f32 %v3516, %v3516
        %v3541 = vmul.f32 %v3517, %v3517
        %v3542 = vmul.f32 %v3518, %v3518
        %v3543 = vmul.f32 %v3519, %v3519
        %v3544 = vmul.f32 %v3520, %v3520
        %v3545 = vmul.f32 %v3521, %v3521
        %v3546 = vmul.f32 %v3522, %v3522
        %v3547 = vadd.f32 %v3539, 0.0
        %v3548 = vadd.f32 %v3540, 0.0
        %v3549 = vadd.f32 %v3541, 0.0
        %v3550 = vadd.f32 %v3542, 0.0
        %v3551 = vadd.f32 %v3543, 0.0
        %v3552 = vadd.f32 %v3544, 0.0
        %v3553 = vadd.f32 %v3545, 0.0
        %v3554 = vadd.f32 %v3546, 0.0
        %v3555 = vmul.f32 %v3503, %v3515
        %v3556 = vmul.f32 %v3504, %v3516
        %v3557 = vmul.f32 %v3505, %v3517
        %v3558 = vmul.f32 %v3506, %v3518
        %v3559 = vmul.f32 %v3507, %v3519
        %v3560 = vmul.f32 %v3508, %v3520
        %v3561 = vmul.f32 %v3509, %v3521
        %v3562 = vmul.f32 %v3510, %v3522
        %v3563 = vadd.f32 %v3555, 0.0
        %v3564 = vadd.f32 %v3556, 0.0
        %v3565 = vadd.f32 %v3557, 0.0
        %v3566 = vadd.f32 %v3558, 0.0
        %v3567 = vadd.f32 %v3559, 0.0
        %v3568 = vadd.f32 %v3560, 0.0
        %v3569 = vadd.f32 %v3561, 0.0
        %v3570 = vadd.f32 %v3562, 0.0
        %v3571 = vld [vmem:[%s245 + $0xc0] sm:$0xff]
        %v3572 = vld [vmem:[%s245 + $0xc8] sm:$0xff]
        %v3573 = vld [vmem:[%s245 + $0xd0] sm:$0xff]
        %v3574 = vld [vmem:[%s245 + $0xd8] sm:$0xff]
        %v3575 = vunpack.c.l.bf16 %v3571
        %v3576 = vunpack.c.h.bf16 %v3571
        %v3577 = vunpack.c.l.bf16 %v3572
        %v3578 = vunpack.c.h.bf16 %v3572
        %v3579 = vunpack.c.l.bf16 %v3573
        %v3580 = vunpack.c.h.bf16 %v3573
        %v3581 = vunpack.c.l.bf16 %v3574
        %v3582 = vunpack.c.h.bf16 %v3574
        %v3583 = vld [vmem:[%s254 + $0xc0] sm:$0xff]
        %v3584 = vld [vmem:[%s254 + $0xc8] sm:$0xff]
        %v3585 = vld [vmem:[%s254 + $0xd0] sm:$0xff]
        %v3586 = vld [vmem:[%s254 + $0xd8] sm:$0xff]
        %v3587 = vunpack.c.l.bf16 %v3583
        %v3588 = vunpack.c.h.bf16 %v3583
        %v3589 = vunpack.c.l.bf16 %v3584
        %v3590 = vunpack.c.h.bf16 %v3584
        %v3591 = vunpack.c.l.bf16 %v3585
        %v3592 = vunpack.c.h.bf16 %v3585
        %v3593 = vunpack.c.l.bf16 %v3586
        %v3594 = vunpack.c.h.bf16 %v3586
        %v3595 = vmul.f32 %v3575, %v3575
        %v3596 = vmul.f32 %v3576, %v3576
        %v3597 = vmul.f32 %v3577, %v3577
        %v3598 = vmul.f32 %v3578, %v3578
        %v3599 = vmul.f32 %v3579, %v3579
        %v3600 = vmul.f32 %v3580, %v3580
        %v3601 = vmul.f32 %v3581, %v3581
        %v3602 = vmul.f32 %v3582, %v3582
        %v3603 = vadd.f32 %v3531, %v3595
        %v3604 = vadd.f32 %v3532, %v3596
        %v3605 = vadd.f32 %v3533, %v3597
        %v3606 = vadd.f32 %v3534, %v3598
        %v3607 = vadd.f32 %v3535, %v3599
        %v3608 = vadd.f32 %v3536, %v3600
        %v3609 = vadd.f32 %v3537, %v3601
        %v3610 = vadd.f32 %v3538, %v3602
        %v3611 = vmul.f32 %v3587, %v3587
        %v3612 = vmul.f32 %v3588, %v3588
        %v3613 = vmul.f32 %v3589, %v3589
        %v3614 = vmul.f32 %v3590, %v3590
        %v3615 = vmul.f32 %v3591, %v3591
        %v3616 = vmul.f32 %v3592, %v3592
        %v3617 = vmul.f32 %v3593, %v3593
        %v3618 = vmul.f32 %v3594, %v3594
        %v3619 = vadd.f32 %v3547, %v3611
        %v3620 = vadd.f32 %v3548, %v3612
        %v3621 = vadd.f32 %v3549, %v3613
        %v3622 = vadd.f32 %v3550, %v3614
        %v3623 = vadd.f32 %v3551, %v3615
        %v3624 = vadd.f32 %v3552, %v3616
        %v3625 = vadd.f32 %v3553, %v3617
        %v3626 = vadd.f32 %v3554, %v3618
        %v3627 = vmul.f32 %v3575, %v3587
        %v3628 = vmul.f32 %v3576, %v3588
        %v3629 = vmul.f32 %v3577, %v3589
        %v3630 = vmul.f32 %v3578, %v3590
        %v3631 = vmul.f32 %v3579, %v3591
        %v3632 = vmul.f32 %v3580, %v3592
        %v3633 = vmul.f32 %v3581, %v3593
        %v3634 = vmul.f32 %v3582, %v3594
        %v3635 = vadd.f32 %v3563, %v3627
        %v3636 = vadd.f32 %v3564, %v3628
        %v3637 = vadd.f32 %v3565, %v3629
        %v3638 = vadd.f32 %v3566, %v3630
        %v3639 = vadd.f32 %v3567, %v3631
        %v3640 = vadd.f32 %v3568, %v3632
        %v3641 = vadd.f32 %v3569, %v3633
        %v3642 = vadd.f32 %v3570, %v3634
        %v3643 = vld [vmem:[%s245 + $0x140] sm:$0xff]
        %v3644 = vld [vmem:[%s245 + $0x148] sm:$0xff]
        %v3645 = vld [vmem:[%s245 + $0x150] sm:$0xff]
        %v3646 = vld [vmem:[%s245 + $0x158] sm:$0xff]
        %v3647 = vunpack.c.l.bf16 %v3643
        %v3648 = vunpack.c.h.bf16 %v3643
        %v3649 = vunpack.c.l.bf16 %v3644
        %v3650 = vunpack.c.h.bf16 %v3644
        %v3651 = vunpack.c.l.bf16 %v3645
        %v3652 = vunpack.c.h.bf16 %v3645
        %v3653 = vunpack.c.l.bf16 %v3646
        %v3654 = vunpack.c.h.bf16 %v3646
        %v3655 = vld [vmem:[%s254 + $0x140] sm:$0xff]
        %v3656 = vld [vmem:[%s254 + $0x148] sm:$0xff]
        %v3657 = vld [vmem:[%s254 + $0x150] sm:$0xff]
        %v3658 = vld [vmem:[%s254 + $0x158] sm:$0xff]
        %v3659 = vunpack.c.l.bf16 %v3655
        %v3660 = vunpack.c.h.bf16 %v3655
        %v3661 = vunpack.c.l.bf16 %v3656
        %v3662 = vunpack.c.h.bf16 %v3656
        %v3663 = vunpack.c.l.bf16 %v3657
        %v3664 = vunpack.c.h.bf16 %v3657
        %v3665 = vunpack.c.l.bf16 %v3658
        %v3666 = vunpack.c.h.bf16 %v3658
        %v3667 = vmul.f32 %v3647, %v3647
        %v3668 = vmul.f32 %v3648, %v3648
        %v3669 = vmul.f32 %v3649, %v3649
        %v3670 = vmul.f32 %v3650, %v3650
        %v3671 = vmul.f32 %v3651, %v3651
        %v3672 = vmul.f32 %v3652, %v3652
        %v3673 = vmul.f32 %v3653, %v3653
        %v3674 = vmul.f32 %v3654, %v3654
        %v3675 = vadd.f32 %v3603, %v3667
        %v3676 = vadd.f32 %v3604, %v3668
        %v3677 = vadd.f32 %v3605, %v3669
        %v3678 = vadd.f32 %v3606, %v3670
        %v3679 = vadd.f32 %v3607, %v3671
        %v3680 = vadd.f32 %v3608, %v3672
        %v3681 = vadd.f32 %v3609, %v3673
        %v3682 = vadd.f32 %v3610, %v3674
        %v3683 = vmul.f32 %v3659, %v3659
        %v3684 = vmul.f32 %v3660, %v3660
        %v3685 = vmul.f32 %v3661, %v3661
        %v3686 = vmul.f32 %v3662, %v3662
        %v3687 = vmul.f32 %v3663, %v3663
        %v3688 = vmul.f32 %v3664, %v3664
        %v3689 = vmul.f32 %v3665, %v3665
        %v3690 = vmul.f32 %v3666, %v3666
        %v3691 = vadd.f32 %v3619, %v3683
        %v3692 = vadd.f32 %v3620, %v3684
        %v3693 = vadd.f32 %v3621, %v3685
        %v3694 = vadd.f32 %v3622, %v3686
        %v3695 = vadd.f32 %v3623, %v3687
        %v3696 = vadd.f32 %v3624, %v3688
        %v3697 = vadd.f32 %v3625, %v3689
        %v3698 = vadd.f32 %v3626, %v3690
        %v3699 = vmul.f32 %v3647, %v3659
        %v3700 = vmul.f32 %v3648, %v3660
        %v3701 = vmul.f32 %v3649, %v3661
        %v3702 = vmul.f32 %v3650, %v3662
        %v3703 = vmul.f32 %v3651, %v3663
        %v3704 = vmul.f32 %v3652, %v3664
        %v3705 = vmul.f32 %v3653, %v3665
        %v3706 = vmul.f32 %v3654, %v3666
        %v3707 = vadd.f32 %v3635, %v3699
        %v3708 = vadd.f32 %v3636, %v3700
        %v3709 = vadd.f32 %v3637, %v3701
        %v3710 = vadd.f32 %v3638, %v3702
        %v3711 = vadd.f32 %v3639, %v3703
        %v3712 = vadd.f32 %v3640, %v3704
        %v3713 = vadd.f32 %v3641, %v3705
        %v3714 = vadd.f32 %v3642, %v3706
        %v3715 = vld [vmem:[%s245 + $0x1c0] sm:$0xff]
        %v3716 = vld [vmem:[%s245 + $0x1c8] sm:$0xff]
        %v3717 = vld [vmem:[%s245 + $0x1d0] sm:$0xff]
        %v3718 = vld [vmem:[%s245 + $0x1d8] sm:$0xff]
        %v3719 = vunpack.c.l.bf16 %v3715
        %v3720 = vunpack.c.h.bf16 %v3715
        %v3721 = vunpack.c.l.bf16 %v3716
        %v3722 = vunpack.c.h.bf16 %v3716
        %v3723 = vunpack.c.l.bf16 %v3717
        %v3724 = vunpack.c.h.bf16 %v3717
        %v3725 = vunpack.c.l.bf16 %v3718
        %v3726 = vunpack.c.h.bf16 %v3718
        %v3727 = vld [vmem:[%s254 + $0x1c0] sm:$0xff]
        %v3728 = vld [vmem:[%s254 + $0x1c8] sm:$0xff]
        %v3729 = vld [vmem:[%s254 + $0x1d0] sm:$0xff]
        %v3730 = vld [vmem:[%s254 + $0x1d8] sm:$0xff]
        %v3731 = vunpack.c.l.bf16 %v3727
        %v3732 = vunpack.c.h.bf16 %v3727
        %v3733 = vunpack.c.l.bf16 %v3728
        %v3734 = vunpack.c.h.bf16 %v3728
        %v3735 = vunpack.c.l.bf16 %v3729
        %v3736 = vunpack.c.h.bf16 %v3729
        %v3737 = vunpack.c.l.bf16 %v3730
        %v3738 = vunpack.c.h.bf16 %v3730
        %v3739 = vmul.f32 %v3719, %v3719
        %v3740 = vmul.f32 %v3720, %v3720
        %v3741 = vmul.f32 %v3721, %v3721
        %v3742 = vmul.f32 %v3722, %v3722
        %v3743 = vmul.f32 %v3723, %v3723
        %v3744 = vmul.f32 %v3724, %v3724
        %v3745 = vmul.f32 %v3725, %v3725
        %v3746 = vmul.f32 %v3726, %v3726
        %v3747 = vadd.f32 %v3675, %v3739
        %v3748 = vadd.f32 %v3676, %v3740
        %v3749 = vadd.f32 %v3677, %v3741
        %v3750 = vadd.f32 %v3678, %v3742
        %v3751 = vadd.f32 %v3679, %v3743
        %v3752 = vadd.f32 %v3680, %v3744
        %v3753 = vadd.f32 %v3681, %v3745
        %v3754 = vadd.f32 %v3682, %v3746
        %v3755 = vmul.f32 %v3731, %v3731
        %v3756 = vmul.f32 %v3732, %v3732
        %v3757 = vmul.f32 %v3733, %v3733
        %v3758 = vmul.f32 %v3734, %v3734
        %v3759 = vmul.f32 %v3735, %v3735
        %v3760 = vmul.f32 %v3736, %v3736
        %v3761 = vmul.f32 %v3737, %v3737
        %v3762 = vmul.f32 %v3738, %v3738
        %v3763 = vadd.f32 %v3691, %v3755
        %v3764 = vadd.f32 %v3692, %v3756
        %v3765 = vadd.f32 %v3693, %v3757
        %v3766 = vadd.f32 %v3694, %v3758
        %v3767 = vadd.f32 %v3695, %v3759
        %v3768 = vadd.f32 %v3696, %v3760
        %v3769 = vadd.f32 %v3697, %v3761
        %v3770 = vadd.f32 %v3698, %v3762
        %v3771 = vmul.f32 %v3719, %v3731
        %v3772 = vmul.f32 %v3720, %v3732
        %v3773 = vmul.f32 %v3721, %v3733
        %v3774 = vmul.f32 %v3722, %v3734
        %v3775 = vmul.f32 %v3723, %v3735
        %v3776 = vmul.f32 %v3724, %v3736
        %v3777 = vmul.f32 %v3725, %v3737
        %v3778 = vmul.f32 %v3726, %v3738
        %v3779 = vadd.f32 %v3707, %v3771
        %v3780 = vadd.f32 %v3708, %v3772
        %v3781 = vadd.f32 %v3709, %v3773
        %v3782 = vadd.f32 %v3710, %v3774
        %v3783 = vadd.f32 %v3711, %v3775
        %v3784 = vadd.f32 %v3712, %v3776
        %v3785 = vadd.f32 %v3713, %v3777
        %v3786 = vadd.f32 %v3714, %v3778
        %v3787 = vld [vmem:[%s245 + $0x240] sm:$0xff]
        %v3788 = vld [vmem:[%s245 + $0x248] sm:$0xff]
        %v3789 = vld [vmem:[%s245 + $0x250] sm:$0xff]
        %v3790 = vld [vmem:[%s245 + $0x258] sm:$0xff]
        %v3791 = vunpack.c.l.bf16 %v3787
        %v3792 = vunpack.c.h.bf16 %v3787
        %v3793 = vunpack.c.l.bf16 %v3788
        %v3794 = vunpack.c.h.bf16 %v3788
        %v3795 = vunpack.c.l.bf16 %v3789
        %v3796 = vunpack.c.h.bf16 %v3789
        %v3797 = vunpack.c.l.bf16 %v3790
        %v3798 = vunpack.c.h.bf16 %v3790
        %v3799 = vld [vmem:[%s254 + $0x240] sm:$0xff]
        %v3800 = vld [vmem:[%s254 + $0x248] sm:$0xff]
        %v3801 = vld [vmem:[%s254 + $0x250] sm:$0xff]
        %v3802 = vld [vmem:[%s254 + $0x258] sm:$0xff]
        %v3803 = vunpack.c.l.bf16 %v3799
        %v3804 = vunpack.c.h.bf16 %v3799
        %v3805 = vunpack.c.l.bf16 %v3800
        %v3806 = vunpack.c.h.bf16 %v3800
        %v3807 = vunpack.c.l.bf16 %v3801
        %v3808 = vunpack.c.h.bf16 %v3801
        %v3809 = vunpack.c.l.bf16 %v3802
        %v3810 = vunpack.c.h.bf16 %v3802
        %v3811 = vmul.f32 %v3791, %v3791
        %v3812 = vmul.f32 %v3792, %v3792
        %v3813 = vmul.f32 %v3793, %v3793
        %v3814 = vmul.f32 %v3794, %v3794
        %v3815 = vmul.f32 %v3795, %v3795
        %v3816 = vmul.f32 %v3796, %v3796
        %v3817 = vmul.f32 %v3797, %v3797
        %v3818 = vmul.f32 %v3798, %v3798
        %v3819 = vadd.f32 %v3747, %v3811
        %v3820 = vadd.f32 %v3748, %v3812
        %v3821 = vadd.f32 %v3749, %v3813
        %v3822 = vadd.f32 %v3750, %v3814
        %v3823 = vadd.f32 %v3751, %v3815
        %v3824 = vadd.f32 %v3752, %v3816
        %v3825 = vadd.f32 %v3753, %v3817
        %v3826 = vadd.f32 %v3754, %v3818
        %v3827 = vmul.f32 %v3803, %v3803
        %v3828 = vmul.f32 %v3804, %v3804
        %v3829 = vmul.f32 %v3805, %v3805
        %v3830 = vmul.f32 %v3806, %v3806
        %v3831 = vmul.f32 %v3807, %v3807
        %v3832 = vmul.f32 %v3808, %v3808
        %v3833 = vmul.f32 %v3809, %v3809
        %v3834 = vmul.f32 %v3810, %v3810
        %v3835 = vadd.f32 %v3763, %v3827
        %v3836 = vadd.f32 %v3764, %v3828
        %v3837 = vadd.f32 %v3765, %v3829
        %v3838 = vadd.f32 %v3766, %v3830
        %v3839 = vadd.f32 %v3767, %v3831
        %v3840 = vadd.f32 %v3768, %v3832
        %v3841 = vadd.f32 %v3769, %v3833
        %v3842 = vadd.f32 %v3770, %v3834
        %v3843 = vmul.f32 %v3791, %v3803
        %v3844 = vmul.f32 %v3792, %v3804
        %v3845 = vmul.f32 %v3793, %v3805
        %v3846 = vmul.f32 %v3794, %v3806
        %v3847 = vmul.f32 %v3795, %v3807
        %v3848 = vmul.f32 %v3796, %v3808
        %v3849 = vmul.f32 %v3797, %v3809
        %v3850 = vmul.f32 %v3798, %v3810
        %v3851 = vadd.f32 %v3779, %v3843
        %v3852 = vadd.f32 %v3780, %v3844
        %v3853 = vadd.f32 %v3781, %v3845
        %v3854 = vadd.f32 %v3782, %v3846
        %v3855 = vadd.f32 %v3783, %v3847
        %v3856 = vadd.f32 %v3784, %v3848
        %v3857 = vadd.f32 %v3785, %v3849
        %v3858 = vadd.f32 %v3786, %v3850
        %v3859 = vld [vmem:[%s245 + $0x2c0] sm:$0xff]
        %v3860 = vld [vmem:[%s245 + $0x2c8] sm:$0xff]
        %v3861 = vld [vmem:[%s245 + $0x2d0] sm:$0xff]
        %v3862 = vld [vmem:[%s245 + $0x2d8] sm:$0xff]
        %v3863 = vunpack.c.l.bf16 %v3859
        %v3864 = vunpack.c.h.bf16 %v3859
        %v3865 = vunpack.c.l.bf16 %v3860
        %v3866 = vunpack.c.h.bf16 %v3860
        %v3867 = vunpack.c.l.bf16 %v3861
        %v3868 = vunpack.c.h.bf16 %v3861
        %v3869 = vunpack.c.l.bf16 %v3862
        %v3870 = vunpack.c.h.bf16 %v3862
        %v3871 = vld [vmem:[%s254 + $0x2c0] sm:$0xff]
        %v3872 = vld [vmem:[%s254 + $0x2c8] sm:$0xff]
        %v3873 = vld [vmem:[%s254 + $0x2d0] sm:$0xff]
        %v3874 = vld [vmem:[%s254 + $0x2d8] sm:$0xff]
        %v3875 = vunpack.c.l.bf16 %v3871
        %v3876 = vunpack.c.h.bf16 %v3871
        %v3877 = vunpack.c.l.bf16 %v3872
        %v3878 = vunpack.c.h.bf16 %v3872
        %v3879 = vunpack.c.l.bf16 %v3873
        %v3880 = vunpack.c.h.bf16 %v3873
        %v3881 = vunpack.c.l.bf16 %v3874
        %v3882 = vunpack.c.h.bf16 %v3874
        %v3883 = vmul.f32 %v3863, %v3863
        %v3884 = vmul.f32 %v3864, %v3864
        %v3885 = vmul.f32 %v3865, %v3865
        %v3886 = vmul.f32 %v3866, %v3866
        %v3887 = vmul.f32 %v3867, %v3867
        %v3888 = vmul.f32 %v3868, %v3868
        %v3889 = vmul.f32 %v3869, %v3869
        %v3890 = vmul.f32 %v3870, %v3870
        %v3891 = vadd.f32 %v3819, %v3883
        %v3892 = vadd.f32 %v3820, %v3884
        %v3893 = vadd.f32 %v3821, %v3885
        %v3894 = vadd.f32 %v3822, %v3886
        %v3895 = vadd.f32 %v3823, %v3887
        %v3896 = vadd.f32 %v3824, %v3888
        %v3897 = vadd.f32 %v3825, %v3889
        %v3898 = vadd.f32 %v3826, %v3890
        %v3899 = vmul.f32 %v3875, %v3875
        %v3900 = vmul.f32 %v3876, %v3876
        %v3901 = vmul.f32 %v3877, %v3877
        %v3902 = vmul.f32 %v3878, %v3878
        %v3903 = vmul.f32 %v3879, %v3879
        %v3904 = vmul.f32 %v3880, %v3880
        %v3905 = vmul.f32 %v3881, %v3881
        %v3906 = vmul.f32 %v3882, %v3882
        %v3907 = vadd.f32 %v3835, %v3899
        %v3908 = vadd.f32 %v3836, %v3900
        %v3909 = vadd.f32 %v3837, %v3901
        %v3910 = vadd.f32 %v3838, %v3902
        %v3911 = vadd.f32 %v3839, %v3903
        %v3912 = vadd.f32 %v3840, %v3904
        %v3913 = vadd.f32 %v3841, %v3905
        %v3914 = vadd.f32 %v3842, %v3906
        %v3915 = vmul.f32 %v3863, %v3875
        %v3916 = vmul.f32 %v3864, %v3876
        %v3917 = vmul.f32 %v3865, %v3877
        %v3918 = vmul.f32 %v3866, %v3878
        %v3919 = vmul.f32 %v3867, %v3879
        %v3920 = vmul.f32 %v3868, %v3880
        %v3921 = vmul.f32 %v3869, %v3881
        %v3922 = vmul.f32 %v3870, %v3882
        %v3923 = vadd.f32 %v3851, %v3915
        %v3924 = vadd.f32 %v3852, %v3916
        %v3925 = vadd.f32 %v3853, %v3917
        %v3926 = vadd.f32 %v3854, %v3918
        %v3927 = vadd.f32 %v3855, %v3919
        %v3928 = vadd.f32 %v3856, %v3920
        %v3929 = vadd.f32 %v3857, %v3921
        %v3930 = vadd.f32 %v3858, %v3922
        %v3931 = vld [vmem:[%s245 + $0x340] sm:$0xff]
        %v3932 = vld [vmem:[%s245 + $0x348] sm:$0xff]
        %v3933 = vld [vmem:[%s245 + $0x350] sm:$0xff]
        %v3934 = vld [vmem:[%s245 + $0x358] sm:$0xff]
        %v3935 = vunpack.c.l.bf16 %v3931
        %v3936 = vunpack.c.h.bf16 %v3931
        %v3937 = vunpack.c.l.bf16 %v3932
        %v3938 = vunpack.c.h.bf16 %v3932
        %v3939 = vunpack.c.l.bf16 %v3933
        %v3940 = vunpack.c.h.bf16 %v3933
        %v3941 = vunpack.c.l.bf16 %v3934
        %v3942 = vunpack.c.h.bf16 %v3934
        %v3943 = vld [vmem:[%s254 + $0x340] sm:$0xff]
        %v3944 = vld [vmem:[%s254 + $0x348] sm:$0xff]
        %v3945 = vld [vmem:[%s254 + $0x350] sm:$0xff]
        %v3946 = vld [vmem:[%s254 + $0x358] sm:$0xff]
        %v3947 = vunpack.c.l.bf16 %v3943
        %v3948 = vunpack.c.h.bf16 %v3943
        %v3949 = vunpack.c.l.bf16 %v3944
        %v3950 = vunpack.c.h.bf16 %v3944
        %v3951 = vunpack.c.l.bf16 %v3945
        %v3952 = vunpack.c.h.bf16 %v3945
        %v3953 = vunpack.c.l.bf16 %v3946
        %v3954 = vunpack.c.h.bf16 %v3946
        %v3955 = vmul.f32 %v3935, %v3935
        %v3956 = vmul.f32 %v3936, %v3936
        %v3957 = vmul.f32 %v3937, %v3937
        %v3958 = vmul.f32 %v3938, %v3938
        %v3959 = vmul.f32 %v3939, %v3939
        %v3960 = vmul.f32 %v3940, %v3940
        %v3961 = vmul.f32 %v3941, %v3941
        %v3962 = vmul.f32 %v3942, %v3942
        %v3963 = vadd.f32 %v3891, %v3955
        %v3964 = vadd.f32 %v3892, %v3956
        %v3965 = vadd.f32 %v3893, %v3957
        %v3966 = vadd.f32 %v3894, %v3958
        %v3967 = vadd.f32 %v3895, %v3959
        %v3968 = vadd.f32 %v3896, %v3960
        %v3969 = vadd.f32 %v3897, %v3961
        %v3970 = vadd.f32 %v3898, %v3962
        %v3971 = vmul.f32 %v3947, %v3947
        %v3972 = vmul.f32 %v3948, %v3948
        %v3973 = vmul.f32 %v3949, %v3949
        %v3974 = vmul.f32 %v3950, %v3950
        %v3975 = vmul.f32 %v3951, %v3951
        %v3976 = vmul.f32 %v3952, %v3952
        %v3977 = vmul.f32 %v3953, %v3953
        %v3978 = vmul.f32 %v3954, %v3954
        %v3979 = vadd.f32 %v3907, %v3971
        %v3980 = vadd.f32 %v3908, %v3972
        %v3981 = vadd.f32 %v3909, %v3973
        %v3982 = vadd.f32 %v3910, %v3974
        %v3983 = vadd.f32 %v3911, %v3975
        %v3984 = vadd.f32 %v3912, %v3976
        %v3985 = vadd.f32 %v3913, %v3977
        %v3986 = vadd.f32 %v3914, %v3978
        %v3987 = vmul.f32 %v3935, %v3947
        %v3988 = vmul.f32 %v3936, %v3948
        %v3989 = vmul.f32 %v3937, %v3949
        %v3990 = vmul.f32 %v3938, %v3950
        %v3991 = vmul.f32 %v3939, %v3951
        %v3992 = vmul.f32 %v3940, %v3952
        %v3993 = vmul.f32 %v3941, %v3953
        %v3994 = vmul.f32 %v3942, %v3954
        %v3995 = vadd.f32 %v3923, %v3987
        %v3996 = vadd.f32 %v3924, %v3988
        %v3997 = vadd.f32 %v3925, %v3989
        %v3998 = vadd.f32 %v3926, %v3990
        %v3999 = vadd.f32 %v3927, %v3991
        %v4000 = vadd.f32 %v3928, %v3992
        %v4001 = vadd.f32 %v3929, %v3993
        %v4002 = vadd.f32 %v3930, %v3994
        %v4003 = vld [vmem:[%s245 + $0x3c0] sm:$0xff]
        %v4004 = vld [vmem:[%s245 + $0x3c8] sm:$0xff]
        %v4005 = vld [vmem:[%s245 + $0x3d0] sm:$0xff]
        %v4006 = vld [vmem:[%s245 + $0x3d8] sm:$0xff]
        %v4007 = vunpack.c.l.bf16 %v4003
        %v4008 = vunpack.c.h.bf16 %v4003
        %v4009 = vunpack.c.l.bf16 %v4004
        %v4010 = vunpack.c.h.bf16 %v4004
        %v4011 = vunpack.c.l.bf16 %v4005
        %v4012 = vunpack.c.h.bf16 %v4005
        %v4013 = vunpack.c.l.bf16 %v4006
        %v4014 = vunpack.c.h.bf16 %v4006
        %v4015 = vld [vmem:[%s254 + $0x3c0] sm:$0xff]
        %v4016 = vld [vmem:[%s254 + $0x3c8] sm:$0xff]
        %v4017 = vld [vmem:[%s254 + $0x3d0] sm:$0xff]
        %v4018 = vld [vmem:[%s254 + $0x3d8] sm:$0xff]
        %v4019 = vunpack.c.l.bf16 %v4015
        %v4020 = vunpack.c.h.bf16 %v4015
        %v4021 = vunpack.c.l.bf16 %v4016
        %v4022 = vunpack.c.h.bf16 %v4016
        %v4023 = vunpack.c.l.bf16 %v4017
        %v4024 = vunpack.c.h.bf16 %v4017
        %v4025 = vunpack.c.l.bf16 %v4018
        %v4026 = vunpack.c.h.bf16 %v4018
        %v4027 = vmul.f32 %v4007, %v4007
        %v4028 = vmul.f32 %v4008, %v4008
        %v4029 = vmul.f32 %v4009, %v4009
        %v4030 = vmul.f32 %v4010, %v4010
        %v4031 = vmul.f32 %v4011, %v4011
        %v4032 = vmul.f32 %v4012, %v4012
        %v4033 = vmul.f32 %v4013, %v4013
        %v4034 = vmul.f32 %v4014, %v4014
        %v4035 = vadd.f32 %v3963, %v4027
        %v4036 = vadd.f32 %v3964, %v4028
        %v4037 = vadd.f32 %v3965, %v4029
        %v4038 = vadd.f32 %v3966, %v4030
        %v4039 = vadd.f32 %v3967, %v4031
        %v4040 = vadd.f32 %v3968, %v4032
        %v4041 = vadd.f32 %v3969, %v4033
        %v4042 = vadd.f32 %v3970, %v4034
        %v4043 = vmul.f32 %v4019, %v4019
        %v4044 = vmul.f32 %v4020, %v4020
        %v4045 = vmul.f32 %v4021, %v4021
        %v4046 = vmul.f32 %v4022, %v4022
        %v4047 = vmul.f32 %v4023, %v4023
        %v4048 = vmul.f32 %v4024, %v4024
        %v4049 = vmul.f32 %v4025, %v4025
        %v4050 = vmul.f32 %v4026, %v4026
        %v4051 = vadd.f32 %v3979, %v4043
        %v4052 = vadd.f32 %v3980, %v4044
        %v4053 = vadd.f32 %v3981, %v4045
        %v4054 = vadd.f32 %v3982, %v4046
        %v4055 = vadd.f32 %v3983, %v4047
        %v4056 = vadd.f32 %v3984, %v4048
        %v4057 = vadd.f32 %v3985, %v4049
        %v4058 = vadd.f32 %v3986, %v4050
        %v4059 = vmul.f32 %v4007, %v4019
        %v4060 = vmul.f32 %v4008, %v4020
        %v4061 = vmul.f32 %v4009, %v4021
        %v4062 = vmul.f32 %v4010, %v4022
        %v4063 = vmul.f32 %v4011, %v4023
        %v4064 = vmul.f32 %v4012, %v4024
        %v4065 = vmul.f32 %v4013, %v4025
        %v4066 = vmul.f32 %v4014, %v4026
        %v4067 = vadd.f32 %v3995, %v4059
        %v4068 = vadd.f32 %v3996, %v4060
        %v4069 = vadd.f32 %v3997, %v4061
        %v4070 = vadd.f32 %v3998, %v4062
        %v4071 = vadd.f32 %v3999, %v4063
        %v4072 = vadd.f32 %v4000, %v4064
        %v4073 = vadd.f32 %v4001, %v4065
        %v4074 = vadd.f32 %v4002, %v4066
        %v4075 = vld [vmem:[%s245 + $0x440] sm:$0xff]
        %v4076 = vld [vmem:[%s245 + $0x448] sm:$0xff]
        %v4077 = vld [vmem:[%s245 + $0x450] sm:$0xff]
        %v4078 = vld [vmem:[%s245 + $0x458] sm:$0xff]
        %v4079 = vunpack.c.l.bf16 %v4075
        %v4080 = vunpack.c.h.bf16 %v4075
        %v4081 = vunpack.c.l.bf16 %v4076
        %v4082 = vunpack.c.h.bf16 %v4076
        %v4083 = vunpack.c.l.bf16 %v4077
        %v4084 = vunpack.c.h.bf16 %v4077
        %v4085 = vunpack.c.l.bf16 %v4078
        %v4086 = vunpack.c.h.bf16 %v4078
        %v4087 = vld [vmem:[%s254 + $0x440] sm:$0xff]
        %v4088 = vld [vmem:[%s254 + $0x448] sm:$0xff]
        %v4089 = vld [vmem:[%s254 + $0x450] sm:$0xff]
        %v4090 = vld [vmem:[%s254 + $0x458] sm:$0xff]
        %v4091 = vunpack.c.l.bf16 %v4087
        %v4092 = vunpack.c.h.bf16 %v4087
        %v4093 = vunpack.c.l.bf16 %v4088
        %v4094 = vunpack.c.h.bf16 %v4088
        %v4095 = vunpack.c.l.bf16 %v4089
        %v4096 = vunpack.c.h.bf16 %v4089
        %v4097 = vunpack.c.l.bf16 %v4090
        %v4098 = vunpack.c.h.bf16 %v4090
        %v4099 = vmul.f32 %v4079, %v4079
        %v4100 = vmul.f32 %v4080, %v4080
        %v4101 = vmul.f32 %v4081, %v4081
        %v4102 = vmul.f32 %v4082, %v4082
        %v4103 = vmul.f32 %v4083, %v4083
        %v4104 = vmul.f32 %v4084, %v4084
        %v4105 = vmul.f32 %v4085, %v4085
        %v4106 = vmul.f32 %v4086, %v4086
        %v4107 = vadd.f32 %v4035, %v4099
        %v4108 = vadd.f32 %v4036, %v4100
        %v4109 = vadd.f32 %v4037, %v4101
        %v4110 = vadd.f32 %v4038, %v4102
        %v4111 = vadd.f32 %v4039, %v4103
        %v4112 = vadd.f32 %v4040, %v4104
        %v4113 = vadd.f32 %v4041, %v4105
        %v4114 = vadd.f32 %v4042, %v4106
        %v4115 = vmul.f32 %v4091, %v4091
        %v4116 = vmul.f32 %v4092, %v4092
        %v4117 = vmul.f32 %v4093, %v4093
        %v4118 = vmul.f32 %v4094, %v4094
        %v4119 = vmul.f32 %v4095, %v4095
        %v4120 = vmul.f32 %v4096, %v4096
        %v4121 = vmul.f32 %v4097, %v4097
        %v4122 = vmul.f32 %v4098, %v4098
        %v4123 = vadd.f32 %v4051, %v4115
        %v4124 = vadd.f32 %v4052, %v4116
        %v4125 = vadd.f32 %v4053, %v4117
        %v4126 = vadd.f32 %v4054, %v4118
        %v4127 = vadd.f32 %v4055, %v4119
        %v4128 = vadd.f32 %v4056, %v4120
        %v4129 = vadd.f32 %v4057, %v4121
        %v4130 = vadd.f32 %v4058, %v4122
        %v4131 = vmul.f32 %v4079, %v4091
        %v4132 = vmul.f32 %v4080, %v4092
        %v4133 = vmul.f32 %v4081, %v4093
        %v4134 = vmul.f32 %v4082, %v4094
        %v4135 = vmul.f32 %v4083, %v4095
        %v4136 = vmul.f32 %v4084, %v4096
        %v4137 = vmul.f32 %v4085, %v4097
        %v4138 = vmul.f32 %v4086, %v4098
        %v4139 = vadd.f32 %v4067, %v4131
        %v4140 = vadd.f32 %v4068, %v4132
        %v4141 = vadd.f32 %v4069, %v4133
        %v4142 = vadd.f32 %v4070, %v4134
        %v4143 = vadd.f32 %v4071, %v4135
        %v4144 = vadd.f32 %v4072, %v4136
        %v4145 = vadd.f32 %v4073, %v4137
        %v4146 = vadd.f32 %v4074, %v4138
        %v4147 = vld [vmem:[%s245 + $0x4c0] sm:$0xff]
        %v4148 = vld [vmem:[%s245 + $0x4c8] sm:$0xff]
        %v4149 = vld [vmem:[%s245 + $0x4d0] sm:$0xff]
        %v4150 = vld [vmem:[%s245 + $0x4d8] sm:$0xff]
        %v4151 = vunpack.c.l.bf16 %v4147
        %v4152 = vunpack.c.h.bf16 %v4147
        %v4153 = vunpack.c.l.bf16 %v4148
        %v4154 = vunpack.c.h.bf16 %v4148
        %v4155 = vunpack.c.l.bf16 %v4149
        %v4156 = vunpack.c.h.bf16 %v4149
        %v4157 = vunpack.c.l.bf16 %v4150
        %v4158 = vunpack.c.h.bf16 %v4150
        %v4159 = vld [vmem:[%s254 + $0x4c0] sm:$0xff]
        %v4160 = vld [vmem:[%s254 + $0x4c8] sm:$0xff]
        %v4161 = vld [vmem:[%s254 + $0x4d0] sm:$0xff]
        %v4162 = vld [vmem:[%s254 + $0x4d8] sm:$0xff]
        %v4163 = vunpack.c.l.bf16 %v4159
        %v4164 = vunpack.c.h.bf16 %v4159
        %v4165 = vunpack.c.l.bf16 %v4160
        %v4166 = vunpack.c.h.bf16 %v4160
        %v4167 = vunpack.c.l.bf16 %v4161
        %v4168 = vunpack.c.h.bf16 %v4161
        %v4169 = vunpack.c.l.bf16 %v4162
        %v4170 = vunpack.c.h.bf16 %v4162
        %v4171 = vmul.f32 %v4151, %v4151
        %v4172 = vmul.f32 %v4152, %v4152
        %v4173 = vmul.f32 %v4153, %v4153
        %v4174 = vmul.f32 %v4154, %v4154
        %v4175 = vmul.f32 %v4155, %v4155
        %v4176 = vmul.f32 %v4156, %v4156
        %v4177 = vmul.f32 %v4157, %v4157
        %v4178 = vmul.f32 %v4158, %v4158
        %v4179 = vadd.f32 %v4107, %v4171
        %v4180 = vadd.f32 %v4108, %v4172
        %v4181 = vadd.f32 %v4109, %v4173
        %v4182 = vadd.f32 %v4110, %v4174
        %v4183 = vadd.f32 %v4111, %v4175
        %v4184 = vadd.f32 %v4112, %v4176
        %v4185 = vadd.f32 %v4113, %v4177
        %v4186 = vadd.f32 %v4114, %v4178
        %v4187 = vmul.f32 %v4163, %v4163
        %v4188 = vmul.f32 %v4164, %v4164
        %v4189 = vmul.f32 %v4165, %v4165
        %v4190 = vmul.f32 %v4166, %v4166
        %v4191 = vmul.f32 %v4167, %v4167
        %v4192 = vmul.f32 %v4168, %v4168
        %v4193 = vmul.f32 %v4169, %v4169
        %v4194 = vmul.f32 %v4170, %v4170
        %v4195 = vadd.f32 %v4123, %v4187
        %v4196 = vadd.f32 %v4124, %v4188
        %v4197 = vadd.f32 %v4125, %v4189
        %v4198 = vadd.f32 %v4126, %v4190
        %v4199 = vadd.f32 %v4127, %v4191
        %v4200 = vadd.f32 %v4128, %v4192
        %v4201 = vadd.f32 %v4129, %v4193
        %v4202 = vadd.f32 %v4130, %v4194
        %v4203 = vmul.f32 %v4151, %v4163
        %v4204 = vmul.f32 %v4152, %v4164
        %v4205 = vmul.f32 %v4153, %v4165
        %v4206 = vmul.f32 %v4154, %v4166
        %v4207 = vmul.f32 %v4155, %v4167
        %v4208 = vmul.f32 %v4156, %v4168
        %v4209 = vmul.f32 %v4157, %v4169
        %v4210 = vmul.f32 %v4158, %v4170
        %v4211 = vadd.f32 %v4139, %v4203
        %v4212 = vadd.f32 %v4140, %v4204
        %v4213 = vadd.f32 %v4141, %v4205
        %v4214 = vadd.f32 %v4142, %v4206
        %v4215 = vadd.f32 %v4143, %v4207
        %v4216 = vadd.f32 %v4144, %v4208
        %v4217 = vadd.f32 %v4145, %v4209
        %v4218 = vadd.f32 %v4146, %v4210
        %v4219 = vld [vmem:[%s245 + $0x540] sm:$0xff]
        %v4220 = vld [vmem:[%s245 + $0x548] sm:$0xff]
        %v4221 = vld [vmem:[%s245 + $0x550] sm:$0xff]
        %v4222 = vld [vmem:[%s245 + $0x558] sm:$0xff]
        %v4223 = vunpack.c.l.bf16 %v4219
        %v4224 = vunpack.c.h.bf16 %v4219
        %v4225 = vunpack.c.l.bf16 %v4220
        %v4226 = vunpack.c.h.bf16 %v4220
        %v4227 = vunpack.c.l.bf16 %v4221
        %v4228 = vunpack.c.h.bf16 %v4221
        %v4229 = vunpack.c.l.bf16 %v4222
        %v4230 = vunpack.c.h.bf16 %v4222
        %v4231 = vld [vmem:[%s254 + $0x540] sm:$0xff]
        %v4232 = vld [vmem:[%s254 + $0x548] sm:$0xff]
        %v4233 = vld [vmem:[%s254 + $0x550] sm:$0xff]
        %v4234 = vld [vmem:[%s254 + $0x558] sm:$0xff]
        %v4235 = vunpack.c.l.bf16 %v4231
        %v4236 = vunpack.c.h.bf16 %v4231
        %v4237 = vunpack.c.l.bf16 %v4232
        %v4238 = vunpack.c.h.bf16 %v4232
        %v4239 = vunpack.c.l.bf16 %v4233
        %v4240 = vunpack.c.h.bf16 %v4233
        %v4241 = vunpack.c.l.bf16 %v4234
        %v4242 = vunpack.c.h.bf16 %v4234
        %v4243 = vmul.f32 %v4223, %v4223
        %v4244 = vmul.f32 %v4224, %v4224
        %v4245 = vmul.f32 %v4225, %v4225
        %v4246 = vmul.f32 %v4226, %v4226
        %v4247 = vmul.f32 %v4227, %v4227
        %v4248 = vmul.f32 %v4228, %v4228
        %v4249 = vmul.f32 %v4229, %v4229
        %v4250 = vmul.f32 %v4230, %v4230
        %v4251 = vadd.f32 %v4179, %v4243
        %v4252 = vadd.f32 %v4180, %v4244
        %v4253 = vadd.f32 %v4181, %v4245
        %v4254 = vadd.f32 %v4182, %v4246
        %v4255 = vadd.f32 %v4183, %v4247
        %v4256 = vadd.f32 %v4184, %v4248
        %v4257 = vadd.f32 %v4185, %v4249
        %v4258 = vadd.f32 %v4186, %v4250
        %v4259 = vmul.f32 %v4235, %v4235
        %v4260 = vmul.f32 %v4236, %v4236
        %v4261 = vmul.f32 %v4237, %v4237
        %v4262 = vmul.f32 %v4238, %v4238
        %v4263 = vmul.f32 %v4239, %v4239
        %v4264 = vmul.f32 %v4240, %v4240
        %v4265 = vmul.f32 %v4241, %v4241
        %v4266 = vmul.f32 %v4242, %v4242
        %v4267 = vadd.f32 %v4195, %v4259
        %v4268 = vadd.f32 %v4196, %v4260
        %v4269 = vadd.f32 %v4197, %v4261
        %v4270 = vadd.f32 %v4198, %v4262
        %v4271 = vadd.f32 %v4199, %v4263
        %v4272 = vadd.f32 %v4200, %v4264
        %v4273 = vadd.f32 %v4201, %v4265
        %v4274 = vadd.f32 %v4202, %v4266
        %v4275 = vmul.f32 %v4223, %v4235
        %v4276 = vmul.f32 %v4224, %v4236
        %v4277 = vmul.f32 %v4225, %v4237
        %v4278 = vmul.f32 %v4226, %v4238
        %v4279 = vmul.f32 %v4227, %v4239
        %v4280 = vmul.f32 %v4228, %v4240
        %v4281 = vmul.f32 %v4229, %v4241
        %v4282 = vmul.f32 %v4230, %v4242
        %v4283 = vadd.f32 %v4211, %v4275
        %v4284 = vadd.f32 %v4212, %v4276
        %v4285 = vadd.f32 %v4213, %v4277
        %v4286 = vadd.f32 %v4214, %v4278
        %v4287 = vadd.f32 %v4215, %v4279
        %v4288 = vadd.f32 %v4216, %v4280
        %v4289 = vadd.f32 %v4217, %v4281
        %v4290 = vadd.f32 %v4218, %v4282
        %v4291 = vld [vmem:[%s245 + $0x5c0] sm:$0xff]
        %v4292 = vld [vmem:[%s245 + $0x5c8] sm:$0xff]
        %v4293 = vld [vmem:[%s245 + $0x5d0] sm:$0xff]
        %v4294 = vld [vmem:[%s245 + $0x5d8] sm:$0xff]
        %v4295 = vunpack.c.l.bf16 %v4291
        %v4296 = vunpack.c.h.bf16 %v4291
        %v4297 = vunpack.c.l.bf16 %v4292
        %v4298 = vunpack.c.h.bf16 %v4292
        %v4299 = vunpack.c.l.bf16 %v4293
        %v4300 = vunpack.c.h.bf16 %v4293
        %v4301 = vunpack.c.l.bf16 %v4294
        %v4302 = vunpack.c.h.bf16 %v4294
        %v4303 = vld [vmem:[%s254 + $0x5c0] sm:$0xff]
        %v4304 = vld [vmem:[%s254 + $0x5c8] sm:$0xff]
        %v4305 = vld [vmem:[%s254 + $0x5d0] sm:$0xff]
        %v4306 = vld [vmem:[%s254 + $0x5d8] sm:$0xff]
        %v4307 = vunpack.c.l.bf16 %v4303
        %v4308 = vunpack.c.h.bf16 %v4303
        %v4309 = vunpack.c.l.bf16 %v4304
        %v4310 = vunpack.c.h.bf16 %v4304
        %v4311 = vunpack.c.l.bf16 %v4305
        %v4312 = vunpack.c.h.bf16 %v4305
        %v4313 = vunpack.c.l.bf16 %v4306
        %v4314 = vunpack.c.h.bf16 %v4306
        %v4315 = vmul.f32 %v4295, %v4295
        %v4316 = vmul.f32 %v4296, %v4296
        %v4317 = vmul.f32 %v4297, %v4297
        %v4318 = vmul.f32 %v4298, %v4298
        %v4319 = vmul.f32 %v4299, %v4299
        %v4320 = vmul.f32 %v4300, %v4300
        %v4321 = vmul.f32 %v4301, %v4301
        %v4322 = vmul.f32 %v4302, %v4302
        %v4323 = vadd.f32 %v4251, %v4315
        %v4324 = vadd.f32 %v4252, %v4316
        %v4325 = vadd.f32 %v4253, %v4317
        %v4326 = vadd.f32 %v4254, %v4318
        %v4327 = vadd.f32 %v4255, %v4319
        %v4328 = vadd.f32 %v4256, %v4320
        %v4329 = vadd.f32 %v4257, %v4321
        %v4330 = vadd.f32 %v4258, %v4322
        %v4331 = vmul.f32 %v4307, %v4307
        %v4332 = vmul.f32 %v4308, %v4308
        %v4333 = vmul.f32 %v4309, %v4309
        %v4334 = vmul.f32 %v4310, %v4310
        %v4335 = vmul.f32 %v4311, %v4311
        %v4336 = vmul.f32 %v4312, %v4312
        %v4337 = vmul.f32 %v4313, %v4313
        %v4338 = vmul.f32 %v4314, %v4314
        %v4339 = vadd.f32 %v4267, %v4331
        %v4340 = vadd.f32 %v4268, %v4332
        %v4341 = vadd.f32 %v4269, %v4333
        %v4342 = vadd.f32 %v4270, %v4334
        %v4343 = vadd.f32 %v4271, %v4335
        %v4344 = vadd.f32 %v4272, %v4336
        %v4345 = vadd.f32 %v4273, %v4337
        %v4346 = vadd.f32 %v4274, %v4338
        %v4347 = vmul.f32 %v4295, %v4307
        %v4348 = vmul.f32 %v4296, %v4308
        %v4349 = vmul.f32 %v4297, %v4309
        %v4350 = vmul.f32 %v4298, %v4310
        %v4351 = vmul.f32 %v4299, %v4311
        %v4352 = vmul.f32 %v4300, %v4312
        %v4353 = vmul.f32 %v4301, %v4313
        %v4354 = vmul.f32 %v4302, %v4314
        %v4355 = vadd.f32 %v4283, %v4347
        %v4356 = vadd.f32 %v4284, %v4348
        %v4357 = vadd.f32 %v4285, %v4349
        %v4358 = vadd.f32 %v4286, %v4350
        %v4359 = vadd.f32 %v4287, %v4351
        %v4360 = vadd.f32 %v4288, %v4352
        %v4361 = vadd.f32 %v4289, %v4353
        %v4362 = vadd.f32 %v4290, %v4354
        %v4363 = vld [vmem:[%s245 + $0x640] sm:$0xff]
        %v4364 = vld [vmem:[%s245 + $0x648] sm:$0xff]
        %v4365 = vld [vmem:[%s245 + $0x650] sm:$0xff]
        %v4366 = vld [vmem:[%s245 + $0x658] sm:$0xff]
        %v4367 = vunpack.c.l.bf16 %v4363
        %v4368 = vunpack.c.h.bf16 %v4363
        %v4369 = vunpack.c.l.bf16 %v4364
        %v4370 = vunpack.c.h.bf16 %v4364
        %v4371 = vunpack.c.l.bf16 %v4365
        %v4372 = vunpack.c.h.bf16 %v4365
        %v4373 = vunpack.c.l.bf16 %v4366
        %v4374 = vunpack.c.h.bf16 %v4366
        %v4375 = vld [vmem:[%s254 + $0x640] sm:$0xff]
        %v4376 = vld [vmem:[%s254 + $0x648] sm:$0xff]
        %v4377 = vld [vmem:[%s254 + $0x650] sm:$0xff]
        %v4378 = vld [vmem:[%s254 + $0x658] sm:$0xff]
        %v4379 = vunpack.c.l.bf16 %v4375
        %v4380 = vunpack.c.h.bf16 %v4375
        %v4381 = vunpack.c.l.bf16 %v4376
        %v4382 = vunpack.c.h.bf16 %v4376
        %v4383 = vunpack.c.l.bf16 %v4377
        %v4384 = vunpack.c.h.bf16 %v4377
        %v4385 = vunpack.c.l.bf16 %v4378
        %v4386 = vunpack.c.h.bf16 %v4378
        %v4387 = vmul.f32 %v4367, %v4367
        %v4388 = vmul.f32 %v4368, %v4368
        %v4389 = vmul.f32 %v4369, %v4369
        %v4390 = vmul.f32 %v4370, %v4370
        %v4391 = vmul.f32 %v4371, %v4371
        %v4392 = vmul.f32 %v4372, %v4372
        %v4393 = vmul.f32 %v4373, %v4373
        %v4394 = vmul.f32 %v4374, %v4374
        %v4395 = vadd.f32 %v4323, %v4387
        %v4396 = vadd.f32 %v4324, %v4388
        %v4397 = vadd.f32 %v4325, %v4389
        %v4398 = vadd.f32 %v4326, %v4390
        %v4399 = vadd.f32 %v4327, %v4391
        %v4400 = vadd.f32 %v4328, %v4392
        %v4401 = vadd.f32 %v4329, %v4393
        %v4402 = vadd.f32 %v4330, %v4394
        %v4403 = vmul.f32 %v4379, %v4379
        %v4404 = vmul.f32 %v4380, %v4380
        %v4405 = vmul.f32 %v4381, %v4381
        %v4406 = vmul.f32 %v4382, %v4382
        %v4407 = vmul.f32 %v4383, %v4383
        %v4408 = vmul.f32 %v4384, %v4384
        %v4409 = vmul.f32 %v4385, %v4385
        %v4410 = vmul.f32 %v4386, %v4386
        %v4411 = vadd.f32 %v4339, %v4403
        %v4412 = vadd.f32 %v4340, %v4404
        %v4413 = vadd.f32 %v4341, %v4405
        %v4414 = vadd.f32 %v4342, %v4406
        %v4415 = vadd.f32 %v4343, %v4407
        %v4416 = vadd.f32 %v4344, %v4408
        %v4417 = vadd.f32 %v4345, %v4409
        %v4418 = vadd.f32 %v4346, %v4410
        %v4419 = vmul.f32 %v4367, %v4379
        %v4420 = vmul.f32 %v4368, %v4380
        %v4421 = vmul.f32 %v4369, %v4381
        %v4422 = vmul.f32 %v4370, %v4382
        %v4423 = vmul.f32 %v4371, %v4383
        %v4424 = vmul.f32 %v4372, %v4384
        %v4425 = vmul.f32 %v4373, %v4385
        %v4426 = vmul.f32 %v4374, %v4386
        %v4427 = vadd.f32 %v4355, %v4419
        %v4428 = vadd.f32 %v4356, %v4420
        %v4429 = vadd.f32 %v4357, %v4421
        %v4430 = vadd.f32 %v4358, %v4422
        %v4431 = vadd.f32 %v4359, %v4423
        %v4432 = vadd.f32 %v4360, %v4424
        %v4433 = vadd.f32 %v4361, %v4425
        %v4434 = vadd.f32 %v4362, %v4426
        %v4435 = vld [vmem:[%s245 + $0x6c0] sm:$0xff]
        %v4436 = vld [vmem:[%s245 + $0x6c8] sm:$0xff]
        %v4437 = vld [vmem:[%s245 + $0x6d0] sm:$0xff]
        %v4438 = vld [vmem:[%s245 + $0x6d8] sm:$0xff]
        %v4439 = vunpack.c.l.bf16 %v4435
        %v4440 = vunpack.c.h.bf16 %v4435
        %v4441 = vunpack.c.l.bf16 %v4436
        %v4442 = vunpack.c.h.bf16 %v4436
        %v4443 = vunpack.c.l.bf16 %v4437
        %v4444 = vunpack.c.h.bf16 %v4437
        %v4445 = vunpack.c.l.bf16 %v4438
        %v4446 = vunpack.c.h.bf16 %v4438
        %v4447 = vld [vmem:[%s254 + $0x6c0] sm:$0xff]
        %v4448 = vld [vmem:[%s254 + $0x6c8] sm:$0xff]
        %v4449 = vld [vmem:[%s254 + $0x6d0] sm:$0xff]
        %v4450 = vld [vmem:[%s254 + $0x6d8] sm:$0xff]
        %v4451 = vunpack.c.l.bf16 %v4447
        %v4452 = vunpack.c.h.bf16 %v4447
        %v4453 = vunpack.c.l.bf16 %v4448
        %v4454 = vunpack.c.h.bf16 %v4448
        %v4455 = vunpack.c.l.bf16 %v4449
        %v4456 = vunpack.c.h.bf16 %v4449
        %v4457 = vunpack.c.l.bf16 %v4450
        %v4458 = vunpack.c.h.bf16 %v4450
        %v4459 = vmul.f32 %v4439, %v4439
        %v4460 = vmul.f32 %v4440, %v4440
        %v4461 = vmul.f32 %v4441, %v4441
        %v4462 = vmul.f32 %v4442, %v4442
        %v4463 = vmul.f32 %v4443, %v4443
        %v4464 = vmul.f32 %v4444, %v4444
        %v4465 = vmul.f32 %v4445, %v4445
        %v4466 = vmul.f32 %v4446, %v4446
        %v4467 = vadd.f32 %v4395, %v4459
        %v4468 = vadd.f32 %v4396, %v4460
        %v4469 = vadd.f32 %v4397, %v4461
        %v4470 = vadd.f32 %v4398, %v4462
        %v4471 = vadd.f32 %v4399, %v4463
        %v4472 = vadd.f32 %v4400, %v4464
        %v4473 = vadd.f32 %v4401, %v4465
        %v4474 = vadd.f32 %v4402, %v4466
        %v4475 = vmul.f32 %v4451, %v4451
        %v4476 = vmul.f32 %v4452, %v4452
        %v4477 = vmul.f32 %v4453, %v4453
        %v4478 = vmul.f32 %v4454, %v4454
        %v4479 = vmul.f32 %v4455, %v4455
        %v4480 = vmul.f32 %v4456, %v4456
        %v4481 = vmul.f32 %v4457, %v4457
        %v4482 = vmul.f32 %v4458, %v4458
        %v4483 = vadd.f32 %v4411, %v4475
        %v4484 = vadd.f32 %v4412, %v4476
        %v4485 = vadd.f32 %v4413, %v4477
        %v4486 = vadd.f32 %v4414, %v4478
        %v4487 = vadd.f32 %v4415, %v4479
        %v4488 = vadd.f32 %v4416, %v4480
        %v4489 = vadd.f32 %v4417, %v4481
        %v4490 = vadd.f32 %v4418, %v4482
        %v4491 = vmul.f32 %v4439, %v4451
        %v4492 = vmul.f32 %v4440, %v4452
        %v4493 = vmul.f32 %v4441, %v4453
        %v4494 = vmul.f32 %v4442, %v4454
        %v4495 = vmul.f32 %v4443, %v4455
        %v4496 = vmul.f32 %v4444, %v4456
        %v4497 = vmul.f32 %v4445, %v4457
        %v4498 = vmul.f32 %v4446, %v4458
        %v4499 = vadd.f32 %v4427, %v4491
        %v4500 = vadd.f32 %v4428, %v4492
        %v4501 = vadd.f32 %v4429, %v4493
        %v4502 = vadd.f32 %v4430, %v4494
        %v4503 = vadd.f32 %v4431, %v4495
        %v4504 = vadd.f32 %v4432, %v4496
        %v4505 = vadd.f32 %v4433, %v4497
        %v4506 = vadd.f32 %v4434, %v4498
        %v4507 = vld [vmem:[%s245 + $0x740] sm:$0xff]
        %v4508 = vld [vmem:[%s245 + $0x748] sm:$0xff]
        %v4509 = vld [vmem:[%s245 + $0x750] sm:$0xff]
        %v4510 = vld [vmem:[%s245 + $0x758] sm:$0xff]
        %v4511 = vunpack.c.l.bf16 %v4507
        %v4512 = vunpack.c.h.bf16 %v4507
        %v4513 = vunpack.c.l.bf16 %v4508
        %v4514 = vunpack.c.h.bf16 %v4508
        %v4515 = vunpack.c.l.bf16 %v4509
        %v4516 = vunpack.c.h.bf16 %v4509
        %v4517 = vunpack.c.l.bf16 %v4510
        %v4518 = vunpack.c.h.bf16 %v4510
        %v4519 = vld [vmem:[%s254 + $0x740] sm:$0xff]
        %v4520 = vld [vmem:[%s254 + $0x748] sm:$0xff]
        %v4521 = vld [vmem:[%s254 + $0x750] sm:$0xff]
        %v4522 = vld [vmem:[%s254 + $0x758] sm:$0xff]
        %v4523 = vunpack.c.l.bf16 %v4519
        %v4524 = vunpack.c.h.bf16 %v4519
        %v4525 = vunpack.c.l.bf16 %v4520
        %v4526 = vunpack.c.h.bf16 %v4520
        %v4527 = vunpack.c.l.bf16 %v4521
        %v4528 = vunpack.c.h.bf16 %v4521
        %v4529 = vunpack.c.l.bf16 %v4522
        %v4530 = vunpack.c.h.bf16 %v4522
        %v4531 = vmul.f32 %v4511, %v4511
        %v4532 = vmul.f32 %v4512, %v4512
        %v4533 = vmul.f32 %v4513, %v4513
        %v4534 = vmul.f32 %v4514, %v4514
        %v4535 = vmul.f32 %v4515, %v4515
        %v4536 = vmul.f32 %v4516, %v4516
        %v4537 = vmul.f32 %v4517, %v4517
        %v4538 = vmul.f32 %v4518, %v4518
        %v4539 = vadd.f32 %v4467, %v4531
        %v4540 = vadd.f32 %v4468, %v4532
        %v4541 = vadd.f32 %v4469, %v4533
        %v4542 = vadd.f32 %v4470, %v4534
        %v4543 = vadd.f32 %v4471, %v4535
        %v4544 = vadd.f32 %v4472, %v4536
        %v4545 = vadd.f32 %v4473, %v4537
        %v4546 = vadd.f32 %v4474, %v4538
        %v4547 = vmul.f32 %v4523, %v4523
        %v4548 = vmul.f32 %v4524, %v4524
        %v4549 = vmul.f32 %v4525, %v4525
        %v4550 = vmul.f32 %v4526, %v4526
        %v4551 = vmul.f32 %v4527, %v4527
        %v4552 = vmul.f32 %v4528, %v4528
        %v4553 = vmul.f32 %v4529, %v4529
        %v4554 = vmul.f32 %v4530, %v4530
        %v4555 = vadd.f32 %v4483, %v4547
        %v4556 = vadd.f32 %v4484, %v4548
        %v4557 = vadd.f32 %v4485, %v4549
        %v4558 = vadd.f32 %v4486, %v4550
        %v4559 = vadd.f32 %v4487, %v4551
        %v4560 = vadd.f32 %v4488, %v4552
        %v4561 = vadd.f32 %v4489, %v4553
        %v4562 = vadd.f32 %v4490, %v4554
        %v4563 = vmul.f32 %v4511, %v4523
        %v4564 = vmul.f32 %v4512, %v4524
        %v4565 = vmul.f32 %v4513, %v4525
        %v4566 = vmul.f32 %v4514, %v4526
        %v4567 = vmul.f32 %v4515, %v4527
        %v4568 = vmul.f32 %v4516, %v4528
        %v4569 = vmul.f32 %v4517, %v4529
        %v4570 = vmul.f32 %v4518, %v4530
        %v4571 = vadd.f32 %v4499, %v4563
        %v4572 = vadd.f32 %v4500, %v4564
        %v4573 = vadd.f32 %v4501, %v4565
        %v4574 = vadd.f32 %v4502, %v4566
        %v4575 = vadd.f32 %v4503, %v4567
        %v4576 = vadd.f32 %v4504, %v4568
        %v4577 = vadd.f32 %v4505, %v4569
        %v4578 = vadd.f32 %v4506, %v4570
        %v4579 = vld [vmem:[%s245 + $0x7c0] sm:$0xff]
        %v4580 = vld [vmem:[%s245 + $0x7c8] sm:$0xff]
        %v4581 = vld [vmem:[%s245 + $0x7d0] sm:$0xff]
        %v4582 = vld [vmem:[%s245 + $0x7d8] sm:$0xff]
        %v4583 = vunpack.c.l.bf16 %v4579
        %v4584 = vunpack.c.h.bf16 %v4579
        %v4585 = vunpack.c.l.bf16 %v4580
        %v4586 = vunpack.c.h.bf16 %v4580
        %v4587 = vunpack.c.l.bf16 %v4581
        %v4588 = vunpack.c.h.bf16 %v4581
        %v4589 = vunpack.c.l.bf16 %v4582
        %v4590 = vunpack.c.h.bf16 %v4582
        %v4591 = vld [vmem:[%s254 + $0x7c0] sm:$0xff]
        %v4592 = vld [vmem:[%s254 + $0x7c8] sm:$0xff]
        %v4593 = vld [vmem:[%s254 + $0x7d0] sm:$0xff]
        %v4594 = vld [vmem:[%s254 + $0x7d8] sm:$0xff]
        %v4595 = vunpack.c.l.bf16 %v4591
        %v4596 = vunpack.c.h.bf16 %v4591
        %v4597 = vunpack.c.l.bf16 %v4592
        %v4598 = vunpack.c.h.bf16 %v4592
        %v4599 = vunpack.c.l.bf16 %v4593
        %v4600 = vunpack.c.h.bf16 %v4593
        %v4601 = vunpack.c.l.bf16 %v4594
        %v4602 = vunpack.c.h.bf16 %v4594
        %v4603 = vmul.f32 %v4583, %v4583
        %v4604 = vmul.f32 %v4584, %v4584
        %v4605 = vmul.f32 %v4585, %v4585
        %v4606 = vmul.f32 %v4586, %v4586
        %v4607 = vmul.f32 %v4587, %v4587
        %v4608 = vmul.f32 %v4588, %v4588
        %v4609 = vmul.f32 %v4589, %v4589
        %v4610 = vmul.f32 %v4590, %v4590
        %v4611 = vadd.f32 %v4539, %v4603
        %v4612 = vadd.f32 %v4540, %v4604
        %v4613 = vadd.f32 %v4541, %v4605
        %v4614 = vadd.f32 %v4542, %v4606
        %v4615 = vadd.f32 %v4543, %v4607
        %v4616 = vadd.f32 %v4544, %v4608
        %v4617 = vadd.f32 %v4545, %v4609
        %v4618 = vadd.f32 %v4546, %v4610
        %v4619 = vmul.f32 %v4595, %v4595
        %v4620 = vmul.f32 %v4596, %v4596
        %v4621 = vmul.f32 %v4597, %v4597
        %v4622 = vmul.f32 %v4598, %v4598
        %v4623 = vmul.f32 %v4599, %v4599
        %v4624 = vmul.f32 %v4600, %v4600
        %v4625 = vmul.f32 %v4601, %v4601
        %v4626 = vmul.f32 %v4602, %v4602
        %v4627 = vadd.f32 %v4555, %v4619
        %v4628 = vadd.f32 %v4556, %v4620
        %v4629 = vadd.f32 %v4557, %v4621
        %v4630 = vadd.f32 %v4558, %v4622
        %v4631 = vadd.f32 %v4559, %v4623
        %v4632 = vadd.f32 %v4560, %v4624
        %v4633 = vadd.f32 %v4561, %v4625
        %v4634 = vadd.f32 %v4562, %v4626
        %v4635 = vmul.f32 %v4583, %v4595
        %v4636 = vmul.f32 %v4584, %v4596
        %v4637 = vmul.f32 %v4585, %v4597
        %v4638 = vmul.f32 %v4586, %v4598
        %v4639 = vmul.f32 %v4587, %v4599
        %v4640 = vmul.f32 %v4588, %v4600
        %v4641 = vmul.f32 %v4589, %v4601
        %v4642 = vmul.f32 %v4590, %v4602
        %v4643 = vadd.f32 %v4571, %v4635
        %v4644 = vadd.f32 %v4572, %v4636
        %v4645 = vadd.f32 %v4573, %v4637
        %v4646 = vadd.f32 %v4574, %v4638
        %v4647 = vadd.f32 %v4575, %v4639
        %v4648 = vadd.f32 %v4576, %v4640
        %v4649 = vadd.f32 %v4577, %v4641
        %v4650 = vadd.f32 %v4578, %v4642
        %v4651 = vrot.slane %v4611, 4
        %v4652 = vadd.f32 %v4611, %v4651
        %v4653 = vrot.slane %v4652, 2
        %v4654 = vadd.f32 %v4652, %v4653
        %v4655 = vrot.slane %v4654, 1
        %v4656 = vadd.f32 %v4654, %v4655
        %v4657 = vrot.slane %v4612, 4
        %v4658 = vadd.f32 %v4612, %v4657
        %v4659 = vrot.slane %v4658, 2
        %v4660 = vadd.f32 %v4658, %v4659
        %v4661 = vrot.slane %v4660, 1
        %v4662 = vadd.f32 %v4660, %v4661
        %v4663 = vrot.slane %v4613, 4
        %v4664 = vadd.f32 %v4613, %v4663
        %v4665 = vrot.slane %v4664, 2
        %v4666 = vadd.f32 %v4664, %v4665
        %v4667 = vrot.slane %v4666, 1
        %v4668 = vadd.f32 %v4666, %v4667
        %v4669 = vrot.slane %v4614, 4
        %v4670 = vadd.f32 %v4614, %v4669
        %v4671 = vrot.slane %v4670, 2
        %v4672 = vadd.f32 %v4670, %v4671
        %v4673 = vrot.slane %v4672, 1
        %v4674 = vadd.f32 %v4672, %v4673
        %v4675 = vrot.slane %v4615, 4
        %v4676 = vadd.f32 %v4615, %v4675
        %v4677 = vrot.slane %v4676, 2
        %v4678 = vadd.f32 %v4676, %v4677
        %v4679 = vrot.slane %v4678, 1
        %v4680 = vadd.f32 %v4678, %v4679
        %v4681 = vrot.slane %v4616, 4
        %v4682 = vadd.f32 %v4616, %v4681
        %v4683 = vrot.slane %v4682, 2
        %v4684 = vadd.f32 %v4682, %v4683
        %v4685 = vrot.slane %v4684, 1
        %v4686 = vadd.f32 %v4684, %v4685
        %v4687 = vrot.slane %v4617, 4
        %v4688 = vadd.f32 %v4617, %v4687
        %v4689 = vrot.slane %v4688, 2
        %v4690 = vadd.f32 %v4688, %v4689
        %v4691 = vrot.slane %v4690, 1
        %v4692 = vadd.f32 %v4690, %v4691
        %v4693 = vrot.slane %v4618, 4
        %v4694 = vadd.f32 %v4618, %v4693
        %v4695 = vrot.slane %v4694, 2
        %v4696 = vadd.f32 %v4694, %v4695
        %v4697 = vrot.slane %v4696, 1
        %v4698 = vadd.f32 %v4696, %v4697
        %v4699 = vrot.slane %v4627, 4
        %v4700 = vadd.f32 %v4627, %v4699
        %v4701 = vrot.slane %v4700, 2
        %v4702 = vadd.f32 %v4700, %v4701
        %v4703 = vrot.slane %v4702, 1
        %v4704 = vadd.f32 %v4702, %v4703
        %v4705 = vrot.slane %v4628, 4
        %v4706 = vadd.f32 %v4628, %v4705
        %v4707 = vrot.slane %v4706, 2
        %v4708 = vadd.f32 %v4706, %v4707
        %v4709 = vrot.slane %v4708, 1
        %v4710 = vadd.f32 %v4708, %v4709
        %v4711 = vrot.slane %v4629, 4
        %v4712 = vadd.f32 %v4629, %v4711
        %v4713 = vrot.slane %v4712, 2
        %v4714 = vadd.f32 %v4712, %v4713
        %v4715 = vrot.slane %v4714, 1
        %v4716 = vadd.f32 %v4714, %v4715
        %v4717 = vrot.slane %v4630, 4
        %v4718 = vadd.f32 %v4630, %v4717
        %v4719 = vrot.slane %v4718, 2
        %v4720 = vadd.f32 %v4718, %v4719
        %v4721 = vrot.slane %v4720, 1
        %v4722 = vadd.f32 %v4720, %v4721
        %v4723 = vrot.slane %v4631, 4
        %v4724 = vadd.f32 %v4631, %v4723
        %v4725 = vrot.slane %v4724, 2
        %v4726 = vadd.f32 %v4724, %v4725
        %v4727 = vrot.slane %v4726, 1
        %v4728 = vadd.f32 %v4726, %v4727
        %v4729 = vrot.slane %v4632, 4
        %v4730 = vadd.f32 %v4632, %v4729
        %v4731 = vrot.slane %v4730, 2
        %v4732 = vadd.f32 %v4730, %v4731
        %v4733 = vrot.slane %v4732, 1
        %v4734 = vadd.f32 %v4732, %v4733
        %v4735 = vrot.slane %v4633, 4
        %v4736 = vadd.f32 %v4633, %v4735
        %v4737 = vrot.slane %v4736, 2
        %v4738 = vadd.f32 %v4736, %v4737
        %v4739 = vrot.slane %v4738, 1
        %v4740 = vadd.f32 %v4738, %v4739
        %v4741 = vrot.slane %v4634, 4
        %v4742 = vadd.f32 %v4634, %v4741
        %v4743 = vrot.slane %v4742, 2
        %v4744 = vadd.f32 %v4742, %v4743
        %v4745 = vrot.slane %v4744, 1
        %v4746 = vadd.f32 %v4744, %v4745
        %v4747 = vrot.slane %v4643, 4
        %v4748 = vadd.f32 %v4643, %v4747
        %v4749 = vrot.slane %v4748, 2
        %v4750 = vadd.f32 %v4748, %v4749
        %v4751 = vrot.slane %v4750, 1
        %v4752 = vadd.f32 %v4750, %v4751
        %v4753 = vrot.slane %v4644, 4
        %v4754 = vadd.f32 %v4644, %v4753
        %v4755 = vrot.slane %v4754, 2
        %v4756 = vadd.f32 %v4754, %v4755
        %v4757 = vrot.slane %v4756, 1
        %v4758 = vadd.f32 %v4756, %v4757
        %v4759 = vrot.slane %v4645, 4
        %v4760 = vadd.f32 %v4645, %v4759
        %v4761 = vrot.slane %v4760, 2
        %v4762 = vadd.f32 %v4760, %v4761
        %v4763 = vrot.slane %v4762, 1
        %v4764 = vadd.f32 %v4762, %v4763
        %v4765 = vrot.slane %v4646, 4
        %v4766 = vadd.f32 %v4646, %v4765
        %v4767 = vrot.slane %v4766, 2
        %v4768 = vadd.f32 %v4766, %v4767
        %v4769 = vrot.slane %v4768, 1
        %v4770 = vadd.f32 %v4768, %v4769
        %v4771 = vrot.slane %v4647, 4
        %v4772 = vadd.f32 %v4647, %v4771
        %v4773 = vrot.slane %v4772, 2
        %v4774 = vadd.f32 %v4772, %v4773
        %v4775 = vrot.slane %v4774, 1
        %v4776 = vadd.f32 %v4774, %v4775
        %v4777 = vrot.slane %v4648, 4
        %v4778 = vadd.f32 %v4648, %v4777
        %v4779 = vrot.slane %v4778, 2
        %v4780 = vadd.f32 %v4778, %v4779
        %v4781 = vrot.slane %v4780, 1
        %v4782 = vadd.f32 %v4780, %v4781
        %v4783 = vrot.slane %v4649, 4
        %v4784 = vadd.f32 %v4649, %v4783
        %v4785 = vrot.slane %v4784, 2
        %v4786 = vadd.f32 %v4784, %v4785
        %v4787 = vrot.slane %v4786, 1
        %v4788 = vadd.f32 %v4786, %v4787
        %v4789 = vrot.slane %v4650, 4
        %v4790 = vadd.f32 %v4650, %v4789
        %v4791 = vrot.slane %v4790, 2
        %v4792 = vadd.f32 %v4790, %v4791
        %v4793 = vrot.slane %v4792, 1
        %v4794 = vadd.f32 %v4792, %v4793
        %v4795 = vmax.f32 %v4656, 1e-24
        %v4796 = vmax.f32 %v4662, 1e-24
        %v4797 = vmax.f32 %v4668, 1e-24
        %v4798 = vmax.f32 %v4674, 1e-24
        %v4799 = vmax.f32 %v4680, 1e-24
        %v4800 = vmax.f32 %v4686, 1e-24
        %v4801 = vmax.f32 %v4692, 1e-24
        %v4802 = vmax.f32 %v4698, 1e-24
        %v4803 = vrsqrt.pop %v4795
        %v4804 = vrsqrt.pop %v4796
        %v4805 = vrsqrt.pop %v4797
        %v4806 = vrsqrt.pop %v4798
        %v4807 = vrsqrt.pop %v4799
        %v4808 = vrsqrt.pop %v4800
        %v4809 = vrsqrt.pop %v4801
        %v4810 = vrsqrt.pop %v4802
        %v4811 = vmul.f32 %v4752, %v4803
        %v4812 = vmul.f32 %v4758, %v4804
        %v4813 = vmul.f32 %v4764, %v4805
        %v4814 = vmul.f32 %v4770, %v4806
        %v4815 = vmul.f32 %v4776, %v4807
        %v4816 = vmul.f32 %v4782, %v4808
        %v4817 = vmul.f32 %v4788, %v4809
        %v4818 = vmul.f32 %v4794, %v4810
        %v4819 = vmax.f32 %v4704, 1e-24
        %v4820 = vmax.f32 %v4710, 1e-24
        %v4821 = vmax.f32 %v4716, 1e-24
        %v4822 = vmax.f32 %v4722, 1e-24
        %v4823 = vmax.f32 %v4728, 1e-24
        %v4824 = vmax.f32 %v4734, 1e-24
        %v4825 = vmax.f32 %v4740, 1e-24
        %v4826 = vmax.f32 %v4746, 1e-24
        %v4827 = vrsqrt.pop %v4819
        %v4828 = vrsqrt.pop %v4820
        %v4829 = vrsqrt.pop %v4821
        %v4830 = vrsqrt.pop %v4822
        %v4831 = vrsqrt.pop %v4823
        %v4832 = vrsqrt.pop %v4824
        %v4833 = vrsqrt.pop %v4825
        %v4834 = vrsqrt.pop %v4826
        %v4835 = vmul.f32 %v4811, %v4827
        %v4836 = vmul.f32 %v4812, %v4828
        %v4837 = vmul.f32 %v4813, %v4829
        %v4838 = vmul.f32 %v4814, %v4830
        %v4839 = vmul.f32 %v4815, %v4831
        %v4840 = vmul.f32 %v4816, %v4832
        %v4841 = vmul.f32 %v4817, %v4833
        %v4842 = vmul.f32 %v4818, %v4834
        %v4843 = vld [vmem:[%s263 + $0x10] sm:$0xff]
        %v4844 = vsub.f32 %v4835, 1.0
        %v4845 = vsub.f32 %v4836, 1.0
        %v4846 = vsub.f32 %v4837, 1.0
        %v4847 = vsub.f32 %v4838, 1.0
        %v4848 = vsub.f32 %v4839, 1.0
        %v4849 = vsub.f32 %v4840, 1.0
        %v4850 = vsub.f32 %v4841, 1.0
        %v4851 = vsub.f32 %v4842, 1.0
        %v4852 = vmul.f32 %v4844, %v4844
        %v4853 = vmul.f32 %v4845, %v4845
        %v4854 = vmul.f32 %v4846, %v4846
        %v4855 = vmul.f32 %v4847, %v4847
        %v4856 = vmul.f32 %v4848, %v4848
        %v4857 = vmul.f32 %v4849, %v4849
        %v4858 = vmul.f32 %v4850, %v4850
        %v4859 = vmul.f32 %v4851, %v4851
        %v4860 = vsub.f32 %v4835, %v1674
        %v4861 = vsub.f32 %v4836, %v1674
        %v4862 = vsub.f32 %v4837, %v1674
        %v4863 = vsub.f32 %v4838, %v1674
        %v4864 = vsub.f32 %v4839, %v1674
        %v4865 = vsub.f32 %v4840, %v1674
        %v4866 = vsub.f32 %v4841, %v1674
        %v4867 = vsub.f32 %v4842, %v1674
        %v4868 = vmax.f32 %v4860, 0.0
        %v4869 = vmax.f32 %v4861, 0.0
        %v4870 = vmax.f32 %v4862, 0.0
        %v4871 = vmax.f32 %v4863, 0.0
        %v4872 = vmax.f32 %v4864, 0.0
        %v4873 = vmax.f32 %v4865, 0.0
        %v4874 = vmax.f32 %v4866, 0.0
        %v4875 = vmax.f32 %v4867, 0.0
        %v4876 = vmul.f32 %v4868, %v4868
        %v4877 = vmul.f32 %v4869, %v4869
        %v4878 = vmul.f32 %v4870, %v4870
        %v4879 = vmul.f32 %v4871, %v4871
        %v4880 = vmul.f32 %v4872, %v4872
        %v4881 = vmul.f32 %v4873, %v4873
        %v4882 = vmul.f32 %v4874, %v4874
        %v4883 = vmul.f32 %v4875, %v4875
        %v4884 = vsub.f32 %v4852, %v4876
        %v4885 = vsub.f32 %v4853, %v4877
        %v4886 = vsub.f32 %v4854, %v4878
        %v4887 = vsub.f32 %v4855, %v4879
        %v4888 = vsub.f32 %v4856, %v4880
        %v4889 = vsub.f32 %v4857, %v4881
        %v4890 = vsub.f32 %v4858, %v4882
        %v4891 = vsub.f32 %v4859, %v4883
        %v4900 = vcombine.low %v4884, %v4885
        %v4901 = vcombine.low %v4886, %v4887
        %v4902 = vcombine.low %v4888, %v4889
        %v4903 = vcombine.low %v4890, %v4891
        %v4905 = vunpack.c.l.s4 1966171168
        %v4906 = vunpack.c.0.s8 %v4905
        %v4907 = vlaneseq
        %v4908 = vshrl.u32 %v4907, 7
        %v4909 = vsub.s32 %v4906, %v4908
        %v4910 = vrot.slane %v4900, %v4909
        %v4912 = vunpack.c.l.s4 1966171168
        %v4913 = vunpack.c.0.s8 %v4912
        %v4914 = vlaneseq
        %v4915 = vshrl.u32 %v4914, 7
        %v4916 = vsub.s32 %v4913, %v4915
        %v4917 = vrot.slane %v4901, %v4916
        %v4919 = vunpack.c.l.s4 1966171168
        %v4920 = vunpack.c.0.s8 %v4919
        %v4921 = vlaneseq
        %v4922 = vshrl.u32 %v4921, 7
        %v4923 = vsub.s32 %v4920, %v4922
        %v4924 = vrot.slane %v4902, %v4923
        %v4926 = vunpack.c.l.s4 1966171168
        %v4927 = vunpack.c.0.s8 %v4926
        %v4928 = vlaneseq
        %v4929 = vshrl.u32 %v4928, 7
        %v4930 = vsub.s32 %v4927, %v4929
        %v4931 = vrot.slane %v4903, %v4930
        %v4932 = vcombine.low %v4910, %v4917
        %v4933 = vcombine.low %v4924, %v4931
        %v4935 = vunpack.c.l.s4 1966171168
        %v4936 = vunpack.c.0.s8 %v4935
        %v4937 = vlaneseq
        %v4938 = vshrl.u32 %v4937, 7
        %v4939 = vsub.s32 %v4936, %v4938
        %v4940 = vrot.slane %v4932, %v4939
        %v4942 = vunpack.c.l.s4 1966171168
        %v4943 = vunpack.c.0.s8 %v4942
        %v4944 = vlaneseq
        %v4945 = vshrl.u32 %v4944, 7
        %v4946 = vsub.s32 %v4943, %v4945
        %v4947 = vrot.slane %v4933, %v4946
        %v4948 = vcombine.low %v4940, %v4947
        %v4950 = vmul.f32 %v4843, %v4948
        %v4952 = vlaneseq
        %v4953 = vshrl.u32 %v4952, 7
        %v4954 = vsub.s32 0, %v4953
        %v4955 = vrot.slane %v4950, %v4954
        %v4956 = vlaneseq
        %v4957 = vshrl.u32 %v4956, 7
        %v4958 = vsub.s32 1, %v4957
        %v4959 = vrot.slane %v4950, %v4958
        %v4960 = vlaneseq
        %v4961 = vshrl.u32 %v4960, 7
        %v4962 = vsub.s32 2, %v4961
        %v4963 = vrot.slane %v4950, %v4962
        %v4964 = vlaneseq
        %v4965 = vshrl.u32 %v4964, 7
        %v4966 = vsub.s32 3, %v4965
        %v4967 = vrot.slane %v4950, %v4966
        %v4968 = vlaneseq
        %v4969 = vshrl.u32 %v4968, 7
        %v4970 = vsub.s32 4, %v4969
        %v4971 = vrot.slane %v4950, %v4970
        %v4972 = vlaneseq
        %v4973 = vshrl.u32 %v4972, 7
        %v4974 = vsub.s32 5, %v4973
        %v4975 = vrot.slane %v4950, %v4974
        %v4976 = vlaneseq
        %v4977 = vshrl.u32 %v4976, 7
        %v4978 = vsub.s32 6, %v4977
        %v4979 = vrot.slane %v4950, %v4978
        %v4980 = vlaneseq
        %v4981 = vshrl.u32 %v4980, 7
        %v4982 = vsub.s32 7, %v4981
        %v4983 = vrot.slane %v4950, %v4982
        %v4992 = vadd.f32 %v4876, %v4955
        %v4993 = vadd.f32 %v4877, %v4959
        %v4994 = vadd.f32 %v4878, %v4963
        %v4995 = vadd.f32 %v4879, %v4967
        %v4996 = vadd.f32 %v4880, %v4971
        %v4997 = vadd.f32 %v4881, %v4975
        %v4998 = vadd.f32 %v4882, %v4979
        %v4999 = vadd.f32 %v4883, %v4983
        %s5000 = sadd.s32 %s312, 2048
        %v5001 = vstv %s5000
        %v5002 = vadd.s32 %v5001, %v1816
        %v5003 = vadd.s32 %v5001, %v1817
        %v5004 = vadd.s32 %v5001, %v1818
        %v5005 = vadd.s32 %v5001, %v1819
        %v5006 = vadd.s32 %v5001, %v1820
        %v5007 = vadd.s32 %v5001, %v1821
        %v5008 = vadd.s32 %v5001, %v1822
        %v5009 = vadd.s32 %v5001, %v1823
        %vm5010 = vcmp.lt.s32.totalorder %v5002, %v1833
        %vm5011 = vcmp.lt.s32.totalorder %v5003, %v1833
        %vm5012 = vcmp.lt.s32.totalorder %v5004, %v1833
        %vm5013 = vcmp.lt.s32.totalorder %v5005, %v1833
        %vm5014 = vcmp.lt.s32.totalorder %v5006, %v1833
        %vm5015 = vcmp.lt.s32.totalorder %v5007, %v1833
        %vm5016 = vcmp.lt.s32.totalorder %v5008, %v1833
        %vm5017 = vcmp.lt.s32.totalorder %v5009, %v1833
        %v5018 = vsel %vm5010, %v4992, 0.0
        %v5019 = vsel %vm5011, %v4993, 0.0
        %v5020 = vsel %vm5012, %v4994, 0.0
        %v5021 = vsel %vm5013, %v4995, 0.0
        %v5022 = vsel %vm5014, %v4996, 0.0
        %v5023 = vsel %vm5015, %v4997, 0.0
        %v5024 = vsel %vm5016, %v4998, 0.0
        %v5025 = vsel %vm5017, %v4999, 0.0
        %v5026 = vld [vmem:[#allocation2 + $0x10] sm:$0xff]
        %v5035 = vcombine.low %v5018, %v5019
        %v5036 = vcombine.low %v5020, %v5021
        %v5037 = vcombine.low %v5022, %v5023
        %v5038 = vcombine.low %v5024, %v5025
        %v5040 = vunpack.c.l.s4 1966171168
        %v5041 = vunpack.c.0.s8 %v5040
        %v5042 = vlaneseq
        %v5043 = vshrl.u32 %v5042, 7
        %v5044 = vsub.s32 %v5041, %v5043
        %v5045 = vrot.slane %v5035, %v5044
        %v5047 = vunpack.c.l.s4 1966171168
        %v5048 = vunpack.c.0.s8 %v5047
        %v5049 = vlaneseq
        %v5050 = vshrl.u32 %v5049, 7
        %v5051 = vsub.s32 %v5048, %v5050
        %v5052 = vrot.slane %v5036, %v5051
        %v5054 = vunpack.c.l.s4 1966171168
        %v5055 = vunpack.c.0.s8 %v5054
        %v5056 = vlaneseq
        %v5057 = vshrl.u32 %v5056, 7
        %v5058 = vsub.s32 %v5055, %v5057
        %v5059 = vrot.slane %v5037, %v5058
        %v5061 = vunpack.c.l.s4 1966171168
        %v5062 = vunpack.c.0.s8 %v5061
        %v5063 = vlaneseq
        %v5064 = vshrl.u32 %v5063, 7
        %v5065 = vsub.s32 %v5062, %v5064
        %v5066 = vrot.slane %v5038, %v5065
        %v5067 = vcombine.low %v5045, %v5052
        %v5068 = vcombine.low %v5059, %v5066
        %v5070 = vunpack.c.l.s4 1966171168
        %v5071 = vunpack.c.0.s8 %v5070
        %v5072 = vlaneseq
        %v5073 = vshrl.u32 %v5072, 7
        %v5074 = vsub.s32 %v5071, %v5073
        %v5075 = vrot.slane %v5067, %v5074
        %v5077 = vunpack.c.l.s4 1966171168
        %v5078 = vunpack.c.0.s8 %v5077
        %v5079 = vlaneseq
        %v5080 = vshrl.u32 %v5079, 7
        %v5081 = vsub.s32 %v5078, %v5080
        %v5082 = vrot.slane %v5068, %v5081
        %v5083 = vcombine.low %v5075, %v5082
        %v5085 = vadd.f32 %v5026, %v5083
        %5086 = vst [vmem:[#allocation2 + $0x10] sm:$0xff] %v5085
        %v5087 = vld [vmem:[%s245 + $0x60] sm:$0xff]
        %v5088 = vld [vmem:[%s245 + $0x68] sm:$0xff]
        %v5089 = vld [vmem:[%s245 + $0x70] sm:$0xff]
        %v5090 = vld [vmem:[%s245 + $0x78] sm:$0xff]
        %v5091 = vunpack.c.l.bf16 %v5087
        %v5092 = vunpack.c.h.bf16 %v5087
        %v5093 = vunpack.c.l.bf16 %v5088
        %v5094 = vunpack.c.h.bf16 %v5088
        %v5095 = vunpack.c.l.bf16 %v5089
        %v5096 = vunpack.c.h.bf16 %v5089
        %v5097 = vunpack.c.l.bf16 %v5090
        %v5098 = vunpack.c.h.bf16 %v5090
        %v5099 = vld [vmem:[%s254 + $0x60] sm:$0xff]
        %v5100 = vld [vmem:[%s254 + $0x68] sm:$0xff]
        %v5101 = vld [vmem:[%s254 + $0x70] sm:$0xff]
        %v5102 = vld [vmem:[%s254 + $0x78] sm:$0xff]
        %v5103 = vunpack.c.l.bf16 %v5099
        %v5104 = vunpack.c.h.bf16 %v5099
        %v5105 = vunpack.c.l.bf16 %v5100
        %v5106 = vunpack.c.h.bf16 %v5100
        %v5107 = vunpack.c.l.bf16 %v5101
        %v5108 = vunpack.c.h.bf16 %v5101
        %v5109 = vunpack.c.l.bf16 %v5102
        %v5110 = vunpack.c.h.bf16 %v5102
        %v5111 = vmul.f32 %v5091, %v5091
        %v5112 = vmul.f32 %v5092, %v5092
        %v5113 = vmul.f32 %v5093, %v5093
        %v5114 = vmul.f32 %v5094, %v5094
        %v5115 = vmul.f32 %v5095, %v5095
        %v5116 = vmul.f32 %v5096, %v5096
        %v5117 = vmul.f32 %v5097, %v5097
        %v5118 = vmul.f32 %v5098, %v5098
        %v5119 = vadd.f32 %v5111, 0.0
        %v5120 = vadd.f32 %v5112, 0.0
        %v5121 = vadd.f32 %v5113, 0.0
        %v5122 = vadd.f32 %v5114, 0.0
        %v5123 = vadd.f32 %v5115, 0.0
        %v5124 = vadd.f32 %v5116, 0.0
        %v5125 = vadd.f32 %v5117, 0.0
        %v5126 = vadd.f32 %v5118, 0.0
        %v5127 = vmul.f32 %v5103, %v5103
        %v5128 = vmul.f32 %v5104, %v5104
        %v5129 = vmul.f32 %v5105, %v5105
        %v5130 = vmul.f32 %v5106, %v5106
        %v5131 = vmul.f32 %v5107, %v5107
        %v5132 = vmul.f32 %v5108, %v5108
        %v5133 = vmul.f32 %v5109, %v5109
        %v5134 = vmul.f32 %v5110, %v5110
        %v5135 = vadd.f32 %v5127, 0.0
        %v5136 = vadd.f32 %v5128, 0.0
        %v5137 = vadd.f32 %v5129, 0.0
        %v5138 = vadd.f32 %v5130, 0.0
        %v5139 = vadd.f32 %v5131, 0.0
        %v5140 = vadd.f32 %v5132, 0.0
        %v5141 = vadd.f32 %v5133, 0.0
        %v5142 = vadd.f32 %v5134, 0.0
        %v5143 = vmul.f32 %v5091, %v5103
        %v5144 = vmul.f32 %v5092, %v5104
        %v5145 = vmul.f32 %v5093, %v5105
        %v5146 = vmul.f32 %v5094, %v5106
        %v5147 = vmul.f32 %v5095, %v5107
        %v5148 = vmul.f32 %v5096, %v5108
        %v5149 = vmul.f32 %v5097, %v5109
        %v5150 = vmul.f32 %v5098, %v5110
        %v5151 = vadd.f32 %v5143, 0.0
        %v5152 = vadd.f32 %v5144, 0.0
        %v5153 = vadd.f32 %v5145, 0.0
        %v5154 = vadd.f32 %v5146, 0.0
        %v5155 = vadd.f32 %v5147, 0.0
        %v5156 = vadd.f32 %v5148, 0.0
        %v5157 = vadd.f32 %v5149, 0.0
        %v5158 = vadd.f32 %v5150, 0.0
        %v5159 = vld [vmem:[%s245 + $0xe0] sm:$0xff]
        %v5160 = vld [vmem:[%s245 + $0xe8] sm:$0xff]
        %v5161 = vld [vmem:[%s245 + $0xf0] sm:$0xff]
        %v5162 = vld [vmem:[%s245 + $0xf8] sm:$0xff]
        %v5163 = vunpack.c.l.bf16 %v5159
        %v5164 = vunpack.c.h.bf16 %v5159
        %v5165 = vunpack.c.l.bf16 %v5160
        %v5166 = vunpack.c.h.bf16 %v5160
        %v5167 = vunpack.c.l.bf16 %v5161
        %v5168 = vunpack.c.h.bf16 %v5161
        %v5169 = vunpack.c.l.bf16 %v5162
        %v5170 = vunpack.c.h.bf16 %v5162
        %v5171 = vld [vmem:[%s254 + $0xe0] sm:$0xff]
        %v5172 = vld [vmem:[%s254 + $0xe8] sm:$0xff]
        %v5173 = vld [vmem:[%s254 + $0xf0] sm:$0xff]
        %v5174 = vld [vmem:[%s254 + $0xf8] sm:$0xff]
        %v5175 = vunpack.c.l.bf16 %v5171
        %v5176 = vunpack.c.h.bf16 %v5171
        %v5177 = vunpack.c.l.bf16 %v5172
        %v5178 = vunpack.c.h.bf16 %v5172
        %v5179 = vunpack.c.l.bf16 %v5173
        %v5180 = vunpack.c.h.bf16 %v5173
        %v5181 = vunpack.c.l.bf16 %v5174
        %v5182 = vunpack.c.h.bf16 %v5174
        %v5183 = vmul.f32 %v5163, %v5163
        %v5184 = vmul.f32 %v5164, %v5164
        %v5185 = vmul.f32 %v5165, %v5165
        %v5186 = vmul.f32 %v5166, %v5166
        %v5187 = vmul.f32 %v5167, %v5167
        %v5188 = vmul.f32 %v5168, %v5168
        %v5189 = vmul.f32 %v5169, %v5169
        %v5190 = vmul.f32 %v5170, %v5170
        %v5191 = vadd.f32 %v5119, %v5183
        %v5192 = vadd.f32 %v5120, %v5184
        %v5193 = vadd.f32 %v5121, %v5185
        %v5194 = vadd.f32 %v5122, %v5186
        %v5195 = vadd.f32 %v5123, %v5187
        %v5196 = vadd.f32 %v5124, %v5188
        %v5197 = vadd.f32 %v5125, %v5189
        %v5198 = vadd.f32 %v5126, %v5190
        %v5199 = vmul.f32 %v5175, %v5175
        %v5200 = vmul.f32 %v5176, %v5176
        %v5201 = vmul.f32 %v5177, %v5177
        %v5202 = vmul.f32 %v5178, %v5178
        %v5203 = vmul.f32 %v5179, %v5179
        %v5204 = vmul.f32 %v5180, %v5180
        %v5205 = vmul.f32 %v5181, %v5181
        %v5206 = vmul.f32 %v5182, %v5182
        %v5207 = vadd.f32 %v5135, %v5199
        %v5208 = vadd.f32 %v5136, %v5200
        %v5209 = vadd.f32 %v5137, %v5201
        %v5210 = vadd.f32 %v5138, %v5202
        %v5211 = vadd.f32 %v5139, %v5203
        %v5212 = vadd.f32 %v5140, %v5204
        %v5213 = vadd.f32 %v5141, %v5205
        %v5214 = vadd.f32 %v5142, %v5206
        %v5215 = vmul.f32 %v5163, %v5175
        %v5216 = vmul.f32 %v5164, %v5176
        %v5217 = vmul.f32 %v5165, %v5177
        %v5218 = vmul.f32 %v5166, %v5178
        %v5219 = vmul.f32 %v5167, %v5179
        %v5220 = vmul.f32 %v5168, %v5180
        %v5221 = vmul.f32 %v5169, %v5181
        %v5222 = vmul.f32 %v5170, %v5182
        %v5223 = vadd.f32 %v5151, %v5215
        %v5224 = vadd.f32 %v5152, %v5216
        %v5225 = vadd.f32 %v5153, %v5217
        %v5226 = vadd.f32 %v5154, %v5218
        %v5227 = vadd.f32 %v5155, %v5219
        %v5228 = vadd.f32 %v5156, %v5220
        %v5229 = vadd.f32 %v5157, %v5221
        %v5230 = vadd.f32 %v5158, %v5222
        %v5231 = vld [vmem:[%s245 + $0x160] sm:$0xff]
        %v5232 = vld [vmem:[%s245 + $0x168] sm:$0xff]
        %v5233 = vld [vmem:[%s245 + $0x170] sm:$0xff]
        %v5234 = vld [vmem:[%s245 + $0x178] sm:$0xff]
        %v5235 = vunpack.c.l.bf16 %v5231
        %v5236 = vunpack.c.h.bf16 %v5231
        %v5237 = vunpack.c.l.bf16 %v5232
        %v5238 = vunpack.c.h.bf16 %v5232
        %v5239 = vunpack.c.l.bf16 %v5233
        %v5240 = vunpack.c.h.bf16 %v5233
        %v5241 = vunpack.c.l.bf16 %v5234
        %v5242 = vunpack.c.h.bf16 %v5234
        %v5243 = vld [vmem:[%s254 + $0x160] sm:$0xff]
        %v5244 = vld [vmem:[%s254 + $0x168] sm:$0xff]
        %v5245 = vld [vmem:[%s254 + $0x170] sm:$0xff]
        %v5246 = vld [vmem:[%s254 + $0x178] sm:$0xff]
        %v5247 = vunpack.c.l.bf16 %v5243
        %v5248 = vunpack.c.h.bf16 %v5243
        %v5249 = vunpack.c.l.bf16 %v5244
        %v5250 = vunpack.c.h.bf16 %v5244
        %v5251 = vunpack.c.l.bf16 %v5245
        %v5252 = vunpack.c.h.bf16 %v5245
        %v5253 = vunpack.c.l.bf16 %v5246
        %v5254 = vunpack.c.h.bf16 %v5246
        %v5255 = vmul.f32 %v5235, %v5235
        %v5256 = vmul.f32 %v5236, %v5236
        %v5257 = vmul.f32 %v5237, %v5237
        %v5258 = vmul.f32 %v5238, %v5238
        %v5259 = vmul.f32 %v5239, %v5239
        %v5260 = vmul.f32 %v5240, %v5240
        %v5261 = vmul.f32 %v5241, %v5241
        %v5262 = vmul.f32 %v5242, %v5242
        %v5263 = vadd.f32 %v5191, %v5255
        %v5264 = vadd.f32 %v5192, %v5256
        %v5265 = vadd.f32 %v5193, %v5257
        %v5266 = vadd.f32 %v5194, %v5258
        %v5267 = vadd.f32 %v5195, %v5259
        %v5268 = vadd.f32 %v5196, %v5260
        %v5269 = vadd.f32 %v5197, %v5261
        %v5270 = vadd.f32 %v5198, %v5262
        %v5271 = vmul.f32 %v5247, %v5247
        %v5272 = vmul.f32 %v5248, %v5248
        %v5273 = vmul.f32 %v5249, %v5249
        %v5274 = vmul.f32 %v5250, %v5250
        %v5275 = vmul.f32 %v5251, %v5251
        %v5276 = vmul.f32 %v5252, %v5252
        %v5277 = vmul.f32 %v5253, %v5253
        %v5278 = vmul.f32 %v5254, %v5254
        %v5279 = vadd.f32 %v5207, %v5271
        %v5280 = vadd.f32 %v5208, %v5272
        %v5281 = vadd.f32 %v5209, %v5273
        %v5282 = vadd.f32 %v5210, %v5274
        %v5283 = vadd.f32 %v5211, %v5275
        %v5284 = vadd.f32 %v5212, %v5276
        %v5285 = vadd.f32 %v5213, %v5277
        %v5286 = vadd.f32 %v5214, %v5278
        %v5287 = vmul.f32 %v5235, %v5247
        %v5288 = vmul.f32 %v5236, %v5248
        %v5289 = vmul.f32 %v5237, %v5249
        %v5290 = vmul.f32 %v5238, %v5250
        %v5291 = vmul.f32 %v5239, %v5251
        %v5292 = vmul.f32 %v5240, %v5252
        %v5293 = vmul.f32 %v5241, %v5253
        %v5294 = vmul.f32 %v5242, %v5254
        %v5295 = vadd.f32 %v5223, %v5287
        %v5296 = vadd.f32 %v5224, %v5288
        %v5297 = vadd.f32 %v5225, %v5289
        %v5298 = vadd.f32 %v5226, %v5290
        %v5299 = vadd.f32 %v5227, %v5291
        %v5300 = vadd.f32 %v5228, %v5292
        %v5301 = vadd.f32 %v5229, %v5293
        %v5302 = vadd.f32 %v5230, %v5294
        %v5303 = vld [vmem:[%s245 + $0x1e0] sm:$0xff]
        %v5304 = vld [vmem:[%s245 + $0x1e8] sm:$0xff]
        %v5305 = vld [vmem:[%s245 + $0x1f0] sm:$0xff]
        %v5306 = vld [vmem:[%s245 + $0x1f8] sm:$0xff]
        %v5307 = vunpack.c.l.bf16 %v5303
        %v5308 = vunpack.c.h.bf16 %v5303
        %v5309 = vunpack.c.l.bf16 %v5304
        %v5310 = vunpack.c.h.bf16 %v5304
        %v5311 = vunpack.c.l.bf16 %v5305
        %v5312 = vunpack.c.h.bf16 %v5305
        %v5313 = vunpack.c.l.bf16 %v5306
        %v5314 = vunpack.c.h.bf16 %v5306
        %v5315 = vld [vmem:[%s254 + $0x1e0] sm:$0xff]
        %v5316 = vld [vmem:[%s254 + $0x1e8] sm:$0xff]
        %v5317 = vld [vmem:[%s254 + $0x1f0] sm:$0xff]
        %v5318 = vld [vmem:[%s254 + $0x1f8] sm:$0xff]
        %v5319 = vunpack.c.l.bf16 %v5315
        %v5320 = vunpack.c.h.bf16 %v5315
        %v5321 = vunpack.c.l.bf16 %v5316
        %v5322 = vunpack.c.h.bf16 %v5316
        %v5323 = vunpack.c.l.bf16 %v5317
        %v5324 = vunpack.c.h.bf16 %v5317
        %v5325 = vunpack.c.l.bf16 %v5318
        %v5326 = vunpack.c.h.bf16 %v5318
        %v5327 = vmul.f32 %v5307, %v5307
        %v5328 = vmul.f32 %v5308, %v5308
        %v5329 = vmul.f32 %v5309, %v5309
        %v5330 = vmul.f32 %v5310, %v5310
        %v5331 = vmul.f32 %v5311, %v5311
        %v5332 = vmul.f32 %v5312, %v5312
        %v5333 = vmul.f32 %v5313, %v5313
        %v5334 = vmul.f32 %v5314, %v5314
        %v5335 = vadd.f32 %v5263, %v5327
        %v5336 = vadd.f32 %v5264, %v5328
        %v5337 = vadd.f32 %v5265, %v5329
        %v5338 = vadd.f32 %v5266, %v5330
        %v5339 = vadd.f32 %v5267, %v5331
        %v5340 = vadd.f32 %v5268, %v5332
        %v5341 = vadd.f32 %v5269, %v5333
        %v5342 = vadd.f32 %v5270, %v5334
        %v5343 = vmul.f32 %v5319, %v5319
        %v5344 = vmul.f32 %v5320, %v5320
        %v5345 = vmul.f32 %v5321, %v5321
        %v5346 = vmul.f32 %v5322, %v5322
        %v5347 = vmul.f32 %v5323, %v5323
        %v5348 = vmul.f32 %v5324, %v5324
        %v5349 = vmul.f32 %v5325, %v5325
        %v5350 = vmul.f32 %v5326, %v5326
        %v5351 = vadd.f32 %v5279, %v5343
        %v5352 = vadd.f32 %v5280, %v5344
        %v5353 = vadd.f32 %v5281, %v5345
        %v5354 = vadd.f32 %v5282, %v5346
        %v5355 = vadd.f32 %v5283, %v5347
        %v5356 = vadd.f32 %v5284, %v5348
        %v5357 = vadd.f32 %v5285, %v5349
        %v5358 = vadd.f32 %v5286, %v5350
        %v5359 = vmul.f32 %v5307, %v5319
        %v5360 = vmul.f32 %v5308, %v5320
        %v5361 = vmul.f32 %v5309, %v5321
        %v5362 = vmul.f32 %v5310, %v5322
        %v5363 = vmul.f32 %v5311, %v5323
        %v5364 = vmul.f32 %v5312, %v5324
        %v5365 = vmul.f32 %v5313, %v5325
        %v5366 = vmul.f32 %v5314, %v5326
        %v5367 = vadd.f32 %v5295, %v5359
        %v5368 = vadd.f32 %v5296, %v5360
        %v5369 = vadd.f32 %v5297, %v5361
        %v5370 = vadd.f32 %v5298, %v5362
        %v5371 = vadd.f32 %v5299, %v5363
        %v5372 = vadd.f32 %v5300, %v5364
        %v5373 = vadd.f32 %v5301, %v5365
        %v5374 = vadd.f32 %v5302, %v5366
        %v5375 = vld [vmem:[%s245 + $0x260] sm:$0xff]
        %v5376 = vld [vmem:[%s245 + $0x268] sm:$0xff]
        %v5377 = vld [vmem:[%s245 + $0x270] sm:$0xff]
        %v5378 = vld [vmem:[%s245 + $0x278] sm:$0xff]
        %v5379 = vunpack.c.l.bf16 %v5375
        %v5380 = vunpack.c.h.bf16 %v5375
        %v5381 = vunpack.c.l.bf16 %v5376
        %v5382 = vunpack.c.h.bf16 %v5376
        %v5383 = vunpack.c.l.bf16 %v5377
        %v5384 = vunpack.c.h.bf16 %v5377
        %v5385 = vunpack.c.l.bf16 %v5378
        %v5386 = vunpack.c.h.bf16 %v5378
        %v5387 = vld [vmem:[%s254 + $0x260] sm:$0xff]
        %v5388 = vld [vmem:[%s254 + $0x268] sm:$0xff]
        %v5389 = vld [vmem:[%s254 + $0x270] sm:$0xff]
        %v5390 = vld [vmem:[%s254 + $0x278] sm:$0xff]
        %v5391 = vunpack.c.l.bf16 %v5387
        %v5392 = vunpack.c.h.bf16 %v5387
        %v5393 = vunpack.c.l.bf16 %v5388
        %v5394 = vunpack.c.h.bf16 %v5388
        %v5395 = vunpack.c.l.bf16 %v5389
        %v5396 = vunpack.c.h.bf16 %v5389
        %v5397 = vunpack.c.l.bf16 %v5390
        %v5398 = vunpack.c.h.bf16 %v5390
        %v5399 = vmul.f32 %v5379, %v5379
        %v5400 = vmul.f32 %v5380, %v5380
        %v5401 = vmul.f32 %v5381, %v5381
        %v5402 = vmul.f32 %v5382, %v5382
        %v5403 = vmul.f32 %v5383, %v5383
        %v5404 = vmul.f32 %v5384, %v5384
        %v5405 = vmul.f32 %v5385, %v5385
        %v5406 = vmul.f32 %v5386, %v5386
        %v5407 = vadd.f32 %v5335, %v5399
        %v5408 = vadd.f32 %v5336, %v5400
        %v5409 = vadd.f32 %v5337, %v5401
        %v5410 = vadd.f32 %v5338, %v5402
        %v5411 = vadd.f32 %v5339, %v5403
        %v5412 = vadd.f32 %v5340, %v5404
        %v5413 = vadd.f32 %v5341, %v5405
        %v5414 = vadd.f32 %v5342, %v5406
        %v5415 = vmul.f32 %v5391, %v5391
        %v5416 = vmul.f32 %v5392, %v5392
        %v5417 = vmul.f32 %v5393, %v5393
        %v5418 = vmul.f32 %v5394, %v5394
        %v5419 = vmul.f32 %v5395, %v5395
        %v5420 = vmul.f32 %v5396, %v5396
        %v5421 = vmul.f32 %v5397, %v5397
        %v5422 = vmul.f32 %v5398, %v5398
        %v5423 = vadd.f32 %v5351, %v5415
        %v5424 = vadd.f32 %v5352, %v5416
        %v5425 = vadd.f32 %v5353, %v5417
        %v5426 = vadd.f32 %v5354, %v5418
        %v5427 = vadd.f32 %v5355, %v5419
        %v5428 = vadd.f32 %v5356, %v5420
        %v5429 = vadd.f32 %v5357, %v5421
        %v5430 = vadd.f32 %v5358, %v5422
        %v5431 = vmul.f32 %v5379, %v5391
        %v5432 = vmul.f32 %v5380, %v5392
        %v5433 = vmul.f32 %v5381, %v5393
        %v5434 = vmul.f32 %v5382, %v5394
        %v5435 = vmul.f32 %v5383, %v5395
        %v5436 = vmul.f32 %v5384, %v5396
        %v5437 = vmul.f32 %v5385, %v5397
        %v5438 = vmul.f32 %v5386, %v5398
        %v5439 = vadd.f32 %v5367, %v5431
        %v5440 = vadd.f32 %v5368, %v5432
        %v5441 = vadd.f32 %v5369, %v5433
        %v5442 = vadd.f32 %v5370, %v5434
        %v5443 = vadd.f32 %v5371, %v5435
        %v5444 = vadd.f32 %v5372, %v5436
        %v5445 = vadd.f32 %v5373, %v5437
        %v5446 = vadd.f32 %v5374, %v5438
        %v5447 = vld [vmem:[%s245 + $0x2e0] sm:$0xff]
        %v5448 = vld [vmem:[%s245 + $0x2e8] sm:$0xff]
        %v5449 = vld [vmem:[%s245 + $0x2f0] sm:$0xff]
        %v5450 = vld [vmem:[%s245 + $0x2f8] sm:$0xff]
        %v5451 = vunpack.c.l.bf16 %v5447
        %v5452 = vunpack.c.h.bf16 %v5447
        %v5453 = vunpack.c.l.bf16 %v5448
        %v5454 = vunpack.c.h.bf16 %v5448
        %v5455 = vunpack.c.l.bf16 %v5449
        %v5456 = vunpack.c.h.bf16 %v5449
        %v5457 = vunpack.c.l.bf16 %v5450
        %v5458 = vunpack.c.h.bf16 %v5450
        %v5459 = vld [vmem:[%s254 + $0x2e0] sm:$0xff]
        %v5460 = vld [vmem:[%s254 + $0x2e8] sm:$0xff]
        %v5461 = vld [vmem:[%s254 + $0x2f0] sm:$0xff]
        %v5462 = vld [vmem:[%s254 + $0x2f8] sm:$0xff]
        %v5463 = vunpack.c.l.bf16 %v5459
        %v5464 = vunpack.c.h.bf16 %v5459
        %v5465 = vunpack.c.l.bf16 %v5460
        %v5466 = vunpack.c.h.bf16 %v5460
        %v5467 = vunpack.c.l.bf16 %v5461
        %v5468 = vunpack.c.h.bf16 %v5461
        %v5469 = vunpack.c.l.bf16 %v5462
        %v5470 = vunpack.c.h.bf16 %v5462
        %v5471 = vmul.f32 %v5451, %v5451
        %v5472 = vmul.f32 %v5452, %v5452
        %v5473 = vmul.f32 %v5453, %v5453
        %v5474 = vmul.f32 %v5454, %v5454
        %v5475 = vmul.f32 %v5455, %v5455
        %v5476 = vmul.f32 %v5456, %v5456
        %v5477 = vmul.f32 %v5457, %v5457
        %v5478 = vmul.f32 %v5458, %v5458
        %v5479 = vadd.f32 %v5407, %v5471
        %v5480 = vadd.f32 %v5408, %v5472
        %v5481 = vadd.f32 %v5409, %v5473
        %v5482 = vadd.f32 %v5410, %v5474
        %v5483 = vadd.f32 %v5411, %v5475
        %v5484 = vadd.f32 %v5412, %v5476
        %v5485 = vadd.f32 %v5413, %v5477
        %v5486 = vadd.f32 %v5414, %v5478
        %v5487 = vmul.f32 %v5463, %v5463
        %v5488 = vmul.f32 %v5464, %v5464
        %v5489 = vmul.f32 %v5465, %v5465
        %v5490 = vmul.f32 %v5466, %v5466
        %v5491 = vmul.f32 %v5467, %v5467
        %v5492 = vmul.f32 %v5468, %v5468
        %v5493 = vmul.f32 %v5469, %v5469
        %v5494 = vmul.f32 %v5470, %v5470
        %v5495 = vadd.f32 %v5423, %v5487
        %v5496 = vadd.f32 %v5424, %v5488
        %v5497 = vadd.f32 %v5425, %v5489
        %v5498 = vadd.f32 %v5426, %v5490
        %v5499 = vadd.f32 %v5427, %v5491
        %v5500 = vadd.f32 %v5428, %v5492
        %v5501 = vadd.f32 %v5429, %v5493
        %v5502 = vadd.f32 %v5430, %v5494
        %v5503 = vmul.f32 %v5451, %v5463
        %v5504 = vmul.f32 %v5452, %v5464
        %v5505 = vmul.f32 %v5453, %v5465
        %v5506 = vmul.f32 %v5454, %v5466
        %v5507 = vmul.f32 %v5455, %v5467
        %v5508 = vmul.f32 %v5456, %v5468
        %v5509 = vmul.f32 %v5457, %v5469
        %v5510 = vmul.f32 %v5458, %v5470
        %v5511 = vadd.f32 %v5439, %v5503
        %v5512 = vadd.f32 %v5440, %v5504
        %v5513 = vadd.f32 %v5441, %v5505
        %v5514 = vadd.f32 %v5442, %v5506
        %v5515 = vadd.f32 %v5443, %v5507
        %v5516 = vadd.f32 %v5444, %v5508
        %v5517 = vadd.f32 %v5445, %v5509
        %v5518 = vadd.f32 %v5446, %v5510
        %v5519 = vld [vmem:[%s245 + $0x360] sm:$0xff]
        %v5520 = vld [vmem:[%s245 + $0x368] sm:$0xff]
        %v5521 = vld [vmem:[%s245 + $0x370] sm:$0xff]
        %v5522 = vld [vmem:[%s245 + $0x378] sm:$0xff]
        %v5523 = vunpack.c.l.bf16 %v5519
        %v5524 = vunpack.c.h.bf16 %v5519
        %v5525 = vunpack.c.l.bf16 %v5520
        %v5526 = vunpack.c.h.bf16 %v5520
        %v5527 = vunpack.c.l.bf16 %v5521
        %v5528 = vunpack.c.h.bf16 %v5521
        %v5529 = vunpack.c.l.bf16 %v5522
        %v5530 = vunpack.c.h.bf16 %v5522
        %v5531 = vld [vmem:[%s254 + $0x360] sm:$0xff]
        %v5532 = vld [vmem:[%s254 + $0x368] sm:$0xff]
        %v5533 = vld [vmem:[%s254 + $0x370] sm:$0xff]
        %v5534 = vld [vmem:[%s254 + $0x378] sm:$0xff]
        %v5535 = vunpack.c.l.bf16 %v5531
        %v5536 = vunpack.c.h.bf16 %v5531
        %v5537 = vunpack.c.l.bf16 %v5532
        %v5538 = vunpack.c.h.bf16 %v5532
        %v5539 = vunpack.c.l.bf16 %v5533
        %v5540 = vunpack.c.h.bf16 %v5533
        %v5541 = vunpack.c.l.bf16 %v5534
        %v5542 = vunpack.c.h.bf16 %v5534
        %v5543 = vmul.f32 %v5523, %v5523
        %v5544 = vmul.f32 %v5524, %v5524
        %v5545 = vmul.f32 %v5525, %v5525
        %v5546 = vmul.f32 %v5526, %v5526
        %v5547 = vmul.f32 %v5527, %v5527
        %v5548 = vmul.f32 %v5528, %v5528
        %v5549 = vmul.f32 %v5529, %v5529
        %v5550 = vmul.f32 %v5530, %v5530
        %v5551 = vadd.f32 %v5479, %v5543
        %v5552 = vadd.f32 %v5480, %v5544
        %v5553 = vadd.f32 %v5481, %v5545
        %v5554 = vadd.f32 %v5482, %v5546
        %v5555 = vadd.f32 %v5483, %v5547
        %v5556 = vadd.f32 %v5484, %v5548
        %v5557 = vadd.f32 %v5485, %v5549
        %v5558 = vadd.f32 %v5486, %v5550
        %v5559 = vmul.f32 %v5535, %v5535
        %v5560 = vmul.f32 %v5536, %v5536
        %v5561 = vmul.f32 %v5537, %v5537
        %v5562 = vmul.f32 %v5538, %v5538
        %v5563 = vmul.f32 %v5539, %v5539
        %v5564 = vmul.f32 %v5540, %v5540
        %v5565 = vmul.f32 %v5541, %v5541
        %v5566 = vmul.f32 %v5542, %v5542
        %v5567 = vadd.f32 %v5495, %v5559
        %v5568 = vadd.f32 %v5496, %v5560
        %v5569 = vadd.f32 %v5497, %v5561
        %v5570 = vadd.f32 %v5498, %v5562
        %v5571 = vadd.f32 %v5499, %v5563
        %v5572 = vadd.f32 %v5500, %v5564
        %v5573 = vadd.f32 %v5501, %v5565
        %v5574 = vadd.f32 %v5502, %v5566
        %v5575 = vmul.f32 %v5523, %v5535
        %v5576 = vmul.f32 %v5524, %v5536
        %v5577 = vmul.f32 %v5525, %v5537
        %v5578 = vmul.f32 %v5526, %v5538
        %v5579 = vmul.f32 %v5527, %v5539
        %v5580 = vmul.f32 %v5528, %v5540
        %v5581 = vmul.f32 %v5529, %v5541
        %v5582 = vmul.f32 %v5530, %v5542
        %v5583 = vadd.f32 %v5511, %v5575
        %v5584 = vadd.f32 %v5512, %v5576
        %v5585 = vadd.f32 %v5513, %v5577
        %v5586 = vadd.f32 %v5514, %v5578
        %v5587 = vadd.f32 %v5515, %v5579
        %v5588 = vadd.f32 %v5516, %v5580
        %v5589 = vadd.f32 %v5517, %v5581
        %v5590 = vadd.f32 %v5518, %v5582
        %v5591 = vld [vmem:[%s245 + $0x3e0] sm:$0xff]
        %v5592 = vld [vmem:[%s245 + $0x3e8] sm:$0xff]
        %v5593 = vld [vmem:[%s245 + $0x3f0] sm:$0xff]
        %v5594 = vld [vmem:[%s245 + $0x3f8] sm:$0xff]
        %v5595 = vunpack.c.l.bf16 %v5591
        %v5596 = vunpack.c.h.bf16 %v5591
        %v5597 = vunpack.c.l.bf16 %v5592
        %v5598 = vunpack.c.h.bf16 %v5592
        %v5599 = vunpack.c.l.bf16 %v5593
        %v5600 = vunpack.c.h.bf16 %v5593
        %v5601 = vunpack.c.l.bf16 %v5594
        %v5602 = vunpack.c.h.bf16 %v5594
        %v5603 = vld [vmem:[%s254 + $0x3e0] sm:$0xff]
        %v5604 = vld [vmem:[%s254 + $0x3e8] sm:$0xff]
        %v5605 = vld [vmem:[%s254 + $0x3f0] sm:$0xff]
        %v5606 = vld [vmem:[%s254 + $0x3f8] sm:$0xff]
        %v5607 = vunpack.c.l.bf16 %v5603
        %v5608 = vunpack.c.h.bf16 %v5603
        %v5609 = vunpack.c.l.bf16 %v5604
        %v5610 = vunpack.c.h.bf16 %v5604
        %v5611 = vunpack.c.l.bf16 %v5605
        %v5612 = vunpack.c.h.bf16 %v5605
        %v5613 = vunpack.c.l.bf16 %v5606
        %v5614 = vunpack.c.h.bf16 %v5606
        %v5615 = vmul.f32 %v5595, %v5595
        %v5616 = vmul.f32 %v5596, %v5596
        %v5617 = vmul.f32 %v5597, %v5597
        %v5618 = vmul.f32 %v5598, %v5598
        %v5619 = vmul.f32 %v5599, %v5599
        %v5620 = vmul.f32 %v5600, %v5600
        %v5621 = vmul.f32 %v5601, %v5601
        %v5622 = vmul.f32 %v5602, %v5602
        %v5623 = vadd.f32 %v5551, %v5615
        %v5624 = vadd.f32 %v5552, %v5616
        %v5625 = vadd.f32 %v5553, %v5617
        %v5626 = vadd.f32 %v5554, %v5618
        %v5627 = vadd.f32 %v5555, %v5619
        %v5628 = vadd.f32 %v5556, %v5620
        %v5629 = vadd.f32 %v5557, %v5621
        %v5630 = vadd.f32 %v5558, %v5622
        %v5631 = vmul.f32 %v5607, %v5607
        %v5632 = vmul.f32 %v5608, %v5608
        %v5633 = vmul.f32 %v5609, %v5609
        %v5634 = vmul.f32 %v5610, %v5610
        %v5635 = vmul.f32 %v5611, %v5611
        %v5636 = vmul.f32 %v5612, %v5612
        %v5637 = vmul.f32 %v5613, %v5613
        %v5638 = vmul.f32 %v5614, %v5614
        %v5639 = vadd.f32 %v5567, %v5631
        %v5640 = vadd.f32 %v5568, %v5632
        %v5641 = vadd.f32 %v5569, %v5633
        %v5642 = vadd.f32 %v5570, %v5634
        %v5643 = vadd.f32 %v5571, %v5635
        %v5644 = vadd.f32 %v5572, %v5636
        %v5645 = vadd.f32 %v5573, %v5637
        %v5646 = vadd.f32 %v5574, %v5638
        %v5647 = vmul.f32 %v5595, %v5607
        %v5648 = vmul.f32 %v5596, %v5608
        %v5649 = vmul.f32 %v5597, %v5609
        %v5650 = vmul.f32 %v5598, %v5610
        %v5651 = vmul.f32 %v5599, %v5611
        %v5652 = vmul.f32 %v5600, %v5612
        %v5653 = vmul.f32 %v5601, %v5613
        %v5654 = vmul.f32 %v5602, %v5614
        %v5655 = vadd.f32 %v5583, %v5647
        %v5656 = vadd.f32 %v5584, %v5648
        %v5657 = vadd.f32 %v5585, %v5649
        %v5658 = vadd.f32 %v5586, %v5650
        %v5659 = vadd.f32 %v5587, %v5651
        %v5660 = vadd.f32 %v5588, %v5652
        %v5661 = vadd.f32 %v5589, %v5653
        %v5662 = vadd.f32 %v5590, %v5654
        %v5663 = vld [vmem:[%s245 + $0x460] sm:$0xff]
        %v5664 = vld [vmem:[%s245 + $0x468] sm:$0xff]
        %v5665 = vld [vmem:[%s245 + $0x470] sm:$0xff]
        %v5666 = vld [vmem:[%s245 + $0x478] sm:$0xff]
        %v5667 = vunpack.c.l.bf16 %v5663
        %v5668 = vunpack.c.h.bf16 %v5663
        %v5669 = vunpack.c.l.bf16 %v5664
        %v5670 = vunpack.c.h.bf16 %v5664
        %v5671 = vunpack.c.l.bf16 %v5665
        %v5672 = vunpack.c.h.bf16 %v5665
        %v5673 = vunpack.c.l.bf16 %v5666
        %v5674 = vunpack.c.h.bf16 %v5666
        %v5675 = vld [vmem:[%s254 + $0x460] sm:$0xff]
        %v5676 = vld [vmem:[%s254 + $0x468] sm:$0xff]
        %v5677 = vld [vmem:[%s254 + $0x470] sm:$0xff]
        %v5678 = vld [vmem:[%s254 + $0x478] sm:$0xff]
        %v5679 = vunpack.c.l.bf16 %v5675
        %v5680 = vunpack.c.h.bf16 %v5675
        %v5681 = vunpack.c.l.bf16 %v5676
        %v5682 = vunpack.c.h.bf16 %v5676
        %v5683 = vunpack.c.l.bf16 %v5677
        %v5684 = vunpack.c.h.bf16 %v5677
        %v5685 = vunpack.c.l.bf16 %v5678
        %v5686 = vunpack.c.h.bf16 %v5678
        %v5687 = vmul.f32 %v5667, %v5667
        %v5688 = vmul.f32 %v5668, %v5668
        %v5689 = vmul.f32 %v5669, %v5669
        %v5690 = vmul.f32 %v5670, %v5670
        %v5691 = vmul.f32 %v5671, %v5671
        %v5692 = vmul.f32 %v5672, %v5672
        %v5693 = vmul.f32 %v5673, %v5673
        %v5694 = vmul.f32 %v5674, %v5674
        %v5695 = vadd.f32 %v5623, %v5687
        %v5696 = vadd.f32 %v5624, %v5688
        %v5697 = vadd.f32 %v5625, %v5689
        %v5698 = vadd.f32 %v5626, %v5690
        %v5699 = vadd.f32 %v5627, %v5691
        %v5700 = vadd.f32 %v5628, %v5692
        %v5701 = vadd.f32 %v5629, %v5693
        %v5702 = vadd.f32 %v5630, %v5694
        %v5703 = vmul.f32 %v5679, %v5679
        %v5704 = vmul.f32 %v5680, %v5680
        %v5705 = vmul.f32 %v5681, %v5681
        %v5706 = vmul.f32 %v5682, %v5682
        %v5707 = vmul.f32 %v5683, %v5683
        %v5708 = vmul.f32 %v5684, %v5684
        %v5709 = vmul.f32 %v5685, %v5685
        %v5710 = vmul.f32 %v5686, %v5686
        %v5711 = vadd.f32 %v5639, %v5703
        %v5712 = vadd.f32 %v5640, %v5704
        %v5713 = vadd.f32 %v5641, %v5705
        %v5714 = vadd.f32 %v5642, %v5706
        %v5715 = vadd.f32 %v5643, %v5707
        %v5716 = vadd.f32 %v5644, %v5708
        %v5717 = vadd.f32 %v5645, %v5709
        %v5718 = vadd.f32 %v5646, %v5710
        %v5719 = vmul.f32 %v5667, %v5679
        %v5720 = vmul.f32 %v5668, %v5680
        %v5721 = vmul.f32 %v5669, %v5681
        %v5722 = vmul.f32 %v5670, %v5682
        %v5723 = vmul.f32 %v5671, %v5683
        %v5724 = vmul.f32 %v5672, %v5684
        %v5725 = vmul.f32 %v5673, %v5685
        %v5726 = vmul.f32 %v5674, %v5686
        %v5727 = vadd.f32 %v5655, %v5719
        %v5728 = vadd.f32 %v5656, %v5720
        %v5729 = vadd.f32 %v5657, %v5721
        %v5730 = vadd.f32 %v5658, %v5722
        %v5731 = vadd.f32 %v5659, %v5723
        %v5732 = vadd.f32 %v5660, %v5724
        %v5733 = vadd.f32 %v5661, %v5725
        %v5734 = vadd.f32 %v5662, %v5726
        %v5735 = vld [vmem:[%s245 + $0x4e0] sm:$0xff]
        %v5736 = vld [vmem:[%s245 + $0x4e8] sm:$0xff]
        %v5737 = vld [vmem:[%s245 + $0x4f0] sm:$0xff]
        %v5738 = vld [vmem:[%s245 + $0x4f8] sm:$0xff]
        %v5739 = vunpack.c.l.bf16 %v5735
        %v5740 = vunpack.c.h.bf16 %v5735
        %v5741 = vunpack.c.l.bf16 %v5736
        %v5742 = vunpack.c.h.bf16 %v5736
        %v5743 = vunpack.c.l.bf16 %v5737
        %v5744 = vunpack.c.h.bf16 %v5737
        %v5745 = vunpack.c.l.bf16 %v5738
        %v5746 = vunpack.c.h.bf16 %v5738
        %v5747 = vld [vmem:[%s254 + $0x4e0] sm:$0xff]
        %v5748 = vld [vmem:[%s254 + $0x4e8] sm:$0xff]
        %v5749 = vld [vmem:[%s254 + $0x4f0] sm:$0xff]
        %v5750 = vld [vmem:[%s254 + $0x4f8] sm:$0xff]
        %v5751 = vunpack.c.l.bf16 %v5747
        %v5752 = vunpack.c.h.bf16 %v5747
        %v5753 = vunpack.c.l.bf16 %v5748
        %v5754 = vunpack.c.h.bf16 %v5748
        %v5755 = vunpack.c.l.bf16 %v5749
        %v5756 = vunpack.c.h.bf16 %v5749
        %v5757 = vunpack.c.l.bf16 %v5750
        %v5758 = vunpack.c.h.bf16 %v5750
        %v5759 = vmul.f32 %v5739, %v5739
        %v5760 = vmul.f32 %v5740, %v5740
        %v5761 = vmul.f32 %v5741, %v5741
        %v5762 = vmul.f32 %v5742, %v5742
        %v5763 = vmul.f32 %v5743, %v5743
        %v5764 = vmul.f32 %v5744, %v5744
        %v5765 = vmul.f32 %v5745, %v5745
        %v5766 = vmul.f32 %v5746, %v5746
        %v5767 = vadd.f32 %v5695, %v5759
        %v5768 = vadd.f32 %v5696, %v5760
        %v5769 = vadd.f32 %v5697, %v5761
        %v5770 = vadd.f32 %v5698, %v5762
        %v5771 = vadd.f32 %v5699, %v5763
        %v5772 = vadd.f32 %v5700, %v5764
        %v5773 = vadd.f32 %v5701, %v5765
        %v5774 = vadd.f32 %v5702, %v5766
        %v5775 = vmul.f32 %v5751, %v5751
        %v5776 = vmul.f32 %v5752, %v5752
        %v5777 = vmul.f32 %v5753, %v5753
        %v5778 = vmul.f32 %v5754, %v5754
        %v5779 = vmul.f32 %v5755, %v5755
        %v5780 = vmul.f32 %v5756, %v5756
        %v5781 = vmul.f32 %v5757, %v5757
        %v5782 = vmul.f32 %v5758, %v5758
        %v5783 = vadd.f32 %v5711, %v5775
        %v5784 = vadd.f32 %v5712, %v5776
        %v5785 = vadd.f32 %v5713, %v5777
        %v5786 = vadd.f32 %v5714, %v5778
        %v5787 = vadd.f32 %v5715, %v5779
        %v5788 = vadd.f32 %v5716, %v5780
        %v5789 = vadd.f32 %v5717, %v5781
        %v5790 = vadd.f32 %v5718, %v5782
        %v5791 = vmul.f32 %v5739, %v5751
        %v5792 = vmul.f32 %v5740, %v5752
        %v5793 = vmul.f32 %v5741, %v5753
        %v5794 = vmul.f32 %v5742, %v5754
        %v5795 = vmul.f32 %v5743, %v5755
        %v5796 = vmul.f32 %v5744, %v5756
        %v5797 = vmul.f32 %v5745, %v5757
        %v5798 = vmul.f32 %v5746, %v5758
        %v5799 = vadd.f32 %v5727, %v5791
        %v5800 = vadd.f32 %v5728, %v5792
        %v5801 = vadd.f32 %v5729, %v5793
        %v5802 = vadd.f32 %v5730, %v5794
        %v5803 = vadd.f32 %v5731, %v5795
        %v5804 = vadd.f32 %v5732, %v5796
        %v5805 = vadd.f32 %v5733, %v5797
        %v5806 = vadd.f32 %v5734, %v5798
        %v5807 = vld [vmem:[%s245 + $0x560] sm:$0xff]
        %v5808 = vld [vmem:[%s245 + $0x568] sm:$0xff]
        %v5809 = vld [vmem:[%s245 + $0x570] sm:$0xff]
        %v5810 = vld [vmem:[%s245 + $0x578] sm:$0xff]
        %v5811 = vunpack.c.l.bf16 %v5807
        %v5812 = vunpack.c.h.bf16 %v5807
        %v5813 = vunpack.c.l.bf16 %v5808
        %v5814 = vunpack.c.h.bf16 %v5808
        %v5815 = vunpack.c.l.bf16 %v5809
        %v5816 = vunpack.c.h.bf16 %v5809
        %v5817 = vunpack.c.l.bf16 %v5810
        %v5818 = vunpack.c.h.bf16 %v5810
        %v5819 = vld [vmem:[%s254 + $0x560] sm:$0xff]
        %v5820 = vld [vmem:[%s254 + $0x568] sm:$0xff]
        %v5821 = vld [vmem:[%s254 + $0x570] sm:$0xff]
        %v5822 = vld [vmem:[%s254 + $0x578] sm:$0xff]
        %v5823 = vunpack.c.l.bf16 %v5819
        %v5824 = vunpack.c.h.bf16 %v5819
        %v5825 = vunpack.c.l.bf16 %v5820
        %v5826 = vunpack.c.h.bf16 %v5820
        %v5827 = vunpack.c.l.bf16 %v5821
        %v5828 = vunpack.c.h.bf16 %v5821
        %v5829 = vunpack.c.l.bf16 %v5822
        %v5830 = vunpack.c.h.bf16 %v5822
        %v5831 = vmul.f32 %v5811, %v5811
        %v5832 = vmul.f32 %v5812, %v5812
        %v5833 = vmul.f32 %v5813, %v5813
        %v5834 = vmul.f32 %v5814, %v5814
        %v5835 = vmul.f32 %v5815, %v5815
        %v5836 = vmul.f32 %v5816, %v5816
        %v5837 = vmul.f32 %v5817, %v5817
        %v5838 = vmul.f32 %v5818, %v5818
        %v5839 = vadd.f32 %v5767, %v5831
        %v5840 = vadd.f32 %v5768, %v5832
        %v5841 = vadd.f32 %v5769, %v5833
        %v5842 = vadd.f32 %v5770, %v5834
        %v5843 = vadd.f32 %v5771, %v5835
        %v5844 = vadd.f32 %v5772, %v5836
        %v5845 = vadd.f32 %v5773, %v5837
        %v5846 = vadd.f32 %v5774, %v5838
        %v5847 = vmul.f32 %v5823, %v5823
        %v5848 = vmul.f32 %v5824, %v5824
        %v5849 = vmul.f32 %v5825, %v5825
        %v5850 = vmul.f32 %v5826, %v5826
        %v5851 = vmul.f32 %v5827, %v5827
        %v5852 = vmul.f32 %v5828, %v5828
        %v5853 = vmul.f32 %v5829, %v5829
        %v5854 = vmul.f32 %v5830, %v5830
        %v5855 = vadd.f32 %v5783, %v5847
        %v5856 = vadd.f32 %v5784, %v5848
        %v5857 = vadd.f32 %v5785, %v5849
        %v5858 = vadd.f32 %v5786, %v5850
        %v5859 = vadd.f32 %v5787, %v5851
        %v5860 = vadd.f32 %v5788, %v5852
        %v5861 = vadd.f32 %v5789, %v5853
        %v5862 = vadd.f32 %v5790, %v5854
        %v5863 = vmul.f32 %v5811, %v5823
        %v5864 = vmul.f32 %v5812, %v5824
        %v5865 = vmul.f32 %v5813, %v5825
        %v5866 = vmul.f32 %v5814, %v5826
        %v5867 = vmul.f32 %v5815, %v5827
        %v5868 = vmul.f32 %v5816, %v5828
        %v5869 = vmul.f32 %v5817, %v5829
        %v5870 = vmul.f32 %v5818, %v5830
        %v5871 = vadd.f32 %v5799, %v5863
        %v5872 = vadd.f32 %v5800, %v5864
        %v5873 = vadd.f32 %v5801, %v5865
        %v5874 = vadd.f32 %v5802, %v5866
        %v5875 = vadd.f32 %v5803, %v5867
        %v5876 = vadd.f32 %v5804, %v5868
        %v5877 = vadd.f32 %v5805, %v5869
        %v5878 = vadd.f32 %v5806, %v5870
        %v5879 = vld [vmem:[%s245 + $0x5e0] sm:$0xff]
        %v5880 = vld [vmem:[%s245 + $0x5e8] sm:$0xff]
        %v5881 = vld [vmem:[%s245 + $0x5f0] sm:$0xff]
        %v5882 = vld [vmem:[%s245 + $0x5f8] sm:$0xff]
        %v5883 = vunpack.c.l.bf16 %v5879
        %v5884 = vunpack.c.h.bf16 %v5879
        %v5885 = vunpack.c.l.bf16 %v5880
        %v5886 = vunpack.c.h.bf16 %v5880
        %v5887 = vunpack.c.l.bf16 %v5881
        %v5888 = vunpack.c.h.bf16 %v5881
        %v5889 = vunpack.c.l.bf16 %v5882
        %v5890 = vunpack.c.h.bf16 %v5882
        %v5891 = vld [vmem:[%s254 + $0x5e0] sm:$0xff]
        %v5892 = vld [vmem:[%s254 + $0x5e8] sm:$0xff]
        %v5893 = vld [vmem:[%s254 + $0x5f0] sm:$0xff]
        %v5894 = vld [vmem:[%s254 + $0x5f8] sm:$0xff]
        %v5895 = vunpack.c.l.bf16 %v5891
        %v5896 = vunpack.c.h.bf16 %v5891
        %v5897 = vunpack.c.l.bf16 %v5892
        %v5898 = vunpack.c.h.bf16 %v5892
        %v5899 = vunpack.c.l.bf16 %v5893
        %v5900 = vunpack.c.h.bf16 %v5893
        %v5901 = vunpack.c.l.bf16 %v5894
        %v5902 = vunpack.c.h.bf16 %v5894
        %v5903 = vmul.f32 %v5883, %v5883
        %v5904 = vmul.f32 %v5884, %v5884
        %v5905 = vmul.f32 %v5885, %v5885
        %v5906 = vmul.f32 %v5886, %v5886
        %v5907 = vmul.f32 %v5887, %v5887
        %v5908 = vmul.f32 %v5888, %v5888
        %v5909 = vmul.f32 %v5889, %v5889
        %v5910 = vmul.f32 %v5890, %v5890
        %v5911 = vadd.f32 %v5839, %v5903
        %v5912 = vadd.f32 %v5840, %v5904
        %v5913 = vadd.f32 %v5841, %v5905
        %v5914 = vadd.f32 %v5842, %v5906
        %v5915 = vadd.f32 %v5843, %v5907
        %v5916 = vadd.f32 %v5844, %v5908
        %v5917 = vadd.f32 %v5845, %v5909
        %v5918 = vadd.f32 %v5846, %v5910
        %v5919 = vmul.f32 %v5895, %v5895
        %v5920 = vmul.f32 %v5896, %v5896
        %v5921 = vmul.f32 %v5897, %v5897
        %v5922 = vmul.f32 %v5898, %v5898
        %v5923 = vmul.f32 %v5899, %v5899
        %v5924 = vmul.f32 %v5900, %v5900
        %v5925 = vmul.f32 %v5901, %v5901
        %v5926 = vmul.f32 %v5902, %v5902
        %v5927 = vadd.f32 %v5855, %v5919
        %v5928 = vadd.f32 %v5856, %v5920
        %v5929 = vadd.f32 %v5857, %v5921
        %v5930 = vadd.f32 %v5858, %v5922
        %v5931 = vadd.f32 %v5859, %v5923
        %v5932 = vadd.f32 %v5860, %v5924
        %v5933 = vadd.f32 %v5861, %v5925
        %v5934 = vadd.f32 %v5862, %v5926
        %v5935 = vmul.f32 %v5883, %v5895
        %v5936 = vmul.f32 %v5884, %v5896
        %v5937 = vmul.f32 %v5885, %v5897
        %v5938 = vmul.f32 %v5886, %v5898
        %v5939 = vmul.f32 %v5887, %v5899
        %v5940 = vmul.f32 %v5888, %v5900
        %v5941 = vmul.f32 %v5889, %v5901
        %v5942 = vmul.f32 %v5890, %v5902
        %v5943 = vadd.f32 %v5871, %v5935
        %v5944 = vadd.f32 %v5872, %v5936
        %v5945 = vadd.f32 %v5873, %v5937
        %v5946 = vadd.f32 %v5874, %v5938
        %v5947 = vadd.f32 %v5875, %v5939
        %v5948 = vadd.f32 %v5876, %v5940
        %v5949 = vadd.f32 %v5877, %v5941
        %v5950 = vadd.f32 %v5878, %v5942
        %v5951 = vld [vmem:[%s245 + $0x660] sm:$0xff]
        %v5952 = vld [vmem:[%s245 + $0x668] sm:$0xff]
        %v5953 = vld [vmem:[%s245 + $0x670] sm:$0xff]
        %v5954 = vld [vmem:[%s245 + $0x678] sm:$0xff]
        %v5955 = vunpack.c.l.bf16 %v5951
        %v5956 = vunpack.c.h.bf16 %v5951
        %v5957 = vunpack.c.l.bf16 %v5952
        %v5958 = vunpack.c.h.bf16 %v5952
        %v5959 = vunpack.c.l.bf16 %v5953
        %v5960 = vunpack.c.h.bf16 %v5953
        %v5961 = vunpack.c.l.bf16 %v5954
        %v5962 = vunpack.c.h.bf16 %v5954
        %v5963 = vld [vmem:[%s254 + $0x660] sm:$0xff]
        %v5964 = vld [vmem:[%s254 + $0x668] sm:$0xff]
        %v5965 = vld [vmem:[%s254 + $0x670] sm:$0xff]
        %v5966 = vld [vmem:[%s254 + $0x678] sm:$0xff]
        %v5967 = vunpack.c.l.bf16 %v5963
        %v5968 = vunpack.c.h.bf16 %v5963
        %v5969 = vunpack.c.l.bf16 %v5964
        %v5970 = vunpack.c.h.bf16 %v5964
        %v5971 = vunpack.c.l.bf16 %v5965
        %v5972 = vunpack.c.h.bf16 %v5965
        %v5973 = vunpack.c.l.bf16 %v5966
        %v5974 = vunpack.c.h.bf16 %v5966
        %v5975 = vmul.f32 %v5955, %v5955
        %v5976 = vmul.f32 %v5956, %v5956
        %v5977 = vmul.f32 %v5957, %v5957
        %v5978 = vmul.f32 %v5958, %v5958
        %v5979 = vmul.f32 %v5959, %v5959
        %v5980 = vmul.f32 %v5960, %v5960
        %v5981 = vmul.f32 %v5961, %v5961
        %v5982 = vmul.f32 %v5962, %v5962
        %v5983 = vadd.f32 %v5911, %v5975
        %v5984 = vadd.f32 %v5912, %v5976
        %v5985 = vadd.f32 %v5913, %v5977
        %v5986 = vadd.f32 %v5914, %v5978
        %v5987 = vadd.f32 %v5915, %v5979
        %v5988 = vadd.f32 %v5916, %v5980
        %v5989 = vadd.f32 %v5917, %v5981
        %v5990 = vadd.f32 %v5918, %v5982
        %v5991 = vmul.f32 %v5967, %v5967
        %v5992 = vmul.f32 %v5968, %v5968
        %v5993 = vmul.f32 %v5969, %v5969
        %v5994 = vmul.f32 %v5970, %v5970
        %v5995 = vmul.f32 %v5971, %v5971
        %v5996 = vmul.f32 %v5972, %v5972
        %v5997 = vmul.f32 %v5973, %v5973
        %v5998 = vmul.f32 %v5974, %v5974
        %v5999 = vadd.f32 %v5927, %v5991
        %v6000 = vadd.f32 %v5928, %v5992
        %v6001 = vadd.f32 %v5929, %v5993
        %v6002 = vadd.f32 %v5930, %v5994
        %v6003 = vadd.f32 %v5931, %v5995
        %v6004 = vadd.f32 %v5932, %v5996
        %v6005 = vadd.f32 %v5933, %v5997
        %v6006 = vadd.f32 %v5934, %v5998
        %v6007 = vmul.f32 %v5955, %v5967
        %v6008 = vmul.f32 %v5956, %v5968
        %v6009 = vmul.f32 %v5957, %v5969
        %v6010 = vmul.f32 %v5958, %v5970
        %v6011 = vmul.f32 %v5959, %v5971
        %v6012 = vmul.f32 %v5960, %v5972
        %v6013 = vmul.f32 %v5961, %v5973
        %v6014 = vmul.f32 %v5962, %v5974
        %v6015 = vadd.f32 %v5943, %v6007
        %v6016 = vadd.f32 %v5944, %v6008
        %v6017 = vadd.f32 %v5945, %v6009
        %v6018 = vadd.f32 %v5946, %v6010
        %v6019 = vadd.f32 %v5947, %v6011
        %v6020 = vadd.f32 %v5948, %v6012
        %v6021 = vadd.f32 %v5949, %v6013
        %v6022 = vadd.f32 %v5950, %v6014
        %v6023 = vld [vmem:[%s245 + $0x6e0] sm:$0xff]
        %v6024 = vld [vmem:[%s245 + $0x6e8] sm:$0xff]
        %v6025 = vld [vmem:[%s245 + $0x6f0] sm:$0xff]
        %v6026 = vld [vmem:[%s245 + $0x6f8] sm:$0xff]
        %v6027 = vunpack.c.l.bf16 %v6023
        %v6028 = vunpack.c.h.bf16 %v6023
        %v6029 = vunpack.c.l.bf16 %v6024
        %v6030 = vunpack.c.h.bf16 %v6024
        %v6031 = vunpack.c.l.bf16 %v6025
        %v6032 = vunpack.c.h.bf16 %v6025
        %v6033 = vunpack.c.l.bf16 %v6026
        %v6034 = vunpack.c.h.bf16 %v6026
        %v6035 = vld [vmem:[%s254 + $0x6e0] sm:$0xff]
        %v6036 = vld [vmem:[%s254 + $0x6e8] sm:$0xff]
        %v6037 = vld [vmem:[%s254 + $0x6f0] sm:$0xff]
        %v6038 = vld [vmem:[%s254 + $0x6f8] sm:$0xff]
        %v6039 = vunpack.c.l.bf16 %v6035
        %v6040 = vunpack.c.h.bf16 %v6035
        %v6041 = vunpack.c.l.bf16 %v6036
        %v6042 = vunpack.c.h.bf16 %v6036
        %v6043 = vunpack.c.l.bf16 %v6037
        %v6044 = vunpack.c.h.bf16 %v6037
        %v6045 = vunpack.c.l.bf16 %v6038
        %v6046 = vunpack.c.h.bf16 %v6038
        %v6047 = vmul.f32 %v6027, %v6027
        %v6048 = vmul.f32 %v6028, %v6028
        %v6049 = vmul.f32 %v6029, %v6029
        %v6050 = vmul.f32 %v6030, %v6030
        %v6051 = vmul.f32 %v6031, %v6031
        %v6052 = vmul.f32 %v6032, %v6032
        %v6053 = vmul.f32 %v6033, %v6033
        %v6054 = vmul.f32 %v6034, %v6034
        %v6055 = vadd.f32 %v5983, %v6047
        %v6056 = vadd.f32 %v5984, %v6048
        %v6057 = vadd.f32 %v5985, %v6049
        %v6058 = vadd.f32 %v5986, %v6050
        %v6059 = vadd.f32 %v5987, %v6051
        %v6060 = vadd.f32 %v5988, %v6052
        %v6061 = vadd.f32 %v5989, %v6053
        %v6062 = vadd.f32 %v5990, %v6054
        %v6063 = vmul.f32 %v6039, %v6039
        %v6064 = vmul.f32 %v6040, %v6040
        %v6065 = vmul.f32 %v6041, %v6041
        %v6066 = vmul.f32 %v6042, %v6042
        %v6067 = vmul.f32 %v6043, %v6043
        %v6068 = vmul.f32 %v6044, %v6044
        %v6069 = vmul.f32 %v6045, %v6045
        %v6070 = vmul.f32 %v6046, %v6046
        %v6071 = vadd.f32 %v5999, %v6063
        %v6072 = vadd.f32 %v6000, %v6064
        %v6073 = vadd.f32 %v6001, %v6065
        %v6074 = vadd.f32 %v6002, %v6066
        %v6075 = vadd.f32 %v6003, %v6067
        %v6076 = vadd.f32 %v6004, %v6068
        %v6077 = vadd.f32 %v6005, %v6069
        %v6078 = vadd.f32 %v6006, %v6070
        %v6079 = vmul.f32 %v6027, %v6039
        %v6080 = vmul.f32 %v6028, %v6040
        %v6081 = vmul.f32 %v6029, %v6041
        %v6082 = vmul.f32 %v6030, %v6042
        %v6083 = vmul.f32 %v6031, %v6043
        %v6084 = vmul.f32 %v6032, %v6044
        %v6085 = vmul.f32 %v6033, %v6045
        %v6086 = vmul.f32 %v6034, %v6046
        %v6087 = vadd.f32 %v6015, %v6079
        %v6088 = vadd.f32 %v6016, %v6080
        %v6089 = vadd.f32 %v6017, %v6081
        %v6090 = vadd.f32 %v6018, %v6082
        %v6091 = vadd.f32 %v6019, %v6083
        %v6092 = vadd.f32 %v6020, %v6084
        %v6093 = vadd.f32 %v6021, %v6085
        %v6094 = vadd.f32 %v6022, %v6086
        %v6095 = vld [vmem:[%s245 + $0x760] sm:$0xff]
        %v6096 = vld [vmem:[%s245 + $0x768] sm:$0xff]
        %v6097 = vld [vmem:[%s245 + $0x770] sm:$0xff]
        %v6098 = vld [vmem:[%s245 + $0x778] sm:$0xff]
        %v6099 = vunpack.c.l.bf16 %v6095
        %v6100 = vunpack.c.h.bf16 %v6095
        %v6101 = vunpack.c.l.bf16 %v6096
        %v6102 = vunpack.c.h.bf16 %v6096
        %v6103 = vunpack.c.l.bf16 %v6097
        %v6104 = vunpack.c.h.bf16 %v6097
        %v6105 = vunpack.c.l.bf16 %v6098
        %v6106 = vunpack.c.h.bf16 %v6098
        %v6107 = vld [vmem:[%s254 + $0x760] sm:$0xff]
        %v6108 = vld [vmem:[%s254 + $0x768] sm:$0xff]
        %v6109 = vld [vmem:[%s254 + $0x770] sm:$0xff]
        %v6110 = vld [vmem:[%s254 + $0x778] sm:$0xff]
        %v6111 = vunpack.c.l.bf16 %v6107
        %v6112 = vunpack.c.h.bf16 %v6107
        %v6113 = vunpack.c.l.bf16 %v6108
        %v6114 = vunpack.c.h.bf16 %v6108
        %v6115 = vunpack.c.l.bf16 %v6109
        %v6116 = vunpack.c.h.bf16 %v6109
        %v6117 = vunpack.c.l.bf16 %v6110
        %v6118 = vunpack.c.h.bf16 %v6110
        %v6119 = vmul.f32 %v6099, %v6099
        %v6120 = vmul.f32 %v6100, %v6100
        %v6121 = vmul.f32 %v6101, %v6101
        %v6122 = vmul.f32 %v6102, %v6102
        %v6123 = vmul.f32 %v6103, %v6103
        %v6124 = vmul.f32 %v6104, %v6104
        %v6125 = vmul.f32 %v6105, %v6105
        %v6126 = vmul.f32 %v6106, %v6106
        %v6127 = vadd.f32 %v6055, %v6119
        %v6128 = vadd.f32 %v6056, %v6120
        %v6129 = vadd.f32 %v6057, %v6121
        %v6130 = vadd.f32 %v6058, %v6122
        %v6131 = vadd.f32 %v6059, %v6123
        %v6132 = vadd.f32 %v6060, %v6124
        %v6133 = vadd.f32 %v6061, %v6125
        %v6134 = vadd.f32 %v6062, %v6126
        %v6135 = vmul.f32 %v6111, %v6111
        %v6136 = vmul.f32 %v6112, %v6112
        %v6137 = vmul.f32 %v6113, %v6113
        %v6138 = vmul.f32 %v6114, %v6114
        %v6139 = vmul.f32 %v6115, %v6115
        %v6140 = vmul.f32 %v6116, %v6116
        %v6141 = vmul.f32 %v6117, %v6117
        %v6142 = vmul.f32 %v6118, %v6118
        %v6143 = vadd.f32 %v6071, %v6135
        %v6144 = vadd.f32 %v6072, %v6136
        %v6145 = vadd.f32 %v6073, %v6137
        %v6146 = vadd.f32 %v6074, %v6138
        %v6147 = vadd.f32 %v6075, %v6139
        %v6148 = vadd.f32 %v6076, %v6140
        %v6149 = vadd.f32 %v6077, %v6141
        %v6150 = vadd.f32 %v6078, %v6142
        %v6151 = vmul.f32 %v6099, %v6111
        %v6152 = vmul.f32 %v6100, %v6112
        %v6153 = vmul.f32 %v6101, %v6113
        %v6154 = vmul.f32 %v6102, %v6114
        %v6155 = vmul.f32 %v6103, %v6115
        %v6156 = vmul.f32 %v6104, %v6116
        %v6157 = vmul.f32 %v6105, %v6117
        %v6158 = vmul.f32 %v6106, %v6118
        %v6159 = vadd.f32 %v6087, %v6151
        %v6160 = vadd.f32 %v6088, %v6152
        %v6161 = vadd.f32 %v6089, %v6153
        %v6162 = vadd.f32 %v6090, %v6154
        %v6163 = vadd.f32 %v6091, %v6155
        %v6164 = vadd.f32 %v6092, %v6156
        %v6165 = vadd.f32 %v6093, %v6157
        %v6166 = vadd.f32 %v6094, %v6158
        %v6167 = vld [vmem:[%s245 + $0x7e0] sm:$0xff]
        %v6168 = vld [vmem:[%s245 + $0x7e8] sm:$0xff]
        %v6169 = vld [vmem:[%s245 + $0x7f0] sm:$0xff]
        %v6170 = vld [vmem:[%s245 + $0x7f8] sm:$0xff]
        %v6171 = vunpack.c.l.bf16 %v6167
        %v6172 = vunpack.c.h.bf16 %v6167
        %v6173 = vunpack.c.l.bf16 %v6168
        %v6174 = vunpack.c.h.bf16 %v6168
        %v6175 = vunpack.c.l.bf16 %v6169
        %v6176 = vunpack.c.h.bf16 %v6169
        %v6177 = vunpack.c.l.bf16 %v6170
        %v6178 = vunpack.c.h.bf16 %v6170
        %v6179 = vld [vmem:[%s254 + $0x7e0] sm:$0xff]
        %v6180 = vld [vmem:[%s254 + $0x7e8] sm:$0xff]
        %v6181 = vld [vmem:[%s254 + $0x7f0] sm:$0xff]
        %v6182 = vld [vmem:[%s254 + $0x7f8] sm:$0xff]
        %v6183 = vunpack.c.l.bf16 %v6179
        %v6184 = vunpack.c.h.bf16 %v6179
        %v6185 = vunpack.c.l.bf16 %v6180
        %v6186 = vunpack.c.h.bf16 %v6180
        %v6187 = vunpack.c.l.bf16 %v6181
        %v6188 = vunpack.c.h.bf16 %v6181
        %v6189 = vunpack.c.l.bf16 %v6182
        %v6190 = vunpack.c.h.bf16 %v6182
        %v6191 = vmul.f32 %v6171, %v6171
        %v6192 = vmul.f32 %v6172, %v6172
        %v6193 = vmul.f32 %v6173, %v6173
        %v6194 = vmul.f32 %v6174, %v6174
        %v6195 = vmul.f32 %v6175, %v6175
        %v6196 = vmul.f32 %v6176, %v6176
        %v6197 = vmul.f32 %v6177, %v6177
        %v6198 = vmul.f32 %v6178, %v6178
        %v6199 = vadd.f32 %v6127, %v6191
        %v6200 = vadd.f32 %v6128, %v6192
        %v6201 = vadd.f32 %v6129, %v6193
        %v6202 = vadd.f32 %v6130, %v6194
        %v6203 = vadd.f32 %v6131, %v6195
        %v6204 = vadd.f32 %v6132, %v6196
        %v6205 = vadd.f32 %v6133, %v6197
        %v6206 = vadd.f32 %v6134, %v6198
        %v6207 = vmul.f32 %v6183, %v6183
        %v6208 = vmul.f32 %v6184, %v6184
        %v6209 = vmul.f32 %v6185, %v6185
        %v6210 = vmul.f32 %v6186, %v6186
        %v6211 = vmul.f32 %v6187, %v6187
        %v6212 = vmul.f32 %v6188, %v6188
        %v6213 = vmul.f32 %v6189, %v6189
        %v6214 = vmul.f32 %v6190, %v6190
        %v6215 = vadd.f32 %v6143, %v6207
        %v6216 = vadd.f32 %v6144, %v6208
        %v6217 = vadd.f32 %v6145, %v6209
        %v6218 = vadd.f32 %v6146, %v6210
        %v6219 = vadd.f32 %v6147, %v6211
        %v6220 = vadd.f32 %v6148, %v6212
        %v6221 = vadd.f32 %v6149, %v6213
        %v6222 = vadd.f32 %v6150, %v6214
        %v6223 = vmul.f32 %v6171, %v6183
        %v6224 = vmul.f32 %v6172, %v6184
        %v6225 = vmul.f32 %v6173, %v6185
        %v6226 = vmul.f32 %v6174, %v6186
        %v6227 = vmul.f32 %v6175, %v6187
        %v6228 = vmul.f32 %v6176, %v6188
        %v6229 = vmul.f32 %v6177, %v6189
        %v6230 = vmul.f32 %v6178, %v6190
        %v6231 = vadd.f32 %v6159, %v6223
        %v6232 = vadd.f32 %v6160, %v6224
        %v6233 = vadd.f32 %v6161, %v6225
        %v6234 = vadd.f32 %v6162, %v6226
        %v6235 = vadd.f32 %v6163, %v6227
        %v6236 = vadd.f32 %v6164, %v6228
        %v6237 = vadd.f32 %v6165, %v6229
        %v6238 = vadd.f32 %v6166, %v6230
        %v6239 = vrot.slane %v6199, 4
        %v6240 = vadd.f32 %v6199, %v6239
        %v6241 = vrot.slane %v6240, 2
        %v6242 = vadd.f32 %v6240, %v6241
        %v6243 = vrot.slane %v6242, 1
        %v6244 = vadd.f32 %v6242, %v6243
        %v6245 = vrot.slane %v6200, 4
        %v6246 = vadd.f32 %v6200, %v6245
        %v6247 = vrot.slane %v6246, 2
        %v6248 = vadd.f32 %v6246, %v6247
        %v6249 = vrot.slane %v6248, 1
        %v6250 = vadd.f32 %v6248, %v6249
        %v6251 = vrot.slane %v6201, 4
        %v6252 = vadd.f32 %v6201, %v6251
        %v6253 = vrot.slane %v6252, 2
        %v6254 = vadd.f32 %v6252, %v6253
        %v6255 = vrot.slane %v6254, 1
        %v6256 = vadd.f32 %v6254, %v6255
        %v6257 = vrot.slane %v6202, 4
        %v6258 = vadd.f32 %v6202, %v6257
        %v6259 = vrot.slane %v6258, 2
        %v6260 = vadd.f32 %v6258, %v6259
        %v6261 = vrot.slane %v6260, 1
        %v6262 = vadd.f32 %v6260, %v6261
        %v6263 = vrot.slane %v6203, 4
        %v6264 = vadd.f32 %v6203, %v6263
        %v6265 = vrot.slane %v6264, 2
        %v6266 = vadd.f32 %v6264, %v6265
        %v6267 = vrot.slane %v6266, 1
        %v6268 = vadd.f32 %v6266, %v6267
        %v6269 = vrot.slane %v6204, 4
        %v6270 = vadd.f32 %v6204, %v6269
        %v6271 = vrot.slane %v6270, 2
        %v6272 = vadd.f32 %v6270, %v6271
        %v6273 = vrot.slane %v6272, 1
        %v6274 = vadd.f32 %v6272, %v6273
        %v6275 = vrot.slane %v6205, 4
        %v6276 = vadd.f32 %v6205, %v6275
        %v6277 = vrot.slane %v6276, 2
        %v6278 = vadd.f32 %v6276, %v6277
        %v6279 = vrot.slane %v6278, 1
        %v6280 = vadd.f32 %v6278, %v6279
        %v6281 = vrot.slane %v6206, 4
        %v6282 = vadd.f32 %v6206, %v6281
        %v6283 = vrot.slane %v6282, 2
        %v6284 = vadd.f32 %v6282, %v6283
        %v6285 = vrot.slane %v6284, 1
        %v6286 = vadd.f32 %v6284, %v6285
        %v6287 = vrot.slane %v6215, 4
        %v6288 = vadd.f32 %v6215, %v6287
        %v6289 = vrot.slane %v6288, 2
        %v6290 = vadd.f32 %v6288, %v6289
        %v6291 = vrot.slane %v6290, 1
        %v6292 = vadd.f32 %v6290, %v6291
        %v6293 = vrot.slane %v6216, 4
        %v6294 = vadd.f32 %v6216, %v6293
        %v6295 = vrot.slane %v6294, 2
        %v6296 = vadd.f32 %v6294, %v6295
        %v6297 = vrot.slane %v6296, 1
        %v6298 = vadd.f32 %v6296, %v6297
        %v6299 = vrot.slane %v6217, 4
        %v6300 = vadd.f32 %v6217, %v6299
        %v6301 = vrot.slane %v6300, 2
        %v6302 = vadd.f32 %v6300, %v6301
        %v6303 = vrot.slane %v6302, 1
        %v6304 = vadd.f32 %v6302, %v6303
        %v6305 = vrot.slane %v6218, 4
        %v6306 = vadd.f32 %v6218, %v6305
        %v6307 = vrot.slane %v6306, 2
        %v6308 = vadd.f32 %v6306, %v6307
        %v6309 = vrot.slane %v6308, 1
        %v6310 = vadd.f32 %v6308, %v6309
        %v6311 = vrot.slane %v6219, 4
        %v6312 = vadd.f32 %v6219, %v6311
        %v6313 = vrot.slane %v6312, 2
        %v6314 = vadd.f32 %v6312, %v6313
        %v6315 = vrot.slane %v6314, 1
        %v6316 = vadd.f32 %v6314, %v6315
        %v6317 = vrot.slane %v6220, 4
        %v6318 = vadd.f32 %v6220, %v6317
        %v6319 = vrot.slane %v6318, 2
        %v6320 = vadd.f32 %v6318, %v6319
        %v6321 = vrot.slane %v6320, 1
        %v6322 = vadd.f32 %v6320, %v6321
        %v6323 = vrot.slane %v6221, 4
        %v6324 = vadd.f32 %v6221, %v6323
        %v6325 = vrot.slane %v6324, 2
        %v6326 = vadd.f32 %v6324, %v6325
        %v6327 = vrot.slane %v6326, 1
        %v6328 = vadd.f32 %v6326, %v6327
        %v6329 = vrot.slane %v6222, 4
        %v6330 = vadd.f32 %v6222, %v6329
        %v6331 = vrot.slane %v6330, 2
        %v6332 = vadd.f32 %v6330, %v6331
        %v6333 = vrot.slane %v6332, 1
        %v6334 = vadd.f32 %v6332, %v6333
        %v6335 = vrot.slane %v6231, 4
        %v6336 = vadd.f32 %v6231, %v6335
        %v6337 = vrot.slane %v6336, 2
        %v6338 = vadd.f32 %v6336, %v6337
        %v6339 = vrot.slane %v6338, 1
        %v6340 = vadd.f32 %v6338, %v6339
        %v6341 = vrot.slane %v6232, 4
        %v6342 = vadd.f32 %v6232, %v6341
        %v6343 = vrot.slane %v6342, 2
        %v6344 = vadd.f32 %v6342, %v6343
        %v6345 = vrot.slane %v6344, 1
        %v6346 = vadd.f32 %v6344, %v6345
        %v6347 = vrot.slane %v6233, 4
        %v6348 = vadd.f32 %v6233, %v6347
        %v6349 = vrot.slane %v6348, 2
        %v6350 = vadd.f32 %v6348, %v6349
        %v6351 = vrot.slane %v6350, 1
        %v6352 = vadd.f32 %v6350, %v6351
        %v6353 = vrot.slane %v6234, 4
        %v6354 = vadd.f32 %v6234, %v6353
        %v6355 = vrot.slane %v6354, 2
        %v6356 = vadd.f32 %v6354, %v6355
        %v6357 = vrot.slane %v6356, 1
        %v6358 = vadd.f32 %v6356, %v6357
        %v6359 = vrot.slane %v6235, 4
        %v6360 = vadd.f32 %v6235, %v6359
        %v6361 = vrot.slane %v6360, 2
        %v6362 = vadd.f32 %v6360, %v6361
        %v6363 = vrot.slane %v6362, 1
        %v6364 = vadd.f32 %v6362, %v6363
        %v6365 = vrot.slane %v6236, 4
        %v6366 = vadd.f32 %v6236, %v6365
        %v6367 = vrot.slane %v6366, 2
        %v6368 = vadd.f32 %v6366, %v6367
        %v6369 = vrot.slane %v6368, 1
        %v6370 = vadd.f32 %v6368, %v6369
        %v6371 = vrot.slane %v6237, 4
        %v6372 = vadd.f32 %v6237, %v6371
        %v6373 = vrot.slane %v6372, 2
        %v6374 = vadd.f32 %v6372, %v6373
        %v6375 = vrot.slane %v6374, 1
        %v6376 = vadd.f32 %v6374, %v6375
        %v6377 = vrot.slane %v6238, 4
        %v6378 = vadd.f32 %v6238, %v6377
        %v6379 = vrot.slane %v6378, 2
        %v6380 = vadd.f32 %v6378, %v6379
        %v6381 = vrot.slane %v6380, 1
        %v6382 = vadd.f32 %v6380, %v6381
        %v6383 = vmax.f32 %v6244, 1e-24
        %v6384 = vmax.f32 %v6250, 1e-24
        %v6385 = vmax.f32 %v6256, 1e-24
        %v6386 = vmax.f32 %v6262, 1e-24
        %v6387 = vmax.f32 %v6268, 1e-24
        %v6388 = vmax.f32 %v6274, 1e-24
        %v6389 = vmax.f32 %v6280, 1e-24
        %v6390 = vmax.f32 %v6286, 1e-24
        %v6391 = vrsqrt.pop %v6383
        %v6392 = vrsqrt.pop %v6384
        %v6393 = vrsqrt.pop %v6385
        %v6394 = vrsqrt.pop %v6386
        %v6395 = vrsqrt.pop %v6387
        %v6396 = vrsqrt.pop %v6388
        %v6397 = vrsqrt.pop %v6389
        %v6398 = vrsqrt.pop %v6390
        %v6399 = vmul.f32 %v6340, %v6391
        %v6400 = vmul.f32 %v6346, %v6392
        %v6401 = vmul.f32 %v6352, %v6393
        %v6402 = vmul.f32 %v6358, %v6394
        %v6403 = vmul.f32 %v6364, %v6395
        %v6404 = vmul.f32 %v6370, %v6396
        %v6405 = vmul.f32 %v6376, %v6397
        %v6406 = vmul.f32 %v6382, %v6398
        %v6407 = vmax.f32 %v6292, 1e-24
        %v6408 = vmax.f32 %v6298, 1e-24
        %v6409 = vmax.f32 %v6304, 1e-24
        %v6410 = vmax.f32 %v6310, 1e-24
        %v6411 = vmax.f32 %v6316, 1e-24
        %v6412 = vmax.f32 %v6322, 1e-24
        %v6413 = vmax.f32 %v6328, 1e-24
        %v6414 = vmax.f32 %v6334, 1e-24
        %v6415 = vrsqrt.pop %v6407
        %v6416 = vrsqrt.pop %v6408
        %v6417 = vrsqrt.pop %v6409
        %v6418 = vrsqrt.pop %v6410
        %v6419 = vrsqrt.pop %v6411
        %v6420 = vrsqrt.pop %v6412
        %v6421 = vrsqrt.pop %v6413
        %v6422 = vrsqrt.pop %v6414
        %v6423 = vmul.f32 %v6399, %v6415
        %v6424 = vmul.f32 %v6400, %v6416
        %v6425 = vmul.f32 %v6401, %v6417
        %v6426 = vmul.f32 %v6402, %v6418
        %v6427 = vmul.f32 %v6403, %v6419
        %v6428 = vmul.f32 %v6404, %v6420
        %v6429 = vmul.f32 %v6405, %v6421
        %v6430 = vmul.f32 %v6406, %v6422
        %v6431 = vld [vmem:[%s263 + $0x18] sm:$0xff]
        %v6432 = vsub.f32 %v6423, 1.0
        %v6433 = vsub.f32 %v6424, 1.0
        %v6434 = vsub.f32 %v6425, 1.0
        %v6435 = vsub.f32 %v6426, 1.0
        %v6436 = vsub.f32 %v6427, 1.0
        %v6437 = vsub.f32 %v6428, 1.0
        %v6438 = vsub.f32 %v6429, 1.0
        %v6439 = vsub.f32 %v6430, 1.0
        %v6440 = vmul.f32 %v6432, %v6432
        %v6441 = vmul.f32 %v6433, %v6433
        %v6442 = vmul.f32 %v6434, %v6434
        %v6443 = vmul.f32 %v6435, %v6435
        %v6444 = vmul.f32 %v6436, %v6436
        %v6445 = vmul.f32 %v6437, %v6437
        %v6446 = vmul.f32 %v6438, %v6438
        %v6447 = vmul.f32 %v6439, %v6439
        %v6448 = vsub.f32 %v6423, %v1674
        %v6449 = vsub.f32 %v6424, %v1674
        %v6450 = vsub.f32 %v6425, %v1674
        %v6451 = vsub.f32 %v6426, %v1674
        %v6452 = vsub.f32 %v6427, %v1674
        %v6453 = vsub.f32 %v6428, %v1674
        %v6454 = vsub.f32 %v6429, %v1674
        %v6455 = vsub.f32 %v6430, %v1674
        %v6456 = vmax.f32 %v6448, 0.0
        %v6457 = vmax.f32 %v6449, 0.0
        %v6458 = vmax.f32 %v6450, 0.0
        %v6459 = vmax.f32 %v6451, 0.0
        %v6460 = vmax.f32 %v6452, 0.0
        %v6461 = vmax.f32 %v6453, 0.0
        %v6462 = vmax.f32 %v6454, 0.0
        %v6463 = vmax.f32 %v6455, 0.0
        %v6464 = vmul.f32 %v6456, %v6456
        %v6465 = vmul.f32 %v6457, %v6457
        %v6466 = vmul.f32 %v6458, %v6458
        %v6467 = vmul.f32 %v6459, %v6459
        %v6468 = vmul.f32 %v6460, %v6460
        %v6469 = vmul.f32 %v6461, %v6461
        %v6470 = vmul.f32 %v6462, %v6462
        %v6471 = vmul.f32 %v6463, %v6463
        %v6472 = vsub.f32 %v6440, %v6464
        %v6473 = vsub.f32 %v6441, %v6465
        %v6474 = vsub.f32 %v6442, %v6466
        %v6475 = vsub.f32 %v6443, %v6467
        %v6476 = vsub.f32 %v6444, %v6468
        %v6477 = vsub.f32 %v6445, %v6469
        %v6478 = vsub.f32 %v6446, %v6470
        %v6479 = vsub.f32 %v6447, %v6471
        %v6488 = vcombine.low %v6472, %v6473
        %v6489 = vcombine.low %v6474, %v6475
        %v6490 = vcombine.low %v6476, %v6477
        %v6491 = vcombine.low %v6478, %v6479
        %v6493 = vunpack.c.l.s4 1966171168
        %v6494 = vunpack.c.0.s8 %v6493
        %v6495 = vlaneseq
        %v6496 = vshrl.u32 %v6495, 7
        %v6497 = vsub.s32 %v6494, %v6496
        %v6498 = vrot.slane %v6488, %v6497
        %v6500 = vunpack.c.l.s4 1966171168
        %v6501 = vunpack.c.0.s8 %v6500
        %v6502 = vlaneseq
        %v6503 = vshrl.u32 %v6502, 7
        %v6504 = vsub.s32 %v6501, %v6503
        %v6505 = vrot.slane %v6489, %v6504
        %v6507 = vunpack.c.l.s4 1966171168
        %v6508 = vunpack.c.0.s8 %v6507
        %v6509 = vlaneseq
        %v6510 = vshrl.u32 %v6509, 7
        %v6511 = vsub.s32 %v6508, %v6510
        %v6512 = vrot.slane %v6490, %v6511
        %v6514 = vunpack.c.l.s4 1966171168
        %v6515 = vunpack.c.0.s8 %v6514
        %v6516 = vlaneseq
        %v6517 = vshrl.u32 %v6516, 7
        %v6518 = vsub.s32 %v6515, %v6517
        %v6519 = vrot.slane %v6491, %v6518
        %v6520 = vcombine.low %v6498, %v6505
        %v6521 = vcombine.low %v6512, %v6519
        %v6523 = vunpack.c.l.s4 1966171168
        %v6524 = vunpack.c.0.s8 %v6523
        %v6525 = vlaneseq
        %v6526 = vshrl.u32 %v6525, 7
        %v6527 = vsub.s32 %v6524, %v6526
        %v6528 = vrot.slane %v6520, %v6527
        %v6530 = vunpack.c.l.s4 1966171168
        %v6531 = vunpack.c.0.s8 %v6530
        %v6532 = vlaneseq
        %v6533 = vshrl.u32 %v6532, 7
        %v6534 = vsub.s32 %v6531, %v6533
        %v6535 = vrot.slane %v6521, %v6534
        %v6536 = vcombine.low %v6528, %v6535
        %v6538 = vmul.f32 %v6431, %v6536
        %v6540 = vlaneseq
        %v6541 = vshrl.u32 %v6540, 7
        %v6542 = vsub.s32 0, %v6541
        %v6543 = vrot.slane %v6538, %v6542
        %v6544 = vlaneseq
        %v6545 = vshrl.u32 %v6544, 7
        %v6546 = vsub.s32 1, %v6545
        %v6547 = vrot.slane %v6538, %v6546
        %v6548 = vlaneseq
        %v6549 = vshrl.u32 %v6548, 7
        %v6550 = vsub.s32 2, %v6549
        %v6551 = vrot.slane %v6538, %v6550
        %v6552 = vlaneseq
        %v6553 = vshrl.u32 %v6552, 7
        %v6554 = vsub.s32 3, %v6553
        %v6555 = vrot.slane %v6538, %v6554
        %v6556 = vlaneseq
        %v6557 = vshrl.u32 %v6556, 7
        %v6558 = vsub.s32 4, %v6557
        %v6559 = vrot.slane %v6538, %v6558
        %v6560 = vlaneseq
        %v6561 = vshrl.u32 %v6560, 7
        %v6562 = vsub.s32 5, %v6561
        %v6563 = vrot.slane %v6538, %v6562
        %v6564 = vlaneseq
        %v6565 = vshrl.u32 %v6564, 7
        %v6566 = vsub.s32 6, %v6565
        %v6567 = vrot.slane %v6538, %v6566
        %v6568 = vlaneseq
        %v6569 = vshrl.u32 %v6568, 7
        %v6570 = vsub.s32 7, %v6569
        %v6571 = vrot.slane %v6538, %v6570
        %v6580 = vadd.f32 %v6464, %v6543
        %v6581 = vadd.f32 %v6465, %v6547
        %v6582 = vadd.f32 %v6466, %v6551
        %v6583 = vadd.f32 %v6467, %v6555
        %v6584 = vadd.f32 %v6468, %v6559
        %v6585 = vadd.f32 %v6469, %v6563
        %v6586 = vadd.f32 %v6470, %v6567
        %v6587 = vadd.f32 %v6471, %v6571
        %s6588 = sadd.s32 %s312, 3072
        %v6589 = vstv %s6588
        %v6590 = vadd.s32 %v6589, %v1816
        %v6591 = vadd.s32 %v6589, %v1817
        %v6592 = vadd.s32 %v6589, %v1818
        %v6593 = vadd.s32 %v6589, %v1819
        %v6594 = vadd.s32 %v6589, %v1820
        %v6595 = vadd.s32 %v6589, %v1821
        %v6596 = vadd.s32 %v6589, %v1822
        %v6597 = vadd.s32 %v6589, %v1823
        %vm6598 = vcmp.lt.s32.totalorder %v6590, %v1833
        %vm6599 = vcmp.lt.s32.totalorder %v6591, %v1833
        %vm6600 = vcmp.lt.s32.totalorder %v6592, %v1833
        %vm6601 = vcmp.lt.s32.totalorder %v6593, %v1833
        %vm6602 = vcmp.lt.s32.totalorder %v6594, %v1833
        %vm6603 = vcmp.lt.s32.totalorder %v6595, %v1833
        %vm6604 = vcmp.lt.s32.totalorder %v6596, %v1833
        %vm6605 = vcmp.lt.s32.totalorder %v6597, %v1833
        %v6606 = vsel %vm6598, %v6580, 0.0
        %v6607 = vsel %vm6599, %v6581, 0.0
        %v6608 = vsel %vm6600, %v6582, 0.0
        %v6609 = vsel %vm6601, %v6583, 0.0
        %v6610 = vsel %vm6602, %v6584, 0.0
        %v6611 = vsel %vm6603, %v6585, 0.0
        %v6612 = vsel %vm6604, %v6586, 0.0
        %v6613 = vsel %vm6605, %v6587, 0.0
        %v6614 = vld [vmem:[#allocation2 + $0x18] sm:$0xff]
        %v6623 = vcombine.low %v6606, %v6607
        %v6624 = vcombine.low %v6608, %v6609
        %v6625 = vcombine.low %v6610, %v6611
        %v6626 = vcombine.low %v6612, %v6613
        %v6628 = vunpack.c.l.s4 1966171168
        %v6629 = vunpack.c.0.s8 %v6628
        %v6630 = vlaneseq
        %v6631 = vshrl.u32 %v6630, 7
        %v6632 = vsub.s32 %v6629, %v6631
        %v6633 = vrot.slane %v6623, %v6632
        %v6635 = vunpack.c.l.s4 1966171168
        %v6636 = vunpack.c.0.s8 %v6635
        %v6637 = vlaneseq
        %v6638 = vshrl.u32 %v6637, 7
        %v6639 = vsub.s32 %v6636, %v6638
        %v6640 = vrot.slane %v6624, %v6639
        %v6642 = vunpack.c.l.s4 1966171168
        %v6643 = vunpack.c.0.s8 %v6642
        %v6644 = vlaneseq
        %v6645 = vshrl.u32 %v6644, 7
        %v6646 = vsub.s32 %v6643, %v6645
        %v6647 = vrot.slane %v6625, %v6646
        %v6649 = vunpack.c.l.s4 1966171168
        %v6650 = vunpack.c.0.s8 %v6649
        %v6651 = vlaneseq
        %v6652 = vshrl.u32 %v6651, 7
        %v6653 = vsub.s32 %v6650, %v6652
        %v6654 = vrot.slane %v6626, %v6653
        %v6655 = vcombine.low %v6633, %v6640
        %v6656 = vcombine.low %v6647, %v6654
        %v6658 = vunpack.c.l.s4 1966171168
        %v6659 = vunpack.c.0.s8 %v6658
        %v6660 = vlaneseq
        %v6661 = vshrl.u32 %v6660, 7
        %v6662 = vsub.s32 %v6659, %v6661
        %v6663 = vrot.slane %v6655, %v6662
        %v6665 = vunpack.c.l.s4 1966171168
        %v6666 = vunpack.c.0.s8 %v6665
        %v6667 = vlaneseq
        %v6668 = vshrl.u32 %v6667, 7
        %v6669 = vsub.s32 %v6666, %v6668
        %v6670 = vrot.slane %v6656, %v6669
        %v6671 = vcombine.low %v6663, %v6670
        %v6673 = vadd.f32 %v6614, %v6671
        %6674 = vst [vmem:[#allocation2 + $0x18] sm:$0xff] %v6673
        %p6675 = scmp.eq.s32.totalorder %s30, 2
        // Predicated region
        $region49: #{tpu_custom_call.1} parent=31 // pred_check
          %p6676 = pneg %p6675
        $region50: #{tpu_custom_call.1} parent=31 // pred_check_branch
          %6678 = sbr.rel (%p6676) target = $region52
        $region51: #{tpu_custom_call.1} parent=31 // pred_region
          %v6679 = vld [vmem:[#allocation2] sm:$0xff]
          %v6680 = vld [vmem:[#allocation2 + $0x8] sm:$0xff]
          %v6681 = vld [vmem:[#allocation2 + $0x10] sm:$0xff]
          %v6682 = vld [vmem:[#allocation2 + $0x18] sm:$0xff]
          %v6687 = vlaneseq
          %v6688 = vshrl.u32 %v6687, 7
          %v6689 = vsub.s32 0, %v6688
          %v6690 = vrot.slane %v6679, %v6689
          %v6691 = vlaneseq
          %v6692 = vshrl.u32 %v6691, 7
          %v6693 = vsub.s32 1, %v6692
          %v6694 = vrot.slane %v6679, %v6693
          %v6695 = vlaneseq
          %v6696 = vshrl.u32 %v6695, 7
          %v6697 = vsub.s32 2, %v6696
          %v6698 = vrot.slane %v6679, %v6697
          %v6699 = vlaneseq
          %v6700 = vshrl.u32 %v6699, 7
          %v6701 = vsub.s32 3, %v6700
          %v6702 = vrot.slane %v6679, %v6701
          %v6703 = vlaneseq
          %v6704 = vshrl.u32 %v6703, 7
          %v6705 = vsub.s32 4, %v6704
          %v6706 = vrot.slane %v6679, %v6705
          %v6707 = vlaneseq
          %v6708 = vshrl.u32 %v6707, 7
          %v6709 = vsub.s32 5, %v6708
          %v6710 = vrot.slane %v6679, %v6709
          %v6711 = vlaneseq
          %v6712 = vshrl.u32 %v6711, 7
          %v6713 = vsub.s32 6, %v6712
          %v6714 = vrot.slane %v6679, %v6713
          %v6715 = vlaneseq
          %v6716 = vshrl.u32 %v6715, 7
          %v6717 = vsub.s32 7, %v6716
          %v6718 = vrot.slane %v6679, %v6717
          %v6719 = vlaneseq
          %v6720 = vshrl.u32 %v6719, 7
          %v6721 = vsub.s32 0, %v6720
          %v6722 = vrot.slane %v6680, %v6721
          %v6723 = vlaneseq
          %v6724 = vshrl.u32 %v6723, 7
          %v6725 = vsub.s32 1, %v6724
          %v6726 = vrot.slane %v6680, %v6725
          %v6727 = vlaneseq
          %v6728 = vshrl.u32 %v6727, 7
          %v6729 = vsub.s32 2, %v6728
          %v6730 = vrot.slane %v6680, %v6729
          %v6731 = vlaneseq
          %v6732 = vshrl.u32 %v6731, 7
          %v6733 = vsub.s32 3, %v6732
          %v6734 = vrot.slane %v6680, %v6733
          %v6735 = vlaneseq
          %v6736 = vshrl.u32 %v6735, 7
          %v6737 = vsub.s32 4, %v6736
          %v6738 = vrot.slane %v6680, %v6737
          %v6739 = vlaneseq
          %v6740 = vshrl.u32 %v6739, 7
          %v6741 = vsub.s32 5, %v6740
          %v6742 = vrot.slane %v6680, %v6741
          %v6743 = vlaneseq
          %v6744 = vshrl.u32 %v6743, 7
          %v6745 = vsub.s32 6, %v6744
          %v6746 = vrot.slane %v6680, %v6745
          %v6747 = vlaneseq
          %v6748 = vshrl.u32 %v6747, 7
          %v6749 = vsub.s32 7, %v6748
          %v6750 = vrot.slane %v6680, %v6749
          %v6751 = vlaneseq
          %v6752 = vshrl.u32 %v6751, 7
          %v6753 = vsub.s32 0, %v6752
          %v6754 = vrot.slane %v6681, %v6753
          %v6755 = vlaneseq
          %v6756 = vshrl.u32 %v6755, 7
          %v6757 = vsub.s32 1, %v6756
          %v6758 = vrot.slane %v6681, %v6757
          %v6759 = vlaneseq
          %v6760 = vshrl.u32 %v6759, 7
          %v6761 = vsub.s32 2, %v6760
          %v6762 = vrot.slane %v6681, %v6761
          %v6763 = vlaneseq
          %v6764 = vshrl.u32 %v6763, 7
          %v6765 = vsub.s32 3, %v6764
          %v6766 = vrot.slane %v6681, %v6765
          %v6767 = vlaneseq
          %v6768 = vshrl.u32 %v6767, 7
          %v6769 = vsub.s32 4, %v6768
          %v6770 = vrot.slane %v6681, %v6769
          %v6771 = vlaneseq
          %v6772 = vshrl.u32 %v6771, 7
          %v6773 = vsub.s32 5, %v6772
          %v6774 = vrot.slane %v6681, %v6773
          %v6775 = vlaneseq
          %v6776 = vshrl.u32 %v6775, 7
          %v6777 = vsub.s32 6, %v6776
          %v6778 = vrot.slane %v6681, %v6777
          %v6779 = vlaneseq
          %v6780 = vshrl.u32 %v6779, 7
          %v6781 = vsub.s32 7, %v6780
          %v6782 = vrot.slane %v6681, %v6781
          %v6783 = vlaneseq
          %v6784 = vshrl.u32 %v6783, 7
          %v6785 = vsub.s32 0, %v6784
          %v6786 = vrot.slane %v6682, %v6785
          %v6787 = vlaneseq
          %v6788 = vshrl.u32 %v6787, 7
          %v6789 = vsub.s32 1, %v6788
          %v6790 = vrot.slane %v6682, %v6789
          %v6791 = vlaneseq
          %v6792 = vshrl.u32 %v6791, 7
          %v6793 = vsub.s32 2, %v6792
          %v6794 = vrot.slane %v6682, %v6793
          %v6795 = vlaneseq
          %v6796 = vshrl.u32 %v6795, 7
          %v6797 = vsub.s32 3, %v6796
          %v6798 = vrot.slane %v6682, %v6797
          %v6799 = vlaneseq
          %v6800 = vshrl.u32 %v6799, 7
          %v6801 = vsub.s32 4, %v6800
          %v6802 = vrot.slane %v6682, %v6801
          %v6803 = vlaneseq
          %v6804 = vshrl.u32 %v6803, 7
          %v6805 = vsub.s32 5, %v6804
          %v6806 = vrot.slane %v6682, %v6805
          %v6807 = vlaneseq
          %v6808 = vshrl.u32 %v6807, 7
          %v6809 = vsub.s32 6, %v6808
          %v6810 = vrot.slane %v6682, %v6809
          %v6811 = vlaneseq
          %v6812 = vshrl.u32 %v6811, 7
          %v6813 = vsub.s32 7, %v6812
          %v6814 = vrot.slane %v6682, %v6813
          %vm6847 = vcmask 1040384
          %v6848 = vsel %vm6847, %v6690, 0.0
          %v6849 = vsel %vm6847, %v6694, 0.0
          %v6850 = vadd.f32 %v6848, %v6849
          %v6851 = vsel %vm6847, %v6698, 0.0
          %v6852 = vadd.f32 %v6850, %v6851
          %v6853 = vsel %vm6847, %v6702, 0.0
          %v6854 = vadd.f32 %v6852, %v6853
          %v6855 = vsel %vm6847, %v6706, 0.0
          %v6856 = vadd.f32 %v6854, %v6855
          %v6857 = vsel %vm6847, %v6710, 0.0
          %v6858 = vadd.f32 %v6856, %v6857
          %v6859 = vsel %vm6847, %v6714, 0.0
          %v6860 = vadd.f32 %v6858, %v6859
          %v6861 = vsel %vm6847, %v6718, 0.0
          %v6862 = vadd.f32 %v6860, %v6861
          %v6863 = vsel %vm6847, %v6722, 0.0
          %v6864 = vadd.f32 %v6862, %v6863
          %v6865 = vsel %vm6847, %v6726, 0.0
          %v6866 = vadd.f32 %v6864, %v6865
          %v6867 = vsel %vm6847, %v6730, 0.0
          %v6868 = vadd.f32 %v6866, %v6867
          %v6869 = vsel %vm6847, %v6734, 0.0
          %v6870 = vadd.f32 %v6868, %v6869
          %v6871 = vsel %vm6847, %v6738, 0.0
          %v6872 = vadd.f32 %v6870, %v6871
          %v6873 = vsel %vm6847, %v6742, 0.0
          %v6874 = vadd.f32 %v6872, %v6873
          %v6875 = vsel %vm6847, %v6746, 0.0
          %v6876 = vadd.f32 %v6874, %v6875
          %v6877 = vsel %vm6847, %v6750, 0.0
          %v6878 = vadd.f32 %v6876, %v6877
          %v6879 = vsel %vm6847, %v6754, 0.0
          %v6880 = vadd.f32 %v6878, %v6879
          %v6881 = vsel %vm6847, %v6758, 0.0
          %v6882 = vadd.f32 %v6880, %v6881
          %v6883 = vsel %vm6847, %v6762, 0.0
          %v6884 = vadd.f32 %v6882, %v6883
          %v6885 = vsel %vm6847, %v6766, 0.0
          %v6886 = vadd.f32 %v6884, %v6885
          %v6887 = vsel %vm6847, %v6770, 0.0
          %v6888 = vadd.f32 %v6886, %v6887
          %v6889 = vsel %vm6847, %v6774, 0.0
          %v6890 = vadd.f32 %v6888, %v6889
          %v6891 = vsel %vm6847, %v6778, 0.0
          %v6892 = vadd.f32 %v6890, %v6891
          %v6893 = vsel %vm6847, %v6782, 0.0
          %v6894 = vadd.f32 %v6892, %v6893
          %v6895 = vsel %vm6847, %v6786, 0.0
          %v6896 = vadd.f32 %v6894, %v6895
          %v6897 = vsel %vm6847, %v6790, 0.0
          %v6898 = vadd.f32 %v6896, %v6897
          %v6899 = vsel %vm6847, %v6794, 0.0
          %v6900 = vadd.f32 %v6898, %v6899
          %v6901 = vsel %vm6847, %v6798, 0.0
          %v6902 = vadd.f32 %v6900, %v6901
          %v6903 = vsel %vm6847, %v6802, 0.0
          %v6904 = vadd.f32 %v6902, %v6903
          %v6905 = vsel %vm6847, %v6806, 0.0
          %v6906 = vadd.f32 %v6904, %v6905
          %v6907 = vsel %vm6847, %v6810, 0.0
          %v6908 = vadd.f32 %v6906, %v6907
          %v6909 = vsel %vm6847, %v6814, 0.0
          %v6910 = vadd.f32 %v6908, %v6909
          %6911 = vadd.xlane.f32.xlu0 %v6910
          %v6912 = vpop.xlane.xlu0 %6911
          %v6913 = vrot.slane %v6912, 4
          %v6914 = vadd.f32 %v6912, %v6913
          %v6915 = vrot.slane %v6914, 2
          %v6916 = vadd.f32 %v6914, %v6915
          %v6917 = vrot.slane %v6916, 1
          %v6918 = vadd.f32 %v6916, %v6917
          %s6919 = vtos %v6918
          %v6920 = vstv %s6919
          %vm6921 = vcmask 0
          %6922 = vst.msk [vmem:[#allocation12] sm:$0x1] %vm6921, %v6920
        $region52: #{tpu_custom_call.1} parent=31 // pred_fallthru
          _
        // Predicated region
        $region53: #{tpu_custom_call.1} parent=31 // pred_check
          %p6923 = pneg %p145
        $region54: #{tpu_custom_call.1} parent=31 // pred_check_branch
          %6925 = sbr.rel (%p6923) target = $region56
        $region55: #{tpu_custom_call.1} parent=31 // pred_region
          %s6927 = ssub.s32 16, 16
          %6928 = vsyncadd [#allocation8], %s6927
          %s6929 = smul.addr %s29, 16
          %s6930 = scalar_lea.hbm %s5, %s6929
          %s6932 = sshll.u32 [#allocation12], 4
          %s6933 = int_to_ptr.vmem [resolvable:$true] %s6932
          %6935 = dma.vmem_to_hbm [thread:$0]  %s6933, 16, %s6930, [#allocation8]
        $region56: #{tpu_custom_call.1} parent=31 // pred_fallthru
          _
        // Predicated region
        $region57: #{tpu_custom_call.1} parent=31 // pred_check
          %p6936 = pneg %p145
        $region58: #{tpu_custom_call.1} parent=31 // pred_check_branch
          %6938 = sbr.rel (%p6936) target = $region60
        $region59: #{tpu_custom_call.1} parent=31 // pred_region
          %6939 = dma.done [#allocation8], 16
        $region60: #{tpu_custom_call.1} parent=31 // pred_fallthru
          _
      $region32: #{tpu_custom_call.1} parent=5 // pred_fallthru
        _
      %p6940 = scmp.le.s32.totalorder 2, %s20
      // Predicated region
      $region61: #{tpu_custom_call.1} parent=5 // pred_check
        %p6941 = pneg %p6940
      $region62: #{tpu_custom_call.1} parent=5 // pred_check_branch
        %6943 = sbr.rel (%p6941) target = $region64
      $region63: #{tpu_custom_call.1} parent=5 // pred_region
        %s6944 = ssub.s32 %s20, 2
      $region64: #{tpu_custom_call.1} parent=5 // pred_fallthru
        _
    $region6: #{tpu_custom_call.1} parent=1 // loop_footer
      %s24 = sadd.s32 1, %s20
    $region7: #{tpu_custom_call.1} parent=1 // loop_footer_branch
      %19 = sbr.rel target = $region3
    $region8: #{tpu_custom_call.1} parent=1 // loop_exit
      _
    %6945 = vsyncpa [#allocation7], 1
    %s6946 = scalar_lea.sflag [#allocation7], 1
    %6947 = vsyncpa %s6946, 1
    %6948 = vsyncpa [#allocation10], 1
    %s6949 = scalar_lea.sflag [#allocation10], 1
    %6950 = vsyncpa %s6949, 1
    %6951 = vsyncpa [#allocation8], 1
    %s6952 = scalar_lea.sflag [#allocation8], 1
    %6953 = vsyncpa %s6952, 1

</llo_original>
